<compile_context>
chip_gen: v6e
topology: v6e:2x2x1
jax: 0.10.0
libtpu: 0.0.40
codegen_flags: <defaults>
</compile_context>

<pallas_src>
import functools

import jax
import jax.numpy as jnp
import numpy as np
from jax.experimental import pallas as pl
from jax.experimental.pallas import tpu as pltpu

EPS = 1e-5


def _tpu_vmem_capacity_bytes():
    try:
        cap = int(getattr(pltpu.get_tpu_info(), "vmem_capacity_bytes", 0))
        if cap > 0:
            return cap
    except Exception:
        pass
    return 64 * 1024 * 1024            # conservative default (v7x per-TC VMEM)


_VMEM_CAP = _tpu_vmem_capacity_bytes()
# Generation-aware scoped-VMEM budget + Stage-A row tile (review: per-chip limits).
VMEM_LIMIT = int(min(_VMEM_CAP * 3 // 4, 100 * 1024 * 1024))
ROW_TILE = 2048 if _VMEM_CAP >= 96 * 1024 * 1024 else 1024


# --------------------------------- kernels -----------------------------------

def _stage_a_kernel(x_ref, s1_ref, b1_ref, w1_ref, s2_ref, b2_ref, o_ref):
    # o = relu(bn2(relu(bn1(x)) @ w1))   -- bf16 matmul, f32 accum + epilogue.
    a1 = jnp.maximum(x_ref[...].astype(jnp.float32) * s1_ref[...] + b1_ref[...], 0.0)
    h = jnp.dot(a1.astype(jnp.bfloat16), w1_ref[...],
                preferred_element_type=jnp.float32)
    o_ref[...] = jnp.maximum(h * s2_ref[...] + b2_ref[...], 0.0).astype(o_ref.dtype)


def _make_stage_b_kernel(stride, H, W, Ho, Wo, planes, has_proj):
    """Fused 3x3 conv2 + bn3 + relu + 1x1 conv3 + residual add, one image/step.

    The 1-pixel halo slab lives only in a VMEM scratch (no HBM pad round trip);
    the 9 taps are read straight from it (strided pl.ds reads when stride>1)."""
    Hp, Wp = H + 2, W + 2
    Mo = Ho * Wo

    def kernel(*refs):
        if has_proj:
            (a2_ref, xs_ref, w2_ref, w3_ref, wsc_ref, s1_ref, b1_ref,
             s3_ref, b3_ref, o_ref, slab_ref) = refs
        else:
            (a2_ref, xs_ref, w2_ref, w3_ref,
             s3_ref, b3_ref, o_ref, slab_ref) = refs

        # Build the halo slab entirely in VMEM: zero it, then copy the interior.
        # (Re-zeroed every step so it is correct under any megacore grid sharding.)
        slab_ref[...] = jnp.zeros((Hp, Wp, planes), jnp.bfloat16)
        slab_ref[pl.ds(1, H), pl.ds(1, W), :] = a2_ref[0]

        # 3x3 conv as 9 shifted taps, all accumulating into one f32 accumulator.
        acc = jnp.zeros((Mo, planes), jnp.float32)
        for dh in range(3):
            for dw in range(3):
                if stride == 1:
                    tap = slab_ref[pl.ds(dh, Ho), pl.ds(dw, Wo), :]
                else:
                    tap = slab_ref[pl.ds(dh, Ho, stride=stride),
                                   pl.ds(dw, Wo, stride=stride), :]
                acc = acc + jnp.dot(tap.reshape(Mo, planes),
                                    w2_ref[dh * 3 + dw],
                                    preferred_element_type=jnp.float32)

        # bn3 + relu + 1x1 conv3 (fused epilogue, tile stays in VMEM/vregs).
        a3 = jnp.maximum(acc * s3_ref[...] + b3_ref[...], 0.0).astype(jnp.bfloat16)
        out = jnp.dot(a3, w3_ref[...], preferred_element_type=jnp.float32)

        # Shortcut (fused residual add), all inputs bf16.
        if has_proj:
            xs = xs_ref[0]                                     # (Mo, cin) bf16
            a1 = jnp.maximum(xs.astype(jnp.float32) * s1_ref[...] + b1_ref[...], 0.0)
            out = out + jnp.dot(a1.astype(jnp.bfloat16), wsc_ref[...],
                                preferred_element_type=jnp.float32)
        else:
            out = out + xs_ref[0].astype(jnp.float32)          # identity, bf16 x

        o_ref[0] = out.astype(o_ref.dtype)                     # bf16 writeback

    return kernel


# --------------------------- pallas_call wrappers -----------------------------

def _row_tile(m, target=ROW_TILE):
    return target if m > target else m


def stage_a(x_flat, s1, b1, w1, s2, b2):
    M, cin = x_flat.shape
    planes = w1.shape[1]
    tm = _row_tile(M)
    grid = (pl.cdiv(M, tm),)
    flops = 2 * M * cin * planes + 4 * M * (cin + planes)
    bytes_accessed = (M * cin + cin * planes + M * planes) * 2 \
        + 2 * 4 * (cin + planes)
    return pl.pallas_call(
        _stage_a_kernel,
        out_shape=jax.ShapeDtypeStruct((M, planes), jnp.bfloat16),
        grid=grid,
        in_specs=[
            pl.BlockSpec((tm, cin), lambda i: (i, 0)),
            pl.BlockSpec((1, cin), lambda i: (0, 0)),
            pl.BlockSpec((1, cin), lambda i: (0, 0)),
            pl.BlockSpec((cin, planes), lambda i: (0, 0)),
            pl.BlockSpec((1, planes), lambda i: (0, 0)),
            pl.BlockSpec((1, planes), lambda i: (0, 0)),
        ],
        out_specs=pl.BlockSpec((tm, planes), lambda i: (i, 0)),
        compiler_params=pltpu.CompilerParams(
            dimension_semantics=("parallel",),
            vmem_limit_bytes=VMEM_LIMIT),
        cost_estimate=pl.CostEstimate(flops=int(flops), transcendentals=0,
                                      bytes_accessed=int(bytes_accessed)),
    )(x_flat, s1.reshape(1, cin), b1.reshape(1, cin), w1,
      s2.reshape(1, planes), b2.reshape(1, planes))


def stage_b(a2, x_sc, w2, w3, s3, b3, stride, Ho, Wo,
            wsc=None, s1=None, b1=None):
    N, H, W, planes = a2.shape
    cout = w3.shape[1]
    Mo = Ho * Wo
    has_proj = wsc is not None
    kernel = _make_stage_b_kernel(stride, H, W, Ho, Wo, planes, has_proj)

    in_arrays = [a2, x_sc, w2, w3]
    in_specs = [
        pl.BlockSpec((1, H, W, planes), lambda n: (n, 0, 0, 0)),
        pl.BlockSpec((1, Mo, x_sc.shape[-1]), lambda n: (n, 0, 0)),
        pl.BlockSpec((9, planes, planes), lambda n: (0, 0, 0)),
        pl.BlockSpec((planes, cout), lambda n: (0, 0)),
    ]
    if has_proj:
        cin = wsc.shape[0]
        in_arrays += [wsc, s1.reshape(1, cin), b1.reshape(1, cin)]
        in_specs += [pl.BlockSpec((cin, cout), lambda n: (0, 0)),
                     pl.BlockSpec((1, cin), lambda n: (0, 0)),
                     pl.BlockSpec((1, cin), lambda n: (0, 0))]
    in_arrays += [s3.reshape(1, planes), b3.reshape(1, planes)]
    in_specs += [pl.BlockSpec((1, planes), lambda n: (0, 0)),
                 pl.BlockSpec((1, planes), lambda n: (0, 0))]

    flops = N * Mo * (18 * planes * planes + 2 * planes * cout)
    if has_proj:
        flops += N * Mo * 2 * wsc.shape[0] * cout
    bytes_accessed = sum(int(np.prod(a.shape)) * int(a.dtype.itemsize)
                         for a in in_arrays) + N * Mo * cout * 2   # bf16 out

    # TODO(synk): v7x megacore: add a second "parallel" grid axis band-tiling Ho
    # (halo-aware) so small-batch blocks fan out over both TensorCores.
    return pl.pallas_call(
        kernel,
        out_shape=jax.ShapeDtypeStruct((N, Mo, cout), jnp.bfloat16),
        grid=(N,),
        in_specs=in_specs,
        out_specs=pl.BlockSpec((1, Mo, cout), lambda n: (n, 0, 0)),
        scratch_shapes=[pltpu.VMEM((H + 2, W + 2, planes), jnp.bfloat16)],
        compiler_params=pltpu.CompilerParams(
            dimension_semantics=("parallel",),
            vmem_limit_bytes=VMEM_LIMIT),
        cost_estimate=pl.CostEstimate(flops=int(flops), transcendentals=0,
                                      bytes_accessed=int(bytes_accessed)),
    )(*in_arrays)


# -------------------------------- forward pass --------------------------------

def _fold_bn(gamma, beta, mean, var):
    s = gamma / jnp.sqrt(var + EPS)
    return s, beta - mean * s


def preact_bottleneck_pallas(x_nchw, p, stride):
    N, cin, H, W = x_nchw.shape
    # NCHW interface to match the PyTorch spec; a full network should stay
    # NHWC/bf16 end-to-end to drop the transposes and the final f32 cast.
    x = jnp.transpose(x_nchw, (0, 2, 3, 1))                          # NHWC
    x_bf = x.astype(jnp.bfloat16)

    s1, b1 = _fold_bn(*p['bn1'])
    s2, b2 = _fold_bn(*p['bn2'])
    s3, b3 = _fold_bn(*p['bn3'])

    planes = p['w1'].shape[0]
    expansion = 4
    cout = expansion * planes

    # Weights to bf16 (MXU-native); all matmuls accumulate in f32.
    w1 = p['w1'][:, :, 0, 0].T.astype(jnp.bfloat16)                  # (cin, planes)
    w3 = p['w3'][:, :, 0, 0].T.astype(jnp.bfloat16)                  # (planes, 4p)
    w2 = jnp.stack([p['w2'][:, :, dh, dw].T
                    for dh in range(3) for dw in range(3)],
                   axis=0).astype(jnp.bfloat16)                      # (9, planes, planes)

    # Stage A: relu(bn1) -> conv1 -> relu(bn2), row-tiled.
    a2_flat = stage_a(x_bf.reshape(N * H * W, cin), s1, b1, w1, s2, b2)
    a2 = a2_flat.reshape(N, H, W, planes)       # unpadded: halo is built in VMEM

    Ho = (H - 1) // stride + 1
    Wo = (W - 1) // stride + 1

    # Stage B: conv2(3x3) + bn3 + relu + conv3 + shortcut, one image per step.
    if 'wsc' in p:
        wsc = p['wsc'][:, :, 0, 0].T.astype(jnp.bfloat16)            # (cin, 4p)
        # Wrapper-side decimation for the strided 1x1 projection (4x less work).
        x_dec = x_bf if stride == 1 else x_bf[:, ::stride, ::stride, :]
        x_sc = x_dec.reshape(N, Ho * Wo, cin)
        out_flat = stage_b(a2, x_sc, w2, w3, s3, b3, stride, Ho, Wo,
                           wsc=wsc, s1=s1, b1=b1)
    else:
        # Identity shortcut (stride==1 and cin == 4*planes): bf16 x, upcast in-kernel.
        out_flat = stage_b(a2, x_bf.reshape(N, H * W, cin), w2, w3, s3, b3,
                           stride, Ho, Wo)

    out = out_flat.reshape(N, Ho, Wo, cout)
    # NCHW + f32 only for interface parity with the PyTorch module.
    return jnp.transpose(out, (0, 3, 1, 2)).astype(jnp.float32)


# --------------------------- reference (pure JAX) ------------------------------

def reference_forward(x_nchw, p, stride):
    def bn(x, g, b, m, v):
        return (x - m) / jnp.sqrt(v + EPS) * g + b

    def conv(x, w_oihw, s, pad):
        w = jnp.transpose(w_oihw, (2, 3, 1, 0))      # OIHW -> HWIO
        return jax.lax.conv_general_dilated(
            x, w, (s, s), [(pad, pad), (pad, pad)],
            dimension_numbers=('NHWC', 'HWIO', 'NHWC'),
            precision=jax.lax.Precision.HIGHEST)

    x = jnp.transpose(x_nchw, (0, 2, 3, 1)).astype(jnp.float32)
    a1 = jax.nn.relu(bn(x, *p['bn1']))
    sc = conv(a1, p['wsc'], stride, 0) if 'wsc' in p else x
    h = conv(a1, p['w1'], 1, 0)
    h = conv(jax.nn.relu(bn(h, *p['bn2'])), p['w2'], stride, 1)
    h = conv(jax.nn.relu(bn(h, *p['bn3'])), p['w3'], 1, 0)
    return jnp.transpose(h + sc, (0, 3, 1, 2))


# ------------------------------ parameter init ---------------------------------

def init_params(key, in_planes, planes, stride):
    expansion = 4
    ks = jax.random.split(key, 8)

    def bn_params(k, c):
        k1, k2, k3, k4 = jax.random.split(k, 4)
        gamma = jax.random.uniform(k1, (c,), jnp.float32, 0.5, 1.5)
        beta = 0.1 * jax.random.normal(k2, (c,), jnp.float32)
        mean = 0.1 * jax.random.normal(k3, (c,), jnp.float32)
        var = jax.random.uniform(k4, (c,), jnp.float32, 0.5, 1.5)
        return (gamma, beta, mean, var)

    p = {}
    p['bn1'] = bn_params(ks[0], in_planes)
    p['w1'] = 0.2 * jax.random.normal(ks[1], (planes, in_planes, 1, 1), jnp.float32)
    p['bn2'] = bn_params(ks[2], planes)
    p['w2'] = 0.2 * jax.random.normal(ks[3], (planes, planes, 3, 3), jnp.float32)
    p['bn3'] = bn_params(ks[4], planes)
    p['w3'] = 0.2 * jax.random.normal(ks[5], (expansion * planes, planes, 1, 1),
                                      jnp.float32)
    if stride != 1 or in_planes != expansion * planes:
        p['wsc'] = 0.2 * jax.random.normal(
            ks[6], (expansion * planes, in_planes, 1, 1), jnp.float32)
    return p


# ------------------------------------ main --------------------------------------

if __name__ == "__main__":
    key = jax.random.PRNGKey(0)
    cases = [
        # (in_planes, planes, stride, H, W)
        (16, 4, 1, 16, 16),   # identity shortcut (in_planes == 4*planes, stride 1)
        (4, 4, 1, 16, 16),    # 1x1 projection shortcut, stride 1
        (8, 8, 2, 16, 16),    # strided projection + strided 3x3 conv
    ]
    for idx, (in_planes, planes, stride, H, W) in enumerate(cases):
        kx, kp, key = jax.random.split(key, 3)
        x = jax.random.normal(kx, (2, in_planes, H, W), jnp.float32)   # NCHW
        params = init_params(kp, in_planes, planes, stride)

        fwd = jax.jit(functools.partial(preact_bottleneck_pallas, stride=stride))
        out = jax.block_until_ready(fwd(x, params))
        ref = jax.block_until_ready(reference_forward(x, params, stride))

        assert out.shape == ref.shape, (idx, out.shape, ref.shape)
        err = float(np.max(np.abs(np.asarray(out) - np.asarray(ref))))
        # bf16 activations/weights/output (f32 accumulation) vs f32 HIGHEST ref.
        assert np.allclose(np.asarray(out), np.asarray(ref),
                           rtol=4e-2, atol=4e-2), f"case {idx}: max abs err {err}"
    print("KERNEL_OK")
</pallas_src>

<mosaic_0001>
module attributes {stable_mosaic.version = 11 : i64} {
  func.func @_stage_a_kernel(%arg0: i32, %arg1: memref<512x16xbf16, #tpu.memory_space<vmem>>, %arg2: memref<1x16xf32, #tpu.memory_space<vmem>>, %arg3: memref<1x16xf32, #tpu.memory_space<vmem>>, %arg4: memref<16x4xbf16, #tpu.memory_space<vmem>>, %arg5: memref<1x4xf32, #tpu.memory_space<vmem>>, %arg6: memref<1x4xf32, #tpu.memory_space<vmem>>, %arg7: memref<512x4xbf16, #tpu.memory_space<vmem>>) attributes {dimension_semantics = [#tpu.dimension_semantics<parallel>], iteration_bounds = array<i64: 1>, scalar_prefetch = 0 : i64, scratch_operands = 0 : i64, tpu.core_type = #tpu.core_type<tc>, window_params = [{transform_indices = @transform_0, window_bounds = array<i64: 512, 16>}, {pipeline_mode = #tpu.pipeline_mode<synchronous>, transform_indices = @transform_1, window_bounds = array<i64: 1, 16>}, {pipeline_mode = #tpu.pipeline_mode<synchronous>, transform_indices = @transform_2, window_bounds = array<i64: 1, 16>}, {pipeline_mode = #tpu.pipeline_mode<synchronous>, transform_indices = @transform_3, window_bounds = array<i64: 16, 4>}, {pipeline_mode = #tpu.pipeline_mode<synchronous>, transform_indices = @transform_4, window_bounds = array<i64: 1, 4>}, {pipeline_mode = #tpu.pipeline_mode<synchronous>, transform_indices = @transform_5, window_bounds = array<i64: 1, 4>}, {transform_indices = @transform_6, window_bounds = array<i64: 512, 4>}]} {
    %c0 = arith.constant 0 : index
    %c0_0 = arith.constant 0 : index
    %0 = vector.load %arg1[%c0, %c0_0] : memref<512x16xbf16, #tpu.memory_space<vmem>>, vector<512x16xbf16>
    %1 = arith.extf %0 : vector<512x16xbf16> to vector<512x16xf32>
    %c0_1 = arith.constant 0 : index
    %c0_2 = arith.constant 0 : index
    %2 = vector.load %arg2[%c0_1, %c0_2] : memref<1x16xf32, #tpu.memory_space<vmem>>, vector<1x16xf32>
    %3 = vector.broadcast %2 : vector<1x16xf32> to vector<512x16xf32>
    %4 = arith.mulf %1, %3 : vector<512x16xf32>
    %c0_3 = arith.constant 0 : index
    %c0_4 = arith.constant 0 : index
    %5 = vector.load %arg3[%c0_3, %c0_4] : memref<1x16xf32, #tpu.memory_space<vmem>>, vector<1x16xf32>
    %6 = vector.broadcast %5 : vector<1x16xf32> to vector<512x16xf32>
    %7 = arith.addf %4, %6 : vector<512x16xf32>
    %cst = arith.constant 0.000000e+00 : f32
    %8 = vector.broadcast %cst : f32 to vector<512x16xf32>
    %9 = arith.maximumf %7, %8 : vector<512x16xf32>
    %10 = arith.truncf %9 : vector<512x16xf32> to vector<512x16xbf16>
    %c0_5 = arith.constant 0 : index
    %c0_6 = arith.constant 0 : index
    %11 = vector.load %arg4[%c0_5, %c0_6] : memref<16x4xbf16, #tpu.memory_space<vmem>>, vector<16x4xbf16>
    %cst_7 = arith.constant dense<0.000000e+00> : vector<512x4xf32>
    %12 = tpu.matmul %10, %11, %cst_7 {dimension_numbers = #tpu.dot_dimension_numbers<[1], [0], [0], [1], [0, 0, 1, 1], [], []>} : vector<512x16xbf16>, vector<16x4xbf16>, vector<512x4xf32> -> vector<512x4xf32>
    %c0_8 = arith.constant 0 : index
    %c0_9 = arith.constant 0 : index
    %13 = vector.load %arg5[%c0_8, %c0_9] : memref<1x4xf32, #tpu.memory_space<vmem>>, vector<1x4xf32>
    %14 = vector.broadcast %13 : vector<1x4xf32> to vector<512x4xf32>
    %15 = arith.mulf %12, %14 : vector<512x4xf32>
    %c0_10 = arith.constant 0 : index
    %c0_11 = arith.constant 0 : index
    %16 = vector.load %arg6[%c0_10, %c0_11] : memref<1x4xf32, #tpu.memory_space<vmem>>, vector<1x4xf32>
    %17 = vector.broadcast %16 : vector<1x4xf32> to vector<512x4xf32>
    %18 = arith.addf %15, %17 : vector<512x4xf32>
    %cst_12 = arith.constant 0.000000e+00 : f32
    %19 = vector.broadcast %cst_12 : f32 to vector<512x4xf32>
    %20 = arith.maximumf %18, %19 : vector<512x4xf32>
    %21 = arith.truncf %20 : vector<512x4xf32> to vector<512x4xbf16>
    %c0_13 = arith.constant 0 : index
    %c0_14 = arith.constant 0 : index
    %22 = vector.load %arg7[%c0_13, %c0_14] : memref<512x4xbf16, #tpu.memory_space<vmem>>, vector<512x4xbf16>
    tpu.vector_store %arg7[%c0_13, %c0_14], %21 {strides = array<i32>} : memref<512x4xbf16, #tpu.memory_space<vmem>>, vector<512x4xbf16>,
    return
  }
  func.func @transform_0(%arg0: i32) -> (i32, i32) {
    %c0_i32 = arith.constant 0 : i32
    %c0_i32_0 = arith.constant 0 : i32
    return %arg0, %c0_i32 : i32, i32
  }
  func.func @transform_1(%arg0: i32) -> (i32, i32) {
    %c0_i32 = arith.constant 0 : i32
    %c0_i32_0 = arith.constant 0 : i32
    %c0_i32_1 = arith.constant 0 : i32
    return %c0_i32, %c0_i32_0 : i32, i32
  }
  func.func @transform_2(%arg0: i32) -> (i32, i32) {
    %c0_i32 = arith.constant 0 : i32
    %c0_i32_0 = arith.constant 0 : i32
    %c0_i32_1 = arith.constant 0 : i32
    return %c0_i32, %c0_i32_0 : i32, i32
  }
  func.func @transform_3(%arg0: i32) -> (i32, i32) {
    %c0_i32 = arith.constant 0 : i32
    %c0_i32_0 = arith.constant 0 : i32
    %c0_i32_1 = arith.constant 0 : i32
    return %c0_i32, %c0_i32_0 : i32, i32
  }
  func.func @transform_4(%arg0: i32) -> (i32, i32) {
    %c0_i32 = arith.constant 0 : i32
    %c0_i32_0 = arith.constant 0 : i32
    %c0_i32_1 = arith.constant 0 : i32
    return %c0_i32, %c0_i32_0 : i32, i32
  }
  func.func @transform_5(%arg0: i32) -> (i32, i32) {
    %c0_i32 = arith.constant 0 : i32
    %c0_i32_0 = arith.constant 0 : i32
    %c0_i32_1 = arith.constant 0 : i32
    return %c0_i32, %c0_i32_0 : i32, i32
  }
  func.func @transform_6(%arg0: i32) -> (i32, i32) {
    %c0_i32 = arith.constant 0 : i32
    %c0_i32_0 = arith.constant 0 : i32
    return %arg0, %c0_i32 : i32, i32
  }
}

module attributes {stable_mosaic.version = 11 : i64} {
  func.func @kernel(%arg0: i32, %arg1: memref<1x16x16x4xbf16, #tpu.memory_space<vmem>>, %arg2: memref<1x256x16xbf16, #tpu.memory_space<vmem>>, %arg3: memref<9x4x4xbf16, #tpu.memory_space<vmem>>, %arg4: memref<4x16xbf16, #tpu.memory_space<vmem>>, %arg5: memref<1x4xf32, #tpu.memory_space<vmem>>, %arg6: memref<1x4xf32, #tpu.memory_space<vmem>>, %arg7: memref<1x256x16xbf16, #tpu.memory_space<vmem>>, %arg8: memref<18x18x4xbf16, #tpu.memory_space<vmem>>) attributes {dimension_semantics = [#tpu.dimension_semantics<parallel>], iteration_bounds = array<i64: 2>, scalar_prefetch = 0 : i64, scratch_operands = 1 : i64, tpu.core_type = #tpu.core_type<tc>, window_params = [{transform_indices = @transform_0, window_bounds = array<i64: 1, 16, 16, 4>}, {transform_indices = @transform_1, window_bounds = array<i64: 1, 256, 16>}, {pipeline_mode = #tpu.pipeline_mode<synchronous>, transform_indices = @transform_2, window_bounds = array<i64: 9, 4, 4>}, {pipeline_mode = #tpu.pipeline_mode<synchronous>, transform_indices = @transform_3, window_bounds = array<i64: 4, 16>}, {pipeline_mode = #tpu.pipeline_mode<synchronous>, transform_indices = @transform_4, window_bounds = array<i64: 1, 4>}, {pipeline_mode = #tpu.pipeline_mode<synchronous>, transform_indices = @transform_5, window_bounds = array<i64: 1, 4>}, {transform_indices = @transform_6, window_bounds = array<i64: 1, 256, 16>}]} {
    %cst = arith.constant 0.000000e+00 : bf16
    %0 = vector.broadcast %cst : bf16 to vector<18x18x4xbf16>
    %c0 = arith.constant 0 : index
    %c0_0 = arith.constant 0 : index
    %c0_1 = arith.constant 0 : index
    %1 = vector.load %arg8[%c0, %c0_0, %c0_1] : memref<18x18x4xbf16, #tpu.memory_space<vmem>>, vector<18x18x4xbf16>
    tpu.vector_store %arg8[%c0, %c0_0, %c0_1], %0 {strides = array<i32>} : memref<18x18x4xbf16, #tpu.memory_space<vmem>>, vector<18x18x4xbf16>,
    %c0_2 = arith.constant 0 : index
    %c0_3 = arith.constant 0 : index
    %c0_4 = arith.constant 0 : index
    %c0_5 = arith.constant 0 : index
    %2 = vector.load %arg1[%c0_2, %c0_3, %c0_4, %c0_5] : memref<1x16x16x4xbf16, #tpu.memory_space<vmem>>, vector<1x16x16x4xbf16>
    %3 = vector.shape_cast %2 : vector<1x16x16x4xbf16> to vector<16x16x4xbf16>
    %c1 = arith.constant 1 : index
    %c1_6 = arith.constant 1 : index
    %c0_7 = arith.constant 0 : index
    %4 = vector.load %arg8[%c1, %c1_6, %c0_7] : memref<18x18x4xbf16, #tpu.memory_space<vmem>>, vector<16x16x4xbf16>
    tpu.vector_store %arg8[%c1, %c1_6, %c0_7], %3 {strides = array<i32>} : memref<18x18x4xbf16, #tpu.memory_space<vmem>>, vector<16x16x4xbf16>,
    %cst_8 = arith.constant 0.000000e+00 : f32
    %5 = vector.broadcast %cst_8 : f32 to vector<256x4xf32>
    %c0_9 = arith.constant 0 : index
    %c0_10 = arith.constant 0 : index
    %c0_11 = arith.constant 0 : index
    %6 = vector.load %arg8[%c0_9, %c0_10, %c0_11] : memref<18x18x4xbf16, #tpu.memory_space<vmem>>, vector<16x16x4xbf16>
    %7 = vector.shape_cast %6 : vector<16x16x4xbf16> to vector<256x4xbf16>
    %c0_12 = arith.constant 0 : index
    %c0_13 = arith.constant 0 : index
    %c0_14 = arith.constant 0 : index
    %8 = vector.load %arg3[%c0_12, %c0_13, %c0_14] : memref<9x4x4xbf16, #tpu.memory_space<vmem>>, vector<1x4x4xbf16>
    %9 = vector.shape_cast %8 : vector<1x4x4xbf16> to vector<4x4xbf16>
    %cst_15 = arith.constant dense<0.000000e+00> : vector<256x4xf32>
    %10 = tpu.matmul %7, %9, %cst_15 {dimension_numbers = #tpu.dot_dimension_numbers<[1], [0], [0], [1], [0, 0, 1, 1], [], []>} : vector<256x4xbf16>, vector<4x4xbf16>, vector<256x4xf32> -> vector<256x4xf32>
    %11 = arith.addf %5, %10 : vector<256x4xf32>
    %c0_16 = arith.constant 0 : index
    %c1_17 = arith.constant 1 : index
    %c0_18 = arith.constant 0 : index
    %12 = vector.load %arg8[%c0_16, %c1_17, %c0_18] : memref<18x18x4xbf16, #tpu.memory_space<vmem>>, vector<16x16x4xbf16>
    %13 = vector.shape_cast %12 : vector<16x16x4xbf16> to vector<256x4xbf16>
    %c1_19 = arith.constant 1 : index
    %c0_20 = arith.constant 0 : index
    %c0_21 = arith.constant 0 : index
    %14 = vector.load %arg3[%c1_19, %c0_20, %c0_21] : memref<9x4x4xbf16, #tpu.memory_space<vmem>>, vector<1x4x4xbf16>
    %15 = vector.shape_cast %14 : vector<1x4x4xbf16> to vector<4x4xbf16>
    %cst_22 = arith.constant dense<0.000000e+00> : vector<256x4xf32>
    %16 = tpu.matmul %13, %15, %cst_22 {dimension_numbers = #tpu.dot_dimension_numbers<[1], [0], [0], [1], [0, 0, 1, 1], [], []>} : vector<256x4xbf16>, vector<4x4xbf16>, vector<256x4xf32> -> vector<256x4xf32>
    %17 = arith.addf %11, %16 : vector<256x4xf32>
    %c0_23 = arith.constant 0 : index
    %c2 = arith.constant 2 : index
    %c0_24 = arith.constant 0 : index
    %18 = vector.load %arg8[%c0_23, %c2, %c0_24] : memref<18x18x4xbf16, #tpu.memory_space<vmem>>, vector<16x16x4xbf16>
    %19 = vector.shape_cast %18 : vector<16x16x4xbf16> to vector<256x4xbf16>
    %c2_25 = arith.constant 2 : index
    %c0_26 = arith.constant 0 : index
    %c0_27 = arith.constant 0 : index
    %20 = vector.load %arg3[%c2_25, %c0_26, %c0_27] : memref<9x4x4xbf16, #tpu.memory_space<vmem>>, vector<1x4x4xbf16>
    %21 = vector.shape_cast %20 : vector<1x4x4xbf16> to vector<4x4xbf16>
    %cst_28 = arith.constant dense<0.000000e+00> : vector<256x4xf32>
    %22 = tpu.matmul %19, %21, %cst_28 {dimension_numbers = #tpu.dot_dimension_numbers<[1], [0], [0], [1], [0, 0, 1, 1], [], []>} : vector<256x4xbf16>, vector<4x4xbf16>, vector<256x4xf32> -> vector<256x4xf32>
    %23 = arith.addf %17, %22 : vector<256x4xf32>
    %c1_29 = arith.constant 1 : index
    %c0_30 = arith.constant 0 : index
    %c0_31 = arith.constant 0 : index
    %24 = vector.load %arg8[%c1_29, %c0_30, %c0_31] : memref<18x18x4xbf16, #tpu.memory_space<vmem>>, vector<16x16x4xbf16>
    %25 = vector.shape_cast %24 : vector<16x16x4xbf16> to vector<256x4xbf16>
    %c3 = arith.constant 3 : index
    %c0_32 = arith.constant 0 : index
    %c0_33 = arith.constant 0 : index
    %26 = vector.load %arg3[%c3, %c0_32, %c0_33] : memref<9x4x4xbf16, #tpu.memory_space<vmem>>, vector<1x4x4xbf16>
    %27 = vector.shape_cast %26 : vector<1x4x4xbf16> to vector<4x4xbf16>
    %cst_34 = arith.constant dense<0.000000e+00> : vector<256x4xf32>
    %28 = tpu.matmul %25, %27, %cst_34 {dimension_numbers = #tpu.dot_dimension_numbers<[1], [0], [0], [1], [0, 0, 1, 1], [], []>} : vector<256x4xbf16>, vector<4x4xbf16>, vector<256x4xf32> -> vector<256x4xf32>
    %29 = arith.addf %23, %28 : vector<256x4xf32>
    %c1_35 = arith.constant 1 : index
    %c1_36 = arith.constant 1 : index
    %c0_37 = arith.constant 0 : index
    %30 = vector.load %arg8[%c1_35, %c1_36, %c0_37] : memref<18x18x4xbf16, #tpu.memory_space<vmem>>, vector<16x16x4xbf16>
    %31 = vector.shape_cast %30 : vector<16x16x4xbf16> to vector<256x4xbf16>
    %c4 = arith.constant 4 : index
    %c0_38 = arith.constant 0 : index
    %c0_39 = arith.constant 0 : index
    %32 = vector.load %arg3[%c4, %c0_38, %c0_39] : memref<9x4x4xbf16, #tpu.memory_space<vmem>>, vector<1x4x4xbf16>
    %33 = vector.shape_cast %32 : vector<1x4x4xbf16> to vector<4x4xbf16>
    %cst_40 = arith.constant dense<0.000000e+00> : vector<256x4xf32>
    %34 = tpu.matmul %31, %33, %cst_40 {dimension_numbers = #tpu.dot_dimension_numbers<[1], [0], [0], [1], [0, 0, 1, 1], [], []>} : vector<256x4xbf16>, vector<4x4xbf16>, vector<256x4xf32> -> vector<256x4xf32>
    %35 = arith.addf %29, %34 : vector<256x4xf32>
    %c1_41 = arith.constant 1 : index
    %c2_42 = arith.constant 2 : index
    %c0_43 = arith.constant 0 : index
    %36 = vector.load %arg8[%c1_41, %c2_42, %c0_43] : memref<18x18x4xbf16, #tpu.memory_space<vmem>>, vector<16x16x4xbf16>
    %37 = vector.shape_cast %36 : vector<16x16x4xbf16> to vector<256x4xbf16>
    %c5 = arith.constant 5 : index
    %c0_44 = arith.constant 0 : index
    %c0_45 = arith.constant 0 : index
    %38 = vector.load %arg3[%c5, %c0_44, %c0_45] : memref<9x4x4xbf16, #tpu.memory_space<vmem>>, vector<1x4x4xbf16>
    %39 = vector.shape_cast %38 : vector<1x4x4xbf16> to vector<4x4xbf16>
    %cst_46 = arith.constant dense<0.000000e+00> : vector<256x4xf32>
    %40 = tpu.matmul %37, %39, %cst_46 {dimension_numbers = #tpu.dot_dimension_numbers<[1], [0], [0], [1], [0, 0, 1, 1], [], []>} : vector<256x4xbf16>, vector<4x4xbf16>, vector<256x4xf32> -> vector<256x4xf32>
    %41 = arith.addf %35, %40 : vector<256x4xf32>
    %c2_47 = arith.constant 2 : index
    %c0_48 = arith.constant 0 : index
    %c0_49 = arith.constant 0 : index
    %42 = vector.load %arg8[%c2_47, %c0_48, %c0_49] : memref<18x18x4xbf16, #tpu.memory_space<vmem>>, vector<16x16x4xbf16>
    %43 = vector.shape_cast %42 : vector<16x16x4xbf16> to vector<256x4xbf16>
    %c6 = arith.constant 6 : index
    %c0_50 = arith.constant 0 : index
    %c0_51 = arith.constant 0 : index
    %44 = vector.load %arg3[%c6, %c0_50, %c0_51] : memref<9x4x4xbf16, #tpu.memory_space<vmem>>, vector<1x4x4xbf16>
    %45 = vector.shape_cast %44 : vector<1x4x4xbf16> to vector<4x4xbf16>
    %cst_52 = arith.constant dense<0.000000e+00> : vector<256x4xf32>
    %46 = tpu.matmul %43, %45, %cst_52 {dimension_numbers = #tpu.dot_dimension_numbers<[1], [0], [0], [1], [0, 0, 1, 1], [], []>} : vector<256x4xbf16>, vector<4x4xbf16>, vector<256x4xf32> -> vector<256x4xf32>
    %47 = arith.addf %41, %46 : vector<256x4xf32>
    %c2_53 = arith.constant 2 : index
    %c1_54 = arith.constant 1 : index
    %c0_55 = arith.constant 0 : index
    %48 = vector.load %arg8[%c2_53, %c1_54, %c0_55] : memref<18x18x4xbf16, #tpu.memory_space<vmem>>, vector<16x16x4xbf16>
    %49 = vector.shape_cast %48 : vector<16x16x4xbf16> to vector<256x4xbf16>
    %c7 = arith.constant 7 : index
    %c0_56 = arith.constant 0 : index
    %c0_57 = arith.constant 0 : index
    %50 = vector.load %arg3[%c7, %c0_56, %c0_57] : memref<9x4x4xbf16, #tpu.memory_space<vmem>>, vector<1x4x4xbf16>
    %51 = vector.shape_cast %50 : vector<1x4x4xbf16> to vector<4x4xbf16>
    %cst_58 = arith.constant dense<0.000000e+00> : vector<256x4xf32>
    %52 = tpu.matmul %49, %51, %cst_58 {dimension_numbers = #tpu.dot_dimension_numbers<[1], [0], [0], [1], [0, 0, 1, 1], [], []>} : vector<256x4xbf16>, vector<4x4xbf16>, vector<256x4xf32> -> vector<256x4xf32>
    %53 = arith.addf %47, %52 : vector<256x4xf32>
    %c2_59 = arith.constant 2 : index
    %c2_60 = arith.constant 2 : index
    %c0_61 = arith.constant 0 : index
    %54 = vector.load %arg8[%c2_59, %c2_60, %c0_61] : memref<18x18x4xbf16, #tpu.memory_space<vmem>>, vector<16x16x4xbf16>
    %55 = vector.shape_cast %54 : vector<16x16x4xbf16> to vector<256x4xbf16>
    %c8 = arith.constant 8 : index
    %c0_62 = arith.constant 0 : index
    %c0_63 = arith.constant 0 : index
    %56 = vector.load %arg3[%c8, %c0_62, %c0_63] : memref<9x4x4xbf16, #tpu.memory_space<vmem>>, vector<1x4x4xbf16>
    %57 = vector.shape_cast %56 : vector<1x4x4xbf16> to vector<4x4xbf16>
    %cst_64 = arith.constant dense<0.000000e+00> : vector<256x4xf32>
    %58 = tpu.matmul %55, %57, %cst_64 {dimension_numbers = #tpu.dot_dimension_numbers<[1], [0], [0], [1], [0, 0, 1, 1], [], []>} : vector<256x4xbf16>, vector<4x4xbf16>, vector<256x4xf32> -> vector<256x4xf32>
    %59 = arith.addf %53, %58 : vector<256x4xf32>
    %c0_65 = arith.constant 0 : index
    %c0_66 = arith.constant 0 : index
    %60 = vector.load %arg5[%c0_65, %c0_66] : memref<1x4xf32, #tpu.memory_space<vmem>>, vector<1x4xf32>
    %61 = vector.broadcast %60 : vector<1x4xf32> to vector<256x4xf32>
    %62 = arith.mulf %59, %61 : vector<256x4xf32>
    %c0_67 = arith.constant 0 : index
    %c0_68 = arith.constant 0 : index
    %63 = vector.load %arg6[%c0_67, %c0_68] : memref<1x4xf32, #tpu.memory_space<vmem>>, vector<1x4xf32>
    %64 = vector.broadcast %63 : vector<1x4xf32> to vector<256x4xf32>
    %65 = arith.addf %62, %64 : vector<256x4xf32>
    %cst_69 = arith.constant 0.000000e+00 : f32
    %66 = vector.broadcast %cst_69 : f32 to vector<256x4xf32>
    %67 = arith.maximumf %65, %66 : vector<256x4xf32>
    %68 = arith.truncf %67 : vector<256x4xf32> to vector<256x4xbf16>
    %c0_70 = arith.constant 0 : index
    %c0_71 = arith.constant 0 : index
    %69 = vector.load %arg4[%c0_70, %c0_71] : memref<4x16xbf16, #tpu.memory_space<vmem>>, vector<4x16xbf16>
    %cst_72 = arith.constant dense<0.000000e+00> : vector<256x16xf32>
    %70 = tpu.matmul %68, %69, %cst_72 {dimension_numbers = #tpu.dot_dimension_numbers<[1], [0], [0], [1], [0, 0, 1, 1], [], []>} : vector<256x4xbf16>, vector<4x16xbf16>, vector<256x16xf32> -> vector<256x16xf32>
    %c0_73 = arith.constant 0 : index
    %c0_74 = arith.constant 0 : index
    %c0_75 = arith.constant 0 : index
    %71 = vector.load %arg2[%c0_73, %c0_74, %c0_75] : memref<1x256x16xbf16, #tpu.memory_space<vmem>>, vector<1x256x16xbf16>
    %72 = vector.shape_cast %71 : vector<1x256x16xbf16> to vector<256x16xbf16>
    %73 = arith.extf %72 : vector<256x16xbf16> to vector<256x16xf32>
    %74 = arith.addf %70, %73 : vector<256x16xf32>
    %75 = arith.truncf %74 : vector<256x16xf32> to vector<256x16xbf16>
    %c0_76 = arith.constant 0 : index
    %c0_77 = arith.constant 0 : index
    %c0_78 = arith.constant 0 : index
    %76 = vector.load %arg7[%c0_76, %c0_77, %c0_78] : memref<1x256x16xbf16, #tpu.memory_space<vmem>>, vector<1x256x16xbf16>
    %77 = vector.shape_cast %76 : vector<1x256x16xbf16> to vector<256x16xbf16>
    %78 = vector.shape_cast %75 : vector<256x16xbf16> to vector<1x256x16xbf16>
    tpu.vector_store %arg7[%c0_76, %c0_77, %c0_78], %78 {strides = array<i32>} : memref<1x256x16xbf16, #tpu.memory_space<vmem>>, vector<1x256x16xbf16>,
    return
  }
  func.func @transform_0(%arg0: i32) -> (i32, i32, i32, i32) {
    %c0_i32 = arith.constant 0 : i32
    %c0_i32_0 = arith.constant 0 : i32
    %c0_i32_1 = arith.constant 0 : i32
    %c0_i32_2 = arith.constant 0 : i32
    return %arg0, %c0_i32, %c0_i32_0, %c0_i32_1 : i32, i32, i32, i32
  }
  func.func @transform_1(%arg0: i32) -> (i32, i32, i32) {
    %c0_i32 = arith.constant 0 : i32
    %c0_i32_0 = arith.constant 0 : i32
    %c0_i32_1 = arith.constant 0 : i32
    return %arg0, %c0_i32, %c0_i32_0 : i32, i32, i32
  }
  func.func @transform_2(%arg0: i32) -> (i32, i32, i32) {
    %c0_i32 = arith.constant 0 : i32
    %c0_i32_0 = arith.constant 0 : i32
    %c0_i32_1 = arith.constant 0 : i32
    %c0_i32_2 = arith.constant 0 : i32
    return %c0_i32, %c0_i32_0, %c0_i32_1 : i32, i32, i32
  }
  func.func @transform_3(%arg0: i32) -> (i32, i32) {
    %c0_i32 = arith.constant 0 : i32
    %c0_i32_0 = arith.constant 0 : i32
    %c0_i32_1 = arith.constant 0 : i32
    return %c0_i32, %c0_i32_0 : i32, i32
  }
  func.func @transform_4(%arg0: i32) -> (i32, i32) {
    %c0_i32 = arith.constant 0 : i32
    %c0_i32_0 = arith.constant 0 : i32
    %c0_i32_1 = arith.constant 0 : i32
    return %c0_i32, %c0_i32_0 : i32, i32
  }
  func.func @transform_5(%arg0: i32) -> (i32, i32) {
    %c0_i32 = arith.constant 0 : i32
    %c0_i32_0 = arith.constant 0 : i32
    %c0_i32_1 = arith.constant 0 : i32
    return %c0_i32, %c0_i32_0 : i32, i32
  }
  func.func @transform_6(%arg0: i32) -> (i32, i32, i32) {
    %c0_i32 = arith.constant 0 : i32
    %c0_i32_0 = arith.constant 0 : i32
    %c0_i32_1 = arith.constant 0 : i32
    return %arg0, %c0_i32, %c0_i32_0 : i32, i32, i32
  }
}

</mosaic_0001>

<llo_original>
// kernel: preact_bottleneck_pallas.2
$region0: #{preact_bottleneck_pallas.2}
  #allocation0 [shape = 'u32[]', space=smem, size = 0x4, offset = 0x4, fixed_abs, tag = 'smem constant byte address 0x4 - core index']
  #allocation1 [shape = 'u32[144,128]{1,0:T(1,128)}', space=vmem, size = 0x12000, scoped, tag = 'internal scratch']
  %s0 = inlined_call_operand.vmem [shape: bf16[512,16], index: 0, kind: input, shape index: {}]
  %s1 = inlined_call_operand.vmem [shape: f32[1,16], index: 1, kind: input, shape index: {}]
  %s2 = inlined_call_operand.vmem [shape: f32[1,16], index: 2, kind: input, shape index: {}]
  %s3 = inlined_call_operand.vmem [shape: bf16[16,4], index: 3, kind: input, shape index: {}]
  %s4 = inlined_call_operand.vmem [shape: f32[1,4], index: 4, kind: input, shape index: {}]
  %s5 = inlined_call_operand.vmem [shape: f32[1,4], index: 5, kind: input, shape index: {}]
  %s6 = inlined_call_operand.vmem [shape: bf16[512,4], index: 6, kind: output, shape index: {}]
  %s7 = sld [smem:[#allocation0]]
  $region34: #{preact_bottleneck_pallas.2} parent=0
    _
  %s9 = ssub.s32 1, %s7
  %s10 = scalar_select 0, %s9, %s7
  // Predicated region
  $region2: #{preact_bottleneck_pallas.2} parent=0 // pred_check
    _
  $region3: #{preact_bottleneck_pallas.2} parent=0 // pred_check_branch
    %12 = sbr.rel (0) target = $region5
  $region4: #{preact_bottleneck_pallas.2} parent=0 // pred_region
    _
  $region5: #{preact_bottleneck_pallas.2} parent=0 // pred_fallthru
    _
  // Predicated region
  $region6: #{preact_bottleneck_pallas.2} parent=0 // pred_check
    _
  $region7: #{preact_bottleneck_pallas.2} parent=0 // pred_check_branch
    %14 = sbr.rel (0) target = $region9
  $region8: #{preact_bottleneck_pallas.2} parent=0 // pred_region
    _
  $region9: #{preact_bottleneck_pallas.2} parent=0 // pred_fallthru
    _
  // Predicated region
  $region10: #{preact_bottleneck_pallas.2} parent=0 // pred_check
    _
  $region11: #{preact_bottleneck_pallas.2} parent=0 // pred_check_branch
    %16 = sbr.rel (0) target = $region13
  $region12: #{preact_bottleneck_pallas.2} parent=0 // pred_region
    _
  $region13: #{preact_bottleneck_pallas.2} parent=0 // pred_fallthru
    _
  // Predicated region
  $region14: #{preact_bottleneck_pallas.2} parent=0 // pred_check
    _
  $region15: #{preact_bottleneck_pallas.2} parent=0 // pred_check_branch
    %18 = sbr.rel (0) target = $region17
  $region16: #{preact_bottleneck_pallas.2} parent=0 // pred_region
    _
  $region17: #{preact_bottleneck_pallas.2} parent=0 // pred_fallthru
    _
  // Predicated region
  $region18: #{preact_bottleneck_pallas.2} parent=0 // pred_check
    _
  $region19: #{preact_bottleneck_pallas.2} parent=0 // pred_check_branch
    %20 = sbr.rel (0) target = $region21
  $region20: #{preact_bottleneck_pallas.2} parent=0 // pred_region
    _
  $region21: #{preact_bottleneck_pallas.2} parent=0 // pred_fallthru
    _
  // Predicated region
  $region22: #{preact_bottleneck_pallas.2} parent=0 // pred_check
    _
  $region23: #{preact_bottleneck_pallas.2} parent=0 // pred_check_branch
    %22 = sbr.rel (0) target = $region25
  $region24: #{preact_bottleneck_pallas.2} parent=0 // pred_region
    _
  $region25: #{preact_bottleneck_pallas.2} parent=0 // pred_fallthru
    _
  %v24 = vld [vmem:[%s0] sm:$0xf]
  %v25 = vld [vmem:[%s0 + $0x4] sm:$0xf]
  %v26 = vld [vmem:[%s0 + $0x8] sm:$0xf]
  %v27 = vld [vmem:[%s0 + $0xc] sm:$0xf]
  %v28 = vld [vmem:[%s0 + $0x10] sm:$0xf]
  %v29 = vld [vmem:[%s0 + $0x14] sm:$0xf]
  %v30 = vld [vmem:[%s0 + $0x18] sm:$0xf]
  %v31 = vld [vmem:[%s0 + $0x1c] sm:$0xf]
  %v32 = vld [vmem:[%s0 + $0x20] sm:$0xf]
  %v33 = vld [vmem:[%s0 + $0x24] sm:$0xf]
  %v34 = vld [vmem:[%s0 + $0x28] sm:$0xf]
  %v35 = vld [vmem:[%s0 + $0x2c] sm:$0xf]
  %v36 = vld [vmem:[%s0 + $0x30] sm:$0xf]
  %v37 = vld [vmem:[%s0 + $0x34] sm:$0xf]
  %v38 = vld [vmem:[%s0 + $0x38] sm:$0xf]
  %v39 = vld [vmem:[%s0 + $0x3c] sm:$0xf]
  %v40 = vld [vmem:[%s0 + $0x40] sm:$0xf]
  %v41 = vld [vmem:[%s0 + $0x44] sm:$0xf]
  %v42 = vld [vmem:[%s0 + $0x48] sm:$0xf]
  %v43 = vld [vmem:[%s0 + $0x4c] sm:$0xf]
  %v44 = vld [vmem:[%s0 + $0x50] sm:$0xf]
  %v45 = vld [vmem:[%s0 + $0x54] sm:$0xf]
  %v46 = vld [vmem:[%s0 + $0x58] sm:$0xf]
  %v47 = vld [vmem:[%s0 + $0x5c] sm:$0xf]
  %v48 = vld [vmem:[%s0 + $0x60] sm:$0xf]
  %v49 = vld [vmem:[%s0 + $0x64] sm:$0xf]
  %v50 = vld [vmem:[%s0 + $0x68] sm:$0xf]
  %v51 = vld [vmem:[%s0 + $0x6c] sm:$0xf]
  %v52 = vld [vmem:[%s0 + $0x70] sm:$0xf]
  %v53 = vld [vmem:[%s0 + $0x74] sm:$0xf]
  %v54 = vld [vmem:[%s0 + $0x78] sm:$0xf]
  %v55 = vld [vmem:[%s0 + $0x7c] sm:$0xf]
  %v56 = vld [vmem:[%s0 + $0x80] sm:$0xf]
  %v57 = vld [vmem:[%s0 + $0x84] sm:$0xf]
  %v58 = vld [vmem:[%s0 + $0x88] sm:$0xf]
  %v59 = vld [vmem:[%s0 + $0x8c] sm:$0xf]
  %v60 = vld [vmem:[%s0 + $0x90] sm:$0xf]
  %v61 = vld [vmem:[%s0 + $0x94] sm:$0xf]
  %v62 = vld [vmem:[%s0 + $0x98] sm:$0xf]
  %v63 = vld [vmem:[%s0 + $0x9c] sm:$0xf]
  %v64 = vld [vmem:[%s0 + $0xa0] sm:$0xf]
  %v65 = vld [vmem:[%s0 + $0xa4] sm:$0xf]
  %v66 = vld [vmem:[%s0 + $0xa8] sm:$0xf]
  %v67 = vld [vmem:[%s0 + $0xac] sm:$0xf]
  %v68 = vld [vmem:[%s0 + $0xb0] sm:$0xf]
  %v69 = vld [vmem:[%s0 + $0xb4] sm:$0xf]
  %v70 = vld [vmem:[%s0 + $0xb8] sm:$0xf]
  %v71 = vld [vmem:[%s0 + $0xbc] sm:$0xf]
  %v72 = vld [vmem:[%s0 + $0xc0] sm:$0xf]
  %v73 = vld [vmem:[%s0 + $0xc4] sm:$0xf]
  %v74 = vld [vmem:[%s0 + $0xc8] sm:$0xf]
  %v75 = vld [vmem:[%s0 + $0xcc] sm:$0xf]
  %v76 = vld [vmem:[%s0 + $0xd0] sm:$0xf]
  %v77 = vld [vmem:[%s0 + $0xd4] sm:$0xf]
  %v78 = vld [vmem:[%s0 + $0xd8] sm:$0xf]
  %v79 = vld [vmem:[%s0 + $0xdc] sm:$0xf]
  %v80 = vld [vmem:[%s0 + $0xe0] sm:$0xf]
  %v81 = vld [vmem:[%s0 + $0xe4] sm:$0xf]
  %v82 = vld [vmem:[%s0 + $0xe8] sm:$0xf]
  %v83 = vld [vmem:[%s0 + $0xec] sm:$0xf]
  %v84 = vld [vmem:[%s0 + $0xf0] sm:$0xf]
  %v85 = vld [vmem:[%s0 + $0xf4] sm:$0xf]
  %v86 = vld [vmem:[%s0 + $0xf8] sm:$0xf]
  %v87 = vld [vmem:[%s0 + $0xfc] sm:$0xf]
  %v88 = vunpack.c.l.bf16 %v24
  %v89 = vunpack.c.l.bf16 %v25
  %v90 = vunpack.c.l.bf16 %v26
  %v91 = vunpack.c.l.bf16 %v27
  %v92 = vunpack.c.l.bf16 %v28
  %v93 = vunpack.c.l.bf16 %v29
  %v94 = vunpack.c.l.bf16 %v30
  %v95 = vunpack.c.l.bf16 %v31
  %v96 = vunpack.c.l.bf16 %v32
  %v97 = vunpack.c.l.bf16 %v33
  %v98 = vunpack.c.l.bf16 %v34
  %v99 = vunpack.c.l.bf16 %v35
  %v100 = vunpack.c.l.bf16 %v36
  %v101 = vunpack.c.l.bf16 %v37
  %v102 = vunpack.c.l.bf16 %v38
  %v103 = vunpack.c.l.bf16 %v39
  %v104 = vunpack.c.l.bf16 %v40
  %v105 = vunpack.c.l.bf16 %v41
  %v106 = vunpack.c.l.bf16 %v42
  %v107 = vunpack.c.l.bf16 %v43
  %v108 = vunpack.c.l.bf16 %v44
  %v109 = vunpack.c.l.bf16 %v45
  %v110 = vunpack.c.l.bf16 %v46
  %v111 = vunpack.c.l.bf16 %v47
  %v112 = vunpack.c.l.bf16 %v48
  %v113 = vunpack.c.l.bf16 %v49
  %v114 = vunpack.c.l.bf16 %v50
  %v115 = vunpack.c.l.bf16 %v51
  %v116 = vunpack.c.l.bf16 %v52
  %v117 = vunpack.c.l.bf16 %v53
  %v118 = vunpack.c.l.bf16 %v54
  %v119 = vunpack.c.l.bf16 %v55
  %v120 = vunpack.c.l.bf16 %v56
  %v121 = vunpack.c.l.bf16 %v57
  %v122 = vunpack.c.l.bf16 %v58
  %v123 = vunpack.c.l.bf16 %v59
  %v124 = vunpack.c.l.bf16 %v60
  %v125 = vunpack.c.l.bf16 %v61
  %v126 = vunpack.c.l.bf16 %v62
  %v127 = vunpack.c.l.bf16 %v63
  %v128 = vunpack.c.l.bf16 %v64
  %v129 = vunpack.c.l.bf16 %v65
  %v130 = vunpack.c.l.bf16 %v66
  %v131 = vunpack.c.l.bf16 %v67
  %v132 = vunpack.c.l.bf16 %v68
  %v133 = vunpack.c.l.bf16 %v69
  %v134 = vunpack.c.l.bf16 %v70
  %v135 = vunpack.c.l.bf16 %v71
  %v136 = vunpack.c.l.bf16 %v72
  %v137 = vunpack.c.l.bf16 %v73
  %v138 = vunpack.c.l.bf16 %v74
  %v139 = vunpack.c.l.bf16 %v75
  %v140 = vunpack.c.l.bf16 %v76
  %v141 = vunpack.c.l.bf16 %v77
  %v142 = vunpack.c.l.bf16 %v78
  %v143 = vunpack.c.l.bf16 %v79
  %v144 = vunpack.c.l.bf16 %v80
  %v145 = vunpack.c.l.bf16 %v81
  %v146 = vunpack.c.l.bf16 %v82
  %v147 = vunpack.c.l.bf16 %v83
  %v148 = vunpack.c.l.bf16 %v84
  %v149 = vunpack.c.l.bf16 %v85
  %v150 = vunpack.c.l.bf16 %v86
  %v151 = vunpack.c.l.bf16 %v87
  %v152 = vld [vmem:[%s1] sm:$0x1]
  %v154 = vlaneseq
  %v155 = vshrl.u32 %v154, 7
  %v156 = vsub.s32 0, %v155
  %v157 = vrot.slane %v152, %v156
  %v159 = vmul.f32 %v88, %v157
  %v160 = vmul.f32 %v89, %v157
  %v161 = vmul.f32 %v90, %v157
  %v162 = vmul.f32 %v91, %v157
  %v163 = vmul.f32 %v92, %v157
  %v164 = vmul.f32 %v93, %v157
  %v165 = vmul.f32 %v94, %v157
  %v166 = vmul.f32 %v95, %v157
  %v167 = vmul.f32 %v96, %v157
  %v168 = vmul.f32 %v97, %v157
  %v169 = vmul.f32 %v98, %v157
  %v170 = vmul.f32 %v99, %v157
  %v171 = vmul.f32 %v100, %v157
  %v172 = vmul.f32 %v101, %v157
  %v173 = vmul.f32 %v102, %v157
  %v174 = vmul.f32 %v103, %v157
  %v175 = vmul.f32 %v104, %v157
  %v176 = vmul.f32 %v105, %v157
  %v177 = vmul.f32 %v106, %v157
  %v178 = vmul.f32 %v107, %v157
  %v179 = vmul.f32 %v108, %v157
  %v180 = vmul.f32 %v109, %v157
  %v181 = vmul.f32 %v110, %v157
  %v182 = vmul.f32 %v111, %v157
  %v183 = vmul.f32 %v112, %v157
  %v184 = vmul.f32 %v113, %v157
  %v185 = vmul.f32 %v114, %v157
  %v186 = vmul.f32 %v115, %v157
  %v187 = vmul.f32 %v116, %v157
  %v188 = vmul.f32 %v117, %v157
  %v189 = vmul.f32 %v118, %v157
  %v190 = vmul.f32 %v119, %v157
  %v191 = vmul.f32 %v120, %v157
  %v192 = vmul.f32 %v121, %v157
  %v193 = vmul.f32 %v122, %v157
  %v194 = vmul.f32 %v123, %v157
  %v195 = vmul.f32 %v124, %v157
  %v196 = vmul.f32 %v125, %v157
  %v197 = vmul.f32 %v126, %v157
  %v198 = vmul.f32 %v127, %v157
  %v199 = vmul.f32 %v128, %v157
  %v200 = vmul.f32 %v129, %v157
  %v201 = vmul.f32 %v130, %v157
  %v202 = vmul.f32 %v131, %v157
  %v203 = vmul.f32 %v132, %v157
  %v204 = vmul.f32 %v133, %v157
  %v205 = vmul.f32 %v134, %v157
  %v206 = vmul.f32 %v135, %v157
  %v207 = vmul.f32 %v136, %v157
  %v208 = vmul.f32 %v137, %v157
  %v209 = vmul.f32 %v138, %v157
  %v210 = vmul.f32 %v139, %v157
  %v211 = vmul.f32 %v140, %v157
  %v212 = vmul.f32 %v141, %v157
  %v213 = vmul.f32 %v142, %v157
  %v214 = vmul.f32 %v143, %v157
  %v215 = vmul.f32 %v144, %v157
  %v216 = vmul.f32 %v145, %v157
  %v217 = vmul.f32 %v146, %v157
  %v218 = vmul.f32 %v147, %v157
  %v219 = vmul.f32 %v148, %v157
  %v220 = vmul.f32 %v149, %v157
  %v221 = vmul.f32 %v150, %v157
  %v222 = vmul.f32 %v151, %v157
  %v223 = vld [vmem:[%s2] sm:$0x1]
  %v225 = vlaneseq
  %v226 = vshrl.u32 %v225, 7
  %v227 = vsub.s32 0, %v226
  %v228 = vrot.slane %v223, %v227
  %v230 = vadd.f32 %v159, %v228
  %v231 = vadd.f32 %v160, %v228
  %v232 = vadd.f32 %v161, %v228
  %v233 = vadd.f32 %v162, %v228
  %v234 = vadd.f32 %v163, %v228
  %v235 = vadd.f32 %v164, %v228
  %v236 = vadd.f32 %v165, %v228
  %v237 = vadd.f32 %v166, %v228
  %v238 = vadd.f32 %v167, %v228
  %v239 = vadd.f32 %v168, %v228
  %v240 = vadd.f32 %v169, %v228
  %v241 = vadd.f32 %v170, %v228
  %v242 = vadd.f32 %v171, %v228
  %v243 = vadd.f32 %v172, %v228
  %v244 = vadd.f32 %v173, %v228
  %v245 = vadd.f32 %v174, %v228
  %v246 = vadd.f32 %v175, %v228
  %v247 = vadd.f32 %v176, %v228
  %v248 = vadd.f32 %v177, %v228
  %v249 = vadd.f32 %v178, %v228
  %v250 = vadd.f32 %v179, %v228
  %v251 = vadd.f32 %v180, %v228
  %v252 = vadd.f32 %v181, %v228
  %v253 = vadd.f32 %v182, %v228
  %v254 = vadd.f32 %v183, %v228
  %v255 = vadd.f32 %v184, %v228
  %v256 = vadd.f32 %v185, %v228
  %v257 = vadd.f32 %v186, %v228
  %v258 = vadd.f32 %v187, %v228
  %v259 = vadd.f32 %v188, %v228
  %v260 = vadd.f32 %v189, %v228
  %v261 = vadd.f32 %v190, %v228
  %v262 = vadd.f32 %v191, %v228
  %v263 = vadd.f32 %v192, %v228
  %v264 = vadd.f32 %v193, %v228
  %v265 = vadd.f32 %v194, %v228
  %v266 = vadd.f32 %v195, %v228
  %v267 = vadd.f32 %v196, %v228
  %v268 = vadd.f32 %v197, %v228
  %v269 = vadd.f32 %v198, %v228
  %v270 = vadd.f32 %v199, %v228
  %v271 = vadd.f32 %v200, %v228
  %v272 = vadd.f32 %v201, %v228
  %v273 = vadd.f32 %v202, %v228
  %v274 = vadd.f32 %v203, %v228
  %v275 = vadd.f32 %v204, %v228
  %v276 = vadd.f32 %v205, %v228
  %v277 = vadd.f32 %v206, %v228
  %v278 = vadd.f32 %v207, %v228
  %v279 = vadd.f32 %v208, %v228
  %v280 = vadd.f32 %v209, %v228
  %v281 = vadd.f32 %v210, %v228
  %v282 = vadd.f32 %v211, %v228
  %v283 = vadd.f32 %v212, %v228
  %v284 = vadd.f32 %v213, %v228
  %v285 = vadd.f32 %v214, %v228
  %v286 = vadd.f32 %v215, %v228
  %v287 = vadd.f32 %v216, %v228
  %v288 = vadd.f32 %v217, %v228
  %v289 = vadd.f32 %v218, %v228
  %v290 = vadd.f32 %v219, %v228
  %v291 = vadd.f32 %v220, %v228
  %v292 = vadd.f32 %v221, %v228
  %v293 = vadd.f32 %v222, %v228
  %v294 = vmax.f32 %v230, 0.0
  %v295 = vmax.f32 %v231, 0.0
  %v296 = vmax.f32 %v232, 0.0
  %v297 = vmax.f32 %v233, 0.0
  %v298 = vmax.f32 %v234, 0.0
  %v299 = vmax.f32 %v235, 0.0
  %v300 = vmax.f32 %v236, 0.0
  %v301 = vmax.f32 %v237, 0.0
  %v302 = vmax.f32 %v238, 0.0
  %v303 = vmax.f32 %v239, 0.0
  %v304 = vmax.f32 %v240, 0.0
  %v305 = vmax.f32 %v241, 0.0
  %v306 = vmax.f32 %v242, 0.0
  %v307 = vmax.f32 %v243, 0.0
  %v308 = vmax.f32 %v244, 0.0
  %v309 = vmax.f32 %v245, 0.0
  %v310 = vmax.f32 %v246, 0.0
  %v311 = vmax.f32 %v247, 0.0
  %v312 = vmax.f32 %v248, 0.0
  %v313 = vmax.f32 %v249, 0.0
  %v314 = vmax.f32 %v250, 0.0
  %v315 = vmax.f32 %v251, 0.0
  %v316 = vmax.f32 %v252, 0.0
  %v317 = vmax.f32 %v253, 0.0
  %v318 = vmax.f32 %v254, 0.0
  %v319 = vmax.f32 %v255, 0.0
  %v320 = vmax.f32 %v256, 0.0
  %v321 = vmax.f32 %v257, 0.0
  %v322 = vmax.f32 %v258, 0.0
  %v323 = vmax.f32 %v259, 0.0
  %v324 = vmax.f32 %v260, 0.0
  %v325 = vmax.f32 %v261, 0.0
  %v326 = vmax.f32 %v262, 0.0
  %v327 = vmax.f32 %v263, 0.0
  %v328 = vmax.f32 %v264, 0.0
  %v329 = vmax.f32 %v265, 0.0
  %v330 = vmax.f32 %v266, 0.0
  %v331 = vmax.f32 %v267, 0.0
  %v332 = vmax.f32 %v268, 0.0
  %v333 = vmax.f32 %v269, 0.0
  %v334 = vmax.f32 %v270, 0.0
  %v335 = vmax.f32 %v271, 0.0
  %v336 = vmax.f32 %v272, 0.0
  %v337 = vmax.f32 %v273, 0.0
  %v338 = vmax.f32 %v274, 0.0
  %v339 = vmax.f32 %v275, 0.0
  %v340 = vmax.f32 %v276, 0.0
  %v341 = vmax.f32 %v277, 0.0
  %v342 = vmax.f32 %v278, 0.0
  %v343 = vmax.f32 %v279, 0.0
  %v344 = vmax.f32 %v280, 0.0
  %v345 = vmax.f32 %v281, 0.0
  %v346 = vmax.f32 %v282, 0.0
  %v347 = vmax.f32 %v283, 0.0
  %v348 = vmax.f32 %v284, 0.0
  %v349 = vmax.f32 %v285, 0.0
  %v350 = vmax.f32 %v286, 0.0
  %v351 = vmax.f32 %v287, 0.0
  %v352 = vmax.f32 %v288, 0.0
  %v353 = vmax.f32 %v289, 0.0
  %v354 = vmax.f32 %v290, 0.0
  %v355 = vmax.f32 %v291, 0.0
  %v356 = vmax.f32 %v292, 0.0
  %v357 = vmax.f32 %v293, 0.0
  %v358 = vpack.c.bf16 %v295, %v294
  %v359 = vpack.c.bf16 %v297, %v296
  %v360 = vpack.c.bf16 %v299, %v298
  %v361 = vpack.c.bf16 %v301, %v300
  %v362 = vpack.c.bf16 %v303, %v302
  %v363 = vpack.c.bf16 %v305, %v304
  %v364 = vpack.c.bf16 %v307, %v306
  %v365 = vpack.c.bf16 %v309, %v308
  %v366 = vpack.c.bf16 %v311, %v310
  %v367 = vpack.c.bf16 %v313, %v312
  %v368 = vpack.c.bf16 %v315, %v314
  %v369 = vpack.c.bf16 %v317, %v316
  %v370 = vpack.c.bf16 %v319, %v318
  %v371 = vpack.c.bf16 %v321, %v320
  %v372 = vpack.c.bf16 %v323, %v322
  %v373 = vpack.c.bf16 %v325, %v324
  %v374 = vpack.c.bf16 %v327, %v326
  %v375 = vpack.c.bf16 %v329, %v328
  %v376 = vpack.c.bf16 %v331, %v330
  %v377 = vpack.c.bf16 %v333, %v332
  %v378 = vpack.c.bf16 %v335, %v334
  %v379 = vpack.c.bf16 %v337, %v336
  %v380 = vpack.c.bf16 %v339, %v338
  %v381 = vpack.c.bf16 %v341, %v340
  %v382 = vpack.c.bf16 %v343, %v342
  %v383 = vpack.c.bf16 %v345, %v344
  %v384 = vpack.c.bf16 %v347, %v346
  %v385 = vpack.c.bf16 %v349, %v348
  %v386 = vpack.c.bf16 %v351, %v350
  %v387 = vpack.c.bf16 %v353, %v352
  %v388 = vpack.c.bf16 %v355, %v354
  %v389 = vpack.c.bf16 %v357, %v356
  %v390 = vld [vmem:[%s3] sm:$0xf]
  %v391 = vld [vmem:[%s3 + $0x4] sm:$0xf]
  %v394 = vunpack.c.l.b16 %v390
  %v395 = vunpack.c.l.b16 %v391
  %v396 = vpack.c.b16 %v395, %v394
  %vm398 = vcmask 130048
  %v400 = vsel %vm398, %v358, 0
  %v403 = vsel %vm398, %v359, 0
  %v406 = vsel %vm398, %v360, 0
  %v409 = vsel %vm398, %v361, 0
  %v412 = vsel %vm398, %v362, 0
  %v415 = vsel %vm398, %v363, 0
  %v418 = vsel %vm398, %v364, 0
  %v421 = vsel %vm398, %v365, 0
  %v424 = vsel %vm398, %v366, 0
  %v427 = vsel %vm398, %v367, 0
  %v430 = vsel %vm398, %v368, 0
  %v433 = vsel %vm398, %v369, 0
  %v436 = vsel %vm398, %v370, 0
  %v439 = vsel %vm398, %v371, 0
  %v442 = vsel %vm398, %v372, 0
  %v445 = vsel %vm398, %v373, 0
  %v448 = vsel %vm398, %v374, 0
  %v451 = vsel %vm398, %v375, 0
  %v454 = vsel %vm398, %v376, 0
  %v457 = vsel %vm398, %v377, 0
  %v460 = vsel %vm398, %v378, 0
  %v463 = vsel %vm398, %v379, 0
  %v466 = vsel %vm398, %v380, 0
  %v469 = vsel %vm398, %v381, 0
  %v472 = vsel %vm398, %v382, 0
  %v475 = vsel %vm398, %v383, 0
  %v478 = vsel %vm398, %v384, 0
  %v481 = vsel %vm398, %v385, 0
  %v484 = vsel %vm398, %v386, 0
  %v487 = vsel %vm398, %v387, 0
  %v490 = vsel %vm398, %v388, 0
  %v493 = vsel %vm398, %v389, 0
  %495 = vmatprep.subr.bf16.mxu0 0
  %496 = vmatpush1.bf16.msra.mxu0 0
  %497 = vmatprep.subr.bf16.mxu0 0
  %498 = vmatpush1.bf16.msra.mxu0 0
  %499 = vmatprep.subr.bf16.mxu0 0
  %500 = vmatpush1.bf16.msra.mxu0 0
  %501 = vmatprep.subr.bf16.mxu0 0
  %502 = vmatpush1.bf16.msra.mxu0 0
  %503 = vmatprep.subr.bf16.mxu0 0
  %504 = vmatpush1.bf16.msra.mxu0 0
  %505 = vmatprep.subr.bf16.mxu0 0
  %506 = vmatpush1.bf16.msra.mxu0 0
  %507 = vmatprep.subr.bf16.mxu0 0
  %508 = vmatpush1.bf16.msra.mxu0 0
  %509 = vmatprep.subr.bf16.mxu0 0
  %510 = vmatpush1.bf16.msra.mxu0 %v396
  %511 = vmatprep.subr.bf16.mxu0 0
  %512 = vmatpush2.bf16.msra.mxu0 0
  %513 = vmatprep.subr.bf16.mxu0 0
  %514 = vmatpush2.bf16.msra.mxu0 0
  %515 = vmatprep.subr.bf16.mxu0 0
  %516 = vmatpush2.bf16.msra.mxu0 0
  %517 = vmatprep.subr.bf16.mxu0 0
  %518 = vmatpush2.bf16.msra.mxu0 0
  %519 = vmatprep.subr.bf16.mxu0 0
  %520 = vmatpush2.bf16.msra.mxu0 0
  %521 = vmatprep.subr.bf16.mxu0 0
  %522 = vmatpush2.bf16.msra.mxu0 0
  %523 = vmatprep.subr.bf16.mxu0 0
  %524 = vmatpush2.bf16.msra.mxu0 0
  %525 = vmatprep.subr.bf16.mxu0 0
  %526 = vmatpush2.bf16.msra.mxu0 0
  %527 = vmatprep.mubr.bf16.mxu0 0
  %528 = vmatmul.mubr.bf16.gmra.mxu0 %v400
  %v529 = vpop.f32.mrf.mxu0
  %v530 = vadd.f32 0.0, %v529
  %v531 = vpop.f32.mrf.mxu0
  %v532 = vpop.f32.mrf.mxu0
  %v533 = vadd.f32 0.0, %v532
  %v534 = vpop.f32.mrf.mxu0
  %535 = vmatprep.mubr.bf16.mxu0 0
  %536 = vmatmul.mubr.bf16.gmra.mxu0 %v403
  %v537 = vpop.f32.mrf.mxu0
  %v538 = vadd.f32 0.0, %v537
  %v539 = vpop.f32.mrf.mxu0
  %v540 = vpop.f32.mrf.mxu0
  %v541 = vadd.f32 0.0, %v540
  %v542 = vpop.f32.mrf.mxu0
  %543 = vmatprep.mubr.bf16.mxu0 0
  %544 = vmatmul.mubr.bf16.gmra.mxu0 %v406
  %v545 = vpop.f32.mrf.mxu0
  %v546 = vadd.f32 0.0, %v545
  %v547 = vpop.f32.mrf.mxu0
  %v548 = vpop.f32.mrf.mxu0
  %v549 = vadd.f32 0.0, %v548
  %v550 = vpop.f32.mrf.mxu0
  %551 = vmatprep.mubr.bf16.mxu0 0
  %552 = vmatmul.mubr.bf16.gmra.mxu0 %v409
  %v553 = vpop.f32.mrf.mxu0
  %v554 = vadd.f32 0.0, %v553
  %v555 = vpop.f32.mrf.mxu0
  %v556 = vpop.f32.mrf.mxu0
  %v557 = vadd.f32 0.0, %v556
  %v558 = vpop.f32.mrf.mxu0
  %559 = vmatprep.mubr.bf16.mxu0 0
  %560 = vmatmul.mubr.bf16.gmra.mxu0 %v412
  %v561 = vpop.f32.mrf.mxu0
  %v562 = vadd.f32 0.0, %v561
  %v563 = vpop.f32.mrf.mxu0
  %v564 = vpop.f32.mrf.mxu0
  %v565 = vadd.f32 0.0, %v564
  %v566 = vpop.f32.mrf.mxu0
  %567 = vmatprep.mubr.bf16.mxu0 0
  %568 = vmatmul.mubr.bf16.gmra.mxu0 %v415
  %v569 = vpop.f32.mrf.mxu0
  %v570 = vadd.f32 0.0, %v569
  %v571 = vpop.f32.mrf.mxu0
  %v572 = vpop.f32.mrf.mxu0
  %v573 = vadd.f32 0.0, %v572
  %v574 = vpop.f32.mrf.mxu0
  %575 = vmatprep.mubr.bf16.mxu0 0
  %576 = vmatmul.mubr.bf16.gmra.mxu0 %v418
  %v577 = vpop.f32.mrf.mxu0
  %v578 = vadd.f32 0.0, %v577
  %v579 = vpop.f32.mrf.mxu0
  %v580 = vpop.f32.mrf.mxu0
  %v581 = vadd.f32 0.0, %v580
  %v582 = vpop.f32.mrf.mxu0
  %583 = vmatprep.mubr.bf16.mxu0 0
  %584 = vmatmul.mubr.bf16.gmra.mxu0 %v421
  %v585 = vpop.f32.mrf.mxu0
  %v586 = vadd.f32 0.0, %v585
  %v587 = vpop.f32.mrf.mxu0
  %v588 = vpop.f32.mrf.mxu0
  %v589 = vadd.f32 0.0, %v588
  %v590 = vpop.f32.mrf.mxu0
  %591 = vmatprep.mubr.bf16.mxu0 0
  %592 = vmatmul.mubr.bf16.gmra.mxu0 %v424
  %v593 = vpop.f32.mrf.mxu0
  %v594 = vadd.f32 0.0, %v593
  %v595 = vpop.f32.mrf.mxu0
  %v596 = vpop.f32.mrf.mxu0
  %v597 = vadd.f32 0.0, %v596
  %v598 = vpop.f32.mrf.mxu0
  %599 = vmatprep.mubr.bf16.mxu0 0
  %600 = vmatmul.mubr.bf16.gmra.mxu0 %v427
  %v601 = vpop.f32.mrf.mxu0
  %v602 = vadd.f32 0.0, %v601
  %v603 = vpop.f32.mrf.mxu0
  %v604 = vpop.f32.mrf.mxu0
  %v605 = vadd.f32 0.0, %v604
  %v606 = vpop.f32.mrf.mxu0
  %607 = vmatprep.mubr.bf16.mxu0 0
  %608 = vmatmul.mubr.bf16.gmra.mxu0 %v430
  %v609 = vpop.f32.mrf.mxu0
  %v610 = vadd.f32 0.0, %v609
  %v611 = vpop.f32.mrf.mxu0
  %v612 = vpop.f32.mrf.mxu0
  %v613 = vadd.f32 0.0, %v612
  %v614 = vpop.f32.mrf.mxu0
  %615 = vmatprep.mubr.bf16.mxu0 0
  %616 = vmatmul.mubr.bf16.gmra.mxu0 %v433
  %v617 = vpop.f32.mrf.mxu0
  %v618 = vadd.f32 0.0, %v617
  %v619 = vpop.f32.mrf.mxu0
  %v620 = vpop.f32.mrf.mxu0
  %v621 = vadd.f32 0.0, %v620
  %v622 = vpop.f32.mrf.mxu0
  %623 = vmatprep.mubr.bf16.mxu0 0
  %624 = vmatmul.mubr.bf16.gmra.mxu0 %v436
  %v625 = vpop.f32.mrf.mxu0
  %v626 = vadd.f32 0.0, %v625
  %v627 = vpop.f32.mrf.mxu0
  %v628 = vpop.f32.mrf.mxu0
  %v629 = vadd.f32 0.0, %v628
  %v630 = vpop.f32.mrf.mxu0
  %631 = vmatprep.mubr.bf16.mxu0 0
  %632 = vmatmul.mubr.bf16.gmra.mxu0 %v439
  %v633 = vpop.f32.mrf.mxu0
  %v634 = vadd.f32 0.0, %v633
  %v635 = vpop.f32.mrf.mxu0
  %v636 = vpop.f32.mrf.mxu0
  %v637 = vadd.f32 0.0, %v636
  %v638 = vpop.f32.mrf.mxu0
  %639 = vmatprep.mubr.bf16.mxu0 0
  %640 = vmatmul.mubr.bf16.gmra.mxu0 %v442
  %v641 = vpop.f32.mrf.mxu0
  %v642 = vadd.f32 0.0, %v641
  %v643 = vpop.f32.mrf.mxu0
  %v644 = vpop.f32.mrf.mxu0
  %v645 = vadd.f32 0.0, %v644
  %v646 = vpop.f32.mrf.mxu0
  %647 = vmatprep.mubr.bf16.mxu0 0
  %648 = vmatmul.mubr.bf16.gmra.mxu0 %v445
  %v649 = vpop.f32.mrf.mxu0
  %v650 = vadd.f32 0.0, %v649
  %v651 = vpop.f32.mrf.mxu0
  %v652 = vpop.f32.mrf.mxu0
  %v653 = vadd.f32 0.0, %v652
  %v654 = vpop.f32.mrf.mxu0
  %655 = vmatprep.mubr.bf16.mxu0 0
  %656 = vmatmul.mubr.bf16.gmra.mxu0 %v448
  %v657 = vpop.f32.mrf.mxu0
  %v658 = vadd.f32 0.0, %v657
  %v659 = vpop.f32.mrf.mxu0
  %v660 = vpop.f32.mrf.mxu0
  %v661 = vadd.f32 0.0, %v660
  %v662 = vpop.f32.mrf.mxu0
  %663 = vmatprep.mubr.bf16.mxu0 0
  %664 = vmatmul.mubr.bf16.gmra.mxu0 %v451
  %v665 = vpop.f32.mrf.mxu0
  %v666 = vadd.f32 0.0, %v665
  %v667 = vpop.f32.mrf.mxu0
  %v668 = vpop.f32.mrf.mxu0
  %v669 = vadd.f32 0.0, %v668
  %v670 = vpop.f32.mrf.mxu0
  %671 = vmatprep.mubr.bf16.mxu0 0
  %672 = vmatmul.mubr.bf16.gmra.mxu0 %v454
  %v673 = vpop.f32.mrf.mxu0
  %v674 = vadd.f32 0.0, %v673
  %v675 = vpop.f32.mrf.mxu0
  %v676 = vpop.f32.mrf.mxu0
  %v677 = vadd.f32 0.0, %v676
  %v678 = vpop.f32.mrf.mxu0
  %679 = vmatprep.mubr.bf16.mxu0 0
  %680 = vmatmul.mubr.bf16.gmra.mxu0 %v457
  %v681 = vpop.f32.mrf.mxu0
  %v682 = vadd.f32 0.0, %v681
  %v683 = vpop.f32.mrf.mxu0
  %v684 = vpop.f32.mrf.mxu0
  %v685 = vadd.f32 0.0, %v684
  %v686 = vpop.f32.mrf.mxu0
  %687 = vmatprep.mubr.bf16.mxu0 0
  %688 = vmatmul.mubr.bf16.gmra.mxu0 %v460
  %v689 = vpop.f32.mrf.mxu0
  %v690 = vadd.f32 0.0, %v689
  %v691 = vpop.f32.mrf.mxu0
  %v692 = vpop.f32.mrf.mxu0
  %v693 = vadd.f32 0.0, %v692
  %v694 = vpop.f32.mrf.mxu0
  %695 = vmatprep.mubr.bf16.mxu0 0
  %696 = vmatmul.mubr.bf16.gmra.mxu0 %v463
  %v697 = vpop.f32.mrf.mxu0
  %v698 = vadd.f32 0.0, %v697
  %v699 = vpop.f32.mrf.mxu0
  %v700 = vpop.f32.mrf.mxu0
  %v701 = vadd.f32 0.0, %v700
  %v702 = vpop.f32.mrf.mxu0
  %703 = vmatprep.mubr.bf16.mxu0 0
  %704 = vmatmul.mubr.bf16.gmra.mxu0 %v466
  %v705 = vpop.f32.mrf.mxu0
  %v706 = vadd.f32 0.0, %v705
  %v707 = vpop.f32.mrf.mxu0
  %v708 = vpop.f32.mrf.mxu0
  %v709 = vadd.f32 0.0, %v708
  %v710 = vpop.f32.mrf.mxu0
  %711 = vmatprep.mubr.bf16.mxu0 0
  %712 = vmatmul.mubr.bf16.gmra.mxu0 %v469
  %v713 = vpop.f32.mrf.mxu0
  %v714 = vadd.f32 0.0, %v713
  %v715 = vpop.f32.mrf.mxu0
  %v716 = vpop.f32.mrf.mxu0
  %v717 = vadd.f32 0.0, %v716
  %v718 = vpop.f32.mrf.mxu0
  %719 = vmatprep.mubr.bf16.mxu0 0
  %720 = vmatmul.mubr.bf16.gmra.mxu0 %v472
  %v721 = vpop.f32.mrf.mxu0
  %v722 = vadd.f32 0.0, %v721
  %v723 = vpop.f32.mrf.mxu0
  %v724 = vpop.f32.mrf.mxu0
  %v725 = vadd.f32 0.0, %v724
  %v726 = vpop.f32.mrf.mxu0
  %727 = vmatprep.mubr.bf16.mxu0 0
  %728 = vmatmul.mubr.bf16.gmra.mxu0 %v475
  %v729 = vpop.f32.mrf.mxu0
  %v730 = vadd.f32 0.0, %v729
  %v731 = vpop.f32.mrf.mxu0
  %v732 = vpop.f32.mrf.mxu0
  %v733 = vadd.f32 0.0, %v732
  %v734 = vpop.f32.mrf.mxu0
  %735 = vmatprep.mubr.bf16.mxu0 0
  %736 = vmatmul.mubr.bf16.gmra.mxu0 %v478
  %v737 = vpop.f32.mrf.mxu0
  %v738 = vadd.f32 0.0, %v737
  %v739 = vpop.f32.mrf.mxu0
  %v740 = vpop.f32.mrf.mxu0
  %v741 = vadd.f32 0.0, %v740
  %v742 = vpop.f32.mrf.mxu0
  %743 = vmatprep.mubr.bf16.mxu0 0
  %744 = vmatmul.mubr.bf16.gmra.mxu0 %v481
  %v745 = vpop.f32.mrf.mxu0
  %v746 = vadd.f32 0.0, %v745
  %v747 = vpop.f32.mrf.mxu0
  %v748 = vpop.f32.mrf.mxu0
  %v749 = vadd.f32 0.0, %v748
  %v750 = vpop.f32.mrf.mxu0
  %751 = vmatprep.mubr.bf16.mxu0 0
  %752 = vmatmul.mubr.bf16.gmra.mxu0 %v484
  %v753 = vpop.f32.mrf.mxu0
  %v754 = vadd.f32 0.0, %v753
  %v755 = vpop.f32.mrf.mxu0
  %v756 = vpop.f32.mrf.mxu0
  %v757 = vadd.f32 0.0, %v756
  %v758 = vpop.f32.mrf.mxu0
  %759 = vmatprep.mubr.bf16.mxu0 0
  %760 = vmatmul.mubr.bf16.gmra.mxu0 %v487
  %v761 = vpop.f32.mrf.mxu0
  %v762 = vadd.f32 0.0, %v761
  %v763 = vpop.f32.mrf.mxu0
  %v764 = vpop.f32.mrf.mxu0
  %v765 = vadd.f32 0.0, %v764
  %v766 = vpop.f32.mrf.mxu0
  %767 = vmatprep.mubr.bf16.mxu0 0
  %768 = vmatmul.mubr.bf16.gmra.mxu0 %v490
  %v769 = vpop.f32.mrf.mxu0
  %v770 = vadd.f32 0.0, %v769
  %v771 = vpop.f32.mrf.mxu0
  %v772 = vpop.f32.mrf.mxu0
  %v773 = vadd.f32 0.0, %v772
  %v774 = vpop.f32.mrf.mxu0
  %775 = vmatprep.mubr.bf16.mxu0 0
  %776 = vmatmul.mubr.bf16.gmra.mxu0 %v493
  %v777 = vpop.f32.mrf.mxu0
  %v778 = vadd.f32 0.0, %v777
  %v779 = vpop.f32.mrf.mxu0
  %v780 = vpop.f32.mrf.mxu0
  %v781 = vadd.f32 0.0, %v780
  %v782 = vpop.f32.mrf.mxu0
  %783 = vdwg.mxu0
  %v784 = vld [vmem:[%s4] sm:$0x1]
  %v786 = vlaneseq
  %v787 = vshrl.u32 %v786, 7
  %v788 = vsub.s32 0, %v787
  %v789 = vrot.slane %v784, %v788
  %v791 = vmul.f32 %v530, %v789
  %v792 = vmul.f32 %v533, %v789
  %v793 = vmul.f32 %v538, %v789
  %v794 = vmul.f32 %v541, %v789
  %v795 = vmul.f32 %v546, %v789
  %v796 = vmul.f32 %v549, %v789
  %v797 = vmul.f32 %v554, %v789
  %v798 = vmul.f32 %v557, %v789
  %v799 = vmul.f32 %v562, %v789
  %v800 = vmul.f32 %v565, %v789
  %v801 = vmul.f32 %v570, %v789
  %v802 = vmul.f32 %v573, %v789
  %v803 = vmul.f32 %v578, %v789
  %v804 = vmul.f32 %v581, %v789
  %v805 = vmul.f32 %v586, %v789
  %v806 = vmul.f32 %v589, %v789
  %v807 = vmul.f32 %v594, %v789
  %v808 = vmul.f32 %v597, %v789
  %v809 = vmul.f32 %v602, %v789
  %v810 = vmul.f32 %v605, %v789
  %v811 = vmul.f32 %v610, %v789
  %v812 = vmul.f32 %v613, %v789
  %v813 = vmul.f32 %v618, %v789
  %v814 = vmul.f32 %v621, %v789
  %v815 = vmul.f32 %v626, %v789
  %v816 = vmul.f32 %v629, %v789
  %v817 = vmul.f32 %v634, %v789
  %v818 = vmul.f32 %v637, %v789
  %v819 = vmul.f32 %v642, %v789
  %v820 = vmul.f32 %v645, %v789
  %v821 = vmul.f32 %v650, %v789
  %v822 = vmul.f32 %v653, %v789
  %v823 = vmul.f32 %v658, %v789
  %v824 = vmul.f32 %v661, %v789
  %v825 = vmul.f32 %v666, %v789
  %v826 = vmul.f32 %v669, %v789
  %v827 = vmul.f32 %v674, %v789
  %v828 = vmul.f32 %v677, %v789
  %v829 = vmul.f32 %v682, %v789
  %v830 = vmul.f32 %v685, %v789
  %v831 = vmul.f32 %v690, %v789
  %v832 = vmul.f32 %v693, %v789
  %v833 = vmul.f32 %v698, %v789
  %v834 = vmul.f32 %v701, %v789
  %v835 = vmul.f32 %v706, %v789
  %v836 = vmul.f32 %v709, %v789
  %v837 = vmul.f32 %v714, %v789
  %v838 = vmul.f32 %v717, %v789
  %v839 = vmul.f32 %v722, %v789
  %v840 = vmul.f32 %v725, %v789
  %v841 = vmul.f32 %v730, %v789
  %v842 = vmul.f32 %v733, %v789
  %v843 = vmul.f32 %v738, %v789
  %v844 = vmul.f32 %v741, %v789
  %v845 = vmul.f32 %v746, %v789
  %v846 = vmul.f32 %v749, %v789
  %v847 = vmul.f32 %v754, %v789
  %v848 = vmul.f32 %v757, %v789
  %v849 = vmul.f32 %v762, %v789
  %v850 = vmul.f32 %v765, %v789
  %v851 = vmul.f32 %v770, %v789
  %v852 = vmul.f32 %v773, %v789
  %v853 = vmul.f32 %v778, %v789
  %v854 = vmul.f32 %v781, %v789
  %v855 = vld [vmem:[%s5] sm:$0x1]
  %v857 = vlaneseq
  %v858 = vshrl.u32 %v857, 7
  %v859 = vsub.s32 0, %v858
  %v860 = vrot.slane %v855, %v859
  %v862 = vadd.f32 %v791, %v860
  %v863 = vadd.f32 %v792, %v860
  %v864 = vadd.f32 %v793, %v860
  %v865 = vadd.f32 %v794, %v860
  %v866 = vadd.f32 %v795, %v860
  %v867 = vadd.f32 %v796, %v860
  %v868 = vadd.f32 %v797, %v860
  %v869 = vadd.f32 %v798, %v860
  %v870 = vadd.f32 %v799, %v860
  %v871 = vadd.f32 %v800, %v860
  %v872 = vadd.f32 %v801, %v860
  %v873 = vadd.f32 %v802, %v860
  %v874 = vadd.f32 %v803, %v860
  %v875 = vadd.f32 %v804, %v860
  %v876 = vadd.f32 %v805, %v860
  %v877 = vadd.f32 %v806, %v860
  %v878 = vadd.f32 %v807, %v860
  %v879 = vadd.f32 %v808, %v860
  %v880 = vadd.f32 %v809, %v860
  %v881 = vadd.f32 %v810, %v860
  %v882 = vadd.f32 %v811, %v860
  %v883 = vadd.f32 %v812, %v860
  %v884 = vadd.f32 %v813, %v860
  %v885 = vadd.f32 %v814, %v860
  %v886 = vadd.f32 %v815, %v860
  %v887 = vadd.f32 %v816, %v860
  %v888 = vadd.f32 %v817, %v860
  %v889 = vadd.f32 %v818, %v860
  %v890 = vadd.f32 %v819, %v860
  %v891 = vadd.f32 %v820, %v860
  %v892 = vadd.f32 %v821, %v860
  %v893 = vadd.f32 %v822, %v860
  %v894 = vadd.f32 %v823, %v860
  %v895 = vadd.f32 %v824, %v860
  %v896 = vadd.f32 %v825, %v860
  %v897 = vadd.f32 %v826, %v860
  %v898 = vadd.f32 %v827, %v860
  %v899 = vadd.f32 %v828, %v860
  %v900 = vadd.f32 %v829, %v860
  %v901 = vadd.f32 %v830, %v860
  %v902 = vadd.f32 %v831, %v860
  %v903 = vadd.f32 %v832, %v860
  %v904 = vadd.f32 %v833, %v860
  %v905 = vadd.f32 %v834, %v860
  %v906 = vadd.f32 %v835, %v860
  %v907 = vadd.f32 %v836, %v860
  %v908 = vadd.f32 %v837, %v860
  %v909 = vadd.f32 %v838, %v860
  %v910 = vadd.f32 %v839, %v860
  %v911 = vadd.f32 %v840, %v860
  %v912 = vadd.f32 %v841, %v860
  %v913 = vadd.f32 %v842, %v860
  %v914 = vadd.f32 %v843, %v860
  %v915 = vadd.f32 %v844, %v860
  %v916 = vadd.f32 %v845, %v860
  %v917 = vadd.f32 %v846, %v860
  %v918 = vadd.f32 %v847, %v860
  %v919 = vadd.f32 %v848, %v860
  %v920 = vadd.f32 %v849, %v860
  %v921 = vadd.f32 %v850, %v860
  %v922 = vadd.f32 %v851, %v860
  %v923 = vadd.f32 %v852, %v860
  %v924 = vadd.f32 %v853, %v860
  %v925 = vadd.f32 %v854, %v860
  %v926 = vmax.f32 %v862, 0.0
  %v927 = vmax.f32 %v863, 0.0
  %v928 = vmax.f32 %v864, 0.0
  %v929 = vmax.f32 %v865, 0.0
  %v930 = vmax.f32 %v866, 0.0
  %v931 = vmax.f32 %v867, 0.0
  %v932 = vmax.f32 %v868, 0.0
  %v933 = vmax.f32 %v869, 0.0
  %v934 = vmax.f32 %v870, 0.0
  %v935 = vmax.f32 %v871, 0.0
  %v936 = vmax.f32 %v872, 0.0
  %v937 = vmax.f32 %v873, 0.0
  %v938 = vmax.f32 %v874, 0.0
  %v939 = vmax.f32 %v875, 0.0
  %v940 = vmax.f32 %v876, 0.0
  %v941 = vmax.f32 %v877, 0.0
  %v942 = vmax.f32 %v878, 0.0
  %v943 = vmax.f32 %v879, 0.0
  %v944 = vmax.f32 %v880, 0.0
  %v945 = vmax.f32 %v881, 0.0
  %v946 = vmax.f32 %v882, 0.0
  %v947 = vmax.f32 %v883, 0.0
  %v948 = vmax.f32 %v884, 0.0
  %v949 = vmax.f32 %v885, 0.0
  %v950 = vmax.f32 %v886, 0.0
  %v951 = vmax.f32 %v887, 0.0
  %v952 = vmax.f32 %v888, 0.0
  %v953 = vmax.f32 %v889, 0.0
  %v954 = vmax.f32 %v890, 0.0
  %v955 = vmax.f32 %v891, 0.0
  %v956 = vmax.f32 %v892, 0.0
  %v957 = vmax.f32 %v893, 0.0
  %v958 = vmax.f32 %v894, 0.0
  %v959 = vmax.f32 %v895, 0.0
  %v960 = vmax.f32 %v896, 0.0
  %v961 = vmax.f32 %v897, 0.0
  %v962 = vmax.f32 %v898, 0.0
  %v963 = vmax.f32 %v899, 0.0
  %v964 = vmax.f32 %v900, 0.0
  %v965 = vmax.f32 %v901, 0.0
  %v966 = vmax.f32 %v902, 0.0
  %v967 = vmax.f32 %v903, 0.0
  %v968 = vmax.f32 %v904, 0.0
  %v969 = vmax.f32 %v905, 0.0
  %v970 = vmax.f32 %v906, 0.0
  %v971 = vmax.f32 %v907, 0.0
  %v972 = vmax.f32 %v908, 0.0
  %v973 = vmax.f32 %v909, 0.0
  %v974 = vmax.f32 %v910, 0.0
  %v975 = vmax.f32 %v911, 0.0
  %v976 = vmax.f32 %v912, 0.0
  %v977 = vmax.f32 %v913, 0.0
  %v978 = vmax.f32 %v914, 0.0
  %v979 = vmax.f32 %v915, 0.0
  %v980 = vmax.f32 %v916, 0.0
  %v981 = vmax.f32 %v917, 0.0
  %v982 = vmax.f32 %v918, 0.0
  %v983 = vmax.f32 %v919, 0.0
  %v984 = vmax.f32 %v920, 0.0
  %v985 = vmax.f32 %v921, 0.0
  %v986 = vmax.f32 %v922, 0.0
  %v987 = vmax.f32 %v923, 0.0
  %v988 = vmax.f32 %v924, 0.0
  %v989 = vmax.f32 %v925, 0.0
  %v990 = vpack.c.bf16 %v927, %v926
  %v991 = vpack.c.bf16 %v929, %v928
  %v992 = vpack.c.bf16 %v931, %v930
  %v993 = vpack.c.bf16 %v933, %v932
  %v994 = vpack.c.bf16 %v935, %v934
  %v995 = vpack.c.bf16 %v937, %v936
  %v996 = vpack.c.bf16 %v939, %v938
  %v997 = vpack.c.bf16 %v941, %v940
  %v998 = vpack.c.bf16 %v943, %v942
  %v999 = vpack.c.bf16 %v945, %v944
  %v1000 = vpack.c.bf16 %v947, %v946
  %v1001 = vpack.c.bf16 %v949, %v948
  %v1002 = vpack.c.bf16 %v951, %v950
  %v1003 = vpack.c.bf16 %v953, %v952
  %v1004 = vpack.c.bf16 %v955, %v954
  %v1005 = vpack.c.bf16 %v957, %v956
  %v1006 = vpack.c.bf16 %v959, %v958
  %v1007 = vpack.c.bf16 %v961, %v960
  %v1008 = vpack.c.bf16 %v963, %v962
  %v1009 = vpack.c.bf16 %v965, %v964
  %v1010 = vpack.c.bf16 %v967, %v966
  %v1011 = vpack.c.bf16 %v969, %v968
  %v1012 = vpack.c.bf16 %v971, %v970
  %v1013 = vpack.c.bf16 %v973, %v972
  %v1014 = vpack.c.bf16 %v975, %v974
  %v1015 = vpack.c.bf16 %v977, %v976
  %v1016 = vpack.c.bf16 %v979, %v978
  %v1017 = vpack.c.bf16 %v981, %v980
  %v1018 = vpack.c.bf16 %v983, %v982
  %v1019 = vpack.c.bf16 %v985, %v984
  %v1020 = vpack.c.bf16 %v987, %v986
  %v1021 = vpack.c.bf16 %v989, %v988
  %v1054 = vunpack.c.l.b16 %v990
  %v1055 = vunpack.c.h.b16 %v990
  %v1056 = vunpack.c.l.b16 %v991
  %v1057 = vunpack.c.h.b16 %v991
  %v1058 = vunpack.c.l.b16 %v992
  %v1059 = vunpack.c.h.b16 %v992
  %v1060 = vunpack.c.l.b16 %v993
  %v1061 = vunpack.c.h.b16 %v993
  %v1062 = vunpack.c.l.b16 %v994
  %v1063 = vunpack.c.h.b16 %v994
  %v1064 = vunpack.c.l.b16 %v995
  %v1065 = vunpack.c.h.b16 %v995
  %v1066 = vunpack.c.l.b16 %v996
  %v1067 = vunpack.c.h.b16 %v996
  %v1068 = vunpack.c.l.b16 %v997
  %v1069 = vunpack.c.h.b16 %v997
  %v1070 = vunpack.c.l.b16 %v998
  %v1071 = vunpack.c.h.b16 %v998
  %v1072 = vunpack.c.l.b16 %v999
  %v1073 = vunpack.c.h.b16 %v999
  %v1074 = vunpack.c.l.b16 %v1000
  %v1075 = vunpack.c.h.b16 %v1000
  %v1076 = vunpack.c.l.b16 %v1001
  %v1077 = vunpack.c.h.b16 %v1001
  %v1078 = vunpack.c.l.b16 %v1002
  %v1079 = vunpack.c.h.b16 %v1002
  %v1080 = vunpack.c.l.b16 %v1003
  %v1081 = vunpack.c.h.b16 %v1003
  %v1082 = vunpack.c.l.b16 %v1004
  %v1083 = vunpack.c.h.b16 %v1004
  %v1084 = vunpack.c.l.b16 %v1005
  %v1085 = vunpack.c.h.b16 %v1005
  %v1086 = vunpack.c.l.b16 %v1006
  %v1087 = vunpack.c.h.b16 %v1006
  %v1088 = vunpack.c.l.b16 %v1007
  %v1089 = vunpack.c.h.b16 %v1007
  %v1090 = vunpack.c.l.b16 %v1008
  %v1091 = vunpack.c.h.b16 %v1008
  %v1092 = vunpack.c.l.b16 %v1009
  %v1093 = vunpack.c.h.b16 %v1009
  %v1094 = vunpack.c.l.b16 %v1010
  %v1095 = vunpack.c.h.b16 %v1010
  %v1096 = vunpack.c.l.b16 %v1011
  %v1097 = vunpack.c.h.b16 %v1011
  %v1098 = vunpack.c.l.b16 %v1012
  %v1099 = vunpack.c.h.b16 %v1012
  %v1100 = vunpack.c.l.b16 %v1013
  %v1101 = vunpack.c.h.b16 %v1013
  %v1102 = vunpack.c.l.b16 %v1014
  %v1103 = vunpack.c.h.b16 %v1014
  %v1104 = vunpack.c.l.b16 %v1015
  %v1105 = vunpack.c.h.b16 %v1015
  %v1106 = vunpack.c.l.b16 %v1016
  %v1107 = vunpack.c.h.b16 %v1016
  %v1108 = vunpack.c.l.b16 %v1017
  %v1109 = vunpack.c.h.b16 %v1017
  %v1110 = vunpack.c.l.b16 %v1018
  %v1111 = vunpack.c.h.b16 %v1018
  %v1112 = vunpack.c.l.b16 %v1019
  %v1113 = vunpack.c.h.b16 %v1019
  %v1114 = vunpack.c.l.b16 %v1020
  %v1115 = vunpack.c.h.b16 %v1020
  %v1116 = vunpack.c.l.b16 %v1021
  %v1117 = vunpack.c.h.b16 %v1021
  %v1118 = vpack.c.b16 %v1054, %v1054
  %v1119 = vpack.c.b16 %v1055, %v1055
  %v1120 = vpack.c.b16 %v1056, %v1056
  %v1121 = vpack.c.b16 %v1057, %v1057
  %v1122 = vpack.c.b16 %v1058, %v1058
  %v1123 = vpack.c.b16 %v1059, %v1059
  %v1124 = vpack.c.b16 %v1060, %v1060
  %v1125 = vpack.c.b16 %v1061, %v1061
  %v1126 = vpack.c.b16 %v1062, %v1062
  %v1127 = vpack.c.b16 %v1063, %v1063
  %v1128 = vpack.c.b16 %v1064, %v1064
  %v1129 = vpack.c.b16 %v1065, %v1065
  %v1130 = vpack.c.b16 %v1066, %v1066
  %v1131 = vpack.c.b16 %v1067, %v1067
  %v1132 = vpack.c.b16 %v1068, %v1068
  %v1133 = vpack.c.b16 %v1069, %v1069
  %v1134 = vpack.c.b16 %v1070, %v1070
  %v1135 = vpack.c.b16 %v1071, %v1071
  %v1136 = vpack.c.b16 %v1072, %v1072
  %v1137 = vpack.c.b16 %v1073, %v1073
  %v1138 = vpack.c.b16 %v1074, %v1074
  %v1139 = vpack.c.b16 %v1075, %v1075
  %v1140 = vpack.c.b16 %v1076, %v1076
  %v1141 = vpack.c.b16 %v1077, %v1077
  %v1142 = vpack.c.b16 %v1078, %v1078
  %v1143 = vpack.c.b16 %v1079, %v1079
  %v1144 = vpack.c.b16 %v1080, %v1080
  %v1145 = vpack.c.b16 %v1081, %v1081
  %v1146 = vpack.c.b16 %v1082, %v1082
  %v1147 = vpack.c.b16 %v1083, %v1083
  %v1148 = vpack.c.b16 %v1084, %v1084
  %v1149 = vpack.c.b16 %v1085, %v1085
  %v1150 = vpack.c.b16 %v1086, %v1086
  %v1151 = vpack.c.b16 %v1087, %v1087
  %v1152 = vpack.c.b16 %v1088, %v1088
  %v1153 = vpack.c.b16 %v1089, %v1089
  %v1154 = vpack.c.b16 %v1090, %v1090
  %v1155 = vpack.c.b16 %v1091, %v1091
  %v1156 = vpack.c.b16 %v1092, %v1092
  %v1157 = vpack.c.b16 %v1093, %v1093
  %v1158 = vpack.c.b16 %v1094, %v1094
  %v1159 = vpack.c.b16 %v1095, %v1095
  %v1160 = vpack.c.b16 %v1096, %v1096
  %v1161 = vpack.c.b16 %v1097, %v1097
  %v1162 = vpack.c.b16 %v1098, %v1098
  %v1163 = vpack.c.b16 %v1099, %v1099
  %v1164 = vpack.c.b16 %v1100, %v1100
  %v1165 = vpack.c.b16 %v1101, %v1101
  %v1166 = vpack.c.b16 %v1102, %v1102
  %v1167 = vpack.c.b16 %v1103, %v1103
  %v1168 = vpack.c.b16 %v1104, %v1104
  %v1169 = vpack.c.b16 %v1105, %v1105
  %v1170 = vpack.c.b16 %v1106, %v1106
  %v1171 = vpack.c.b16 %v1107, %v1107
  %v1172 = vpack.c.b16 %v1108, %v1108
  %v1173 = vpack.c.b16 %v1109, %v1109
  %v1174 = vpack.c.b16 %v1110, %v1110
  %v1175 = vpack.c.b16 %v1111, %v1111
  %v1176 = vpack.c.b16 %v1112, %v1112
  %v1177 = vpack.c.b16 %v1113, %v1113
  %v1178 = vpack.c.b16 %v1114, %v1114
  %v1179 = vpack.c.b16 %v1115, %v1115
  %v1180 = vpack.c.b16 %v1116, %v1116
  %v1181 = vpack.c.b16 %v1117, %v1117
  %vm1246 = vcmask 27648
  %1247 = vst.msk [vmem:[%s6] sm:$0xf] %vm1246, %v1118
  %1248 = vst.msk [vmem:[%s6 + $0x4] sm:$0xf] %vm1246, %v1119
  %1249 = vst.msk [vmem:[%s6 + $0x8] sm:$0xf] %vm1246, %v1120
  %1250 = vst.msk [vmem:[%s6 + $0xc] sm:$0xf] %vm1246, %v1121
  %1251 = vst.msk [vmem:[%s6 + $0x10] sm:$0xf] %vm1246, %v1122
  %1252 = vst.msk [vmem:[%s6 + $0x14] sm:$0xf] %vm1246, %v1123
  %1253 = vst.msk [vmem:[%s6 + $0x18] sm:$0xf] %vm1246, %v1124
  %1254 = vst.msk [vmem:[%s6 + $0x1c] sm:$0xf] %vm1246, %v1125
  %1255 = vst.msk [vmem:[%s6 + $0x20] sm:$0xf] %vm1246, %v1126
  %1256 = vst.msk [vmem:[%s6 + $0x24] sm:$0xf] %vm1246, %v1127
  %1257 = vst.msk [vmem:[%s6 + $0x28] sm:$0xf] %vm1246, %v1128
  %1258 = vst.msk [vmem:[%s6 + $0x2c] sm:$0xf] %vm1246, %v1129
  %1259 = vst.msk [vmem:[%s6 + $0x30] sm:$0xf] %vm1246, %v1130
  %1260 = vst.msk [vmem:[%s6 + $0x34] sm:$0xf] %vm1246, %v1131
  %1261 = vst.msk [vmem:[%s6 + $0x38] sm:$0xf] %vm1246, %v1132
  %1262 = vst.msk [vmem:[%s6 + $0x3c] sm:$0xf] %vm1246, %v1133
  %1263 = vst.msk [vmem:[%s6 + $0x40] sm:$0xf] %vm1246, %v1134
  %1264 = vst.msk [vmem:[%s6 + $0x44] sm:$0xf] %vm1246, %v1135
  %1265 = vst.msk [vmem:[%s6 + $0x48] sm:$0xf] %vm1246, %v1136
  %1266 = vst.msk [vmem:[%s6 + $0x4c] sm:$0xf] %vm1246, %v1137
  %1267 = vst.msk [vmem:[%s6 + $0x50] sm:$0xf] %vm1246, %v1138
  %1268 = vst.msk [vmem:[%s6 + $0x54] sm:$0xf] %vm1246, %v1139
  %1269 = vst.msk [vmem:[%s6 + $0x58] sm:$0xf] %vm1246, %v1140
  %1270 = vst.msk [vmem:[%s6 + $0x5c] sm:$0xf] %vm1246, %v1141
  %1271 = vst.msk [vmem:[%s6 + $0x60] sm:$0xf] %vm1246, %v1142
  %1272 = vst.msk [vmem:[%s6 + $0x64] sm:$0xf] %vm1246, %v1143
  %1273 = vst.msk [vmem:[%s6 + $0x68] sm:$0xf] %vm1246, %v1144
  %1274 = vst.msk [vmem:[%s6 + $0x6c] sm:$0xf] %vm1246, %v1145
  %1275 = vst.msk [vmem:[%s6 + $0x70] sm:$0xf] %vm1246, %v1146
  %1276 = vst.msk [vmem:[%s6 + $0x74] sm:$0xf] %vm1246, %v1147
  %1277 = vst.msk [vmem:[%s6 + $0x78] sm:$0xf] %vm1246, %v1148
  %1278 = vst.msk [vmem:[%s6 + $0x7c] sm:$0xf] %vm1246, %v1149
  %1279 = vst.msk [vmem:[%s6 + $0x80] sm:$0xf] %vm1246, %v1150
  %1280 = vst.msk [vmem:[%s6 + $0x84] sm:$0xf] %vm1246, %v1151
  %1281 = vst.msk [vmem:[%s6 + $0x88] sm:$0xf] %vm1246, %v1152
  %1282 = vst.msk [vmem:[%s6 + $0x8c] sm:$0xf] %vm1246, %v1153
  %1283 = vst.msk [vmem:[%s6 + $0x90] sm:$0xf] %vm1246, %v1154
  %1284 = vst.msk [vmem:[%s6 + $0x94] sm:$0xf] %vm1246, %v1155
  %1285 = vst.msk [vmem:[%s6 + $0x98] sm:$0xf] %vm1246, %v1156
  %1286 = vst.msk [vmem:[%s6 + $0x9c] sm:$0xf] %vm1246, %v1157
  %1287 = vst.msk [vmem:[%s6 + $0xa0] sm:$0xf] %vm1246, %v1158
  %1288 = vst.msk [vmem:[%s6 + $0xa4] sm:$0xf] %vm1246, %v1159
  %1289 = vst.msk [vmem:[%s6 + $0xa8] sm:$0xf] %vm1246, %v1160
  %1290 = vst.msk [vmem:[%s6 + $0xac] sm:$0xf] %vm1246, %v1161
  %1291 = vst.msk [vmem:[%s6 + $0xb0] sm:$0xf] %vm1246, %v1162
  %1292 = vst.msk [vmem:[%s6 + $0xb4] sm:$0xf] %vm1246, %v1163
  %1293 = vst.msk [vmem:[%s6 + $0xb8] sm:$0xf] %vm1246, %v1164
  %1294 = vst.msk [vmem:[%s6 + $0xbc] sm:$0xf] %vm1246, %v1165
  %1295 = vst.msk [vmem:[%s6 + $0xc0] sm:$0xf] %vm1246, %v1166
  %1296 = vst.msk [vmem:[%s6 + $0xc4] sm:$0xf] %vm1246, %v1167
  %1297 = vst.msk [vmem:[%s6 + $0xc8] sm:$0xf] %vm1246, %v1168
  %1298 = vst.msk [vmem:[%s6 + $0xcc] sm:$0xf] %vm1246, %v1169
  %1299 = vst.msk [vmem:[%s6 + $0xd0] sm:$0xf] %vm1246, %v1170
  %1300 = vst.msk [vmem:[%s6 + $0xd4] sm:$0xf] %vm1246, %v1171
  %1301 = vst.msk [vmem:[%s6 + $0xd8] sm:$0xf] %vm1246, %v1172
  %1302 = vst.msk [vmem:[%s6 + $0xdc] sm:$0xf] %vm1246, %v1173
  %1303 = vst.msk [vmem:[%s6 + $0xe0] sm:$0xf] %vm1246, %v1174
  %1304 = vst.msk [vmem:[%s6 + $0xe4] sm:$0xf] %vm1246, %v1175
  %1305 = vst.msk [vmem:[%s6 + $0xe8] sm:$0xf] %vm1246, %v1176
  %1306 = vst.msk [vmem:[%s6 + $0xec] sm:$0xf] %vm1246, %v1177
  %1307 = vst.msk [vmem:[%s6 + $0xf0] sm:$0xf] %vm1246, %v1178
  %1308 = vst.msk [vmem:[%s6 + $0xf4] sm:$0xf] %vm1246, %v1179
  %1309 = vst.msk [vmem:[%s6 + $0xf8] sm:$0xf] %vm1246, %v1180
  %1310 = vst.msk [vmem:[%s6 + $0xfc] sm:$0xf] %vm1246, %v1181
  // Predicated region
  $region26: #{preact_bottleneck_pallas.2} parent=0 // pred_check
    _
  $region27: #{preact_bottleneck_pallas.2} parent=0 // pred_check_branch
    %1312 = sbr.rel (0) target = $region29
  $region28: #{preact_bottleneck_pallas.2} parent=0 // pred_region
    _
  $region29: #{preact_bottleneck_pallas.2} parent=0 // pred_fallthru
    _
  // Predicated region
  $region30: #{preact_bottleneck_pallas.2} parent=0 // pred_check
    _
  $region31: #{preact_bottleneck_pallas.2} parent=0 // pred_check_branch
    %1314 = sbr.rel (0) target = $region33
  $region32: #{preact_bottleneck_pallas.2} parent=0 // pred_region
    _
  $region33: #{preact_bottleneck_pallas.2} parent=0 // pred_fallthru
    _

// kernel: preact_bottleneck_pallas.3
$region0: #{preact_bottleneck_pallas.3}
  #allocation0 [shape = 'u32[]', space=smem, size = 0x4, offset = 0x4, fixed_abs, tag = 'smem constant byte address 0x4 - core index']
  #allocation1 [shape = 'u32[144,128]{1,0:T(1,128)}', space=vmem, size = 0x12000, scoped, tag = 'internal scratch']
  #allocation2 [shape = 'bf16[18,18,4]{2,1,0:T(8,128)(2,1)}', space=vmem, size = 0x1b000, scoped, tag = 'scratch operand']
  %s0 = inlined_call_operand.vmem [shape: bf16[2,16,16,4], index: 0, kind: input, shape index: {}]
  %s1 = inlined_call_operand.vmem [shape: bf16[2,256,16], index: 1, kind: input, shape index: {}]
  %s2 = inlined_call_operand.vmem [shape: bf16[9,4,4], index: 2, kind: input, shape index: {}]
  %s3 = inlined_call_operand.vmem [shape: bf16[4,16], index: 3, kind: input, shape index: {}]
  %s4 = inlined_call_operand.vmem [shape: f32[1,4], index: 4, kind: input, shape index: {}]
  %s5 = inlined_call_operand.vmem [shape: f32[1,4], index: 5, kind: input, shape index: {}]
  %s6 = inlined_call_operand.vmem [shape: bf16[2,256,16], index: 6, kind: output, shape index: {}]
  %s7 = sld [smem:[#allocation0]]
  $region57: #{preact_bottleneck_pallas.3} parent=0
    _
  %s9 = ssub.s32 1, %s7
  %s10 = scalar_select 0, %s9, %s7
  loop: start=0, step=1, limit=4
  $region2: #{preact_bottleneck_pallas.3} parent=0 // loop_pre_header
    _
  $region3: #{preact_bottleneck_pallas.3} parent=0 // loop_header
    %s12 = sphi 0, %s16
    %p13 = scmp.ge.s32.totalorder %s12, 4
    %s22 = sphi 0, %s24
    %s25 = sphi 0, %s22
    %s26 = sphi 0, %s25
    %s42 = sphi 0, %s26
    %s48 = sphi 0, %s50
    %s51 = sphi 0, %s48
    %s52 = sphi 0, %s51
    %s68 = sphi 0, %s52
    %s72 = sphi 0, %s72
    %s74 = sphi 0, %s72
    %s75 = sphi 0, %s74
    %s89 = sphi 0, %s75
    %s93 = sphi 0, %s93
    %s95 = sphi 0, %s93
    %s96 = sphi 0, %s95
    %s110 = sphi 0, %s96
    %s114 = sphi 0, %s114
    %s116 = sphi 0, %s114
    %s117 = sphi 0, %s116
    %s131 = sphi 0, %s117
    %s135 = sphi 0, %s135
    %s137 = sphi 0, %s135
    %s138 = sphi 0, %s137
    %s152 = sphi 0, %s138
    %s158 = sphi 0, %s160
    %s161 = sphi 0, %s158
    %s162 = sphi 0, %s161
    %s178 = sphi 0, %s162
  $region4: #{preact_bottleneck_pallas.3} parent=0 // loop_header_branch
    %15 = sbr.rel (%p13) target = $region8
  $region5: #{preact_bottleneck_pallas.3} parent=0 // loop_body
    %s17 = ssub.s32 %s12, 1
    %s18 = ssub.s32 %s12, 2
    %s19 = sadd.s32 %s12, 1
    %s20 = ssub.s32 %s12, %s19
    %p21 = scmp.eq.s32.totalorder %s20, 0
    %s23 = sadd.s32 %s22, 1
    %s24 = scalar_select %p21, %s22, %s23
    %p27 = pneg %p21
    %p28 = scmp.eq.s32.totalorder %s12, 1
    %p29 = por %p27, %p28
    %p30 = scmp.ne.s32.totalorder %s22, %s25
    %p31 = scmp.eq.s32.totalorder %s12, 0
    %p32 = por %p30, %p31
    %p33 = scmp.ne.s32.totalorder %s22, %s25
    %p34 = scmp.eq.s32.totalorder %s17, 1
    %p35 = por %p33, %p34
    %p36 = scmp.ne.s32.totalorder %s25, %s26
    %p37 = scmp.eq.s32.totalorder %s17, 0
    %p38 = por %p36, %p37
    %p39 = scmp.ne.s32.totalorder %s25, %s26
    %p40 = scmp.eq.s32.totalorder %s18, 1
    %p41 = por %p39, %p40
    %p43 = scmp.ne.s32.totalorder %s26, %s42
    %p44 = scmp.eq.s32.totalorder %s18, 0
    %p45 = por %p43, %p44
    %s46 = ssub.s32 %s12, %s19
    %p47 = scmp.eq.s32.totalorder %s46, 0
    %s49 = sadd.s32 %s48, 1
    %s50 = scalar_select %p47, %s48, %s49
    %p53 = pneg %p47
    %p54 = scmp.eq.s32.totalorder %s12, 1
    %p55 = por %p53, %p54
    %p56 = scmp.ne.s32.totalorder %s48, %s51
    %p57 = scmp.eq.s32.totalorder %s12, 0
    %p58 = por %p56, %p57
    %p59 = scmp.ne.s32.totalorder %s48, %s51
    %p60 = scmp.eq.s32.totalorder %s17, 1
    %p61 = por %p59, %p60
    %p62 = scmp.ne.s32.totalorder %s51, %s52
    %p63 = scmp.eq.s32.totalorder %s17, 0
    %p64 = por %p62, %p63
    %p65 = scmp.ne.s32.totalorder %s51, %s52
    %p66 = scmp.eq.s32.totalorder %s18, 1
    %p67 = por %p65, %p66
    %p69 = scmp.ne.s32.totalorder %s52, %s68
    %p70 = scmp.eq.s32.totalorder %s18, 0
    %p71 = por %p69, %p70
    %s73 = sadd.s32 %s72, 1
    %p76 = scmp.eq.s32.totalorder %s12, 1
    %p77 = scmp.ne.s32.totalorder %s72, %s74
    %p78 = scmp.eq.s32.totalorder %s12, 0
    %p79 = por %p77, %p78
    %p80 = scmp.ne.s32.totalorder %s72, %s74
    %p81 = scmp.eq.s32.totalorder %s17, 1
    %p82 = por %p80, %p81
    %p83 = scmp.ne.s32.totalorder %s74, %s75
    %p84 = scmp.eq.s32.totalorder %s17, 0
    %p85 = por %p83, %p84
    %p86 = scmp.ne.s32.totalorder %s74, %s75
    %p87 = scmp.eq.s32.totalorder %s18, 1
    %p88 = por %p86, %p87
    %p90 = scmp.ne.s32.totalorder %s75, %s89
    %p91 = scmp.eq.s32.totalorder %s18, 0
    %p92 = por %p90, %p91
    %s94 = sadd.s32 %s93, 1
    %p97 = scmp.eq.s32.totalorder %s12, 1
    %p98 = scmp.ne.s32.totalorder %s93, %s95
    %p99 = scmp.eq.s32.totalorder %s12, 0
    %p100 = por %p98, %p99
    %p101 = scmp.ne.s32.totalorder %s93, %s95
    %p102 = scmp.eq.s32.totalorder %s17, 1
    %p103 = por %p101, %p102
    %p104 = scmp.ne.s32.totalorder %s95, %s96
    %p105 = scmp.eq.s32.totalorder %s17, 0
    %p106 = por %p104, %p105
    %p107 = scmp.ne.s32.totalorder %s95, %s96
    %p108 = scmp.eq.s32.totalorder %s18, 1
    %p109 = por %p107, %p108
    %p111 = scmp.ne.s32.totalorder %s96, %s110
    %p112 = scmp.eq.s32.totalorder %s18, 0
    %p113 = por %p111, %p112
    %s115 = sadd.s32 %s114, 1
    %p118 = scmp.eq.s32.totalorder %s12, 1
    %p119 = scmp.ne.s32.totalorder %s114, %s116
    %p120 = scmp.eq.s32.totalorder %s12, 0
    %p121 = por %p119, %p120
    %p122 = scmp.ne.s32.totalorder %s114, %s116
    %p123 = scmp.eq.s32.totalorder %s17, 1
    %p124 = por %p122, %p123
    %p125 = scmp.ne.s32.totalorder %s116, %s117
    %p126 = scmp.eq.s32.totalorder %s17, 0
    %p127 = por %p125, %p126
    %p128 = scmp.ne.s32.totalorder %s116, %s117
    %p129 = scmp.eq.s32.totalorder %s18, 1
    %p130 = por %p128, %p129
    %p132 = scmp.ne.s32.totalorder %s117, %s131
    %p133 = scmp.eq.s32.totalorder %s18, 0
    %p134 = por %p132, %p133
    %s136 = sadd.s32 %s135, 1
    %p139 = scmp.eq.s32.totalorder %s12, 1
    %p140 = scmp.ne.s32.totalorder %s135, %s137
    %p141 = scmp.eq.s32.totalorder %s12, 0
    %p142 = por %p140, %p141
    %p143 = scmp.ne.s32.totalorder %s135, %s137
    %p144 = scmp.eq.s32.totalorder %s17, 1
    %p145 = por %p143, %p144
    %p146 = scmp.ne.s32.totalorder %s137, %s138
    %p147 = scmp.eq.s32.totalorder %s17, 0
    %p148 = por %p146, %p147
    %p149 = scmp.ne.s32.totalorder %s137, %s138
    %p150 = scmp.eq.s32.totalorder %s18, 1
    %p151 = por %p149, %p150
    %p153 = scmp.ne.s32.totalorder %s138, %s152
    %p154 = scmp.eq.s32.totalorder %s18, 0
    %p155 = por %p153, %p154
    %s156 = ssub.s32 %s12, %s19
    %p157 = scmp.eq.s32.totalorder %s156, 0
    %s159 = sadd.s32 %s158, 1
    %s160 = scalar_select %p157, %s158, %s159
    %p163 = pneg %p157
    %p164 = scmp.eq.s32.totalorder %s12, 1
    %p165 = por %p163, %p164
    %p166 = scmp.ne.s32.totalorder %s158, %s161
    %p167 = scmp.eq.s32.totalorder %s12, 0
    %p168 = por %p166, %p167
    %p169 = scmp.ne.s32.totalorder %s158, %s161
    %p170 = scmp.eq.s32.totalorder %s17, 1
    %p171 = por %p169, %p170
    %p172 = scmp.ne.s32.totalorder %s161, %s162
    %p173 = scmp.eq.s32.totalorder %s17, 0
    %p174 = por %p172, %p173
    %p175 = scmp.ne.s32.totalorder %s161, %s162
    %p176 = scmp.eq.s32.totalorder %s18, 1
    %p177 = por %p175, %p176
    %p179 = scmp.ne.s32.totalorder %s162, %s178
    %p180 = scmp.eq.s32.totalorder %s18, 0
    %p181 = por %p179, %p180
    %p182 = scmp.le.s32.totalorder 1, %s12
    %p183 = scmp.lt.s32.totalorder %s12, 3
    %p184 = pnand %p182, %p183
    %p185 = pneg %p184
    // Predicated region
    $region9: #{preact_bottleneck_pallas.3} parent=5 // pred_check
      _
    $region10: #{preact_bottleneck_pallas.3} parent=5 // pred_check_branch
      %187 = sbr.rel (%p184) target = $region12
    $region11: #{preact_bottleneck_pallas.3} parent=5 // pred_region
      %s188 = ssub.s32 %s12, 1
      // Predicated region
      $region13: #{preact_bottleneck_pallas.3} parent=11 // pred_check
        %p189 = pneg %p85
      $region14: #{preact_bottleneck_pallas.3} parent=11 // pred_check_branch
        %191 = sbr.rel (%p189) target = $region16
      $region15: #{preact_bottleneck_pallas.3} parent=11 // pred_region
        _
      $region16: #{preact_bottleneck_pallas.3} parent=11 // pred_fallthru
        _
      // Predicated region
      $region17: #{preact_bottleneck_pallas.3} parent=11 // pred_check
        %p192 = pneg %p106
      $region18: #{preact_bottleneck_pallas.3} parent=11 // pred_check_branch
        %194 = sbr.rel (%p192) target = $region20
      $region19: #{preact_bottleneck_pallas.3} parent=11 // pred_region
        _
      $region20: #{preact_bottleneck_pallas.3} parent=11 // pred_fallthru
        _
      // Predicated region
      $region21: #{preact_bottleneck_pallas.3} parent=11 // pred_check
        %p195 = pneg %p127
      $region22: #{preact_bottleneck_pallas.3} parent=11 // pred_check_branch
        %197 = sbr.rel (%p195) target = $region24
      $region23: #{preact_bottleneck_pallas.3} parent=11 // pred_region
        _
      $region24: #{preact_bottleneck_pallas.3} parent=11 // pred_fallthru
        _
      // Predicated region
      $region25: #{preact_bottleneck_pallas.3} parent=11 // pred_check
        %p198 = pneg %p148
      $region26: #{preact_bottleneck_pallas.3} parent=11 // pred_check_branch
        %200 = sbr.rel (%p198) target = $region28
      $region27: #{preact_bottleneck_pallas.3} parent=11 // pred_region
        _
      $region28: #{preact_bottleneck_pallas.3} parent=11 // pred_fallthru
        _
    $region12: #{preact_bottleneck_pallas.3} parent=5 // pred_fallthru
      _
    %p201 = scmp.lt.s32.totalorder %s12, 2
    // Predicated region
    $region29: #{preact_bottleneck_pallas.3} parent=5 // pred_check
      %p202 = pneg %p201
    $region30: #{preact_bottleneck_pallas.3} parent=5 // pred_check_branch
      %204 = sbr.rel (%p202) target = $region32
    $region31: #{preact_bottleneck_pallas.3} parent=5 // pred_region
      // Predicated region
      $region33: #{preact_bottleneck_pallas.3} parent=31 // pred_check
        %p205 = pneg %p32
      $region34: #{preact_bottleneck_pallas.3} parent=31 // pred_check_branch
        %207 = sbr.rel (%p205) target = $region36
      $region35: #{preact_bottleneck_pallas.3} parent=31 // pred_region
        %p208 = scmp.lt.s32.totalorder %s12, 1
        %s209 = scalar_select %p208, %s12, 1
        %s210 = smul.addr %s209, 32
        %s211 = smul.addr %s210, 4
        %s212 = scalar_lea.vmem %s0, %s211
      $region36: #{preact_bottleneck_pallas.3} parent=31 // pred_fallthru
        _
      // Predicated region
      $region37: #{preact_bottleneck_pallas.3} parent=31 // pred_check
        %p213 = pneg %p58
      $region38: #{preact_bottleneck_pallas.3} parent=31 // pred_check_branch
        %215 = sbr.rel (%p213) target = $region40
      $region39: #{preact_bottleneck_pallas.3} parent=31 // pred_region
        %p216 = scmp.lt.s32.totalorder %s12, 1
        %s217 = scalar_select %p216, %s12, 1
        %s218 = smul.addr %s217, 32
        %s219 = smul.addr %s218, 4
        %s220 = scalar_lea.vmem %s1, %s219
      $region40: #{preact_bottleneck_pallas.3} parent=31 // pred_fallthru
        _
    $region32: #{preact_bottleneck_pallas.3} parent=5 // pred_fallthru
      _
    %p221 = scmp.le.s32.totalorder 1, %s12
    %p222 = scmp.lt.s32.totalorder %s12, 3
    %p223 = pnand %p221, %p222
    %p224 = pneg %p223
    // Predicated region
    $region41: #{preact_bottleneck_pallas.3} parent=5 // pred_check
      _
    $region42: #{preact_bottleneck_pallas.3} parent=5 // pred_check_branch
      %226 = sbr.rel (%p223) target = $region44
    $region43: #{preact_bottleneck_pallas.3} parent=5 // pred_region
      %s227 = ssub.s32 %s12, 1
      %p228 = scmp.lt.s32.totalorder %s17, 1
      %s229 = scalar_select %p228, %s17, 1
      %s230 = smul.addr %s229, 32
      %s231 = smul.addr %s230, 4
      %s232 = scalar_lea.vmem %s0, %s231
      %p233 = pneg %p38
      %p234 = pneg %p35
      %p235 = scmp.lt.s32.totalorder %s17, 1
      %s236 = scalar_select %p235, %s17, 1
      %s237 = smul.addr %s236, 32
      %s238 = smul.addr %s237, 4
      %s239 = scalar_lea.vmem %s1, %s238
      %p240 = pneg %p64
      %p241 = pneg %p61
      %p242 = pneg %p85
      %p243 = pneg %p82
      %p244 = pneg %p106
      %p245 = pneg %p103
      %p246 = pneg %p127
      %p247 = pneg %p124
      %p248 = pneg %p148
      %p249 = pneg %p145
      %p250 = pneg %p174
      %p251 = pneg %p171
      %p252 = scmp.lt.s32.totalorder %s17, 1
      %s253 = scalar_select %p252, %s17, 1
      %s254 = smul.addr %s253, 32
      %s255 = smul.addr %s254, 4
      %s256 = scalar_lea.vmem %s6, %s255
      %p257 = scmp.lt.s32.totalorder %s17, 1
      %s258 = scalar_select %p257, %s17, 1
      %s259 = smul.addr %s258, 32
      %s260 = smul.addr %s259, 4
      %s261 = scalar_lea.vmem %s0, %s260
      %p262 = scmp.lt.s32.totalorder %s17, 1
      %s263 = scalar_select %p262, %s17, 1
      %s264 = smul.addr %s263, 32
      %s265 = smul.addr %s264, 4
      %s266 = scalar_lea.vmem %s1, %s265
      %p267 = scmp.lt.s32.totalorder %s17, 1
      %s268 = scalar_select %p267, %s17, 1
      %s269 = smul.addr %s268, 32
      %s270 = smul.addr %s269, 4
      %s271 = scalar_lea.vmem %s6, %s270
      %vm273 = vcmask 27648
      %274 = vst.msk [vmem:[#allocation2] sm:$0xf] %vm273, 0
      %275 = vst.msk [vmem:[#allocation2 + $0x4] sm:$0xf] %vm273, 0
      %vm276 = vcmask 24576
      %277 = vst.msk [vmem:[#allocation2 + $0x8] sm:$0x1] %vm276, 0
      %278 = vst.msk [vmem:[#allocation2 + $0xc] sm:$0xf] %vm273, 0
      %279 = vst.msk [vmem:[#allocation2 + $0x10] sm:$0xf] %vm273, 0
      %280 = vst.msk [vmem:[#allocation2 + $0x14] sm:$0x1] %vm276, 0
      %281 = vst.msk [vmem:[#allocation2 + $0x18] sm:$0xf] %vm273, 0
      %282 = vst.msk [vmem:[#allocation2 + $0x1c] sm:$0xf] %vm273, 0
      %283 = vst.msk [vmem:[#allocation2 + $0x20] sm:$0x1] %vm276, 0
      %284 = vst.msk [vmem:[#allocation2 + $0x24] sm:$0xf] %vm273, 0
      %285 = vst.msk [vmem:[#allocation2 + $0x28] sm:$0xf] %vm273, 0
      %286 = vst.msk [vmem:[#allocation2 + $0x2c] sm:$0x1] %vm276, 0
      %287 = vst.msk [vmem:[#allocation2 + $0x30] sm:$0xf] %vm273, 0
      %288 = vst.msk [vmem:[#allocation2 + $0x34] sm:$0xf] %vm273, 0
      %289 = vst.msk [vmem:[#allocation2 + $0x38] sm:$0x1] %vm276, 0
      %290 = vst.msk [vmem:[#allocation2 + $0x3c] sm:$0xf] %vm273, 0
      %291 = vst.msk [vmem:[#allocation2 + $0x40] sm:$0xf] %vm273, 0
      %292 = vst.msk [vmem:[#allocation2 + $0x44] sm:$0x1] %vm276, 0
      %293 = vst.msk [vmem:[#allocation2 + $0x48] sm:$0xf] %vm273, 0
      %294 = vst.msk [vmem:[#allocation2 + $0x4c] sm:$0xf] %vm273, 0
      %295 = vst.msk [vmem:[#allocation2 + $0x50] sm:$0x1] %vm276, 0
      %296 = vst.msk [vmem:[#allocation2 + $0x54] sm:$0xf] %vm273, 0
      %297 = vst.msk [vmem:[#allocation2 + $0x58] sm:$0xf] %vm273, 0
      %298 = vst.msk [vmem:[#allocation2 + $0x5c] sm:$0x1] %vm276, 0
      %299 = vst.msk [vmem:[#allocation2 + $0x60] sm:$0xf] %vm273, 0
      %300 = vst.msk [vmem:[#allocation2 + $0x64] sm:$0xf] %vm273, 0
      %301 = vst.msk [vmem:[#allocation2 + $0x68] sm:$0x1] %vm276, 0
      %302 = vst.msk [vmem:[#allocation2 + $0x6c] sm:$0xf] %vm273, 0
      %303 = vst.msk [vmem:[#allocation2 + $0x70] sm:$0xf] %vm273, 0
      %304 = vst.msk [vmem:[#allocation2 + $0x74] sm:$0x1] %vm276, 0
      %305 = vst.msk [vmem:[#allocation2 + $0x78] sm:$0xf] %vm273, 0
      %306 = vst.msk [vmem:[#allocation2 + $0x7c] sm:$0xf] %vm273, 0
      %307 = vst.msk [vmem:[#allocation2 + $0x80] sm:$0x1] %vm276, 0
      %308 = vst.msk [vmem:[#allocation2 + $0x84] sm:$0xf] %vm273, 0
      %309 = vst.msk [vmem:[#allocation2 + $0x88] sm:$0xf] %vm273, 0
      %310 = vst.msk [vmem:[#allocation2 + $0x8c] sm:$0x1] %vm276, 0
      %311 = vst.msk [vmem:[#allocation2 + $0x90] sm:$0xf] %vm273, 0
      %312 = vst.msk [vmem:[#allocation2 + $0x94] sm:$0xf] %vm273, 0
      %313 = vst.msk [vmem:[#allocation2 + $0x98] sm:$0x1] %vm276, 0
      %314 = vst.msk [vmem:[#allocation2 + $0x9c] sm:$0xf] %vm273, 0
      %315 = vst.msk [vmem:[#allocation2 + $0xa0] sm:$0xf] %vm273, 0
      %316 = vst.msk [vmem:[#allocation2 + $0xa4] sm:$0x1] %vm276, 0
      %317 = vst.msk [vmem:[#allocation2 + $0xa8] sm:$0xf] %vm273, 0
      %318 = vst.msk [vmem:[#allocation2 + $0xac] sm:$0xf] %vm273, 0
      %319 = vst.msk [vmem:[#allocation2 + $0xb0] sm:$0x1] %vm276, 0
      %320 = vst.msk [vmem:[#allocation2 + $0xb4] sm:$0xf] %vm273, 0
      %321 = vst.msk [vmem:[#allocation2 + $0xb8] sm:$0xf] %vm273, 0
      %322 = vst.msk [vmem:[#allocation2 + $0xbc] sm:$0x1] %vm276, 0
      %323 = vst.msk [vmem:[#allocation2 + $0xc0] sm:$0xf] %vm273, 0
      %324 = vst.msk [vmem:[#allocation2 + $0xc4] sm:$0xf] %vm273, 0
      %325 = vst.msk [vmem:[#allocation2 + $0xc8] sm:$0x1] %vm276, 0
      %326 = vst.msk [vmem:[#allocation2 + $0xcc] sm:$0xf] %vm273, 0
      %327 = vst.msk [vmem:[#allocation2 + $0xd0] sm:$0xf] %vm273, 0
      %328 = vst.msk [vmem:[#allocation2 + $0xd4] sm:$0x1] %vm276, 0
      %v329 = vld [vmem:[%s261] sm:$0xf]
      %v330 = vld [vmem:[%s261 + $0x4] sm:$0xf]
      %v331 = vld [vmem:[%s261 + $0x8] sm:$0xf]
      %v332 = vld [vmem:[%s261 + $0xc] sm:$0xf]
      %v333 = vld [vmem:[%s261 + $0x10] sm:$0xf]
      %v334 = vld [vmem:[%s261 + $0x14] sm:$0xf]
      %v335 = vld [vmem:[%s261 + $0x18] sm:$0xf]
      %v336 = vld [vmem:[%s261 + $0x1c] sm:$0xf]
      %v337 = vld [vmem:[%s261 + $0x20] sm:$0xf]
      %v338 = vld [vmem:[%s261 + $0x24] sm:$0xf]
      %v339 = vld [vmem:[%s261 + $0x28] sm:$0xf]
      %v340 = vld [vmem:[%s261 + $0x2c] sm:$0xf]
      %v341 = vld [vmem:[%s261 + $0x30] sm:$0xf]
      %v342 = vld [vmem:[%s261 + $0x34] sm:$0xf]
      %v343 = vld [vmem:[%s261 + $0x38] sm:$0xf]
      %v344 = vld [vmem:[%s261 + $0x3c] sm:$0xf]
      %v345 = vld [vmem:[%s261 + $0x40] sm:$0xf]
      %v346 = vld [vmem:[%s261 + $0x44] sm:$0xf]
      %v347 = vld [vmem:[%s261 + $0x48] sm:$0xf]
      %v348 = vld [vmem:[%s261 + $0x4c] sm:$0xf]
      %v349 = vld [vmem:[%s261 + $0x50] sm:$0xf]
      %v350 = vld [vmem:[%s261 + $0x54] sm:$0xf]
      %v351 = vld [vmem:[%s261 + $0x58] sm:$0xf]
      %v352 = vld [vmem:[%s261 + $0x5c] sm:$0xf]
      %v353 = vld [vmem:[%s261 + $0x60] sm:$0xf]
      %v354 = vld [vmem:[%s261 + $0x64] sm:$0xf]
      %v355 = vld [vmem:[%s261 + $0x68] sm:$0xf]
      %v356 = vld [vmem:[%s261 + $0x6c] sm:$0xf]
      %v357 = vld [vmem:[%s261 + $0x70] sm:$0xf]
      %v358 = vld [vmem:[%s261 + $0x74] sm:$0xf]
      %v359 = vld [vmem:[%s261 + $0x78] sm:$0xf]
      %v360 = vld [vmem:[%s261 + $0x7c] sm:$0xf]
      %vm361 = vsmask.f32 256
      %vm362 = vsmask.f32 4368
      %vm363 = vmor %vm361, %vm362
      %v365 = vshrl.u32 %v329, 16
      %v367 = vrot.slane %v365, 7
      %v368 = vshll.u32 %v329, 16
      %v370 = vor.u32 %v367, %v368
      %v371 = vrot.slane %v367, 4
      %v373 = vshrl.u32 %v330, 16
      %v375 = vrot.slane %v373, 7
      %v376 = vshll.u32 %v330, 16
      %v378 = vor.u32 %v375, %v376
      %v379 = vsel %vm363, %v371, %v378
      %v380 = vrot.slane %v375, 4
      %v382 = vshrl.u32 %v331, 16
      %v384 = vrot.slane %v382, 7
      %v385 = vshll.u32 %v331, 16
      %v387 = vor.u32 %v384, %v385
      %v388 = vrot.slane %v384, 4
      %v390 = vshrl.u32 %v332, 16
      %v392 = vrot.slane %v390, 7
      %v393 = vshll.u32 %v332, 16
      %v395 = vor.u32 %v392, %v393
      %v396 = vsel %vm363, %v388, %v395
      %v397 = vrot.slane %v392, 4
      %v399 = vshrl.u32 %v333, 16
      %v401 = vrot.slane %v399, 7
      %v402 = vshll.u32 %v333, 16
      %v404 = vor.u32 %v401, %v402
      %v405 = vrot.slane %v401, 4
      %v407 = vshrl.u32 %v334, 16
      %v409 = vrot.slane %v407, 7
      %v410 = vshll.u32 %v334, 16
      %v412 = vor.u32 %v409, %v410
      %v413 = vsel %vm363, %v405, %v412
      %v414 = vrot.slane %v409, 4
      %v416 = vshrl.u32 %v335, 16
      %v418 = vrot.slane %v416, 7
      %v419 = vshll.u32 %v335, 16
      %v421 = vor.u32 %v418, %v419
      %v422 = vrot.slane %v418, 4
      %v424 = vshrl.u32 %v336, 16
      %v426 = vrot.slane %v424, 7
      %v427 = vshll.u32 %v336, 16
      %v429 = vor.u32 %v426, %v427
      %v430 = vsel %vm363, %v422, %v429
      %v431 = vrot.slane %v426, 4
      %v433 = vshrl.u32 %v337, 16
      %v435 = vrot.slane %v433, 7
      %v436 = vshll.u32 %v337, 16
      %v438 = vor.u32 %v435, %v436
      %v439 = vrot.slane %v435, 4
      %v441 = vshrl.u32 %v338, 16
      %v443 = vrot.slane %v441, 7
      %v444 = vshll.u32 %v338, 16
      %v446 = vor.u32 %v443, %v444
      %v447 = vsel %vm363, %v439, %v446
      %v448 = vrot.slane %v443, 4
      %v450 = vshrl.u32 %v339, 16
      %v452 = vrot.slane %v450, 7
      %v453 = vshll.u32 %v339, 16
      %v455 = vor.u32 %v452, %v453
      %v456 = vrot.slane %v452, 4
      %v458 = vshrl.u32 %v340, 16
      %v460 = vrot.slane %v458, 7
      %v461 = vshll.u32 %v340, 16
      %v463 = vor.u32 %v460, %v461
      %v464 = vsel %vm363, %v456, %v463
      %v465 = vrot.slane %v460, 4
      %v467 = vshrl.u32 %v341, 16
      %v469 = vrot.slane %v467, 7
      %v470 = vshll.u32 %v341, 16
      %v472 = vor.u32 %v469, %v470
      %v473 = vrot.slane %v469, 4
      %v475 = vshrl.u32 %v342, 16
      %v477 = vrot.slane %v475, 7
      %v478 = vshll.u32 %v342, 16
      %v480 = vor.u32 %v477, %v478
      %v481 = vsel %vm363, %v473, %v480
      %v482 = vrot.slane %v477, 4
      %v484 = vshrl.u32 %v343, 16
      %v486 = vrot.slane %v484, 7
      %v487 = vshll.u32 %v343, 16
      %v489 = vor.u32 %v486, %v487
      %v490 = vrot.slane %v486, 4
      %v492 = vshrl.u32 %v344, 16
      %v494 = vrot.slane %v492, 7
      %v495 = vshll.u32 %v344, 16
      %v497 = vor.u32 %v494, %v495
      %v498 = vsel %vm363, %v490, %v497
      %v499 = vrot.slane %v494, 4
      %v501 = vshrl.u32 %v345, 16
      %v503 = vrot.slane %v501, 7
      %v504 = vshll.u32 %v345, 16
      %v506 = vor.u32 %v503, %v504
      %v507 = vrot.slane %v503, 4
      %v509 = vshrl.u32 %v346, 16
      %v511 = vrot.slane %v509, 7
      %v512 = vshll.u32 %v346, 16
      %v514 = vor.u32 %v511, %v512
      %v515 = vsel %vm363, %v507, %v514
      %v516 = vrot.slane %v511, 4
      %v518 = vshrl.u32 %v347, 16
      %v520 = vrot.slane %v518, 7
      %v521 = vshll.u32 %v347, 16
      %v523 = vor.u32 %v520, %v521
      %v524 = vrot.slane %v520, 4
      %v526 = vshrl.u32 %v348, 16
      %v528 = vrot.slane %v526, 7
      %v529 = vshll.u32 %v348, 16
      %v531 = vor.u32 %v528, %v529
      %v532 = vsel %vm363, %v524, %v531
      %v533 = vrot.slane %v528, 4
      %v535 = vshrl.u32 %v349, 16
      %v537 = vrot.slane %v535, 7
      %v538 = vshll.u32 %v349, 16
      %v540 = vor.u32 %v537, %v538
      %v541 = vrot.slane %v537, 4
      %v543 = vshrl.u32 %v350, 16
      %v545 = vrot.slane %v543, 7
      %v546 = vshll.u32 %v350, 16
      %v548 = vor.u32 %v545, %v546
      %v549 = vsel %vm363, %v541, %v548
      %v550 = vrot.slane %v545, 4
      %v552 = vshrl.u32 %v351, 16
      %v554 = vrot.slane %v552, 7
      %v555 = vshll.u32 %v351, 16
      %v557 = vor.u32 %v554, %v555
      %v558 = vrot.slane %v554, 4
      %v560 = vshrl.u32 %v352, 16
      %v562 = vrot.slane %v560, 7
      %v563 = vshll.u32 %v352, 16
      %v565 = vor.u32 %v562, %v563
      %v566 = vsel %vm363, %v558, %v565
      %v567 = vrot.slane %v562, 4
      %v569 = vshrl.u32 %v353, 16
      %v571 = vrot.slane %v569, 7
      %v572 = vshll.u32 %v353, 16
      %v574 = vor.u32 %v571, %v572
      %v575 = vrot.slane %v571, 4
      %v577 = vshrl.u32 %v354, 16
      %v579 = vrot.slane %v577, 7
      %v580 = vshll.u32 %v354, 16
      %v582 = vor.u32 %v579, %v580
      %v583 = vsel %vm363, %v575, %v582
      %v584 = vrot.slane %v579, 4
      %v586 = vshrl.u32 %v355, 16
      %v588 = vrot.slane %v586, 7
      %v589 = vshll.u32 %v355, 16
      %v591 = vor.u32 %v588, %v589
      %v592 = vrot.slane %v588, 4
      %v594 = vshrl.u32 %v356, 16
      %v596 = vrot.slane %v594, 7
      %v597 = vshll.u32 %v356, 16
      %v599 = vor.u32 %v596, %v597
      %v600 = vsel %vm363, %v592, %v599
      %v601 = vrot.slane %v596, 4
      %v603 = vshrl.u32 %v357, 16
      %v605 = vrot.slane %v603, 7
      %v606 = vshll.u32 %v357, 16
      %v608 = vor.u32 %v605, %v606
      %v609 = vrot.slane %v605, 4
      %v611 = vshrl.u32 %v358, 16
      %v613 = vrot.slane %v611, 7
      %v614 = vshll.u32 %v358, 16
      %v616 = vor.u32 %v613, %v614
      %v617 = vsel %vm363, %v609, %v616
      %v618 = vrot.slane %v613, 4
      %v620 = vshrl.u32 %v359, 16
      %v622 = vrot.slane %v620, 7
      %v623 = vshll.u32 %v359, 16
      %v625 = vor.u32 %v622, %v623
      %v626 = vrot.slane %v622, 4
      %v628 = vshrl.u32 %v360, 16
      %v630 = vrot.slane %v628, 7
      %v631 = vshll.u32 %v360, 16
      %v633 = vor.u32 %v630, %v631
      %v634 = vsel %vm363, %v626, %v633
      %v635 = vrot.slane %v630, 4
      %s684 = scalar_lea.vmem [#allocation2], 12
      %vm685 = vcmask 27648
      %vm686 = vsmask.f32 7938
      %vm687 = vmand %vm685, %vm686
      %v688 = vld [vmem:[%s684] sm:$0xf]
      %v689 = vsel %vm687, %v370, %v688
      %690 = vst [vmem:[%s684] sm:$0xf] %v689
      %691 = vst.msk [vmem:[%s684 + $0x4] sm:$0xf] %vm273, %v379
      %vm692 = vcmask 24576
      %vm693 = vmand %vm692, %vm361
      %v694 = vld [vmem:[%s684 + $0x8] sm:$0x1]
      %v695 = vsel %vm693, %v380, %v694
      %696 = vst [vmem:[%s684 + $0x8] sm:$0x1] %v695
      %v697 = vld [vmem:[%s684 + $0xc] sm:$0xf]
      %v698 = vsel %vm687, %v387, %v697
      %699 = vst [vmem:[%s684 + $0xc] sm:$0xf] %v698
      %700 = vst.msk [vmem:[%s684 + $0x10] sm:$0xf] %vm273, %v396
      %v701 = vld [vmem:[%s684 + $0x14] sm:$0x1]
      %v702 = vsel %vm693, %v397, %v701
      %703 = vst [vmem:[%s684 + $0x14] sm:$0x1] %v702
      %v704 = vld [vmem:[%s684 + $0x18] sm:$0xf]
      %v705 = vsel %vm687, %v404, %v704
      %706 = vst [vmem:[%s684 + $0x18] sm:$0xf] %v705
      %707 = vst.msk [vmem:[%s684 + $0x1c] sm:$0xf] %vm273, %v413
      %v708 = vld [vmem:[%s684 + $0x20] sm:$0x1]
      %v709 = vsel %vm693, %v414, %v708
      %710 = vst [vmem:[%s684 + $0x20] sm:$0x1] %v709
      %v711 = vld [vmem:[%s684 + $0x24] sm:$0xf]
      %v712 = vsel %vm687, %v421, %v711
      %713 = vst [vmem:[%s684 + $0x24] sm:$0xf] %v712
      %714 = vst.msk [vmem:[%s684 + $0x28] sm:$0xf] %vm273, %v430
      %v715 = vld [vmem:[%s684 + $0x2c] sm:$0x1]
      %v716 = vsel %vm693, %v431, %v715
      %717 = vst [vmem:[%s684 + $0x2c] sm:$0x1] %v716
      %v718 = vld [vmem:[%s684 + $0x30] sm:$0xf]
      %v719 = vsel %vm687, %v438, %v718
      %720 = vst [vmem:[%s684 + $0x30] sm:$0xf] %v719
      %721 = vst.msk [vmem:[%s684 + $0x34] sm:$0xf] %vm273, %v447
      %v722 = vld [vmem:[%s684 + $0x38] sm:$0x1]
      %v723 = vsel %vm693, %v448, %v722
      %724 = vst [vmem:[%s684 + $0x38] sm:$0x1] %v723
      %v725 = vld [vmem:[%s684 + $0x3c] sm:$0xf]
      %v726 = vsel %vm687, %v455, %v725
      %727 = vst [vmem:[%s684 + $0x3c] sm:$0xf] %v726
      %728 = vst.msk [vmem:[%s684 + $0x40] sm:$0xf] %vm273, %v464
      %v729 = vld [vmem:[%s684 + $0x44] sm:$0x1]
      %v730 = vsel %vm693, %v465, %v729
      %731 = vst [vmem:[%s684 + $0x44] sm:$0x1] %v730
      %v732 = vld [vmem:[%s684 + $0x48] sm:$0xf]
      %v733 = vsel %vm687, %v472, %v732
      %734 = vst [vmem:[%s684 + $0x48] sm:$0xf] %v733
      %735 = vst.msk [vmem:[%s684 + $0x4c] sm:$0xf] %vm273, %v481
      %v736 = vld [vmem:[%s684 + $0x50] sm:$0x1]
      %v737 = vsel %vm693, %v482, %v736
      %738 = vst [vmem:[%s684 + $0x50] sm:$0x1] %v737
      %v739 = vld [vmem:[%s684 + $0x54] sm:$0xf]
      %v740 = vsel %vm687, %v489, %v739
      %741 = vst [vmem:[%s684 + $0x54] sm:$0xf] %v740
      %742 = vst.msk [vmem:[%s684 + $0x58] sm:$0xf] %vm273, %v498
      %v743 = vld [vmem:[%s684 + $0x5c] sm:$0x1]
      %v744 = vsel %vm693, %v499, %v743
      %745 = vst [vmem:[%s684 + $0x5c] sm:$0x1] %v744
      %v746 = vld [vmem:[%s684 + $0x60] sm:$0xf]
      %v747 = vsel %vm687, %v506, %v746
      %748 = vst [vmem:[%s684 + $0x60] sm:$0xf] %v747
      %749 = vst.msk [vmem:[%s684 + $0x64] sm:$0xf] %vm273, %v515
      %v750 = vld [vmem:[%s684 + $0x68] sm:$0x1]
      %v751 = vsel %vm693, %v516, %v750
      %752 = vst [vmem:[%s684 + $0x68] sm:$0x1] %v751
      %v753 = vld [vmem:[%s684 + $0x6c] sm:$0xf]
      %v754 = vsel %vm687, %v523, %v753
      %755 = vst [vmem:[%s684 + $0x6c] sm:$0xf] %v754
      %756 = vst.msk [vmem:[%s684 + $0x70] sm:$0xf] %vm273, %v532
      %v757 = vld [vmem:[%s684 + $0x74] sm:$0x1]
      %v758 = vsel %vm693, %v533, %v757
      %759 = vst [vmem:[%s684 + $0x74] sm:$0x1] %v758
      %v760 = vld [vmem:[%s684 + $0x78] sm:$0xf]
      %v761 = vsel %vm687, %v540, %v760
      %762 = vst [vmem:[%s684 + $0x78] sm:$0xf] %v761
      %763 = vst.msk [vmem:[%s684 + $0x7c] sm:$0xf] %vm273, %v549
      %v764 = vld [vmem:[%s684 + $0x80] sm:$0x1]
      %v765 = vsel %vm693, %v550, %v764
      %766 = vst [vmem:[%s684 + $0x80] sm:$0x1] %v765
      %v767 = vld [vmem:[%s684 + $0x84] sm:$0xf]
      %v768 = vsel %vm687, %v557, %v767
      %769 = vst [vmem:[%s684 + $0x84] sm:$0xf] %v768
      %770 = vst.msk [vmem:[%s684 + $0x88] sm:$0xf] %vm273, %v566
      %v771 = vld [vmem:[%s684 + $0x8c] sm:$0x1]
      %v772 = vsel %vm693, %v567, %v771
      %773 = vst [vmem:[%s684 + $0x8c] sm:$0x1] %v772
      %v774 = vld [vmem:[%s684 + $0x90] sm:$0xf]
      %v775 = vsel %vm687, %v574, %v774
      %776 = vst [vmem:[%s684 + $0x90] sm:$0xf] %v775
      %777 = vst.msk [vmem:[%s684 + $0x94] sm:$0xf] %vm273, %v583
      %v778 = vld [vmem:[%s684 + $0x98] sm:$0x1]
      %v779 = vsel %vm693, %v584, %v778
      %780 = vst [vmem:[%s684 + $0x98] sm:$0x1] %v779
      %v781 = vld [vmem:[%s684 + $0x9c] sm:$0xf]
      %v782 = vsel %vm687, %v591, %v781
      %783 = vst [vmem:[%s684 + $0x9c] sm:$0xf] %v782
      %784 = vst.msk [vmem:[%s684 + $0xa0] sm:$0xf] %vm273, %v600
      %v785 = vld [vmem:[%s684 + $0xa4] sm:$0x1]
      %v786 = vsel %vm693, %v601, %v785
      %787 = vst [vmem:[%s684 + $0xa4] sm:$0x1] %v786
      %v788 = vld [vmem:[%s684 + $0xa8] sm:$0xf]
      %v789 = vsel %vm687, %v608, %v788
      %790 = vst [vmem:[%s684 + $0xa8] sm:$0xf] %v789
      %791 = vst.msk [vmem:[%s684 + $0xac] sm:$0xf] %vm273, %v617
      %v792 = vld [vmem:[%s684 + $0xb0] sm:$0x1]
      %v793 = vsel %vm693, %v618, %v792
      %794 = vst [vmem:[%s684 + $0xb0] sm:$0x1] %v793
      %v795 = vld [vmem:[%s684 + $0xb4] sm:$0xf]
      %v796 = vsel %vm687, %v625, %v795
      %797 = vst [vmem:[%s684 + $0xb4] sm:$0xf] %v796
      %798 = vst.msk [vmem:[%s684 + $0xb8] sm:$0xf] %vm273, %v634
      %v799 = vld [vmem:[%s684 + $0xbc] sm:$0x1]
      %v800 = vsel %vm693, %v635, %v799
      %801 = vst [vmem:[%s684 + $0xbc] sm:$0x1] %v800
      %v802 = vld [vmem:[#allocation2] sm:$0xf]
      %v803 = vld [vmem:[#allocation2 + $0x4] sm:$0xf]
      %v804 = vld [vmem:[#allocation2 + $0xc] sm:$0xf]
      %v805 = vld [vmem:[#allocation2 + $0x10] sm:$0xf]
      %v806 = vld [vmem:[#allocation2 + $0x18] sm:$0xf]
      %v807 = vld [vmem:[#allocation2 + $0x1c] sm:$0xf]
      %v808 = vld [vmem:[#allocation2 + $0x24] sm:$0xf]
      %v809 = vld [vmem:[#allocation2 + $0x28] sm:$0xf]
      %v810 = vld [vmem:[#allocation2 + $0x30] sm:$0xf]
      %v811 = vld [vmem:[#allocation2 + $0x34] sm:$0xf]
      %v812 = vld [vmem:[#allocation2 + $0x3c] sm:$0xf]
      %v813 = vld [vmem:[#allocation2 + $0x40] sm:$0xf]
      %v814 = vld [vmem:[#allocation2 + $0x48] sm:$0xf]
      %v815 = vld [vmem:[#allocation2 + $0x4c] sm:$0xf]
      %v816 = vld [vmem:[#allocation2 + $0x54] sm:$0xf]
      %v817 = vld [vmem:[#allocation2 + $0x58] sm:$0xf]
      %v818 = vld [vmem:[#allocation2 + $0x60] sm:$0xf]
      %v819 = vld [vmem:[#allocation2 + $0x64] sm:$0xf]
      %v820 = vld [vmem:[#allocation2 + $0x6c] sm:$0xf]
      %v821 = vld [vmem:[#allocation2 + $0x70] sm:$0xf]
      %v822 = vld [vmem:[#allocation2 + $0x78] sm:$0xf]
      %v823 = vld [vmem:[#allocation2 + $0x7c] sm:$0xf]
      %v824 = vld [vmem:[#allocation2 + $0x84] sm:$0xf]
      %v825 = vld [vmem:[#allocation2 + $0x88] sm:$0xf]
      %v826 = vld [vmem:[#allocation2 + $0x90] sm:$0xf]
      %v827 = vld [vmem:[#allocation2 + $0x94] sm:$0xf]
      %v828 = vld [vmem:[#allocation2 + $0x9c] sm:$0xf]
      %v829 = vld [vmem:[#allocation2 + $0xa0] sm:$0xf]
      %v830 = vld [vmem:[#allocation2 + $0xa8] sm:$0xf]
      %v831 = vld [vmem:[#allocation2 + $0xac] sm:$0xf]
      %v832 = vld [vmem:[#allocation2 + $0xb4] sm:$0xf]
      %v833 = vld [vmem:[#allocation2 + $0xb8] sm:$0xf]
      %v834 = vld [vmem:[%s2] sm:$0x3]
      %v835 = vld [vmem:[#allocation2 + $0x8] sm:$0x1]
      %v836 = vld [vmem:[#allocation2 + $0x14] sm:$0x1]
      %v837 = vld [vmem:[#allocation2 + $0x20] sm:$0x1]
      %v838 = vld [vmem:[#allocation2 + $0x2c] sm:$0x1]
      %v839 = vld [vmem:[#allocation2 + $0x38] sm:$0x1]
      %v840 = vld [vmem:[#allocation2 + $0x44] sm:$0x1]
      %v841 = vld [vmem:[#allocation2 + $0x50] sm:$0x1]
      %v842 = vld [vmem:[#allocation2 + $0x5c] sm:$0x1]
      %v843 = vld [vmem:[#allocation2 + $0x68] sm:$0x1]
      %v844 = vld [vmem:[#allocation2 + $0x74] sm:$0x1]
      %v845 = vld [vmem:[#allocation2 + $0x80] sm:$0x1]
      %v846 = vld [vmem:[#allocation2 + $0x8c] sm:$0x1]
      %v847 = vld [vmem:[#allocation2 + $0x98] sm:$0x1]
      %v848 = vld [vmem:[#allocation2 + $0xa4] sm:$0x1]
      %v849 = vld [vmem:[#allocation2 + $0xb0] sm:$0x1]
      %v850 = vld [vmem:[#allocation2 + $0xbc] sm:$0x1]
      %vm851 = vsmask.f32 3328
      %vm852 = vsmask.f32 7440
      %vm853 = vmor %vm851, %vm852
      %v855 = vshrl.u32 %v802, 16
      %v857 = vrot.slane %v855, 4
      %v858 = vshll.u32 %v802, 16
      %v860 = vrot.slane %v858, 5
      %v861 = vor.u32 %v857, %v860
      %v862 = vrot.slane %v861, 4
      %v864 = vshll.u32 %v803, 16
      %v866 = vrot.slane %v864, 5
      %v867 = vsel %vm853, %v862, %v866
      %v868 = vshrl.u32 %v803, 16
      %v870 = vrot.slane %v868, 4
      %v871 = vor.u32 %v870, %v866
      %v872 = vrot.slane %v871, 4
      %v874 = vshll.u32 %v835, 16
      %v876 = vrot.slane %v874, 5
      %v877 = vsel %vm853, %v872, %v876
      %v879 = vshrl.u32 %v804, 16
      %v881 = vrot.slane %v879, 4
      %v882 = vshll.u32 %v804, 16
      %v884 = vrot.slane %v882, 5
      %v885 = vor.u32 %v881, %v884
      %v886 = vrot.slane %v885, 4
      %v888 = vshll.u32 %v805, 16
      %v890 = vrot.slane %v888, 5
      %v891 = vsel %vm853, %v886, %v890
      %v892 = vshrl.u32 %v805, 16
      %v894 = vrot.slane %v892, 4
      %v895 = vor.u32 %v894, %v890
      %v896 = vrot.slane %v895, 4
      %v898 = vshll.u32 %v836, 16
      %v900 = vrot.slane %v898, 5
      %v901 = vsel %vm853, %v896, %v900
      %v903 = vshrl.u32 %v806, 16
      %v905 = vrot.slane %v903, 4
      %v906 = vshll.u32 %v806, 16
      %v908 = vrot.slane %v906, 5
      %v909 = vor.u32 %v905, %v908
      %v910 = vrot.slane %v909, 4
      %v912 = vshll.u32 %v807, 16
      %v914 = vrot.slane %v912, 5
      %v915 = vsel %vm853, %v910, %v914
      %v916 = vshrl.u32 %v807, 16
      %v918 = vrot.slane %v916, 4
      %v919 = vor.u32 %v918, %v914
      %v920 = vrot.slane %v919, 4
      %v922 = vshll.u32 %v837, 16
      %v924 = vrot.slane %v922, 5
      %v925 = vsel %vm853, %v920, %v924
      %v927 = vshrl.u32 %v808, 16
      %v929 = vrot.slane %v927, 4
      %v930 = vshll.u32 %v808, 16
      %v932 = vrot.slane %v930, 5
      %v933 = vor.u32 %v929, %v932
      %v934 = vrot.slane %v933, 4
      %v936 = vshll.u32 %v809, 16
      %v938 = vrot.slane %v936, 5
      %v939 = vsel %vm853, %v934, %v938
      %v940 = vshrl.u32 %v809, 16
      %v942 = vrot.slane %v940, 4
      %v943 = vor.u32 %v942, %v938
      %v944 = vrot.slane %v943, 4
      %v946 = vshll.u32 %v838, 16
      %v948 = vrot.slane %v946, 5
      %v949 = vsel %vm853, %v944, %v948
      %v951 = vshrl.u32 %v810, 16
      %v953 = vrot.slane %v951, 4
      %v954 = vshll.u32 %v810, 16
      %v956 = vrot.slane %v954, 5
      %v957 = vor.u32 %v953, %v956
      %v958 = vrot.slane %v957, 4
      %v960 = vshll.u32 %v811, 16
      %v962 = vrot.slane %v960, 5
      %v963 = vsel %vm853, %v958, %v962
      %v964 = vshrl.u32 %v811, 16
      %v966 = vrot.slane %v964, 4
      %v967 = vor.u32 %v966, %v962
      %v968 = vrot.slane %v967, 4
      %v970 = vshll.u32 %v839, 16
      %v972 = vrot.slane %v970, 5
      %v973 = vsel %vm853, %v968, %v972
      %v975 = vshrl.u32 %v812, 16
      %v977 = vrot.slane %v975, 4
      %v978 = vshll.u32 %v812, 16
      %v980 = vrot.slane %v978, 5
      %v981 = vor.u32 %v977, %v980
      %v982 = vrot.slane %v981, 4
      %v984 = vshll.u32 %v813, 16
      %v986 = vrot.slane %v984, 5
      %v987 = vsel %vm853, %v982, %v986
      %v988 = vshrl.u32 %v813, 16
      %v990 = vrot.slane %v988, 4
      %v991 = vor.u32 %v990, %v986
      %v992 = vrot.slane %v991, 4
      %v994 = vshll.u32 %v840, 16
      %v996 = vrot.slane %v994, 5
      %v997 = vsel %vm853, %v992, %v996
      %v999 = vshrl.u32 %v814, 16
      %v1001 = vrot.slane %v999, 4
      %v1002 = vshll.u32 %v814, 16
      %v1004 = vrot.slane %v1002, 5
      %v1005 = vor.u32 %v1001, %v1004
      %v1006 = vrot.slane %v1005, 4
      %v1008 = vshll.u32 %v815, 16
      %v1010 = vrot.slane %v1008, 5
      %v1011 = vsel %vm853, %v1006, %v1010
      %v1012 = vshrl.u32 %v815, 16
      %v1014 = vrot.slane %v1012, 4
      %v1015 = vor.u32 %v1014, %v1010
      %v1016 = vrot.slane %v1015, 4
      %v1018 = vshll.u32 %v841, 16
      %v1020 = vrot.slane %v1018, 5
      %v1021 = vsel %vm853, %v1016, %v1020
      %v1023 = vshrl.u32 %v816, 16
      %v1025 = vrot.slane %v1023, 4
      %v1026 = vshll.u32 %v816, 16
      %v1028 = vrot.slane %v1026, 5
      %v1029 = vor.u32 %v1025, %v1028
      %v1030 = vrot.slane %v1029, 4
      %v1032 = vshll.u32 %v817, 16
      %v1034 = vrot.slane %v1032, 5
      %v1035 = vsel %vm853, %v1030, %v1034
      %v1036 = vshrl.u32 %v817, 16
      %v1038 = vrot.slane %v1036, 4
      %v1039 = vor.u32 %v1038, %v1034
      %v1040 = vrot.slane %v1039, 4
      %v1042 = vshll.u32 %v842, 16
      %v1044 = vrot.slane %v1042, 5
      %v1045 = vsel %vm853, %v1040, %v1044
      %v1047 = vshrl.u32 %v818, 16
      %v1049 = vrot.slane %v1047, 4
      %v1050 = vshll.u32 %v818, 16
      %v1052 = vrot.slane %v1050, 5
      %v1053 = vor.u32 %v1049, %v1052
      %v1054 = vrot.slane %v1053, 4
      %v1056 = vshll.u32 %v819, 16
      %v1058 = vrot.slane %v1056, 5
      %v1059 = vsel %vm853, %v1054, %v1058
      %v1060 = vshrl.u32 %v819, 16
      %v1062 = vrot.slane %v1060, 4
      %v1063 = vor.u32 %v1062, %v1058
      %v1064 = vrot.slane %v1063, 4
      %v1066 = vshll.u32 %v843, 16
      %v1068 = vrot.slane %v1066, 5
      %v1069 = vsel %vm853, %v1064, %v1068
      %v1071 = vshrl.u32 %v820, 16
      %v1073 = vrot.slane %v1071, 4
      %v1074 = vshll.u32 %v820, 16
      %v1076 = vrot.slane %v1074, 5
      %v1077 = vor.u32 %v1073, %v1076
      %v1078 = vrot.slane %v1077, 4
      %v1080 = vshll.u32 %v821, 16
      %v1082 = vrot.slane %v1080, 5
      %v1083 = vsel %vm853, %v1078, %v1082
      %v1084 = vshrl.u32 %v821, 16
      %v1086 = vrot.slane %v1084, 4
      %v1087 = vor.u32 %v1086, %v1082
      %v1088 = vrot.slane %v1087, 4
      %v1090 = vshll.u32 %v844, 16
      %v1092 = vrot.slane %v1090, 5
      %v1093 = vsel %vm853, %v1088, %v1092
      %v1095 = vshrl.u32 %v822, 16
      %v1097 = vrot.slane %v1095, 4
      %v1098 = vshll.u32 %v822, 16
      %v1100 = vrot.slane %v1098, 5
      %v1101 = vor.u32 %v1097, %v1100
      %v1102 = vrot.slane %v1101, 4
      %v1104 = vshll.u32 %v823, 16
      %v1106 = vrot.slane %v1104, 5
      %v1107 = vsel %vm853, %v1102, %v1106
      %v1108 = vshrl.u32 %v823, 16
      %v1110 = vrot.slane %v1108, 4
      %v1111 = vor.u32 %v1110, %v1106
      %v1112 = vrot.slane %v1111, 4
      %v1114 = vshll.u32 %v845, 16
      %v1116 = vrot.slane %v1114, 5
      %v1117 = vsel %vm853, %v1112, %v1116
      %v1119 = vshrl.u32 %v824, 16
      %v1121 = vrot.slane %v1119, 4
      %v1122 = vshll.u32 %v824, 16
      %v1124 = vrot.slane %v1122, 5
      %v1125 = vor.u32 %v1121, %v1124
      %v1126 = vrot.slane %v1125, 4
      %v1128 = vshll.u32 %v825, 16
      %v1130 = vrot.slane %v1128, 5
      %v1131 = vsel %vm853, %v1126, %v1130
      %v1132 = vshrl.u32 %v825, 16
      %v1134 = vrot.slane %v1132, 4
      %v1135 = vor.u32 %v1134, %v1130
      %v1136 = vrot.slane %v1135, 4
      %v1138 = vshll.u32 %v846, 16
      %v1140 = vrot.slane %v1138, 5
      %v1141 = vsel %vm853, %v1136, %v1140
      %v1143 = vshrl.u32 %v826, 16
      %v1145 = vrot.slane %v1143, 4
      %v1146 = vshll.u32 %v826, 16
      %v1148 = vrot.slane %v1146, 5
      %v1149 = vor.u32 %v1145, %v1148
      %v1150 = vrot.slane %v1149, 4
      %v1152 = vshll.u32 %v827, 16
      %v1154 = vrot.slane %v1152, 5
      %v1155 = vsel %vm853, %v1150, %v1154
      %v1156 = vshrl.u32 %v827, 16
      %v1158 = vrot.slane %v1156, 4
      %v1159 = vor.u32 %v1158, %v1154
      %v1160 = vrot.slane %v1159, 4
      %v1162 = vshll.u32 %v847, 16
      %v1164 = vrot.slane %v1162, 5
      %v1165 = vsel %vm853, %v1160, %v1164
      %v1167 = vshrl.u32 %v828, 16
      %v1169 = vrot.slane %v1167, 4
      %v1170 = vshll.u32 %v828, 16
      %v1172 = vrot.slane %v1170, 5
      %v1173 = vor.u32 %v1169, %v1172
      %v1174 = vrot.slane %v1173, 4
      %v1176 = vshll.u32 %v829, 16
      %v1178 = vrot.slane %v1176, 5
      %v1179 = vsel %vm853, %v1174, %v1178
      %v1180 = vshrl.u32 %v829, 16
      %v1182 = vrot.slane %v1180, 4
      %v1183 = vor.u32 %v1182, %v1178
      %v1184 = vrot.slane %v1183, 4
      %v1186 = vshll.u32 %v848, 16
      %v1188 = vrot.slane %v1186, 5
      %v1189 = vsel %vm853, %v1184, %v1188
      %v1191 = vshrl.u32 %v830, 16
      %v1193 = vrot.slane %v1191, 4
      %v1194 = vshll.u32 %v830, 16
      %v1196 = vrot.slane %v1194, 5
      %v1197 = vor.u32 %v1193, %v1196
      %v1198 = vrot.slane %v1197, 4
      %v1200 = vshll.u32 %v831, 16
      %v1202 = vrot.slane %v1200, 5
      %v1203 = vsel %vm853, %v1198, %v1202
      %v1204 = vshrl.u32 %v831, 16
      %v1206 = vrot.slane %v1204, 4
      %v1207 = vor.u32 %v1206, %v1202
      %v1208 = vrot.slane %v1207, 4
      %v1210 = vshll.u32 %v849, 16
      %v1212 = vrot.slane %v1210, 5
      %v1213 = vsel %vm853, %v1208, %v1212
      %v1215 = vshrl.u32 %v832, 16
      %v1217 = vrot.slane %v1215, 4
      %v1218 = vshll.u32 %v832, 16
      %v1220 = vrot.slane %v1218, 5
      %v1221 = vor.u32 %v1217, %v1220
      %v1222 = vrot.slane %v1221, 4
      %v1224 = vshll.u32 %v833, 16
      %v1226 = vrot.slane %v1224, 5
      %v1227 = vsel %vm853, %v1222, %v1226
      %v1228 = vshrl.u32 %v833, 16
      %v1230 = vrot.slane %v1228, 4
      %v1231 = vor.u32 %v1230, %v1226
      %v1232 = vrot.slane %v1231, 4
      %v1234 = vshll.u32 %v850, 16
      %v1236 = vrot.slane %v1234, 5
      %v1237 = vsel %vm853, %v1232, %v1236
      %s1238 = scalar_lea.vmem %s2, 2
      %v1239 = vld [vmem:[%s1238] sm:$0x3]
      %v1240 = vunpack.c.l.b16 %v867
      %v1241 = vunpack.c.l.b16 %v877
      %v1242 = vunpack.c.l.b16 %v891
      %v1243 = vunpack.c.l.b16 %v901
      %v1244 = vunpack.c.l.b16 %v915
      %v1245 = vunpack.c.l.b16 %v925
      %v1246 = vunpack.c.l.b16 %v939
      %v1247 = vunpack.c.l.b16 %v949
      %v1248 = vunpack.c.l.b16 %v963
      %v1249 = vunpack.c.l.b16 %v973
      %v1250 = vunpack.c.l.b16 %v987
      %v1251 = vunpack.c.l.b16 %v997
      %v1252 = vunpack.c.l.b16 %v1011
      %v1253 = vunpack.c.l.b16 %v1021
      %v1254 = vunpack.c.l.b16 %v1035
      %v1255 = vunpack.c.l.b16 %v1045
      %v1256 = vunpack.c.l.b16 %v1059
      %v1257 = vunpack.c.l.b16 %v1069
      %v1258 = vunpack.c.l.b16 %v1083
      %v1259 = vunpack.c.l.b16 %v1093
      %v1260 = vunpack.c.l.b16 %v1107
      %v1261 = vunpack.c.l.b16 %v1117
      %v1262 = vunpack.c.l.b16 %v1131
      %v1263 = vunpack.c.l.b16 %v1141
      %v1264 = vunpack.c.l.b16 %v1155
      %v1265 = vunpack.c.l.b16 %v1165
      %v1266 = vunpack.c.l.b16 %v1179
      %v1267 = vunpack.c.l.b16 %v1189
      %v1268 = vunpack.c.l.b16 %v1203
      %v1269 = vunpack.c.l.b16 %v1213
      %v1270 = vunpack.c.l.b16 %v1227
      %v1271 = vunpack.c.l.b16 %v1237
      %v1272 = vpack.c.b16 %v1241, %v1240
      %v1273 = vpack.c.b16 %v1243, %v1242
      %v1274 = vpack.c.b16 %v1245, %v1244
      %v1275 = vpack.c.b16 %v1247, %v1246
      %v1276 = vpack.c.b16 %v1249, %v1248
      %v1277 = vpack.c.b16 %v1251, %v1250
      %v1278 = vpack.c.b16 %v1253, %v1252
      %v1279 = vpack.c.b16 %v1255, %v1254
      %v1280 = vpack.c.b16 %v1257, %v1256
      %v1281 = vpack.c.b16 %v1259, %v1258
      %v1282 = vpack.c.b16 %v1261, %v1260
      %v1283 = vpack.c.b16 %v1263, %v1262
      %v1284 = vpack.c.b16 %v1265, %v1264
      %v1285 = vpack.c.b16 %v1267, %v1266
      %v1286 = vpack.c.b16 %v1269, %v1268
      %v1287 = vpack.c.b16 %v1271, %v1270
      %vm1288 = vcmask 31744
      %v1290 = vsel %vm1288, %v1272, 0
      %v1293 = vsel %vm1288, %v1273, 0
      %v1296 = vsel %vm1288, %v1274, 0
      %v1299 = vsel %vm1288, %v1275, 0
      %v1302 = vsel %vm1288, %v1276, 0
      %v1305 = vsel %vm1288, %v1277, 0
      %v1308 = vsel %vm1288, %v1278, 0
      %v1311 = vsel %vm1288, %v1279, 0
      %v1314 = vsel %vm1288, %v1280, 0
      %v1317 = vsel %vm1288, %v1281, 0
      %v1320 = vsel %vm1288, %v1282, 0
      %v1323 = vsel %vm1288, %v1283, 0
      %v1326 = vsel %vm1288, %v1284, 0
      %v1329 = vsel %vm1288, %v1285, 0
      %v1332 = vsel %vm1288, %v1286, 0
      %v1335 = vsel %vm1288, %v1287, 0
      %vm1337 = vcmask 1041408
      %v1339 = vsel %vm1337, %v1239, 0
      %1341 = vmatprep.subr.bf16.mxu0 0
      %1342 = vmatpush1.bf16.msra.mxu0 0
      %1343 = vmatprep.subr.bf16.mxu0 0
      %1344 = vmatpush1.bf16.msra.mxu0 0
      %1345 = vmatprep.subr.bf16.mxu0 0
      %1346 = vmatpush1.bf16.msra.mxu0 0
      %1347 = vmatprep.subr.bf16.mxu0 0
      %1348 = vmatpush1.bf16.msra.mxu0 0
      %1349 = vmatprep.subr.bf16.mxu0 0
      %1350 = vmatpush1.bf16.msra.mxu0 0
      %1351 = vmatprep.subr.bf16.mxu0 0
      %1352 = vmatpush1.bf16.msra.mxu0 0
      %1353 = vmatprep.subr.bf16.mxu0 0
      %1354 = vmatpush1.bf16.msra.mxu0 0
      %1355 = vmatprep.subr.bf16.mxu0 0
      %1356 = vmatpush1.bf16.msra.mxu0 %v1339
      %1357 = vmatprep.subr.bf16.mxu0 0
      %1358 = vmatpush2.bf16.msra.mxu0 0
      %1359 = vmatprep.subr.bf16.mxu0 0
      %1360 = vmatpush2.bf16.msra.mxu0 0
      %1361 = vmatprep.subr.bf16.mxu0 0
      %1362 = vmatpush2.bf16.msra.mxu0 0
      %1363 = vmatprep.subr.bf16.mxu0 0
      %1364 = vmatpush2.bf16.msra.mxu0 0
      %1365 = vmatprep.subr.bf16.mxu0 0
      %1366 = vmatpush2.bf16.msra.mxu0 0
      %1367 = vmatprep.subr.bf16.mxu0 0
      %1368 = vmatpush2.bf16.msra.mxu0 0
      %1369 = vmatprep.subr.bf16.mxu0 0
      %1370 = vmatpush2.bf16.msra.mxu0 0
      %1371 = vmatprep.subr.bf16.mxu0 0
      %1372 = vmatpush2.bf16.msra.mxu0 0
      %1373 = vmatprep.mubr.bf16.mxu0 0
      %1374 = vmatmul.mubr.bf16.gmra.mxu0 %v1290
      %v1375 = vpop.f32.mrf.mxu0
      %v1376 = vadd.f32 0.0, %v1375
      %v1377 = vpop.f32.mrf.mxu0
      %v1378 = vpop.f32.mrf.mxu0
      %v1379 = vadd.f32 0.0, %v1378
      %v1380 = vpop.f32.mrf.mxu0
      %1381 = vmatprep.mubr.bf16.mxu0 0
      %1382 = vmatmul.mubr.bf16.gmra.mxu0 %v1293
      %v1383 = vpop.f32.mrf.mxu0
      %v1384 = vadd.f32 0.0, %v1383
      %v1385 = vpop.f32.mrf.mxu0
      %v1386 = vpop.f32.mrf.mxu0
      %v1387 = vadd.f32 0.0, %v1386
      %v1388 = vpop.f32.mrf.mxu0
      %1389 = vmatprep.mubr.bf16.mxu0 0
      %1390 = vmatmul.mubr.bf16.gmra.mxu0 %v1296
      %v1391 = vpop.f32.mrf.mxu0
      %v1392 = vadd.f32 0.0, %v1391
      %v1393 = vpop.f32.mrf.mxu0
      %v1394 = vpop.f32.mrf.mxu0
      %v1395 = vadd.f32 0.0, %v1394
      %v1396 = vpop.f32.mrf.mxu0
      %1397 = vmatprep.mubr.bf16.mxu0 0
      %1398 = vmatmul.mubr.bf16.gmra.mxu0 %v1299
      %v1399 = vpop.f32.mrf.mxu0
      %v1400 = vadd.f32 0.0, %v1399
      %v1401 = vpop.f32.mrf.mxu0
      %v1402 = vpop.f32.mrf.mxu0
      %v1403 = vadd.f32 0.0, %v1402
      %v1404 = vpop.f32.mrf.mxu0
      %1405 = vmatprep.mubr.bf16.mxu0 0
      %1406 = vmatmul.mubr.bf16.gmra.mxu0 %v1302
      %v1407 = vpop.f32.mrf.mxu0
      %v1408 = vadd.f32 0.0, %v1407
      %v1409 = vpop.f32.mrf.mxu0
      %v1410 = vpop.f32.mrf.mxu0
      %v1411 = vadd.f32 0.0, %v1410
      %v1412 = vpop.f32.mrf.mxu0
      %1413 = vmatprep.mubr.bf16.mxu0 0
      %1414 = vmatmul.mubr.bf16.gmra.mxu0 %v1305
      %v1415 = vpop.f32.mrf.mxu0
      %v1416 = vadd.f32 0.0, %v1415
      %v1417 = vpop.f32.mrf.mxu0
      %v1418 = vpop.f32.mrf.mxu0
      %v1419 = vadd.f32 0.0, %v1418
      %v1420 = vpop.f32.mrf.mxu0
      %1421 = vmatprep.mubr.bf16.mxu0 0
      %1422 = vmatmul.mubr.bf16.gmra.mxu0 %v1308
      %v1423 = vpop.f32.mrf.mxu0
      %v1424 = vadd.f32 0.0, %v1423
      %v1425 = vpop.f32.mrf.mxu0
      %v1426 = vpop.f32.mrf.mxu0
      %v1427 = vadd.f32 0.0, %v1426
      %v1428 = vpop.f32.mrf.mxu0
      %1429 = vmatprep.mubr.bf16.mxu0 0
      %1430 = vmatmul.mubr.bf16.gmra.mxu0 %v1311
      %v1431 = vpop.f32.mrf.mxu0
      %v1432 = vadd.f32 0.0, %v1431
      %v1433 = vpop.f32.mrf.mxu0
      %v1434 = vpop.f32.mrf.mxu0
      %v1435 = vadd.f32 0.0, %v1434
      %v1436 = vpop.f32.mrf.mxu0
      %1437 = vmatprep.mubr.bf16.mxu0 0
      %1438 = vmatmul.mubr.bf16.gmra.mxu0 %v1314
      %v1439 = vpop.f32.mrf.mxu0
      %v1440 = vadd.f32 0.0, %v1439
      %v1441 = vpop.f32.mrf.mxu0
      %v1442 = vpop.f32.mrf.mxu0
      %v1443 = vadd.f32 0.0, %v1442
      %v1444 = vpop.f32.mrf.mxu0
      %1445 = vmatprep.mubr.bf16.mxu0 0
      %1446 = vmatmul.mubr.bf16.gmra.mxu0 %v1317
      %v1447 = vpop.f32.mrf.mxu0
      %v1448 = vadd.f32 0.0, %v1447
      %v1449 = vpop.f32.mrf.mxu0
      %v1450 = vpop.f32.mrf.mxu0
      %v1451 = vadd.f32 0.0, %v1450
      %v1452 = vpop.f32.mrf.mxu0
      %1453 = vmatprep.mubr.bf16.mxu0 0
      %1454 = vmatmul.mubr.bf16.gmra.mxu0 %v1320
      %v1455 = vpop.f32.mrf.mxu0
      %v1456 = vadd.f32 0.0, %v1455
      %v1457 = vpop.f32.mrf.mxu0
      %v1458 = vpop.f32.mrf.mxu0
      %v1459 = vadd.f32 0.0, %v1458
      %v1460 = vpop.f32.mrf.mxu0
      %1461 = vmatprep.mubr.bf16.mxu0 0
      %1462 = vmatmul.mubr.bf16.gmra.mxu0 %v1323
      %v1463 = vpop.f32.mrf.mxu0
      %v1464 = vadd.f32 0.0, %v1463
      %v1465 = vpop.f32.mrf.mxu0
      %v1466 = vpop.f32.mrf.mxu0
      %v1467 = vadd.f32 0.0, %v1466
      %v1468 = vpop.f32.mrf.mxu0
      %1469 = vmatprep.mubr.bf16.mxu0 0
      %1470 = vmatmul.mubr.bf16.gmra.mxu0 %v1326
      %v1471 = vpop.f32.mrf.mxu0
      %v1472 = vadd.f32 0.0, %v1471
      %v1473 = vpop.f32.mrf.mxu0
      %v1474 = vpop.f32.mrf.mxu0
      %v1475 = vadd.f32 0.0, %v1474
      %v1476 = vpop.f32.mrf.mxu0
      %1477 = vmatprep.mubr.bf16.mxu0 0
      %1478 = vmatmul.mubr.bf16.gmra.mxu0 %v1329
      %v1479 = vpop.f32.mrf.mxu0
      %v1480 = vadd.f32 0.0, %v1479
      %v1481 = vpop.f32.mrf.mxu0
      %v1482 = vpop.f32.mrf.mxu0
      %v1483 = vadd.f32 0.0, %v1482
      %v1484 = vpop.f32.mrf.mxu0
      %1485 = vmatprep.mubr.bf16.mxu0 0
      %1486 = vmatmul.mubr.bf16.gmra.mxu0 %v1332
      %v1487 = vpop.f32.mrf.mxu0
      %v1488 = vadd.f32 0.0, %v1487
      %v1489 = vpop.f32.mrf.mxu0
      %v1490 = vpop.f32.mrf.mxu0
      %v1491 = vadd.f32 0.0, %v1490
      %v1492 = vpop.f32.mrf.mxu0
      %1493 = vmatprep.mubr.bf16.mxu0 0
      %1494 = vmatmul.mubr.bf16.gmra.mxu0 %v1335
      %v1495 = vpop.f32.mrf.mxu0
      %v1496 = vadd.f32 0.0, %v1495
      %v1497 = vpop.f32.mrf.mxu0
      %v1498 = vpop.f32.mrf.mxu0
      %v1499 = vadd.f32 0.0, %v1498
      %v1500 = vpop.f32.mrf.mxu0
      %1501 = vdwg.mxu0
      %v1534 = vunpack.c.l.b16 %v802
      %v1535 = vunpack.c.l.b16 %v803
      %v1536 = vunpack.c.l.b16 %v804
      %v1537 = vunpack.c.l.b16 %v805
      %v1538 = vunpack.c.l.b16 %v806
      %v1539 = vunpack.c.l.b16 %v807
      %v1540 = vunpack.c.l.b16 %v808
      %v1541 = vunpack.c.l.b16 %v809
      %v1542 = vunpack.c.l.b16 %v810
      %v1543 = vunpack.c.l.b16 %v811
      %v1544 = vunpack.c.l.b16 %v812
      %v1545 = vunpack.c.l.b16 %v813
      %v1546 = vunpack.c.l.b16 %v814
      %v1547 = vunpack.c.l.b16 %v815
      %v1548 = vunpack.c.l.b16 %v816
      %v1549 = vunpack.c.l.b16 %v817
      %v1550 = vunpack.c.l.b16 %v818
      %v1551 = vunpack.c.l.b16 %v819
      %v1552 = vunpack.c.l.b16 %v820
      %v1553 = vunpack.c.l.b16 %v821
      %v1554 = vunpack.c.l.b16 %v822
      %v1555 = vunpack.c.l.b16 %v823
      %v1556 = vunpack.c.l.b16 %v824
      %v1557 = vunpack.c.l.b16 %v825
      %v1558 = vunpack.c.l.b16 %v826
      %v1559 = vunpack.c.l.b16 %v827
      %v1560 = vunpack.c.l.b16 %v828
      %v1561 = vunpack.c.l.b16 %v829
      %v1562 = vunpack.c.l.b16 %v830
      %v1563 = vunpack.c.l.b16 %v831
      %v1564 = vunpack.c.l.b16 %v832
      %v1565 = vunpack.c.l.b16 %v833
      %v1566 = vpack.c.b16 %v1535, %v1534
      %v1567 = vpack.c.b16 %v1537, %v1536
      %v1568 = vpack.c.b16 %v1539, %v1538
      %v1569 = vpack.c.b16 %v1541, %v1540
      %v1570 = vpack.c.b16 %v1543, %v1542
      %v1571 = vpack.c.b16 %v1545, %v1544
      %v1572 = vpack.c.b16 %v1547, %v1546
      %v1573 = vpack.c.b16 %v1549, %v1548
      %v1574 = vpack.c.b16 %v1551, %v1550
      %v1575 = vpack.c.b16 %v1553, %v1552
      %v1576 = vpack.c.b16 %v1555, %v1554
      %v1577 = vpack.c.b16 %v1557, %v1556
      %v1578 = vpack.c.b16 %v1559, %v1558
      %v1579 = vpack.c.b16 %v1561, %v1560
      %v1580 = vpack.c.b16 %v1563, %v1562
      %v1581 = vpack.c.b16 %v1565, %v1564
      %v1583 = vsel %vm1288, %v1566, 0
      %v1586 = vsel %vm1288, %v1567, 0
      %v1589 = vsel %vm1288, %v1568, 0
      %v1592 = vsel %vm1288, %v1569, 0
      %v1595 = vsel %vm1288, %v1570, 0
      %v1598 = vsel %vm1288, %v1571, 0
      %v1601 = vsel %vm1288, %v1572, 0
      %v1604 = vsel %vm1288, %v1573, 0
      %v1607 = vsel %vm1288, %v1574, 0
      %v1610 = vsel %vm1288, %v1575, 0
      %v1613 = vsel %vm1288, %v1576, 0
      %v1616 = vsel %vm1288, %v1577, 0
      %v1619 = vsel %vm1288, %v1578, 0
      %v1622 = vsel %vm1288, %v1579, 0
      %v1625 = vsel %vm1288, %v1580, 0
      %v1628 = vsel %vm1288, %v1581, 0
      %v1631 = vsel %vm1337, %v834, 0
      %1633 = vmatprep.subr.bf16.mxu0 0
      %1634 = vmatpush1.bf16.msra.mxu0 0
      %1635 = vmatprep.subr.bf16.mxu0 0
      %1636 = vmatpush1.bf16.msra.mxu0 0
      %1637 = vmatprep.subr.bf16.mxu0 0
      %1638 = vmatpush1.bf16.msra.mxu0 0
      %1639 = vmatprep.subr.bf16.mxu0 0
      %1640 = vmatpush1.bf16.msra.mxu0 0
      %1641 = vmatprep.subr.bf16.mxu0 0
      %1642 = vmatpush1.bf16.msra.mxu0 0
      %1643 = vmatprep.subr.bf16.mxu0 0
      %1644 = vmatpush1.bf16.msra.mxu0 0
      %1645 = vmatprep.subr.bf16.mxu0 0
      %1646 = vmatpush1.bf16.msra.mxu0 0
      %1647 = vmatprep.subr.bf16.mxu0 0
      %1648 = vmatpush1.bf16.msra.mxu0 %v1631
      %1649 = vmatprep.subr.bf16.mxu0 0
      %1650 = vmatpush2.bf16.msra.mxu0 0
      %1651 = vmatprep.subr.bf16.mxu0 0
      %1652 = vmatpush2.bf16.msra.mxu0 0
      %1653 = vmatprep.subr.bf16.mxu0 0
      %1654 = vmatpush2.bf16.msra.mxu0 0
      %1655 = vmatprep.subr.bf16.mxu0 0
      %1656 = vmatpush2.bf16.msra.mxu0 0
      %1657 = vmatprep.subr.bf16.mxu0 0
      %1658 = vmatpush2.bf16.msra.mxu0 0
      %1659 = vmatprep.subr.bf16.mxu0 0
      %1660 = vmatpush2.bf16.msra.mxu0 0
      %1661 = vmatprep.subr.bf16.mxu0 0
      %1662 = vmatpush2.bf16.msra.mxu0 0
      %1663 = vmatprep.subr.bf16.mxu0 0
      %1664 = vmatpush2.bf16.msra.mxu0 0
      %1665 = vmatprep.mubr.bf16.mxu0 0
      %1666 = vmatmul.mubr.bf16.gmra.mxu0 %v1583
      %v1667 = vpop.f32.mrf.mxu0
      %v1668 = vadd.f32 %v1376, %v1667
      %v1669 = vpop.f32.mrf.mxu0
      %v1670 = vpop.f32.mrf.mxu0
      %v1671 = vadd.f32 %v1379, %v1670
      %v1672 = vpop.f32.mrf.mxu0
      %1673 = vmatprep.mubr.bf16.mxu0 0
      %1674 = vmatmul.mubr.bf16.gmra.mxu0 %v1586
      %v1675 = vpop.f32.mrf.mxu0
      %v1676 = vadd.f32 %v1384, %v1675
      %v1677 = vpop.f32.mrf.mxu0
      %v1678 = vpop.f32.mrf.mxu0
      %v1679 = vadd.f32 %v1387, %v1678
      %v1680 = vpop.f32.mrf.mxu0
      %1681 = vmatprep.mubr.bf16.mxu0 0
      %1682 = vmatmul.mubr.bf16.gmra.mxu0 %v1589
      %v1683 = vpop.f32.mrf.mxu0
      %v1684 = vadd.f32 %v1392, %v1683
      %v1685 = vpop.f32.mrf.mxu0
      %v1686 = vpop.f32.mrf.mxu0
      %v1687 = vadd.f32 %v1395, %v1686
      %v1688 = vpop.f32.mrf.mxu0
      %1689 = vmatprep.mubr.bf16.mxu0 0
      %1690 = vmatmul.mubr.bf16.gmra.mxu0 %v1592
      %v1691 = vpop.f32.mrf.mxu0
      %v1692 = vadd.f32 %v1400, %v1691
      %v1693 = vpop.f32.mrf.mxu0
      %v1694 = vpop.f32.mrf.mxu0
      %v1695 = vadd.f32 %v1403, %v1694
      %v1696 = vpop.f32.mrf.mxu0
      %1697 = vmatprep.mubr.bf16.mxu0 0
      %1698 = vmatmul.mubr.bf16.gmra.mxu0 %v1595
      %v1699 = vpop.f32.mrf.mxu0
      %v1700 = vadd.f32 %v1408, %v1699
      %v1701 = vpop.f32.mrf.mxu0
      %v1702 = vpop.f32.mrf.mxu0
      %v1703 = vadd.f32 %v1411, %v1702
      %v1704 = vpop.f32.mrf.mxu0
      %1705 = vmatprep.mubr.bf16.mxu0 0
      %1706 = vmatmul.mubr.bf16.gmra.mxu0 %v1598
      %v1707 = vpop.f32.mrf.mxu0
      %v1708 = vadd.f32 %v1416, %v1707
      %v1709 = vpop.f32.mrf.mxu0
      %v1710 = vpop.f32.mrf.mxu0
      %v1711 = vadd.f32 %v1419, %v1710
      %v1712 = vpop.f32.mrf.mxu0
      %1713 = vmatprep.mubr.bf16.mxu0 0
      %1714 = vmatmul.mubr.bf16.gmra.mxu0 %v1601
      %v1715 = vpop.f32.mrf.mxu0
      %v1716 = vadd.f32 %v1424, %v1715
      %v1717 = vpop.f32.mrf.mxu0
      %v1718 = vpop.f32.mrf.mxu0
      %v1719 = vadd.f32 %v1427, %v1718
      %v1720 = vpop.f32.mrf.mxu0
      %1721 = vmatprep.mubr.bf16.mxu0 0
      %1722 = vmatmul.mubr.bf16.gmra.mxu0 %v1604
      %v1723 = vpop.f32.mrf.mxu0
      %v1724 = vadd.f32 %v1432, %v1723
      %v1725 = vpop.f32.mrf.mxu0
      %v1726 = vpop.f32.mrf.mxu0
      %v1727 = vadd.f32 %v1435, %v1726
      %v1728 = vpop.f32.mrf.mxu0
      %1729 = vmatprep.mubr.bf16.mxu0 0
      %1730 = vmatmul.mubr.bf16.gmra.mxu0 %v1607
      %v1731 = vpop.f32.mrf.mxu0
      %v1732 = vadd.f32 %v1440, %v1731
      %v1733 = vpop.f32.mrf.mxu0
      %v1734 = vpop.f32.mrf.mxu0
      %v1735 = vadd.f32 %v1443, %v1734
      %v1736 = vpop.f32.mrf.mxu0
      %1737 = vmatprep.mubr.bf16.mxu0 0
      %1738 = vmatmul.mubr.bf16.gmra.mxu0 %v1610
      %v1739 = vpop.f32.mrf.mxu0
      %v1740 = vadd.f32 %v1448, %v1739
      %v1741 = vpop.f32.mrf.mxu0
      %v1742 = vpop.f32.mrf.mxu0
      %v1743 = vadd.f32 %v1451, %v1742
      %v1744 = vpop.f32.mrf.mxu0
      %1745 = vmatprep.mubr.bf16.mxu0 0
      %1746 = vmatmul.mubr.bf16.gmra.mxu0 %v1613
      %v1747 = vpop.f32.mrf.mxu0
      %v1748 = vadd.f32 %v1456, %v1747
      %v1749 = vpop.f32.mrf.mxu0
      %v1750 = vpop.f32.mrf.mxu0
      %v1751 = vadd.f32 %v1459, %v1750
      %v1752 = vpop.f32.mrf.mxu0
      %1753 = vmatprep.mubr.bf16.mxu0 0
      %1754 = vmatmul.mubr.bf16.gmra.mxu0 %v1616
      %v1755 = vpop.f32.mrf.mxu0
      %v1756 = vadd.f32 %v1464, %v1755
      %v1757 = vpop.f32.mrf.mxu0
      %v1758 = vpop.f32.mrf.mxu0
      %v1759 = vadd.f32 %v1467, %v1758
      %v1760 = vpop.f32.mrf.mxu0
      %1761 = vmatprep.mubr.bf16.mxu0 0
      %1762 = vmatmul.mubr.bf16.gmra.mxu0 %v1619
      %v1763 = vpop.f32.mrf.mxu0
      %v1764 = vadd.f32 %v1472, %v1763
      %v1765 = vpop.f32.mrf.mxu0
      %v1766 = vpop.f32.mrf.mxu0
      %v1767 = vadd.f32 %v1475, %v1766
      %v1768 = vpop.f32.mrf.mxu0
      %1769 = vmatprep.mubr.bf16.mxu0 0
      %1770 = vmatmul.mubr.bf16.gmra.mxu0 %v1622
      %v1771 = vpop.f32.mrf.mxu0
      %v1772 = vadd.f32 %v1480, %v1771
      %v1773 = vpop.f32.mrf.mxu0
      %v1774 = vpop.f32.mrf.mxu0
      %v1775 = vadd.f32 %v1483, %v1774
      %v1776 = vpop.f32.mrf.mxu0
      %1777 = vmatprep.mubr.bf16.mxu0 0
      %1778 = vmatmul.mubr.bf16.gmra.mxu0 %v1625
      %v1779 = vpop.f32.mrf.mxu0
      %v1780 = vadd.f32 %v1488, %v1779
      %v1781 = vpop.f32.mrf.mxu0
      %v1782 = vpop.f32.mrf.mxu0
      %v1783 = vadd.f32 %v1491, %v1782
      %v1784 = vpop.f32.mrf.mxu0
      %1785 = vmatprep.mubr.bf16.mxu0 0
      %1786 = vmatmul.mubr.bf16.gmra.mxu0 %v1628
      %v1787 = vpop.f32.mrf.mxu0
      %v1788 = vadd.f32 %v1496, %v1787
      %v1789 = vpop.f32.mrf.mxu0
      %v1790 = vpop.f32.mrf.mxu0
      %v1791 = vadd.f32 %v1499, %v1790
      %v1792 = vpop.f32.mrf.mxu0
      %1793 = vdwg.mxu0
      %v1794 = vld [vmem:[#allocation2] sm:$0xe]
      %v1795 = vld [vmem:[#allocation2 + $0xc] sm:$0xe]
      %v1796 = vld [vmem:[#allocation2 + $0x18] sm:$0xe]
      %v1797 = vld [vmem:[#allocation2 + $0x24] sm:$0xe]
      %v1798 = vld [vmem:[#allocation2 + $0x30] sm:$0xe]
      %v1799 = vld [vmem:[#allocation2 + $0x3c] sm:$0xe]
      %v1800 = vld [vmem:[#allocation2 + $0x48] sm:$0xe]
      %v1801 = vld [vmem:[#allocation2 + $0x54] sm:$0xe]
      %v1802 = vld [vmem:[#allocation2 + $0x60] sm:$0xe]
      %v1803 = vld [vmem:[#allocation2 + $0x6c] sm:$0xe]
      %v1804 = vld [vmem:[#allocation2 + $0x78] sm:$0xe]
      %v1805 = vld [vmem:[#allocation2 + $0x84] sm:$0xe]
      %v1806 = vld [vmem:[#allocation2 + $0x90] sm:$0xe]
      %v1807 = vld [vmem:[#allocation2 + $0x9c] sm:$0xe]
      %v1808 = vld [vmem:[#allocation2 + $0xa8] sm:$0xe]
      %v1809 = vld [vmem:[#allocation2 + $0xb4] sm:$0xe]
      %vm1842 = vcmask 1042432
      %vm1843 = vcmask 1046532
      %vm1844 = vmor %vm1842, %vm1843
      %v1845 = vrot.slane %v1794, 5
      %v1846 = vrot.slane %v1845, 4
      %v1847 = vrot.slane %v803, 5
      %v1848 = vsel %vm1844, %v1846, %v1847
      %v1849 = vrot.slane %v1847, 4
      %v1850 = vrot.slane %v835, 5
      %v1851 = vsel %vm1844, %v1849, %v1850
      %v1852 = vrot.slane %v1795, 5
      %v1853 = vrot.slane %v1852, 4
      %v1854 = vrot.slane %v805, 5
      %v1855 = vsel %vm1844, %v1853, %v1854
      %v1856 = vrot.slane %v1854, 4
      %v1857 = vrot.slane %v836, 5
      %v1858 = vsel %vm1844, %v1856, %v1857
      %v1859 = vrot.slane %v1796, 5
      %v1860 = vrot.slane %v1859, 4
      %v1861 = vrot.slane %v807, 5
      %v1862 = vsel %vm1844, %v1860, %v1861
      %v1863 = vrot.slane %v1861, 4
      %v1864 = vrot.slane %v837, 5
      %v1865 = vsel %vm1844, %v1863, %v1864
      %v1866 = vrot.slane %v1797, 5
      %v1867 = vrot.slane %v1866, 4
      %v1868 = vrot.slane %v809, 5
      %v1869 = vsel %vm1844, %v1867, %v1868
      %v1870 = vrot.slane %v1868, 4
      %v1871 = vrot.slane %v838, 5
      %v1872 = vsel %vm1844, %v1870, %v1871
      %v1873 = vrot.slane %v1798, 5
      %v1874 = vrot.slane %v1873, 4
      %v1875 = vrot.slane %v811, 5
      %v1876 = vsel %vm1844, %v1874, %v1875
      %v1877 = vrot.slane %v1875, 4
      %v1878 = vrot.slane %v839, 5
      %v1879 = vsel %vm1844, %v1877, %v1878
      %v1880 = vrot.slane %v1799, 5
      %v1881 = vrot.slane %v1880, 4
      %v1882 = vrot.slane %v813, 5
      %v1883 = vsel %vm1844, %v1881, %v1882
      %v1884 = vrot.slane %v1882, 4
      %v1885 = vrot.slane %v840, 5
      %v1886 = vsel %vm1844, %v1884, %v1885
      %v1887 = vrot.slane %v1800, 5
      %v1888 = vrot.slane %v1887, 4
      %v1889 = vrot.slane %v815, 5
      %v1890 = vsel %vm1844, %v1888, %v1889
      %v1891 = vrot.slane %v1889, 4
      %v1892 = vrot.slane %v841, 5
      %v1893 = vsel %vm1844, %v1891, %v1892
      %v1894 = vrot.slane %v1801, 5
      %v1895 = vrot.slane %v1894, 4
      %v1896 = vrot.slane %v817, 5
      %v1897 = vsel %vm1844, %v1895, %v1896
      %v1898 = vrot.slane %v1896, 4
      %v1899 = vrot.slane %v842, 5
      %v1900 = vsel %vm1844, %v1898, %v1899
      %v1901 = vrot.slane %v1802, 5
      %v1902 = vrot.slane %v1901, 4
      %v1903 = vrot.slane %v819, 5
      %v1904 = vsel %vm1844, %v1902, %v1903
      %v1905 = vrot.slane %v1903, 4
      %v1906 = vrot.slane %v843, 5
      %v1907 = vsel %vm1844, %v1905, %v1906
      %v1908 = vrot.slane %v1803, 5
      %v1909 = vrot.slane %v1908, 4
      %v1910 = vrot.slane %v821, 5
      %v1911 = vsel %vm1844, %v1909, %v1910
      %v1912 = vrot.slane %v1910, 4
      %v1913 = vrot.slane %v844, 5
      %v1914 = vsel %vm1844, %v1912, %v1913
      %v1915 = vrot.slane %v1804, 5
      %v1916 = vrot.slane %v1915, 4
      %v1917 = vrot.slane %v823, 5
      %v1918 = vsel %vm1844, %v1916, %v1917
      %v1919 = vrot.slane %v1917, 4
      %v1920 = vrot.slane %v845, 5
      %v1921 = vsel %vm1844, %v1919, %v1920
      %v1922 = vrot.slane %v1805, 5
      %v1923 = vrot.slane %v1922, 4
      %v1924 = vrot.slane %v825, 5
      %v1925 = vsel %vm1844, %v1923, %v1924
      %v1926 = vrot.slane %v1924, 4
      %v1927 = vrot.slane %v846, 5
      %v1928 = vsel %vm1844, %v1926, %v1927
      %v1929 = vrot.slane %v1806, 5
      %v1930 = vrot.slane %v1929, 4
      %v1931 = vrot.slane %v827, 5
      %v1932 = vsel %vm1844, %v1930, %v1931
      %v1933 = vrot.slane %v1931, 4
      %v1934 = vrot.slane %v847, 5
      %v1935 = vsel %vm1844, %v1933, %v1934
      %v1936 = vrot.slane %v1807, 5
      %v1937 = vrot.slane %v1936, 4
      %v1938 = vrot.slane %v829, 5
      %v1939 = vsel %vm1844, %v1937, %v1938
      %v1940 = vrot.slane %v1938, 4
      %v1941 = vrot.slane %v848, 5
      %v1942 = vsel %vm1844, %v1940, %v1941
      %v1943 = vrot.slane %v1808, 5
      %v1944 = vrot.slane %v1943, 4
      %v1945 = vrot.slane %v831, 5
      %v1946 = vsel %vm1844, %v1944, %v1945
      %v1947 = vrot.slane %v1945, 4
      %v1948 = vrot.slane %v849, 5
      %v1949 = vsel %vm1844, %v1947, %v1948
      %v1950 = vrot.slane %v1809, 5
      %v1951 = vrot.slane %v1950, 4
      %v1952 = vrot.slane %v833, 5
      %v1953 = vsel %vm1844, %v1951, %v1952
      %v1954 = vrot.slane %v1952, 4
      %v1955 = vrot.slane %v850, 5
      %v1956 = vsel %vm1844, %v1954, %v1955
      %s1957 = scalar_lea.vmem %s2, 4
      %v1958 = vld [vmem:[%s1957] sm:$0x3]
      %v1959 = vunpack.c.l.b16 %v1848
      %v1960 = vunpack.c.l.b16 %v1851
      %v1961 = vunpack.c.l.b16 %v1855
      %v1962 = vunpack.c.l.b16 %v1858
      %v1963 = vunpack.c.l.b16 %v1862
      %v1964 = vunpack.c.l.b16 %v1865
      %v1965 = vunpack.c.l.b16 %v1869
      %v1966 = vunpack.c.l.b16 %v1872
      %v1967 = vunpack.c.l.b16 %v1876
      %v1968 = vunpack.c.l.b16 %v1879
      %v1969 = vunpack.c.l.b16 %v1883
      %v1970 = vunpack.c.l.b16 %v1886
      %v1971 = vunpack.c.l.b16 %v1890
      %v1972 = vunpack.c.l.b16 %v1893
      %v1973 = vunpack.c.l.b16 %v1897
      %v1974 = vunpack.c.l.b16 %v1900
      %v1975 = vunpack.c.l.b16 %v1904
      %v1976 = vunpack.c.l.b16 %v1907
      %v1977 = vunpack.c.l.b16 %v1911
      %v1978 = vunpack.c.l.b16 %v1914
      %v1979 = vunpack.c.l.b16 %v1918
      %v1980 = vunpack.c.l.b16 %v1921
      %v1981 = vunpack.c.l.b16 %v1925
      %v1982 = vunpack.c.l.b16 %v1928
      %v1983 = vunpack.c.l.b16 %v1932
      %v1984 = vunpack.c.l.b16 %v1935
      %v1985 = vunpack.c.l.b16 %v1939
      %v1986 = vunpack.c.l.b16 %v1942
      %v1987 = vunpack.c.l.b16 %v1946
      %v1988 = vunpack.c.l.b16 %v1949
      %v1989 = vunpack.c.l.b16 %v1953
      %v1990 = vunpack.c.l.b16 %v1956
      %v1991 = vpack.c.b16 %v1960, %v1959
      %v1992 = vpack.c.b16 %v1962, %v1961
      %v1993 = vpack.c.b16 %v1964, %v1963
      %v1994 = vpack.c.b16 %v1966, %v1965
      %v1995 = vpack.c.b16 %v1968, %v1967
      %v1996 = vpack.c.b16 %v1970, %v1969
      %v1997 = vpack.c.b16 %v1972, %v1971
      %v1998 = vpack.c.b16 %v1974, %v1973
      %v1999 = vpack.c.b16 %v1976, %v1975
      %v2000 = vpack.c.b16 %v1978, %v1977
      %v2001 = vpack.c.b16 %v1980, %v1979
      %v2002 = vpack.c.b16 %v1982, %v1981
      %v2003 = vpack.c.b16 %v1984, %v1983
      %v2004 = vpack.c.b16 %v1986, %v1985
      %v2005 = vpack.c.b16 %v1988, %v1987
      %v2006 = vpack.c.b16 %v1990, %v1989
      %v2008 = vsel %vm1288, %v1991, 0
      %v2011 = vsel %vm1288, %v1992, 0
      %v2014 = vsel %vm1288, %v1993, 0
      %v2017 = vsel %vm1288, %v1994, 0
      %v2020 = vsel %vm1288, %v1995, 0
      %v2023 = vsel %vm1288, %v1996, 0
      %v2026 = vsel %vm1288, %v1997, 0
      %v2029 = vsel %vm1288, %v1998, 0
      %v2032 = vsel %vm1288, %v1999, 0
      %v2035 = vsel %vm1288, %v2000, 0
      %v2038 = vsel %vm1288, %v2001, 0
      %v2041 = vsel %vm1288, %v2002, 0
      %v2044 = vsel %vm1288, %v2003, 0
      %v2047 = vsel %vm1288, %v2004, 0
      %v2050 = vsel %vm1288, %v2005, 0
      %v2053 = vsel %vm1288, %v2006, 0
      %v2056 = vsel %vm1337, %v1958, 0
      %2058 = vmatprep.subr.bf16.mxu0 0
      %2059 = vmatpush1.bf16.msra.mxu0 0
      %2060 = vmatprep.subr.bf16.mxu0 0
      %2061 = vmatpush1.bf16.msra.mxu0 0
      %2062 = vmatprep.subr.bf16.mxu0 0
      %2063 = vmatpush1.bf16.msra.mxu0 0
      %2064 = vmatprep.subr.bf16.mxu0 0
      %2065 = vmatpush1.bf16.msra.mxu0 0
      %2066 = vmatprep.subr.bf16.mxu0 0
      %2067 = vmatpush1.bf16.msra.mxu0 0
      %2068 = vmatprep.subr.bf16.mxu0 0
      %2069 = vmatpush1.bf16.msra.mxu0 0
      %2070 = vmatprep.subr.bf16.mxu0 0
      %2071 = vmatpush1.bf16.msra.mxu0 0
      %2072 = vmatprep.subr.bf16.mxu0 0
      %2073 = vmatpush1.bf16.msra.mxu0 %v2056
      %2074 = vmatprep.subr.bf16.mxu0 0
      %2075 = vmatpush2.bf16.msra.mxu0 0
      %2076 = vmatprep.subr.bf16.mxu0 0
      %2077 = vmatpush2.bf16.msra.mxu0 0
      %2078 = vmatprep.subr.bf16.mxu0 0
      %2079 = vmatpush2.bf16.msra.mxu0 0
      %2080 = vmatprep.subr.bf16.mxu0 0
      %2081 = vmatpush2.bf16.msra.mxu0 0
      %2082 = vmatprep.subr.bf16.mxu0 0
      %2083 = vmatpush2.bf16.msra.mxu0 0
      %2084 = vmatprep.subr.bf16.mxu0 0
      %2085 = vmatpush2.bf16.msra.mxu0 0
      %2086 = vmatprep.subr.bf16.mxu0 0
      %2087 = vmatpush2.bf16.msra.mxu0 0
      %2088 = vmatprep.subr.bf16.mxu0 0
      %2089 = vmatpush2.bf16.msra.mxu0 0
      %2090 = vmatprep.mubr.bf16.mxu0 0
      %2091 = vmatmul.mubr.bf16.gmra.mxu0 %v2008
      %v2092 = vpop.f32.mrf.mxu0
      %v2093 = vadd.f32 0.0, %v2092
      %v2094 = vpop.f32.mrf.mxu0
      %v2095 = vpop.f32.mrf.mxu0
      %v2096 = vadd.f32 0.0, %v2095
      %v2097 = vpop.f32.mrf.mxu0
      %2098 = vmatprep.mubr.bf16.mxu0 0
      %2099 = vmatmul.mubr.bf16.gmra.mxu0 %v2011
      %v2100 = vpop.f32.mrf.mxu0
      %v2101 = vadd.f32 0.0, %v2100
      %v2102 = vpop.f32.mrf.mxu0
      %v2103 = vpop.f32.mrf.mxu0
      %v2104 = vadd.f32 0.0, %v2103
      %v2105 = vpop.f32.mrf.mxu0
      %2106 = vmatprep.mubr.bf16.mxu0 0
      %2107 = vmatmul.mubr.bf16.gmra.mxu0 %v2014
      %v2108 = vpop.f32.mrf.mxu0
      %v2109 = vadd.f32 0.0, %v2108
      %v2110 = vpop.f32.mrf.mxu0
      %v2111 = vpop.f32.mrf.mxu0
      %v2112 = vadd.f32 0.0, %v2111
      %v2113 = vpop.f32.mrf.mxu0
      %2114 = vmatprep.mubr.bf16.mxu0 0
      %2115 = vmatmul.mubr.bf16.gmra.mxu0 %v2017
      %v2116 = vpop.f32.mrf.mxu0
      %v2117 = vadd.f32 0.0, %v2116
      %v2118 = vpop.f32.mrf.mxu0
      %v2119 = vpop.f32.mrf.mxu0
      %v2120 = vadd.f32 0.0, %v2119
      %v2121 = vpop.f32.mrf.mxu0
      %2122 = vmatprep.mubr.bf16.mxu0 0
      %2123 = vmatmul.mubr.bf16.gmra.mxu0 %v2020
      %v2124 = vpop.f32.mrf.mxu0
      %v2125 = vadd.f32 0.0, %v2124
      %v2126 = vpop.f32.mrf.mxu0
      %v2127 = vpop.f32.mrf.mxu0
      %v2128 = vadd.f32 0.0, %v2127
      %v2129 = vpop.f32.mrf.mxu0
      %2130 = vmatprep.mubr.bf16.mxu0 0
      %2131 = vmatmul.mubr.bf16.gmra.mxu0 %v2023
      %v2132 = vpop.f32.mrf.mxu0
      %v2133 = vadd.f32 0.0, %v2132
      %v2134 = vpop.f32.mrf.mxu0
      %v2135 = vpop.f32.mrf.mxu0
      %v2136 = vadd.f32 0.0, %v2135
      %v2137 = vpop.f32.mrf.mxu0
      %2138 = vmatprep.mubr.bf16.mxu0 0
      %2139 = vmatmul.mubr.bf16.gmra.mxu0 %v2026
      %v2140 = vpop.f32.mrf.mxu0
      %v2141 = vadd.f32 0.0, %v2140
      %v2142 = vpop.f32.mrf.mxu0
      %v2143 = vpop.f32.mrf.mxu0
      %v2144 = vadd.f32 0.0, %v2143
      %v2145 = vpop.f32.mrf.mxu0
      %2146 = vmatprep.mubr.bf16.mxu0 0
      %2147 = vmatmul.mubr.bf16.gmra.mxu0 %v2029
      %v2148 = vpop.f32.mrf.mxu0
      %v2149 = vadd.f32 0.0, %v2148
      %v2150 = vpop.f32.mrf.mxu0
      %v2151 = vpop.f32.mrf.mxu0
      %v2152 = vadd.f32 0.0, %v2151
      %v2153 = vpop.f32.mrf.mxu0
      %2154 = vmatprep.mubr.bf16.mxu0 0
      %2155 = vmatmul.mubr.bf16.gmra.mxu0 %v2032
      %v2156 = vpop.f32.mrf.mxu0
      %v2157 = vadd.f32 0.0, %v2156
      %v2158 = vpop.f32.mrf.mxu0
      %v2159 = vpop.f32.mrf.mxu0
      %v2160 = vadd.f32 0.0, %v2159
      %v2161 = vpop.f32.mrf.mxu0
      %2162 = vmatprep.mubr.bf16.mxu0 0
      %2163 = vmatmul.mubr.bf16.gmra.mxu0 %v2035
      %v2164 = vpop.f32.mrf.mxu0
      %v2165 = vadd.f32 0.0, %v2164
      %v2166 = vpop.f32.mrf.mxu0
      %v2167 = vpop.f32.mrf.mxu0
      %v2168 = vadd.f32 0.0, %v2167
      %v2169 = vpop.f32.mrf.mxu0
      %2170 = vmatprep.mubr.bf16.mxu0 0
      %2171 = vmatmul.mubr.bf16.gmra.mxu0 %v2038
      %v2172 = vpop.f32.mrf.mxu0
      %v2173 = vadd.f32 0.0, %v2172
      %v2174 = vpop.f32.mrf.mxu0
      %v2175 = vpop.f32.mrf.mxu0
      %v2176 = vadd.f32 0.0, %v2175
      %v2177 = vpop.f32.mrf.mxu0
      %2178 = vmatprep.mubr.bf16.mxu0 0
      %2179 = vmatmul.mubr.bf16.gmra.mxu0 %v2041
      %v2180 = vpop.f32.mrf.mxu0
      %v2181 = vadd.f32 0.0, %v2180
      %v2182 = vpop.f32.mrf.mxu0
      %v2183 = vpop.f32.mrf.mxu0
      %v2184 = vadd.f32 0.0, %v2183
      %v2185 = vpop.f32.mrf.mxu0
      %2186 = vmatprep.mubr.bf16.mxu0 0
      %2187 = vmatmul.mubr.bf16.gmra.mxu0 %v2044
      %v2188 = vpop.f32.mrf.mxu0
      %v2189 = vadd.f32 0.0, %v2188
      %v2190 = vpop.f32.mrf.mxu0
      %v2191 = vpop.f32.mrf.mxu0
      %v2192 = vadd.f32 0.0, %v2191
      %v2193 = vpop.f32.mrf.mxu0
      %2194 = vmatprep.mubr.bf16.mxu0 0
      %2195 = vmatmul.mubr.bf16.gmra.mxu0 %v2047
      %v2196 = vpop.f32.mrf.mxu0
      %v2197 = vadd.f32 0.0, %v2196
      %v2198 = vpop.f32.mrf.mxu0
      %v2199 = vpop.f32.mrf.mxu0
      %v2200 = vadd.f32 0.0, %v2199
      %v2201 = vpop.f32.mrf.mxu0
      %2202 = vmatprep.mubr.bf16.mxu0 0
      %2203 = vmatmul.mubr.bf16.gmra.mxu0 %v2050
      %v2204 = vpop.f32.mrf.mxu0
      %v2205 = vadd.f32 0.0, %v2204
      %v2206 = vpop.f32.mrf.mxu0
      %v2207 = vpop.f32.mrf.mxu0
      %v2208 = vadd.f32 0.0, %v2207
      %v2209 = vpop.f32.mrf.mxu0
      %2210 = vmatprep.mubr.bf16.mxu0 0
      %2211 = vmatmul.mubr.bf16.gmra.mxu0 %v2053
      %v2212 = vpop.f32.mrf.mxu0
      %v2213 = vadd.f32 0.0, %v2212
      %v2214 = vpop.f32.mrf.mxu0
      %v2215 = vpop.f32.mrf.mxu0
      %v2216 = vadd.f32 0.0, %v2215
      %v2217 = vpop.f32.mrf.mxu0
      %2218 = vdwg.mxu0
      %v2219 = vadd.f32 %v1668, %v2093
      %v2220 = vadd.f32 %v1671, %v2096
      %v2221 = vadd.f32 %v1676, %v2101
      %v2222 = vadd.f32 %v1679, %v2104
      %v2223 = vadd.f32 %v1684, %v2109
      %v2224 = vadd.f32 %v1687, %v2112
      %v2225 = vadd.f32 %v1692, %v2117
      %v2226 = vadd.f32 %v1695, %v2120
      %v2227 = vadd.f32 %v1700, %v2125
      %v2228 = vadd.f32 %v1703, %v2128
      %v2229 = vadd.f32 %v1708, %v2133
      %v2230 = vadd.f32 %v1711, %v2136
      %v2231 = vadd.f32 %v1716, %v2141
      %v2232 = vadd.f32 %v1719, %v2144
      %v2233 = vadd.f32 %v1724, %v2149
      %v2234 = vadd.f32 %v1727, %v2152
      %v2235 = vadd.f32 %v1732, %v2157
      %v2236 = vadd.f32 %v1735, %v2160
      %v2237 = vadd.f32 %v1740, %v2165
      %v2238 = vadd.f32 %v1743, %v2168
      %v2239 = vadd.f32 %v1748, %v2173
      %v2240 = vadd.f32 %v1751, %v2176
      %v2241 = vadd.f32 %v1756, %v2181
      %v2242 = vadd.f32 %v1759, %v2184
      %v2243 = vadd.f32 %v1764, %v2189
      %v2244 = vadd.f32 %v1767, %v2192
      %v2245 = vadd.f32 %v1772, %v2197
      %v2246 = vadd.f32 %v1775, %v2200
      %v2247 = vadd.f32 %v1780, %v2205
      %v2248 = vadd.f32 %v1783, %v2208
      %v2249 = vadd.f32 %v1788, %v2213
      %v2250 = vadd.f32 %v1791, %v2216
      %v2251 = vld [vmem:[%s684] sm:$0xf]
      %v2252 = vld [vmem:[%s684 + $0x4] sm:$0xf]
      %v2253 = vld [vmem:[%s684 + $0xc] sm:$0xf]
      %v2254 = vld [vmem:[%s684 + $0x10] sm:$0xf]
      %v2255 = vld [vmem:[%s684 + $0x18] sm:$0xf]
      %v2256 = vld [vmem:[%s684 + $0x1c] sm:$0xf]
      %v2257 = vld [vmem:[%s684 + $0x24] sm:$0xf]
      %v2258 = vld [vmem:[%s684 + $0x28] sm:$0xf]
      %v2259 = vld [vmem:[%s684 + $0x30] sm:$0xf]
      %v2260 = vld [vmem:[%s684 + $0x34] sm:$0xf]
      %v2261 = vld [vmem:[%s684 + $0x3c] sm:$0xf]
      %v2262 = vld [vmem:[%s684 + $0x40] sm:$0xf]
      %v2263 = vld [vmem:[%s684 + $0x48] sm:$0xf]
      %v2264 = vld [vmem:[%s684 + $0x4c] sm:$0xf]
      %v2265 = vld [vmem:[%s684 + $0x54] sm:$0xf]
      %v2266 = vld [vmem:[%s684 + $0x58] sm:$0xf]
      %v2267 = vld [vmem:[%s684 + $0x60] sm:$0xf]
      %v2268 = vld [vmem:[%s684 + $0x64] sm:$0xf]
      %v2269 = vld [vmem:[%s684 + $0x6c] sm:$0xf]
      %v2270 = vld [vmem:[%s684 + $0x70] sm:$0xf]
      %v2271 = vld [vmem:[%s684 + $0x78] sm:$0xf]
      %v2272 = vld [vmem:[%s684 + $0x7c] sm:$0xf]
      %v2273 = vld [vmem:[%s684 + $0x84] sm:$0xf]
      %v2274 = vld [vmem:[%s684 + $0x88] sm:$0xf]
      %v2275 = vld [vmem:[%s684 + $0x90] sm:$0xf]
      %v2276 = vld [vmem:[%s684 + $0x94] sm:$0xf]
      %v2277 = vld [vmem:[%s684 + $0x9c] sm:$0xf]
      %v2278 = vld [vmem:[%s684 + $0xa0] sm:$0xf]
      %v2279 = vld [vmem:[%s684 + $0xa8] sm:$0xf]
      %v2280 = vld [vmem:[%s684 + $0xac] sm:$0xf]
      %v2281 = vld [vmem:[%s684 + $0xb4] sm:$0xf]
      %v2282 = vld [vmem:[%s684 + $0xb8] sm:$0xf]
      %s2283 = scalar_lea.vmem %s2, 6
      %v2284 = vld [vmem:[%s2283] sm:$0x3]
      %v2317 = vunpack.c.l.b16 %v2251
      %v2318 = vunpack.c.l.b16 %v2252
      %v2319 = vunpack.c.l.b16 %v2253
      %v2320 = vunpack.c.l.b16 %v2254
      %v2321 = vunpack.c.l.b16 %v2255
      %v2322 = vunpack.c.l.b16 %v2256
      %v2323 = vunpack.c.l.b16 %v2257
      %v2324 = vunpack.c.l.b16 %v2258
      %v2325 = vunpack.c.l.b16 %v2259
      %v2326 = vunpack.c.l.b16 %v2260
      %v2327 = vunpack.c.l.b16 %v2261
      %v2328 = vunpack.c.l.b16 %v2262
      %v2329 = vunpack.c.l.b16 %v2263
      %v2330 = vunpack.c.l.b16 %v2264
      %v2331 = vunpack.c.l.b16 %v2265
      %v2332 = vunpack.c.l.b16 %v2266
      %v2333 = vunpack.c.l.b16 %v2267
      %v2334 = vunpack.c.l.b16 %v2268
      %v2335 = vunpack.c.l.b16 %v2269
      %v2336 = vunpack.c.l.b16 %v2270
      %v2337 = vunpack.c.l.b16 %v2271
      %v2338 = vunpack.c.l.b16 %v2272
      %v2339 = vunpack.c.l.b16 %v2273
      %v2340 = vunpack.c.l.b16 %v2274
      %v2341 = vunpack.c.l.b16 %v2275
      %v2342 = vunpack.c.l.b16 %v2276
      %v2343 = vunpack.c.l.b16 %v2277
      %v2344 = vunpack.c.l.b16 %v2278
      %v2345 = vunpack.c.l.b16 %v2279
      %v2346 = vunpack.c.l.b16 %v2280
      %v2347 = vunpack.c.l.b16 %v2281
      %v2348 = vunpack.c.l.b16 %v2282
      %v2349 = vpack.c.b16 %v2318, %v2317
      %v2350 = vpack.c.b16 %v2320, %v2319
      %v2351 = vpack.c.b16 %v2322, %v2321
      %v2352 = vpack.c.b16 %v2324, %v2323
      %v2353 = vpack.c.b16 %v2326, %v2325
      %v2354 = vpack.c.b16 %v2328, %v2327
      %v2355 = vpack.c.b16 %v2330, %v2329
      %v2356 = vpack.c.b16 %v2332, %v2331
      %v2357 = vpack.c.b16 %v2334, %v2333
      %v2358 = vpack.c.b16 %v2336, %v2335
      %v2359 = vpack.c.b16 %v2338, %v2337
      %v2360 = vpack.c.b16 %v2340, %v2339
      %v2361 = vpack.c.b16 %v2342, %v2341
      %v2362 = vpack.c.b16 %v2344, %v2343
      %v2363 = vpack.c.b16 %v2346, %v2345
      %v2364 = vpack.c.b16 %v2348, %v2347
      %v2366 = vsel %vm1288, %v2349, 0
      %v2369 = vsel %vm1288, %v2350, 0
      %v2372 = vsel %vm1288, %v2351, 0
      %v2375 = vsel %vm1288, %v2352, 0
      %v2378 = vsel %vm1288, %v2353, 0
      %v2381 = vsel %vm1288, %v2354, 0
      %v2384 = vsel %vm1288, %v2355, 0
      %v2387 = vsel %vm1288, %v2356, 0
      %v2390 = vsel %vm1288, %v2357, 0
      %v2393 = vsel %vm1288, %v2358, 0
      %v2396 = vsel %vm1288, %v2359, 0
      %v2399 = vsel %vm1288, %v2360, 0
      %v2402 = vsel %vm1288, %v2361, 0
      %v2405 = vsel %vm1288, %v2362, 0
      %v2408 = vsel %vm1288, %v2363, 0
      %v2411 = vsel %vm1288, %v2364, 0
      %v2414 = vsel %vm1337, %v2284, 0
      %2416 = vmatprep.subr.bf16.mxu0 0
      %2417 = vmatpush1.bf16.msra.mxu0 0
      %2418 = vmatprep.subr.bf16.mxu0 0
      %2419 = vmatpush1.bf16.msra.mxu0 0
      %2420 = vmatprep.subr.bf16.mxu0 0
      %2421 = vmatpush1.bf16.msra.mxu0 0
      %2422 = vmatprep.subr.bf16.mxu0 0
      %2423 = vmatpush1.bf16.msra.mxu0 0
      %2424 = vmatprep.subr.bf16.mxu0 0
      %2425 = vmatpush1.bf16.msra.mxu0 0
      %2426 = vmatprep.subr.bf16.mxu0 0
      %2427 = vmatpush1.bf16.msra.mxu0 0
      %2428 = vmatprep.subr.bf16.mxu0 0
      %2429 = vmatpush1.bf16.msra.mxu0 0
      %2430 = vmatprep.subr.bf16.mxu0 0
      %2431 = vmatpush1.bf16.msra.mxu0 %v2414
      %2432 = vmatprep.subr.bf16.mxu0 0
      %2433 = vmatpush2.bf16.msra.mxu0 0
      %2434 = vmatprep.subr.bf16.mxu0 0
      %2435 = vmatpush2.bf16.msra.mxu0 0
      %2436 = vmatprep.subr.bf16.mxu0 0
      %2437 = vmatpush2.bf16.msra.mxu0 0
      %2438 = vmatprep.subr.bf16.mxu0 0
      %2439 = vmatpush2.bf16.msra.mxu0 0
      %2440 = vmatprep.subr.bf16.mxu0 0
      %2441 = vmatpush2.bf16.msra.mxu0 0
      %2442 = vmatprep.subr.bf16.mxu0 0
      %2443 = vmatpush2.bf16.msra.mxu0 0
      %2444 = vmatprep.subr.bf16.mxu0 0
      %2445 = vmatpush2.bf16.msra.mxu0 0
      %2446 = vmatprep.subr.bf16.mxu0 0
      %2447 = vmatpush2.bf16.msra.mxu0 0
      %2448 = vmatprep.mubr.bf16.mxu0 0
      %2449 = vmatmul.mubr.bf16.gmra.mxu0 %v2366
      %v2450 = vpop.f32.mrf.mxu0
      %v2451 = vadd.f32 0.0, %v2450
      %v2452 = vpop.f32.mrf.mxu0
      %v2453 = vpop.f32.mrf.mxu0
      %v2454 = vadd.f32 0.0, %v2453
      %v2455 = vpop.f32.mrf.mxu0
      %2456 = vmatprep.mubr.bf16.mxu0 0
      %2457 = vmatmul.mubr.bf16.gmra.mxu0 %v2369
      %v2458 = vpop.f32.mrf.mxu0
      %v2459 = vadd.f32 0.0, %v2458
      %v2460 = vpop.f32.mrf.mxu0
      %v2461 = vpop.f32.mrf.mxu0
      %v2462 = vadd.f32 0.0, %v2461
      %v2463 = vpop.f32.mrf.mxu0
      %2464 = vmatprep.mubr.bf16.mxu0 0
      %2465 = vmatmul.mubr.bf16.gmra.mxu0 %v2372
      %v2466 = vpop.f32.mrf.mxu0
      %v2467 = vadd.f32 0.0, %v2466
      %v2468 = vpop.f32.mrf.mxu0
      %v2469 = vpop.f32.mrf.mxu0
      %v2470 = vadd.f32 0.0, %v2469
      %v2471 = vpop.f32.mrf.mxu0
      %2472 = vmatprep.mubr.bf16.mxu0 0
      %2473 = vmatmul.mubr.bf16.gmra.mxu0 %v2375
      %v2474 = vpop.f32.mrf.mxu0
      %v2475 = vadd.f32 0.0, %v2474
      %v2476 = vpop.f32.mrf.mxu0
      %v2477 = vpop.f32.mrf.mxu0
      %v2478 = vadd.f32 0.0, %v2477
      %v2479 = vpop.f32.mrf.mxu0
      %2480 = vmatprep.mubr.bf16.mxu0 0
      %2481 = vmatmul.mubr.bf16.gmra.mxu0 %v2378
      %v2482 = vpop.f32.mrf.mxu0
      %v2483 = vadd.f32 0.0, %v2482
      %v2484 = vpop.f32.mrf.mxu0
      %v2485 = vpop.f32.mrf.mxu0
      %v2486 = vadd.f32 0.0, %v2485
      %v2487 = vpop.f32.mrf.mxu0
      %2488 = vmatprep.mubr.bf16.mxu0 0
      %2489 = vmatmul.mubr.bf16.gmra.mxu0 %v2381
      %v2490 = vpop.f32.mrf.mxu0
      %v2491 = vadd.f32 0.0, %v2490
      %v2492 = vpop.f32.mrf.mxu0
      %v2493 = vpop.f32.mrf.mxu0
      %v2494 = vadd.f32 0.0, %v2493
      %v2495 = vpop.f32.mrf.mxu0
      %2496 = vmatprep.mubr.bf16.mxu0 0
      %2497 = vmatmul.mubr.bf16.gmra.mxu0 %v2384
      %v2498 = vpop.f32.mrf.mxu0
      %v2499 = vadd.f32 0.0, %v2498
      %v2500 = vpop.f32.mrf.mxu0
      %v2501 = vpop.f32.mrf.mxu0
      %v2502 = vadd.f32 0.0, %v2501
      %v2503 = vpop.f32.mrf.mxu0
      %2504 = vmatprep.mubr.bf16.mxu0 0
      %2505 = vmatmul.mubr.bf16.gmra.mxu0 %v2387
      %v2506 = vpop.f32.mrf.mxu0
      %v2507 = vadd.f32 0.0, %v2506
      %v2508 = vpop.f32.mrf.mxu0
      %v2509 = vpop.f32.mrf.mxu0
      %v2510 = vadd.f32 0.0, %v2509
      %v2511 = vpop.f32.mrf.mxu0
      %2512 = vmatprep.mubr.bf16.mxu0 0
      %2513 = vmatmul.mubr.bf16.gmra.mxu0 %v2390
      %v2514 = vpop.f32.mrf.mxu0
      %v2515 = vadd.f32 0.0, %v2514
      %v2516 = vpop.f32.mrf.mxu0
      %v2517 = vpop.f32.mrf.mxu0
      %v2518 = vadd.f32 0.0, %v2517
      %v2519 = vpop.f32.mrf.mxu0
      %2520 = vmatprep.mubr.bf16.mxu0 0
      %2521 = vmatmul.mubr.bf16.gmra.mxu0 %v2393
      %v2522 = vpop.f32.mrf.mxu0
      %v2523 = vadd.f32 0.0, %v2522
      %v2524 = vpop.f32.mrf.mxu0
      %v2525 = vpop.f32.mrf.mxu0
      %v2526 = vadd.f32 0.0, %v2525
      %v2527 = vpop.f32.mrf.mxu0
      %2528 = vmatprep.mubr.bf16.mxu0 0
      %2529 = vmatmul.mubr.bf16.gmra.mxu0 %v2396
      %v2530 = vpop.f32.mrf.mxu0
      %v2531 = vadd.f32 0.0, %v2530
      %v2532 = vpop.f32.mrf.mxu0
      %v2533 = vpop.f32.mrf.mxu0
      %v2534 = vadd.f32 0.0, %v2533
      %v2535 = vpop.f32.mrf.mxu0
      %2536 = vmatprep.mubr.bf16.mxu0 0
      %2537 = vmatmul.mubr.bf16.gmra.mxu0 %v2399
      %v2538 = vpop.f32.mrf.mxu0
      %v2539 = vadd.f32 0.0, %v2538
      %v2540 = vpop.f32.mrf.mxu0
      %v2541 = vpop.f32.mrf.mxu0
      %v2542 = vadd.f32 0.0, %v2541
      %v2543 = vpop.f32.mrf.mxu0
      %2544 = vmatprep.mubr.bf16.mxu0 0
      %2545 = vmatmul.mubr.bf16.gmra.mxu0 %v2402
      %v2546 = vpop.f32.mrf.mxu0
      %v2547 = vadd.f32 0.0, %v2546
      %v2548 = vpop.f32.mrf.mxu0
      %v2549 = vpop.f32.mrf.mxu0
      %v2550 = vadd.f32 0.0, %v2549
      %v2551 = vpop.f32.mrf.mxu0
      %2552 = vmatprep.mubr.bf16.mxu0 0
      %2553 = vmatmul.mubr.bf16.gmra.mxu0 %v2405
      %v2554 = vpop.f32.mrf.mxu0
      %v2555 = vadd.f32 0.0, %v2554
      %v2556 = vpop.f32.mrf.mxu0
      %v2557 = vpop.f32.mrf.mxu0
      %v2558 = vadd.f32 0.0, %v2557
      %v2559 = vpop.f32.mrf.mxu0
      %2560 = vmatprep.mubr.bf16.mxu0 0
      %2561 = vmatmul.mubr.bf16.gmra.mxu0 %v2408
      %v2562 = vpop.f32.mrf.mxu0
      %v2563 = vadd.f32 0.0, %v2562
      %v2564 = vpop.f32.mrf.mxu0
      %v2565 = vpop.f32.mrf.mxu0
      %v2566 = vadd.f32 0.0, %v2565
      %v2567 = vpop.f32.mrf.mxu0
      %2568 = vmatprep.mubr.bf16.mxu0 0
      %2569 = vmatmul.mubr.bf16.gmra.mxu0 %v2411
      %v2570 = vpop.f32.mrf.mxu0
      %v2571 = vadd.f32 0.0, %v2570
      %v2572 = vpop.f32.mrf.mxu0
      %v2573 = vpop.f32.mrf.mxu0
      %v2574 = vadd.f32 0.0, %v2573
      %v2575 = vpop.f32.mrf.mxu0
      %2576 = vdwg.mxu0
      %v2577 = vadd.f32 %v2219, %v2451
      %v2578 = vadd.f32 %v2220, %v2454
      %v2579 = vadd.f32 %v2221, %v2459
      %v2580 = vadd.f32 %v2222, %v2462
      %v2581 = vadd.f32 %v2223, %v2467
      %v2582 = vadd.f32 %v2224, %v2470
      %v2583 = vadd.f32 %v2225, %v2475
      %v2584 = vadd.f32 %v2226, %v2478
      %v2585 = vadd.f32 %v2227, %v2483
      %v2586 = vadd.f32 %v2228, %v2486
      %v2587 = vadd.f32 %v2229, %v2491
      %v2588 = vadd.f32 %v2230, %v2494
      %v2589 = vadd.f32 %v2231, %v2499
      %v2590 = vadd.f32 %v2232, %v2502
      %v2591 = vadd.f32 %v2233, %v2507
      %v2592 = vadd.f32 %v2234, %v2510
      %v2593 = vadd.f32 %v2235, %v2515
      %v2594 = vadd.f32 %v2236, %v2518
      %v2595 = vadd.f32 %v2237, %v2523
      %v2596 = vadd.f32 %v2238, %v2526
      %v2597 = vadd.f32 %v2239, %v2531
      %v2598 = vadd.f32 %v2240, %v2534
      %v2599 = vadd.f32 %v2241, %v2539
      %v2600 = vadd.f32 %v2242, %v2542
      %v2601 = vadd.f32 %v2243, %v2547
      %v2602 = vadd.f32 %v2244, %v2550
      %v2603 = vadd.f32 %v2245, %v2555
      %v2604 = vadd.f32 %v2246, %v2558
      %v2605 = vadd.f32 %v2247, %v2563
      %v2606 = vadd.f32 %v2248, %v2566
      %v2607 = vadd.f32 %v2249, %v2571
      %v2608 = vadd.f32 %v2250, %v2574
      %v2609 = vld [vmem:[%s684] sm:$0xf]
      %v2610 = vld [vmem:[%s684 + $0x4] sm:$0xf]
      %v2611 = vld [vmem:[%s684 + $0x8] sm:$0x1]
      %v2612 = vld [vmem:[%s684 + $0xc] sm:$0xf]
      %v2613 = vld [vmem:[%s684 + $0x10] sm:$0xf]
      %v2614 = vld [vmem:[%s684 + $0x14] sm:$0x1]
      %v2615 = vld [vmem:[%s684 + $0x18] sm:$0xf]
      %v2616 = vld [vmem:[%s684 + $0x1c] sm:$0xf]
      %v2617 = vld [vmem:[%s684 + $0x20] sm:$0x1]
      %v2618 = vld [vmem:[%s684 + $0x24] sm:$0xf]
      %v2619 = vld [vmem:[%s684 + $0x28] sm:$0xf]
      %v2620 = vld [vmem:[%s684 + $0x2c] sm:$0x1]
      %v2621 = vld [vmem:[%s684 + $0x30] sm:$0xf]
      %v2622 = vld [vmem:[%s684 + $0x34] sm:$0xf]
      %v2623 = vld [vmem:[%s684 + $0x38] sm:$0x1]
      %v2624 = vld [vmem:[%s684 + $0x3c] sm:$0xf]
      %v2625 = vld [vmem:[%s684 + $0x40] sm:$0xf]
      %v2626 = vld [vmem:[%s684 + $0x44] sm:$0x1]
      %v2627 = vld [vmem:[%s684 + $0x48] sm:$0xf]
      %v2628 = vld [vmem:[%s684 + $0x4c] sm:$0xf]
      %v2629 = vld [vmem:[%s684 + $0x50] sm:$0x1]
      %v2630 = vld [vmem:[%s684 + $0x54] sm:$0xf]
      %v2631 = vld [vmem:[%s684 + $0x58] sm:$0xf]
      %v2632 = vld [vmem:[%s684 + $0x5c] sm:$0x1]
      %v2633 = vld [vmem:[%s684 + $0x60] sm:$0xf]
      %v2634 = vld [vmem:[%s684 + $0x64] sm:$0xf]
      %v2635 = vld [vmem:[%s684 + $0x68] sm:$0x1]
      %v2636 = vld [vmem:[%s684 + $0x6c] sm:$0xf]
      %v2637 = vld [vmem:[%s684 + $0x70] sm:$0xf]
      %v2638 = vld [vmem:[%s684 + $0x74] sm:$0x1]
      %v2639 = vld [vmem:[%s684 + $0x78] sm:$0xf]
      %v2640 = vld [vmem:[%s684 + $0x7c] sm:$0xf]
      %v2641 = vld [vmem:[%s684 + $0x80] sm:$0x1]
      %v2642 = vld [vmem:[%s684 + $0x84] sm:$0xf]
      %v2643 = vld [vmem:[%s684 + $0x88] sm:$0xf]
      %v2644 = vld [vmem:[%s684 + $0x8c] sm:$0x1]
      %v2645 = vld [vmem:[%s684 + $0x90] sm:$0xf]
      %v2646 = vld [vmem:[%s684 + $0x94] sm:$0xf]
      %v2647 = vld [vmem:[%s684 + $0x98] sm:$0x1]
      %v2648 = vld [vmem:[%s684 + $0x9c] sm:$0xf]
      %v2649 = vld [vmem:[%s684 + $0xa0] sm:$0xf]
      %v2650 = vld [vmem:[%s684 + $0xa4] sm:$0x1]
      %v2651 = vld [vmem:[%s684 + $0xa8] sm:$0xf]
      %v2652 = vld [vmem:[%s684 + $0xac] sm:$0xf]
      %v2653 = vld [vmem:[%s684 + $0xb0] sm:$0x1]
      %v2654 = vld [vmem:[%s684 + $0xb4] sm:$0xf]
      %v2655 = vld [vmem:[%s684 + $0xb8] sm:$0xf]
      %v2656 = vld [vmem:[%s684 + $0xbc] sm:$0x1]
      %v2658 = vshrl.u32 %v2609, 16
      %v2660 = vrot.slane %v2658, 4
      %v2661 = vshll.u32 %v2609, 16
      %v2663 = vrot.slane %v2661, 5
      %v2664 = vor.u32 %v2660, %v2663
      %v2665 = vrot.slane %v2664, 4
      %v2667 = vshll.u32 %v2610, 16
      %v2669 = vrot.slane %v2667, 5
      %v2670 = vsel %vm853, %v2665, %v2669
      %v2671 = vshrl.u32 %v2610, 16
      %v2673 = vrot.slane %v2671, 4
      %v2674 = vor.u32 %v2673, %v2669
      %v2675 = vrot.slane %v2674, 4
      %v2677 = vshll.u32 %v2611, 16
      %v2679 = vrot.slane %v2677, 5
      %v2680 = vsel %vm853, %v2675, %v2679
      %v2682 = vshrl.u32 %v2612, 16
      %v2684 = vrot.slane %v2682, 4
      %v2685 = vshll.u32 %v2612, 16
      %v2687 = vrot.slane %v2685, 5
      %v2688 = vor.u32 %v2684, %v2687
      %v2689 = vrot.slane %v2688, 4
      %v2691 = vshll.u32 %v2613, 16
      %v2693 = vrot.slane %v2691, 5
      %v2694 = vsel %vm853, %v2689, %v2693
      %v2695 = vshrl.u32 %v2613, 16
      %v2697 = vrot.slane %v2695, 4
      %v2698 = vor.u32 %v2697, %v2693
      %v2699 = vrot.slane %v2698, 4
      %v2701 = vshll.u32 %v2614, 16
      %v2703 = vrot.slane %v2701, 5
      %v2704 = vsel %vm853, %v2699, %v2703
      %v2706 = vshrl.u32 %v2615, 16
      %v2708 = vrot.slane %v2706, 4
      %v2709 = vshll.u32 %v2615, 16
      %v2711 = vrot.slane %v2709, 5
      %v2712 = vor.u32 %v2708, %v2711
      %v2713 = vrot.slane %v2712, 4
      %v2715 = vshll.u32 %v2616, 16
      %v2717 = vrot.slane %v2715, 5
      %v2718 = vsel %vm853, %v2713, %v2717
      %v2719 = vshrl.u32 %v2616, 16
      %v2721 = vrot.slane %v2719, 4
      %v2722 = vor.u32 %v2721, %v2717
      %v2723 = vrot.slane %v2722, 4
      %v2725 = vshll.u32 %v2617, 16
      %v2727 = vrot.slane %v2725, 5
      %v2728 = vsel %vm853, %v2723, %v2727
      %v2730 = vshrl.u32 %v2618, 16
      %v2732 = vrot.slane %v2730, 4
      %v2733 = vshll.u32 %v2618, 16
      %v2735 = vrot.slane %v2733, 5
      %v2736 = vor.u32 %v2732, %v2735
      %v2737 = vrot.slane %v2736, 4
      %v2739 = vshll.u32 %v2619, 16
      %v2741 = vrot.slane %v2739, 5
      %v2742 = vsel %vm853, %v2737, %v2741
      %v2743 = vshrl.u32 %v2619, 16
      %v2745 = vrot.slane %v2743, 4
      %v2746 = vor.u32 %v2745, %v2741
      %v2747 = vrot.slane %v2746, 4
      %v2749 = vshll.u32 %v2620, 16
      %v2751 = vrot.slane %v2749, 5
      %v2752 = vsel %vm853, %v2747, %v2751
      %v2754 = vshrl.u32 %v2621, 16
      %v2756 = vrot.slane %v2754, 4
      %v2757 = vshll.u32 %v2621, 16
      %v2759 = vrot.slane %v2757, 5
      %v2760 = vor.u32 %v2756, %v2759
      %v2761 = vrot.slane %v2760, 4
      %v2763 = vshll.u32 %v2622, 16
      %v2765 = vrot.slane %v2763, 5
      %v2766 = vsel %vm853, %v2761, %v2765
      %v2767 = vshrl.u32 %v2622, 16
      %v2769 = vrot.slane %v2767, 4
      %v2770 = vor.u32 %v2769, %v2765
      %v2771 = vrot.slane %v2770, 4
      %v2773 = vshll.u32 %v2623, 16
      %v2775 = vrot.slane %v2773, 5
      %v2776 = vsel %vm853, %v2771, %v2775
      %v2778 = vshrl.u32 %v2624, 16
      %v2780 = vrot.slane %v2778, 4
      %v2781 = vshll.u32 %v2624, 16
      %v2783 = vrot.slane %v2781, 5
      %v2784 = vor.u32 %v2780, %v2783
      %v2785 = vrot.slane %v2784, 4
      %v2787 = vshll.u32 %v2625, 16
      %v2789 = vrot.slane %v2787, 5
      %v2790 = vsel %vm853, %v2785, %v2789
      %v2791 = vshrl.u32 %v2625, 16
      %v2793 = vrot.slane %v2791, 4
      %v2794 = vor.u32 %v2793, %v2789
      %v2795 = vrot.slane %v2794, 4
      %v2797 = vshll.u32 %v2626, 16
      %v2799 = vrot.slane %v2797, 5
      %v2800 = vsel %vm853, %v2795, %v2799
      %v2802 = vshrl.u32 %v2627, 16
      %v2804 = vrot.slane %v2802, 4
      %v2805 = vshll.u32 %v2627, 16
      %v2807 = vrot.slane %v2805, 5
      %v2808 = vor.u32 %v2804, %v2807
      %v2809 = vrot.slane %v2808, 4
      %v2811 = vshll.u32 %v2628, 16
      %v2813 = vrot.slane %v2811, 5
      %v2814 = vsel %vm853, %v2809, %v2813
      %v2815 = vshrl.u32 %v2628, 16
      %v2817 = vrot.slane %v2815, 4
      %v2818 = vor.u32 %v2817, %v2813
      %v2819 = vrot.slane %v2818, 4
      %v2821 = vshll.u32 %v2629, 16
      %v2823 = vrot.slane %v2821, 5
      %v2824 = vsel %vm853, %v2819, %v2823
      %v2826 = vshrl.u32 %v2630, 16
      %v2828 = vrot.slane %v2826, 4
      %v2829 = vshll.u32 %v2630, 16
      %v2831 = vrot.slane %v2829, 5
      %v2832 = vor.u32 %v2828, %v2831
      %v2833 = vrot.slane %v2832, 4
      %v2835 = vshll.u32 %v2631, 16
      %v2837 = vrot.slane %v2835, 5
      %v2838 = vsel %vm853, %v2833, %v2837
      %v2839 = vshrl.u32 %v2631, 16
      %v2841 = vrot.slane %v2839, 4
      %v2842 = vor.u32 %v2841, %v2837
      %v2843 = vrot.slane %v2842, 4
      %v2845 = vshll.u32 %v2632, 16
      %v2847 = vrot.slane %v2845, 5
      %v2848 = vsel %vm853, %v2843, %v2847
      %v2850 = vshrl.u32 %v2633, 16
      %v2852 = vrot.slane %v2850, 4
      %v2853 = vshll.u32 %v2633, 16
      %v2855 = vrot.slane %v2853, 5
      %v2856 = vor.u32 %v2852, %v2855
      %v2857 = vrot.slane %v2856, 4
      %v2859 = vshll.u32 %v2634, 16
      %v2861 = vrot.slane %v2859, 5
      %v2862 = vsel %vm853, %v2857, %v2861
      %v2863 = vshrl.u32 %v2634, 16
      %v2865 = vrot.slane %v2863, 4
      %v2866 = vor.u32 %v2865, %v2861
      %v2867 = vrot.slane %v2866, 4
      %v2869 = vshll.u32 %v2635, 16
      %v2871 = vrot.slane %v2869, 5
      %v2872 = vsel %vm853, %v2867, %v2871
      %v2874 = vshrl.u32 %v2636, 16
      %v2876 = vrot.slane %v2874, 4
      %v2877 = vshll.u32 %v2636, 16
      %v2879 = vrot.slane %v2877, 5
      %v2880 = vor.u32 %v2876, %v2879
      %v2881 = vrot.slane %v2880, 4
      %v2883 = vshll.u32 %v2637, 16
      %v2885 = vrot.slane %v2883, 5
      %v2886 = vsel %vm853, %v2881, %v2885
      %v2887 = vshrl.u32 %v2637, 16
      %v2889 = vrot.slane %v2887, 4
      %v2890 = vor.u32 %v2889, %v2885
      %v2891 = vrot.slane %v2890, 4
      %v2893 = vshll.u32 %v2638, 16
      %v2895 = vrot.slane %v2893, 5
      %v2896 = vsel %vm853, %v2891, %v2895
      %v2898 = vshrl.u32 %v2639, 16
      %v2900 = vrot.slane %v2898, 4
      %v2901 = vshll.u32 %v2639, 16
      %v2903 = vrot.slane %v2901, 5
      %v2904 = vor.u32 %v2900, %v2903
      %v2905 = vrot.slane %v2904, 4
      %v2907 = vshll.u32 %v2640, 16
      %v2909 = vrot.slane %v2907, 5
      %v2910 = vsel %vm853, %v2905, %v2909
      %v2911 = vshrl.u32 %v2640, 16
      %v2913 = vrot.slane %v2911, 4
      %v2914 = vor.u32 %v2913, %v2909
      %v2915 = vrot.slane %v2914, 4
      %v2917 = vshll.u32 %v2641, 16
      %v2919 = vrot.slane %v2917, 5
      %v2920 = vsel %vm853, %v2915, %v2919
      %v2922 = vshrl.u32 %v2642, 16
      %v2924 = vrot.slane %v2922, 4
      %v2925 = vshll.u32 %v2642, 16
      %v2927 = vrot.slane %v2925, 5
      %v2928 = vor.u32 %v2924, %v2927
      %v2929 = vrot.slane %v2928, 4
      %v2931 = vshll.u32 %v2643, 16
      %v2933 = vrot.slane %v2931, 5
      %v2934 = vsel %vm853, %v2929, %v2933
      %v2935 = vshrl.u32 %v2643, 16
      %v2937 = vrot.slane %v2935, 4
      %v2938 = vor.u32 %v2937, %v2933
      %v2939 = vrot.slane %v2938, 4
      %v2941 = vshll.u32 %v2644, 16
      %v2943 = vrot.slane %v2941, 5
      %v2944 = vsel %vm853, %v2939, %v2943
      %v2946 = vshrl.u32 %v2645, 16
      %v2948 = vrot.slane %v2946, 4
      %v2949 = vshll.u32 %v2645, 16
      %v2951 = vrot.slane %v2949, 5
      %v2952 = vor.u32 %v2948, %v2951
      %v2953 = vrot.slane %v2952, 4
      %v2955 = vshll.u32 %v2646, 16
      %v2957 = vrot.slane %v2955, 5
      %v2958 = vsel %vm853, %v2953, %v2957
      %v2959 = vshrl.u32 %v2646, 16
      %v2961 = vrot.slane %v2959, 4
      %v2962 = vor.u32 %v2961, %v2957
      %v2963 = vrot.slane %v2962, 4
      %v2965 = vshll.u32 %v2647, 16
      %v2967 = vrot.slane %v2965, 5
      %v2968 = vsel %vm853, %v2963, %v2967
      %v2970 = vshrl.u32 %v2648, 16
      %v2972 = vrot.slane %v2970, 4
      %v2973 = vshll.u32 %v2648, 16
      %v2975 = vrot.slane %v2973, 5
      %v2976 = vor.u32 %v2972, %v2975
      %v2977 = vrot.slane %v2976, 4
      %v2979 = vshll.u32 %v2649, 16
      %v2981 = vrot.slane %v2979, 5
      %v2982 = vsel %vm853, %v2977, %v2981
      %v2983 = vshrl.u32 %v2649, 16
      %v2985 = vrot.slane %v2983, 4
      %v2986 = vor.u32 %v2985, %v2981
      %v2987 = vrot.slane %v2986, 4
      %v2989 = vshll.u32 %v2650, 16
      %v2991 = vrot.slane %v2989, 5
      %v2992 = vsel %vm853, %v2987, %v2991
      %v2994 = vshrl.u32 %v2651, 16
      %v2996 = vrot.slane %v2994, 4
      %v2997 = vshll.u32 %v2651, 16
      %v2999 = vrot.slane %v2997, 5
      %v3000 = vor.u32 %v2996, %v2999
      %v3001 = vrot.slane %v3000, 4
      %v3003 = vshll.u32 %v2652, 16
      %v3005 = vrot.slane %v3003, 5
      %v3006 = vsel %vm853, %v3001, %v3005
      %v3007 = vshrl.u32 %v2652, 16
      %v3009 = vrot.slane %v3007, 4
      %v3010 = vor.u32 %v3009, %v3005
      %v3011 = vrot.slane %v3010, 4
      %v3013 = vshll.u32 %v2653, 16
      %v3015 = vrot.slane %v3013, 5
      %v3016 = vsel %vm853, %v3011, %v3015
      %v3018 = vshrl.u32 %v2654, 16
      %v3020 = vrot.slane %v3018, 4
      %v3021 = vshll.u32 %v2654, 16
      %v3023 = vrot.slane %v3021, 5
      %v3024 = vor.u32 %v3020, %v3023
      %v3025 = vrot.slane %v3024, 4
      %v3027 = vshll.u32 %v2655, 16
      %v3029 = vrot.slane %v3027, 5
      %v3030 = vsel %vm853, %v3025, %v3029
      %v3031 = vshrl.u32 %v2655, 16
      %v3033 = vrot.slane %v3031, 4
      %v3034 = vor.u32 %v3033, %v3029
      %v3035 = vrot.slane %v3034, 4
      %v3037 = vshll.u32 %v2656, 16
      %v3039 = vrot.slane %v3037, 5
      %v3040 = vsel %vm853, %v3035, %v3039
      %s3041 = scalar_lea.vmem %s2, 8
      %v3042 = vld [vmem:[%s3041] sm:$0x3]
      %v3043 = vunpack.c.l.b16 %v2670
      %v3044 = vunpack.c.l.b16 %v2680
      %v3045 = vunpack.c.l.b16 %v2694
      %v3046 = vunpack.c.l.b16 %v2704
      %v3047 = vunpack.c.l.b16 %v2718
      %v3048 = vunpack.c.l.b16 %v2728
      %v3049 = vunpack.c.l.b16 %v2742
      %v3050 = vunpack.c.l.b16 %v2752
      %v3051 = vunpack.c.l.b16 %v2766
      %v3052 = vunpack.c.l.b16 %v2776
      %v3053 = vunpack.c.l.b16 %v2790
      %v3054 = vunpack.c.l.b16 %v2800
      %v3055 = vunpack.c.l.b16 %v2814
      %v3056 = vunpack.c.l.b16 %v2824
      %v3057 = vunpack.c.l.b16 %v2838
      %v3058 = vunpack.c.l.b16 %v2848
      %v3059 = vunpack.c.l.b16 %v2862
      %v3060 = vunpack.c.l.b16 %v2872
      %v3061 = vunpack.c.l.b16 %v2886
      %v3062 = vunpack.c.l.b16 %v2896
      %v3063 = vunpack.c.l.b16 %v2910
      %v3064 = vunpack.c.l.b16 %v2920
      %v3065 = vunpack.c.l.b16 %v2934
      %v3066 = vunpack.c.l.b16 %v2944
      %v3067 = vunpack.c.l.b16 %v2958
      %v3068 = vunpack.c.l.b16 %v2968
      %v3069 = vunpack.c.l.b16 %v2982
      %v3070 = vunpack.c.l.b16 %v2992
      %v3071 = vunpack.c.l.b16 %v3006
      %v3072 = vunpack.c.l.b16 %v3016
      %v3073 = vunpack.c.l.b16 %v3030
      %v3074 = vunpack.c.l.b16 %v3040
      %v3075 = vpack.c.b16 %v3044, %v3043
      %v3076 = vpack.c.b16 %v3046, %v3045
      %v3077 = vpack.c.b16 %v3048, %v3047
      %v3078 = vpack.c.b16 %v3050, %v3049
      %v3079 = vpack.c.b16 %v3052, %v3051
      %v3080 = vpack.c.b16 %v3054, %v3053
      %v3081 = vpack.c.b16 %v3056, %v3055
      %v3082 = vpack.c.b16 %v3058, %v3057
      %v3083 = vpack.c.b16 %v3060, %v3059
      %v3084 = vpack.c.b16 %v3062, %v3061
      %v3085 = vpack.c.b16 %v3064, %v3063
      %v3086 = vpack.c.b16 %v3066, %v3065
      %v3087 = vpack.c.b16 %v3068, %v3067
      %v3088 = vpack.c.b16 %v3070, %v3069
      %v3089 = vpack.c.b16 %v3072, %v3071
      %v3090 = vpack.c.b16 %v3074, %v3073
      %v3092 = vsel %vm1288, %v3075, 0
      %v3095 = vsel %vm1288, %v3076, 0
      %v3098 = vsel %vm1288, %v3077, 0
      %v3101 = vsel %vm1288, %v3078, 0
      %v3104 = vsel %vm1288, %v3079, 0
      %v3107 = vsel %vm1288, %v3080, 0
      %v3110 = vsel %vm1288, %v3081, 0
      %v3113 = vsel %vm1288, %v3082, 0
      %v3116 = vsel %vm1288, %v3083, 0
      %v3119 = vsel %vm1288, %v3084, 0
      %v3122 = vsel %vm1288, %v3085, 0
      %v3125 = vsel %vm1288, %v3086, 0
      %v3128 = vsel %vm1288, %v3087, 0
      %v3131 = vsel %vm1288, %v3088, 0
      %v3134 = vsel %vm1288, %v3089, 0
      %v3137 = vsel %vm1288, %v3090, 0
      %v3140 = vsel %vm1337, %v3042, 0
      %3142 = vmatprep.subr.bf16.mxu0 0
      %3143 = vmatpush1.bf16.msra.mxu0 0
      %3144 = vmatprep.subr.bf16.mxu0 0
      %3145 = vmatpush1.bf16.msra.mxu0 0
      %3146 = vmatprep.subr.bf16.mxu0 0
      %3147 = vmatpush1.bf16.msra.mxu0 0
      %3148 = vmatprep.subr.bf16.mxu0 0
      %3149 = vmatpush1.bf16.msra.mxu0 0
      %3150 = vmatprep.subr.bf16.mxu0 0
      %3151 = vmatpush1.bf16.msra.mxu0 0
      %3152 = vmatprep.subr.bf16.mxu0 0
      %3153 = vmatpush1.bf16.msra.mxu0 0
      %3154 = vmatprep.subr.bf16.mxu0 0
      %3155 = vmatpush1.bf16.msra.mxu0 0
      %3156 = vmatprep.subr.bf16.mxu0 0
      %3157 = vmatpush1.bf16.msra.mxu0 %v3140
      %3158 = vmatprep.subr.bf16.mxu0 0
      %3159 = vmatpush2.bf16.msra.mxu0 0
      %3160 = vmatprep.subr.bf16.mxu0 0
      %3161 = vmatpush2.bf16.msra.mxu0 0
      %3162 = vmatprep.subr.bf16.mxu0 0
      %3163 = vmatpush2.bf16.msra.mxu0 0
      %3164 = vmatprep.subr.bf16.mxu0 0
      %3165 = vmatpush2.bf16.msra.mxu0 0
      %3166 = vmatprep.subr.bf16.mxu0 0
      %3167 = vmatpush2.bf16.msra.mxu0 0
      %3168 = vmatprep.subr.bf16.mxu0 0
      %3169 = vmatpush2.bf16.msra.mxu0 0
      %3170 = vmatprep.subr.bf16.mxu0 0
      %3171 = vmatpush2.bf16.msra.mxu0 0
      %3172 = vmatprep.subr.bf16.mxu0 0
      %3173 = vmatpush2.bf16.msra.mxu0 0
      %3174 = vmatprep.mubr.bf16.mxu0 0
      %3175 = vmatmul.mubr.bf16.gmra.mxu0 %v3092
      %v3176 = vpop.f32.mrf.mxu0
      %v3177 = vadd.f32 0.0, %v3176
      %v3178 = vpop.f32.mrf.mxu0
      %v3179 = vpop.f32.mrf.mxu0
      %v3180 = vadd.f32 0.0, %v3179
      %v3181 = vpop.f32.mrf.mxu0
      %3182 = vmatprep.mubr.bf16.mxu0 0
      %3183 = vmatmul.mubr.bf16.gmra.mxu0 %v3095
      %v3184 = vpop.f32.mrf.mxu0
      %v3185 = vadd.f32 0.0, %v3184
      %v3186 = vpop.f32.mrf.mxu0
      %v3187 = vpop.f32.mrf.mxu0
      %v3188 = vadd.f32 0.0, %v3187
      %v3189 = vpop.f32.mrf.mxu0
      %3190 = vmatprep.mubr.bf16.mxu0 0
      %3191 = vmatmul.mubr.bf16.gmra.mxu0 %v3098
      %v3192 = vpop.f32.mrf.mxu0
      %v3193 = vadd.f32 0.0, %v3192
      %v3194 = vpop.f32.mrf.mxu0
      %v3195 = vpop.f32.mrf.mxu0
      %v3196 = vadd.f32 0.0, %v3195
      %v3197 = vpop.f32.mrf.mxu0
      %3198 = vmatprep.mubr.bf16.mxu0 0
      %3199 = vmatmul.mubr.bf16.gmra.mxu0 %v3101
      %v3200 = vpop.f32.mrf.mxu0
      %v3201 = vadd.f32 0.0, %v3200
      %v3202 = vpop.f32.mrf.mxu0
      %v3203 = vpop.f32.mrf.mxu0
      %v3204 = vadd.f32 0.0, %v3203
      %v3205 = vpop.f32.mrf.mxu0
      %3206 = vmatprep.mubr.bf16.mxu0 0
      %3207 = vmatmul.mubr.bf16.gmra.mxu0 %v3104
      %v3208 = vpop.f32.mrf.mxu0
      %v3209 = vadd.f32 0.0, %v3208
      %v3210 = vpop.f32.mrf.mxu0
      %v3211 = vpop.f32.mrf.mxu0
      %v3212 = vadd.f32 0.0, %v3211
      %v3213 = vpop.f32.mrf.mxu0
      %3214 = vmatprep.mubr.bf16.mxu0 0
      %3215 = vmatmul.mubr.bf16.gmra.mxu0 %v3107
      %v3216 = vpop.f32.mrf.mxu0
      %v3217 = vadd.f32 0.0, %v3216
      %v3218 = vpop.f32.mrf.mxu0
      %v3219 = vpop.f32.mrf.mxu0
      %v3220 = vadd.f32 0.0, %v3219
      %v3221 = vpop.f32.mrf.mxu0
      %3222 = vmatprep.mubr.bf16.mxu0 0
      %3223 = vmatmul.mubr.bf16.gmra.mxu0 %v3110
      %v3224 = vpop.f32.mrf.mxu0
      %v3225 = vadd.f32 0.0, %v3224
      %v3226 = vpop.f32.mrf.mxu0
      %v3227 = vpop.f32.mrf.mxu0
      %v3228 = vadd.f32 0.0, %v3227
      %v3229 = vpop.f32.mrf.mxu0
      %3230 = vmatprep.mubr.bf16.mxu0 0
      %3231 = vmatmul.mubr.bf16.gmra.mxu0 %v3113
      %v3232 = vpop.f32.mrf.mxu0
      %v3233 = vadd.f32 0.0, %v3232
      %v3234 = vpop.f32.mrf.mxu0
      %v3235 = vpop.f32.mrf.mxu0
      %v3236 = vadd.f32 0.0, %v3235
      %v3237 = vpop.f32.mrf.mxu0
      %3238 = vmatprep.mubr.bf16.mxu0 0
      %3239 = vmatmul.mubr.bf16.gmra.mxu0 %v3116
      %v3240 = vpop.f32.mrf.mxu0
      %v3241 = vadd.f32 0.0, %v3240
      %v3242 = vpop.f32.mrf.mxu0
      %v3243 = vpop.f32.mrf.mxu0
      %v3244 = vadd.f32 0.0, %v3243
      %v3245 = vpop.f32.mrf.mxu0
      %3246 = vmatprep.mubr.bf16.mxu0 0
      %3247 = vmatmul.mubr.bf16.gmra.mxu0 %v3119
      %v3248 = vpop.f32.mrf.mxu0
      %v3249 = vadd.f32 0.0, %v3248
      %v3250 = vpop.f32.mrf.mxu0
      %v3251 = vpop.f32.mrf.mxu0
      %v3252 = vadd.f32 0.0, %v3251
      %v3253 = vpop.f32.mrf.mxu0
      %3254 = vmatprep.mubr.bf16.mxu0 0
      %3255 = vmatmul.mubr.bf16.gmra.mxu0 %v3122
      %v3256 = vpop.f32.mrf.mxu0
      %v3257 = vadd.f32 0.0, %v3256
      %v3258 = vpop.f32.mrf.mxu0
      %v3259 = vpop.f32.mrf.mxu0
      %v3260 = vadd.f32 0.0, %v3259
      %v3261 = vpop.f32.mrf.mxu0
      %3262 = vmatprep.mubr.bf16.mxu0 0
      %3263 = vmatmul.mubr.bf16.gmra.mxu0 %v3125
      %v3264 = vpop.f32.mrf.mxu0
      %v3265 = vadd.f32 0.0, %v3264
      %v3266 = vpop.f32.mrf.mxu0
      %v3267 = vpop.f32.mrf.mxu0
      %v3268 = vadd.f32 0.0, %v3267
      %v3269 = vpop.f32.mrf.mxu0
      %3270 = vmatprep.mubr.bf16.mxu0 0
      %3271 = vmatmul.mubr.bf16.gmra.mxu0 %v3128
      %v3272 = vpop.f32.mrf.mxu0
      %v3273 = vadd.f32 0.0, %v3272
      %v3274 = vpop.f32.mrf.mxu0
      %v3275 = vpop.f32.mrf.mxu0
      %v3276 = vadd.f32 0.0, %v3275
      %v3277 = vpop.f32.mrf.mxu0
      %3278 = vmatprep.mubr.bf16.mxu0 0
      %3279 = vmatmul.mubr.bf16.gmra.mxu0 %v3131
      %v3280 = vpop.f32.mrf.mxu0
      %v3281 = vadd.f32 0.0, %v3280
      %v3282 = vpop.f32.mrf.mxu0
      %v3283 = vpop.f32.mrf.mxu0
      %v3284 = vadd.f32 0.0, %v3283
      %v3285 = vpop.f32.mrf.mxu0
      %3286 = vmatprep.mubr.bf16.mxu0 0
      %3287 = vmatmul.mubr.bf16.gmra.mxu0 %v3134
      %v3288 = vpop.f32.mrf.mxu0
      %v3289 = vadd.f32 0.0, %v3288
      %v3290 = vpop.f32.mrf.mxu0
      %v3291 = vpop.f32.mrf.mxu0
      %v3292 = vadd.f32 0.0, %v3291
      %v3293 = vpop.f32.mrf.mxu0
      %3294 = vmatprep.mubr.bf16.mxu0 0
      %3295 = vmatmul.mubr.bf16.gmra.mxu0 %v3137
      %v3296 = vpop.f32.mrf.mxu0
      %v3297 = vadd.f32 0.0, %v3296
      %v3298 = vpop.f32.mrf.mxu0
      %v3299 = vpop.f32.mrf.mxu0
      %v3300 = vadd.f32 0.0, %v3299
      %v3301 = vpop.f32.mrf.mxu0
      %3302 = vdwg.mxu0
      %v3303 = vadd.f32 %v2577, %v3177
      %v3304 = vadd.f32 %v2578, %v3180
      %v3305 = vadd.f32 %v2579, %v3185
      %v3306 = vadd.f32 %v2580, %v3188
      %v3307 = vadd.f32 %v2581, %v3193
      %v3308 = vadd.f32 %v2582, %v3196
      %v3309 = vadd.f32 %v2583, %v3201
      %v3310 = vadd.f32 %v2584, %v3204
      %v3311 = vadd.f32 %v2585, %v3209
      %v3312 = vadd.f32 %v2586, %v3212
      %v3313 = vadd.f32 %v2587, %v3217
      %v3314 = vadd.f32 %v2588, %v3220
      %v3315 = vadd.f32 %v2589, %v3225
      %v3316 = vadd.f32 %v2590, %v3228
      %v3317 = vadd.f32 %v2591, %v3233
      %v3318 = vadd.f32 %v2592, %v3236
      %v3319 = vadd.f32 %v2593, %v3241
      %v3320 = vadd.f32 %v2594, %v3244
      %v3321 = vadd.f32 %v2595, %v3249
      %v3322 = vadd.f32 %v2596, %v3252
      %v3323 = vadd.f32 %v2597, %v3257
      %v3324 = vadd.f32 %v2598, %v3260
      %v3325 = vadd.f32 %v2599, %v3265
      %v3326 = vadd.f32 %v2600, %v3268
      %v3327 = vadd.f32 %v2601, %v3273
      %v3328 = vadd.f32 %v2602, %v3276
      %v3329 = vadd.f32 %v2603, %v3281
      %v3330 = vadd.f32 %v2604, %v3284
      %v3331 = vadd.f32 %v2605, %v3289
      %v3332 = vadd.f32 %v2606, %v3292
      %v3333 = vadd.f32 %v2607, %v3297
      %v3334 = vadd.f32 %v2608, %v3300
      %v3335 = vld [vmem:[%s684] sm:$0xe]
      %v3336 = vld [vmem:[%s684 + $0xc] sm:$0xe]
      %v3337 = vld [vmem:[%s684 + $0x18] sm:$0xe]
      %v3338 = vld [vmem:[%s684 + $0x24] sm:$0xe]
      %v3339 = vld [vmem:[%s684 + $0x30] sm:$0xe]
      %v3340 = vld [vmem:[%s684 + $0x3c] sm:$0xe]
      %v3341 = vld [vmem:[%s684 + $0x48] sm:$0xe]
      %v3342 = vld [vmem:[%s684 + $0x54] sm:$0xe]
      %v3343 = vld [vmem:[%s684 + $0x60] sm:$0xe]
      %v3344 = vld [vmem:[%s684 + $0x6c] sm:$0xe]
      %v3345 = vld [vmem:[%s684 + $0x78] sm:$0xe]
      %v3346 = vld [vmem:[%s684 + $0x84] sm:$0xe]
      %v3347 = vld [vmem:[%s684 + $0x90] sm:$0xe]
      %v3348 = vld [vmem:[%s684 + $0x9c] sm:$0xe]
      %v3349 = vld [vmem:[%s684 + $0xa8] sm:$0xe]
      %v3350 = vld [vmem:[%s684 + $0xb4] sm:$0xe]
      %v3399 = vrot.slane %v3335, 5
      %v3400 = vrot.slane %v3399, 4
      %v3401 = vrot.slane %v2610, 5
      %v3402 = vsel %vm1844, %v3400, %v3401
      %v3403 = vrot.slane %v3401, 4
      %v3404 = vrot.slane %v2611, 5
      %v3405 = vsel %vm1844, %v3403, %v3404
      %v3406 = vrot.slane %v3336, 5
      %v3407 = vrot.slane %v3406, 4
      %v3408 = vrot.slane %v2613, 5
      %v3409 = vsel %vm1844, %v3407, %v3408
      %v3410 = vrot.slane %v3408, 4
      %v3411 = vrot.slane %v2614, 5
      %v3412 = vsel %vm1844, %v3410, %v3411
      %v3413 = vrot.slane %v3337, 5
      %v3414 = vrot.slane %v3413, 4
      %v3415 = vrot.slane %v2616, 5
      %v3416 = vsel %vm1844, %v3414, %v3415
      %v3417 = vrot.slane %v3415, 4
      %v3418 = vrot.slane %v2617, 5
      %v3419 = vsel %vm1844, %v3417, %v3418
      %v3420 = vrot.slane %v3338, 5
      %v3421 = vrot.slane %v3420, 4
      %v3422 = vrot.slane %v2619, 5
      %v3423 = vsel %vm1844, %v3421, %v3422
      %v3424 = vrot.slane %v3422, 4
      %v3425 = vrot.slane %v2620, 5
      %v3426 = vsel %vm1844, %v3424, %v3425
      %v3427 = vrot.slane %v3339, 5
      %v3428 = vrot.slane %v3427, 4
      %v3429 = vrot.slane %v2622, 5
      %v3430 = vsel %vm1844, %v3428, %v3429
      %v3431 = vrot.slane %v3429, 4
      %v3432 = vrot.slane %v2623, 5
      %v3433 = vsel %vm1844, %v3431, %v3432
      %v3434 = vrot.slane %v3340, 5
      %v3435 = vrot.slane %v3434, 4
      %v3436 = vrot.slane %v2625, 5
      %v3437 = vsel %vm1844, %v3435, %v3436
      %v3438 = vrot.slane %v3436, 4
      %v3439 = vrot.slane %v2626, 5
      %v3440 = vsel %vm1844, %v3438, %v3439
      %v3441 = vrot.slane %v3341, 5
      %v3442 = vrot.slane %v3441, 4
      %v3443 = vrot.slane %v2628, 5
      %v3444 = vsel %vm1844, %v3442, %v3443
      %v3445 = vrot.slane %v3443, 4
      %v3446 = vrot.slane %v2629, 5
      %v3447 = vsel %vm1844, %v3445, %v3446
      %v3448 = vrot.slane %v3342, 5
      %v3449 = vrot.slane %v3448, 4
      %v3450 = vrot.slane %v2631, 5
      %v3451 = vsel %vm1844, %v3449, %v3450
      %v3452 = vrot.slane %v3450, 4
      %v3453 = vrot.slane %v2632, 5
      %v3454 = vsel %vm1844, %v3452, %v3453
      %v3455 = vrot.slane %v3343, 5
      %v3456 = vrot.slane %v3455, 4
      %v3457 = vrot.slane %v2634, 5
      %v3458 = vsel %vm1844, %v3456, %v3457
      %v3459 = vrot.slane %v3457, 4
      %v3460 = vrot.slane %v2635, 5
      %v3461 = vsel %vm1844, %v3459, %v3460
      %v3462 = vrot.slane %v3344, 5
      %v3463 = vrot.slane %v3462, 4
      %v3464 = vrot.slane %v2637, 5
      %v3465 = vsel %vm1844, %v3463, %v3464
      %v3466 = vrot.slane %v3464, 4
      %v3467 = vrot.slane %v2638, 5
      %v3468 = vsel %vm1844, %v3466, %v3467
      %v3469 = vrot.slane %v3345, 5
      %v3470 = vrot.slane %v3469, 4
      %v3471 = vrot.slane %v2640, 5
      %v3472 = vsel %vm1844, %v3470, %v3471
      %v3473 = vrot.slane %v3471, 4
      %v3474 = vrot.slane %v2641, 5
      %v3475 = vsel %vm1844, %v3473, %v3474
      %v3476 = vrot.slane %v3346, 5
      %v3477 = vrot.slane %v3476, 4
      %v3478 = vrot.slane %v2643, 5
      %v3479 = vsel %vm1844, %v3477, %v3478
      %v3480 = vrot.slane %v3478, 4
      %v3481 = vrot.slane %v2644, 5
      %v3482 = vsel %vm1844, %v3480, %v3481
      %v3483 = vrot.slane %v3347, 5
      %v3484 = vrot.slane %v3483, 4
      %v3485 = vrot.slane %v2646, 5
      %v3486 = vsel %vm1844, %v3484, %v3485
      %v3487 = vrot.slane %v3485, 4
      %v3488 = vrot.slane %v2647, 5
      %v3489 = vsel %vm1844, %v3487, %v3488
      %v3490 = vrot.slane %v3348, 5
      %v3491 = vrot.slane %v3490, 4
      %v3492 = vrot.slane %v2649, 5
      %v3493 = vsel %vm1844, %v3491, %v3492
      %v3494 = vrot.slane %v3492, 4
      %v3495 = vrot.slane %v2650, 5
      %v3496 = vsel %vm1844, %v3494, %v3495
      %v3497 = vrot.slane %v3349, 5
      %v3498 = vrot.slane %v3497, 4
      %v3499 = vrot.slane %v2652, 5
      %v3500 = vsel %vm1844, %v3498, %v3499
      %v3501 = vrot.slane %v3499, 4
      %v3502 = vrot.slane %v2653, 5
      %v3503 = vsel %vm1844, %v3501, %v3502
      %v3504 = vrot.slane %v3350, 5
      %v3505 = vrot.slane %v3504, 4
      %v3506 = vrot.slane %v2655, 5
      %v3507 = vsel %vm1844, %v3505, %v3506
      %v3508 = vrot.slane %v3506, 4
      %v3509 = vrot.slane %v2656, 5
      %v3510 = vsel %vm1844, %v3508, %v3509
      %s3511 = scalar_lea.vmem %s2, 10
      %v3512 = vld [vmem:[%s3511] sm:$0x3]
      %v3513 = vunpack.c.l.b16 %v3402
      %v3514 = vunpack.c.l.b16 %v3405
      %v3515 = vunpack.c.l.b16 %v3409
      %v3516 = vunpack.c.l.b16 %v3412
      %v3517 = vunpack.c.l.b16 %v3416
      %v3518 = vunpack.c.l.b16 %v3419
      %v3519 = vunpack.c.l.b16 %v3423
      %v3520 = vunpack.c.l.b16 %v3426
      %v3521 = vunpack.c.l.b16 %v3430
      %v3522 = vunpack.c.l.b16 %v3433
      %v3523 = vunpack.c.l.b16 %v3437
      %v3524 = vunpack.c.l.b16 %v3440
      %v3525 = vunpack.c.l.b16 %v3444
      %v3526 = vunpack.c.l.b16 %v3447
      %v3527 = vunpack.c.l.b16 %v3451
      %v3528 = vunpack.c.l.b16 %v3454
      %v3529 = vunpack.c.l.b16 %v3458
      %v3530 = vunpack.c.l.b16 %v3461
      %v3531 = vunpack.c.l.b16 %v3465
      %v3532 = vunpack.c.l.b16 %v3468
      %v3533 = vunpack.c.l.b16 %v3472
      %v3534 = vunpack.c.l.b16 %v3475
      %v3535 = vunpack.c.l.b16 %v3479
      %v3536 = vunpack.c.l.b16 %v3482
      %v3537 = vunpack.c.l.b16 %v3486
      %v3538 = vunpack.c.l.b16 %v3489
      %v3539 = vunpack.c.l.b16 %v3493
      %v3540 = vunpack.c.l.b16 %v3496
      %v3541 = vunpack.c.l.b16 %v3500
      %v3542 = vunpack.c.l.b16 %v3503
      %v3543 = vunpack.c.l.b16 %v3507
      %v3544 = vunpack.c.l.b16 %v3510
      %v3545 = vpack.c.b16 %v3514, %v3513
      %v3546 = vpack.c.b16 %v3516, %v3515
      %v3547 = vpack.c.b16 %v3518, %v3517
      %v3548 = vpack.c.b16 %v3520, %v3519
      %v3549 = vpack.c.b16 %v3522, %v3521
      %v3550 = vpack.c.b16 %v3524, %v3523
      %v3551 = vpack.c.b16 %v3526, %v3525
      %v3552 = vpack.c.b16 %v3528, %v3527
      %v3553 = vpack.c.b16 %v3530, %v3529
      %v3554 = vpack.c.b16 %v3532, %v3531
      %v3555 = vpack.c.b16 %v3534, %v3533
      %v3556 = vpack.c.b16 %v3536, %v3535
      %v3557 = vpack.c.b16 %v3538, %v3537
      %v3558 = vpack.c.b16 %v3540, %v3539
      %v3559 = vpack.c.b16 %v3542, %v3541
      %v3560 = vpack.c.b16 %v3544, %v3543
      %v3562 = vsel %vm1288, %v3545, 0
      %v3565 = vsel %vm1288, %v3546, 0
      %v3568 = vsel %vm1288, %v3547, 0
      %v3571 = vsel %vm1288, %v3548, 0
      %v3574 = vsel %vm1288, %v3549, 0
      %v3577 = vsel %vm1288, %v3550, 0
      %v3580 = vsel %vm1288, %v3551, 0
      %v3583 = vsel %vm1288, %v3552, 0
      %v3586 = vsel %vm1288, %v3553, 0
      %v3589 = vsel %vm1288, %v3554, 0
      %v3592 = vsel %vm1288, %v3555, 0
      %v3595 = vsel %vm1288, %v3556, 0
      %v3598 = vsel %vm1288, %v3557, 0
      %v3601 = vsel %vm1288, %v3558, 0
      %v3604 = vsel %vm1288, %v3559, 0
      %v3607 = vsel %vm1288, %v3560, 0
      %v3610 = vsel %vm1337, %v3512, 0
      %3612 = vmatprep.subr.bf16.mxu0 0
      %3613 = vmatpush1.bf16.msra.mxu0 0
      %3614 = vmatprep.subr.bf16.mxu0 0
      %3615 = vmatpush1.bf16.msra.mxu0 0
      %3616 = vmatprep.subr.bf16.mxu0 0
      %3617 = vmatpush1.bf16.msra.mxu0 0
      %3618 = vmatprep.subr.bf16.mxu0 0
      %3619 = vmatpush1.bf16.msra.mxu0 0
      %3620 = vmatprep.subr.bf16.mxu0 0
      %3621 = vmatpush1.bf16.msra.mxu0 0
      %3622 = vmatprep.subr.bf16.mxu0 0
      %3623 = vmatpush1.bf16.msra.mxu0 0
      %3624 = vmatprep.subr.bf16.mxu0 0
      %3625 = vmatpush1.bf16.msra.mxu0 0
      %3626 = vmatprep.subr.bf16.mxu0 0
      %3627 = vmatpush1.bf16.msra.mxu0 %v3610
      %3628 = vmatprep.subr.bf16.mxu0 0
      %3629 = vmatpush2.bf16.msra.mxu0 0
      %3630 = vmatprep.subr.bf16.mxu0 0
      %3631 = vmatpush2.bf16.msra.mxu0 0
      %3632 = vmatprep.subr.bf16.mxu0 0
      %3633 = vmatpush2.bf16.msra.mxu0 0
      %3634 = vmatprep.subr.bf16.mxu0 0
      %3635 = vmatpush2.bf16.msra.mxu0 0
      %3636 = vmatprep.subr.bf16.mxu0 0
      %3637 = vmatpush2.bf16.msra.mxu0 0
      %3638 = vmatprep.subr.bf16.mxu0 0
      %3639 = vmatpush2.bf16.msra.mxu0 0
      %3640 = vmatprep.subr.bf16.mxu0 0
      %3641 = vmatpush2.bf16.msra.mxu0 0
      %3642 = vmatprep.subr.bf16.mxu0 0
      %3643 = vmatpush2.bf16.msra.mxu0 0
      %3644 = vmatprep.mubr.bf16.mxu0 0
      %3645 = vmatmul.mubr.bf16.gmra.mxu0 %v3562
      %v3646 = vpop.f32.mrf.mxu0
      %v3647 = vadd.f32 0.0, %v3646
      %v3648 = vpop.f32.mrf.mxu0
      %v3649 = vpop.f32.mrf.mxu0
      %v3650 = vadd.f32 0.0, %v3649
      %v3651 = vpop.f32.mrf.mxu0
      %3652 = vmatprep.mubr.bf16.mxu0 0
      %3653 = vmatmul.mubr.bf16.gmra.mxu0 %v3565
      %v3654 = vpop.f32.mrf.mxu0
      %v3655 = vadd.f32 0.0, %v3654
      %v3656 = vpop.f32.mrf.mxu0
      %v3657 = vpop.f32.mrf.mxu0
      %v3658 = vadd.f32 0.0, %v3657
      %v3659 = vpop.f32.mrf.mxu0
      %3660 = vmatprep.mubr.bf16.mxu0 0
      %3661 = vmatmul.mubr.bf16.gmra.mxu0 %v3568
      %v3662 = vpop.f32.mrf.mxu0
      %v3663 = vadd.f32 0.0, %v3662
      %v3664 = vpop.f32.mrf.mxu0
      %v3665 = vpop.f32.mrf.mxu0
      %v3666 = vadd.f32 0.0, %v3665
      %v3667 = vpop.f32.mrf.mxu0
      %3668 = vmatprep.mubr.bf16.mxu0 0
      %3669 = vmatmul.mubr.bf16.gmra.mxu0 %v3571
      %v3670 = vpop.f32.mrf.mxu0
      %v3671 = vadd.f32 0.0, %v3670
      %v3672 = vpop.f32.mrf.mxu0
      %v3673 = vpop.f32.mrf.mxu0
      %v3674 = vadd.f32 0.0, %v3673
      %v3675 = vpop.f32.mrf.mxu0
      %3676 = vmatprep.mubr.bf16.mxu0 0
      %3677 = vmatmul.mubr.bf16.gmra.mxu0 %v3574
      %v3678 = vpop.f32.mrf.mxu0
      %v3679 = vadd.f32 0.0, %v3678
      %v3680 = vpop.f32.mrf.mxu0
      %v3681 = vpop.f32.mrf.mxu0
      %v3682 = vadd.f32 0.0, %v3681
      %v3683 = vpop.f32.mrf.mxu0
      %3684 = vmatprep.mubr.bf16.mxu0 0
      %3685 = vmatmul.mubr.bf16.gmra.mxu0 %v3577
      %v3686 = vpop.f32.mrf.mxu0
      %v3687 = vadd.f32 0.0, %v3686
      %v3688 = vpop.f32.mrf.mxu0
      %v3689 = vpop.f32.mrf.mxu0
      %v3690 = vadd.f32 0.0, %v3689
      %v3691 = vpop.f32.mrf.mxu0
      %3692 = vmatprep.mubr.bf16.mxu0 0
      %3693 = vmatmul.mubr.bf16.gmra.mxu0 %v3580
      %v3694 = vpop.f32.mrf.mxu0
      %v3695 = vadd.f32 0.0, %v3694
      %v3696 = vpop.f32.mrf.mxu0
      %v3697 = vpop.f32.mrf.mxu0
      %v3698 = vadd.f32 0.0, %v3697
      %v3699 = vpop.f32.mrf.mxu0
      %3700 = vmatprep.mubr.bf16.mxu0 0
      %3701 = vmatmul.mubr.bf16.gmra.mxu0 %v3583
      %v3702 = vpop.f32.mrf.mxu0
      %v3703 = vadd.f32 0.0, %v3702
      %v3704 = vpop.f32.mrf.mxu0
      %v3705 = vpop.f32.mrf.mxu0
      %v3706 = vadd.f32 0.0, %v3705
      %v3707 = vpop.f32.mrf.mxu0
      %3708 = vmatprep.mubr.bf16.mxu0 0
      %3709 = vmatmul.mubr.bf16.gmra.mxu0 %v3586
      %v3710 = vpop.f32.mrf.mxu0
      %v3711 = vadd.f32 0.0, %v3710
      %v3712 = vpop.f32.mrf.mxu0
      %v3713 = vpop.f32.mrf.mxu0
      %v3714 = vadd.f32 0.0, %v3713
      %v3715 = vpop.f32.mrf.mxu0
      %3716 = vmatprep.mubr.bf16.mxu0 0
      %3717 = vmatmul.mubr.bf16.gmra.mxu0 %v3589
      %v3718 = vpop.f32.mrf.mxu0
      %v3719 = vadd.f32 0.0, %v3718
      %v3720 = vpop.f32.mrf.mxu0
      %v3721 = vpop.f32.mrf.mxu0
      %v3722 = vadd.f32 0.0, %v3721
      %v3723 = vpop.f32.mrf.mxu0
      %3724 = vmatprep.mubr.bf16.mxu0 0
      %3725 = vmatmul.mubr.bf16.gmra.mxu0 %v3592
      %v3726 = vpop.f32.mrf.mxu0
      %v3727 = vadd.f32 0.0, %v3726
      %v3728 = vpop.f32.mrf.mxu0
      %v3729 = vpop.f32.mrf.mxu0
      %v3730 = vadd.f32 0.0, %v3729
      %v3731 = vpop.f32.mrf.mxu0
      %3732 = vmatprep.mubr.bf16.mxu0 0
      %3733 = vmatmul.mubr.bf16.gmra.mxu0 %v3595
      %v3734 = vpop.f32.mrf.mxu0
      %v3735 = vadd.f32 0.0, %v3734
      %v3736 = vpop.f32.mrf.mxu0
      %v3737 = vpop.f32.mrf.mxu0
      %v3738 = vadd.f32 0.0, %v3737
      %v3739 = vpop.f32.mrf.mxu0
      %3740 = vmatprep.mubr.bf16.mxu0 0
      %3741 = vmatmul.mubr.bf16.gmra.mxu0 %v3598
      %v3742 = vpop.f32.mrf.mxu0
      %v3743 = vadd.f32 0.0, %v3742
      %v3744 = vpop.f32.mrf.mxu0
      %v3745 = vpop.f32.mrf.mxu0
      %v3746 = vadd.f32 0.0, %v3745
      %v3747 = vpop.f32.mrf.mxu0
      %3748 = vmatprep.mubr.bf16.mxu0 0
      %3749 = vmatmul.mubr.bf16.gmra.mxu0 %v3601
      %v3750 = vpop.f32.mrf.mxu0
      %v3751 = vadd.f32 0.0, %v3750
      %v3752 = vpop.f32.mrf.mxu0
      %v3753 = vpop.f32.mrf.mxu0
      %v3754 = vadd.f32 0.0, %v3753
      %v3755 = vpop.f32.mrf.mxu0
      %3756 = vmatprep.mubr.bf16.mxu0 0
      %3757 = vmatmul.mubr.bf16.gmra.mxu0 %v3604
      %v3758 = vpop.f32.mrf.mxu0
      %v3759 = vadd.f32 0.0, %v3758
      %v3760 = vpop.f32.mrf.mxu0
      %v3761 = vpop.f32.mrf.mxu0
      %v3762 = vadd.f32 0.0, %v3761
      %v3763 = vpop.f32.mrf.mxu0
      %3764 = vmatprep.mubr.bf16.mxu0 0
      %3765 = vmatmul.mubr.bf16.gmra.mxu0 %v3607
      %v3766 = vpop.f32.mrf.mxu0
      %v3767 = vadd.f32 0.0, %v3766
      %v3768 = vpop.f32.mrf.mxu0
      %v3769 = vpop.f32.mrf.mxu0
      %v3770 = vadd.f32 0.0, %v3769
      %v3771 = vpop.f32.mrf.mxu0
      %3772 = vdwg.mxu0
      %v3773 = vadd.f32 %v3303, %v3647
      %v3774 = vadd.f32 %v3304, %v3650
      %v3775 = vadd.f32 %v3305, %v3655
      %v3776 = vadd.f32 %v3306, %v3658
      %v3777 = vadd.f32 %v3307, %v3663
      %v3778 = vadd.f32 %v3308, %v3666
      %v3779 = vadd.f32 %v3309, %v3671
      %v3780 = vadd.f32 %v3310, %v3674
      %v3781 = vadd.f32 %v3311, %v3679
      %v3782 = vadd.f32 %v3312, %v3682
      %v3783 = vadd.f32 %v3313, %v3687
      %v3784 = vadd.f32 %v3314, %v3690
      %v3785 = vadd.f32 %v3315, %v3695
      %v3786 = vadd.f32 %v3316, %v3698
      %v3787 = vadd.f32 %v3317, %v3703
      %v3788 = vadd.f32 %v3318, %v3706
      %v3789 = vadd.f32 %v3319, %v3711
      %v3790 = vadd.f32 %v3320, %v3714
      %v3791 = vadd.f32 %v3321, %v3719
      %v3792 = vadd.f32 %v3322, %v3722
      %v3793 = vadd.f32 %v3323, %v3727
      %v3794 = vadd.f32 %v3324, %v3730
      %v3795 = vadd.f32 %v3325, %v3735
      %v3796 = vadd.f32 %v3326, %v3738
      %v3797 = vadd.f32 %v3327, %v3743
      %v3798 = vadd.f32 %v3328, %v3746
      %v3799 = vadd.f32 %v3329, %v3751
      %v3800 = vadd.f32 %v3330, %v3754
      %v3801 = vadd.f32 %v3331, %v3759
      %v3802 = vadd.f32 %v3332, %v3762
      %v3803 = vadd.f32 %v3333, %v3767
      %v3804 = vadd.f32 %v3334, %v3770
      %s3805 = scalar_lea.vmem [#allocation2], 24
      %v3806 = vld [vmem:[%s3805] sm:$0xf]
      %v3807 = vld [vmem:[%s3805 + $0x4] sm:$0xf]
      %v3808 = vld [vmem:[%s3805 + $0xc] sm:$0xf]
      %v3809 = vld [vmem:[%s3805 + $0x10] sm:$0xf]
      %v3810 = vld [vmem:[%s3805 + $0x18] sm:$0xf]
      %v3811 = vld [vmem:[%s3805 + $0x1c] sm:$0xf]
      %v3812 = vld [vmem:[%s3805 + $0x24] sm:$0xf]
      %v3813 = vld [vmem:[%s3805 + $0x28] sm:$0xf]
      %v3814 = vld [vmem:[%s3805 + $0x30] sm:$0xf]
      %v3815 = vld [vmem:[%s3805 + $0x34] sm:$0xf]
      %v3816 = vld [vmem:[%s3805 + $0x3c] sm:$0xf]
      %v3817 = vld [vmem:[%s3805 + $0x40] sm:$0xf]
      %v3818 = vld [vmem:[%s3805 + $0x48] sm:$0xf]
      %v3819 = vld [vmem:[%s3805 + $0x4c] sm:$0xf]
      %v3820 = vld [vmem:[%s3805 + $0x54] sm:$0xf]
      %v3821 = vld [vmem:[%s3805 + $0x58] sm:$0xf]
      %v3822 = vld [vmem:[%s3805 + $0x60] sm:$0xf]
      %v3823 = vld [vmem:[%s3805 + $0x64] sm:$0xf]
      %v3824 = vld [vmem:[%s3805 + $0x6c] sm:$0xf]
      %v3825 = vld [vmem:[%s3805 + $0x70] sm:$0xf]
      %v3826 = vld [vmem:[%s3805 + $0x78] sm:$0xf]
      %v3827 = vld [vmem:[%s3805 + $0x7c] sm:$0xf]
      %v3828 = vld [vmem:[%s3805 + $0x84] sm:$0xf]
      %v3829 = vld [vmem:[%s3805 + $0x88] sm:$0xf]
      %v3830 = vld [vmem:[%s3805 + $0x90] sm:$0xf]
      %v3831 = vld [vmem:[%s3805 + $0x94] sm:$0xf]
      %v3832 = vld [vmem:[%s3805 + $0x9c] sm:$0xf]
      %v3833 = vld [vmem:[%s3805 + $0xa0] sm:$0xf]
      %v3834 = vld [vmem:[%s3805 + $0xa8] sm:$0xf]
      %v3835 = vld [vmem:[%s3805 + $0xac] sm:$0xf]
      %v3836 = vld [vmem:[%s3805 + $0xb4] sm:$0xf]
      %v3837 = vld [vmem:[%s3805 + $0xb8] sm:$0xf]
      %s3838 = scalar_lea.vmem %s2, 12
      %v3839 = vld [vmem:[%s3838] sm:$0x3]
      %v3872 = vunpack.c.l.b16 %v3806
      %v3873 = vunpack.c.l.b16 %v3807
      %v3874 = vunpack.c.l.b16 %v3808
      %v3875 = vunpack.c.l.b16 %v3809
      %v3876 = vunpack.c.l.b16 %v3810
      %v3877 = vunpack.c.l.b16 %v3811
      %v3878 = vunpack.c.l.b16 %v3812
      %v3879 = vunpack.c.l.b16 %v3813
      %v3880 = vunpack.c.l.b16 %v3814
      %v3881 = vunpack.c.l.b16 %v3815
      %v3882 = vunpack.c.l.b16 %v3816
      %v3883 = vunpack.c.l.b16 %v3817
      %v3884 = vunpack.c.l.b16 %v3818
      %v3885 = vunpack.c.l.b16 %v3819
      %v3886 = vunpack.c.l.b16 %v3820
      %v3887 = vunpack.c.l.b16 %v3821
      %v3888 = vunpack.c.l.b16 %v3822
      %v3889 = vunpack.c.l.b16 %v3823
      %v3890 = vunpack.c.l.b16 %v3824
      %v3891 = vunpack.c.l.b16 %v3825
      %v3892 = vunpack.c.l.b16 %v3826
      %v3893 = vunpack.c.l.b16 %v3827
      %v3894 = vunpack.c.l.b16 %v3828
      %v3895 = vunpack.c.l.b16 %v3829
      %v3896 = vunpack.c.l.b16 %v3830
      %v3897 = vunpack.c.l.b16 %v3831
      %v3898 = vunpack.c.l.b16 %v3832
      %v3899 = vunpack.c.l.b16 %v3833
      %v3900 = vunpack.c.l.b16 %v3834
      %v3901 = vunpack.c.l.b16 %v3835
      %v3902 = vunpack.c.l.b16 %v3836
      %v3903 = vunpack.c.l.b16 %v3837
      %v3904 = vpack.c.b16 %v3873, %v3872
      %v3905 = vpack.c.b16 %v3875, %v3874
      %v3906 = vpack.c.b16 %v3877, %v3876
      %v3907 = vpack.c.b16 %v3879, %v3878
      %v3908 = vpack.c.b16 %v3881, %v3880
      %v3909 = vpack.c.b16 %v3883, %v3882
      %v3910 = vpack.c.b16 %v3885, %v3884
      %v3911 = vpack.c.b16 %v3887, %v3886
      %v3912 = vpack.c.b16 %v3889, %v3888
      %v3913 = vpack.c.b16 %v3891, %v3890
      %v3914 = vpack.c.b16 %v3893, %v3892
      %v3915 = vpack.c.b16 %v3895, %v3894
      %v3916 = vpack.c.b16 %v3897, %v3896
      %v3917 = vpack.c.b16 %v3899, %v3898
      %v3918 = vpack.c.b16 %v3901, %v3900
      %v3919 = vpack.c.b16 %v3903, %v3902
      %v3921 = vsel %vm1288, %v3904, 0
      %v3924 = vsel %vm1288, %v3905, 0
      %v3927 = vsel %vm1288, %v3906, 0
      %v3930 = vsel %vm1288, %v3907, 0
      %v3933 = vsel %vm1288, %v3908, 0
      %v3936 = vsel %vm1288, %v3909, 0
      %v3939 = vsel %vm1288, %v3910, 0
      %v3942 = vsel %vm1288, %v3911, 0
      %v3945 = vsel %vm1288, %v3912, 0
      %v3948 = vsel %vm1288, %v3913, 0
      %v3951 = vsel %vm1288, %v3914, 0
      %v3954 = vsel %vm1288, %v3915, 0
      %v3957 = vsel %vm1288, %v3916, 0
      %v3960 = vsel %vm1288, %v3917, 0
      %v3963 = vsel %vm1288, %v3918, 0
      %v3966 = vsel %vm1288, %v3919, 0
      %v3969 = vsel %vm1337, %v3839, 0
      %3971 = vmatprep.subr.bf16.mxu0 0
      %3972 = vmatpush1.bf16.msra.mxu0 0
      %3973 = vmatprep.subr.bf16.mxu0 0
      %3974 = vmatpush1.bf16.msra.mxu0 0
      %3975 = vmatprep.subr.bf16.mxu0 0
      %3976 = vmatpush1.bf16.msra.mxu0 0
      %3977 = vmatprep.subr.bf16.mxu0 0
      %3978 = vmatpush1.bf16.msra.mxu0 0
      %3979 = vmatprep.subr.bf16.mxu0 0
      %3980 = vmatpush1.bf16.msra.mxu0 0
      %3981 = vmatprep.subr.bf16.mxu0 0
      %3982 = vmatpush1.bf16.msra.mxu0 0
      %3983 = vmatprep.subr.bf16.mxu0 0
      %3984 = vmatpush1.bf16.msra.mxu0 0
      %3985 = vmatprep.subr.bf16.mxu0 0
      %3986 = vmatpush1.bf16.msra.mxu0 %v3969
      %3987 = vmatprep.subr.bf16.mxu0 0
      %3988 = vmatpush2.bf16.msra.mxu0 0
      %3989 = vmatprep.subr.bf16.mxu0 0
      %3990 = vmatpush2.bf16.msra.mxu0 0
      %3991 = vmatprep.subr.bf16.mxu0 0
      %3992 = vmatpush2.bf16.msra.mxu0 0
      %3993 = vmatprep.subr.bf16.mxu0 0
      %3994 = vmatpush2.bf16.msra.mxu0 0
      %3995 = vmatprep.subr.bf16.mxu0 0
      %3996 = vmatpush2.bf16.msra.mxu0 0
      %3997 = vmatprep.subr.bf16.mxu0 0
      %3998 = vmatpush2.bf16.msra.mxu0 0
      %3999 = vmatprep.subr.bf16.mxu0 0
      %4000 = vmatpush2.bf16.msra.mxu0 0
      %4001 = vmatprep.subr.bf16.mxu0 0
      %4002 = vmatpush2.bf16.msra.mxu0 0
      %4003 = vmatprep.mubr.bf16.mxu0 0
      %4004 = vmatmul.mubr.bf16.gmra.mxu0 %v3921
      %v4005 = vpop.f32.mrf.mxu0
      %v4006 = vadd.f32 0.0, %v4005
      %v4007 = vpop.f32.mrf.mxu0
      %v4008 = vpop.f32.mrf.mxu0
      %v4009 = vadd.f32 0.0, %v4008
      %v4010 = vpop.f32.mrf.mxu0
      %4011 = vmatprep.mubr.bf16.mxu0 0
      %4012 = vmatmul.mubr.bf16.gmra.mxu0 %v3924
      %v4013 = vpop.f32.mrf.mxu0
      %v4014 = vadd.f32 0.0, %v4013
      %v4015 = vpop.f32.mrf.mxu0
      %v4016 = vpop.f32.mrf.mxu0
      %v4017 = vadd.f32 0.0, %v4016
      %v4018 = vpop.f32.mrf.mxu0
      %4019 = vmatprep.mubr.bf16.mxu0 0
      %4020 = vmatmul.mubr.bf16.gmra.mxu0 %v3927
      %v4021 = vpop.f32.mrf.mxu0
      %v4022 = vadd.f32 0.0, %v4021
      %v4023 = vpop.f32.mrf.mxu0
      %v4024 = vpop.f32.mrf.mxu0
      %v4025 = vadd.f32 0.0, %v4024
      %v4026 = vpop.f32.mrf.mxu0
      %4027 = vmatprep.mubr.bf16.mxu0 0
      %4028 = vmatmul.mubr.bf16.gmra.mxu0 %v3930
      %v4029 = vpop.f32.mrf.mxu0
      %v4030 = vadd.f32 0.0, %v4029
      %v4031 = vpop.f32.mrf.mxu0
      %v4032 = vpop.f32.mrf.mxu0
      %v4033 = vadd.f32 0.0, %v4032
      %v4034 = vpop.f32.mrf.mxu0
      %4035 = vmatprep.mubr.bf16.mxu0 0
      %4036 = vmatmul.mubr.bf16.gmra.mxu0 %v3933
      %v4037 = vpop.f32.mrf.mxu0
      %v4038 = vadd.f32 0.0, %v4037
      %v4039 = vpop.f32.mrf.mxu0
      %v4040 = vpop.f32.mrf.mxu0
      %v4041 = vadd.f32 0.0, %v4040
      %v4042 = vpop.f32.mrf.mxu0
      %4043 = vmatprep.mubr.bf16.mxu0 0
      %4044 = vmatmul.mubr.bf16.gmra.mxu0 %v3936
      %v4045 = vpop.f32.mrf.mxu0
      %v4046 = vadd.f32 0.0, %v4045
      %v4047 = vpop.f32.mrf.mxu0
      %v4048 = vpop.f32.mrf.mxu0
      %v4049 = vadd.f32 0.0, %v4048
      %v4050 = vpop.f32.mrf.mxu0
      %4051 = vmatprep.mubr.bf16.mxu0 0
      %4052 = vmatmul.mubr.bf16.gmra.mxu0 %v3939
      %v4053 = vpop.f32.mrf.mxu0
      %v4054 = vadd.f32 0.0, %v4053
      %v4055 = vpop.f32.mrf.mxu0
      %v4056 = vpop.f32.mrf.mxu0
      %v4057 = vadd.f32 0.0, %v4056
      %v4058 = vpop.f32.mrf.mxu0
      %4059 = vmatprep.mubr.bf16.mxu0 0
      %4060 = vmatmul.mubr.bf16.gmra.mxu0 %v3942
      %v4061 = vpop.f32.mrf.mxu0
      %v4062 = vadd.f32 0.0, %v4061
      %v4063 = vpop.f32.mrf.mxu0
      %v4064 = vpop.f32.mrf.mxu0
      %v4065 = vadd.f32 0.0, %v4064
      %v4066 = vpop.f32.mrf.mxu0
      %4067 = vmatprep.mubr.bf16.mxu0 0
      %4068 = vmatmul.mubr.bf16.gmra.mxu0 %v3945
      %v4069 = vpop.f32.mrf.mxu0
      %v4070 = vadd.f32 0.0, %v4069
      %v4071 = vpop.f32.mrf.mxu0
      %v4072 = vpop.f32.mrf.mxu0
      %v4073 = vadd.f32 0.0, %v4072
      %v4074 = vpop.f32.mrf.mxu0
      %4075 = vmatprep.mubr.bf16.mxu0 0
      %4076 = vmatmul.mubr.bf16.gmra.mxu0 %v3948
      %v4077 = vpop.f32.mrf.mxu0
      %v4078 = vadd.f32 0.0, %v4077
      %v4079 = vpop.f32.mrf.mxu0
      %v4080 = vpop.f32.mrf.mxu0
      %v4081 = vadd.f32 0.0, %v4080
      %v4082 = vpop.f32.mrf.mxu0
      %4083 = vmatprep.mubr.bf16.mxu0 0
      %4084 = vmatmul.mubr.bf16.gmra.mxu0 %v3951
      %v4085 = vpop.f32.mrf.mxu0
      %v4086 = vadd.f32 0.0, %v4085
      %v4087 = vpop.f32.mrf.mxu0
      %v4088 = vpop.f32.mrf.mxu0
      %v4089 = vadd.f32 0.0, %v4088
      %v4090 = vpop.f32.mrf.mxu0
      %4091 = vmatprep.mubr.bf16.mxu0 0
      %4092 = vmatmul.mubr.bf16.gmra.mxu0 %v3954
      %v4093 = vpop.f32.mrf.mxu0
      %v4094 = vadd.f32 0.0, %v4093
      %v4095 = vpop.f32.mrf.mxu0
      %v4096 = vpop.f32.mrf.mxu0
      %v4097 = vadd.f32 0.0, %v4096
      %v4098 = vpop.f32.mrf.mxu0
      %4099 = vmatprep.mubr.bf16.mxu0 0
      %4100 = vmatmul.mubr.bf16.gmra.mxu0 %v3957
      %v4101 = vpop.f32.mrf.mxu0
      %v4102 = vadd.f32 0.0, %v4101
      %v4103 = vpop.f32.mrf.mxu0
      %v4104 = vpop.f32.mrf.mxu0
      %v4105 = vadd.f32 0.0, %v4104
      %v4106 = vpop.f32.mrf.mxu0
      %4107 = vmatprep.mubr.bf16.mxu0 0
      %4108 = vmatmul.mubr.bf16.gmra.mxu0 %v3960
      %v4109 = vpop.f32.mrf.mxu0
      %v4110 = vadd.f32 0.0, %v4109
      %v4111 = vpop.f32.mrf.mxu0
      %v4112 = vpop.f32.mrf.mxu0
      %v4113 = vadd.f32 0.0, %v4112
      %v4114 = vpop.f32.mrf.mxu0
      %4115 = vmatprep.mubr.bf16.mxu0 0
      %4116 = vmatmul.mubr.bf16.gmra.mxu0 %v3963
      %v4117 = vpop.f32.mrf.mxu0
      %v4118 = vadd.f32 0.0, %v4117
      %v4119 = vpop.f32.mrf.mxu0
      %v4120 = vpop.f32.mrf.mxu0
      %v4121 = vadd.f32 0.0, %v4120
      %v4122 = vpop.f32.mrf.mxu0
      %4123 = vmatprep.mubr.bf16.mxu0 0
      %4124 = vmatmul.mubr.bf16.gmra.mxu0 %v3966
      %v4125 = vpop.f32.mrf.mxu0
      %v4126 = vadd.f32 0.0, %v4125
      %v4127 = vpop.f32.mrf.mxu0
      %v4128 = vpop.f32.mrf.mxu0
      %v4129 = vadd.f32 0.0, %v4128
      %v4130 = vpop.f32.mrf.mxu0
      %4131 = vdwg.mxu0
      %v4132 = vadd.f32 %v3773, %v4006
      %v4133 = vadd.f32 %v3774, %v4009
      %v4134 = vadd.f32 %v3775, %v4014
      %v4135 = vadd.f32 %v3776, %v4017
      %v4136 = vadd.f32 %v3777, %v4022
      %v4137 = vadd.f32 %v3778, %v4025
      %v4138 = vadd.f32 %v3779, %v4030
      %v4139 = vadd.f32 %v3780, %v4033
      %v4140 = vadd.f32 %v3781, %v4038
      %v4141 = vadd.f32 %v3782, %v4041
      %v4142 = vadd.f32 %v3783, %v4046
      %v4143 = vadd.f32 %v3784, %v4049
      %v4144 = vadd.f32 %v3785, %v4054
      %v4145 = vadd.f32 %v3786, %v4057
      %v4146 = vadd.f32 %v3787, %v4062
      %v4147 = vadd.f32 %v3788, %v4065
      %v4148 = vadd.f32 %v3789, %v4070
      %v4149 = vadd.f32 %v3790, %v4073
      %v4150 = vadd.f32 %v3791, %v4078
      %v4151 = vadd.f32 %v3792, %v4081
      %v4152 = vadd.f32 %v3793, %v4086
      %v4153 = vadd.f32 %v3794, %v4089
      %v4154 = vadd.f32 %v3795, %v4094
      %v4155 = vadd.f32 %v3796, %v4097
      %v4156 = vadd.f32 %v3797, %v4102
      %v4157 = vadd.f32 %v3798, %v4105
      %v4158 = vadd.f32 %v3799, %v4110
      %v4159 = vadd.f32 %v3800, %v4113
      %v4160 = vadd.f32 %v3801, %v4118
      %v4161 = vadd.f32 %v3802, %v4121
      %v4162 = vadd.f32 %v3803, %v4126
      %v4163 = vadd.f32 %v3804, %v4129
      %v4164 = vld [vmem:[%s3805] sm:$0xf]
      %v4165 = vld [vmem:[%s3805 + $0x4] sm:$0xf]
      %v4166 = vld [vmem:[%s3805 + $0x8] sm:$0x1]
      %v4167 = vld [vmem:[%s3805 + $0xc] sm:$0xf]
      %v4168 = vld [vmem:[%s3805 + $0x10] sm:$0xf]
      %v4169 = vld [vmem:[%s3805 + $0x14] sm:$0x1]
      %v4170 = vld [vmem:[%s3805 + $0x18] sm:$0xf]
      %v4171 = vld [vmem:[%s3805 + $0x1c] sm:$0xf]
      %v4172 = vld [vmem:[%s3805 + $0x20] sm:$0x1]
      %v4173 = vld [vmem:[%s3805 + $0x24] sm:$0xf]
      %v4174 = vld [vmem:[%s3805 + $0x28] sm:$0xf]
      %v4175 = vld [vmem:[%s3805 + $0x2c] sm:$0x1]
      %v4176 = vld [vmem:[%s3805 + $0x30] sm:$0xf]
      %v4177 = vld [vmem:[%s3805 + $0x34] sm:$0xf]
      %v4178 = vld [vmem:[%s3805 + $0x38] sm:$0x1]
      %v4179 = vld [vmem:[%s3805 + $0x3c] sm:$0xf]
      %v4180 = vld [vmem:[%s3805 + $0x40] sm:$0xf]
      %v4181 = vld [vmem:[%s3805 + $0x44] sm:$0x1]
      %v4182 = vld [vmem:[%s3805 + $0x48] sm:$0xf]
      %v4183 = vld [vmem:[%s3805 + $0x4c] sm:$0xf]
      %v4184 = vld [vmem:[%s3805 + $0x50] sm:$0x1]
      %v4185 = vld [vmem:[%s3805 + $0x54] sm:$0xf]
      %v4186 = vld [vmem:[%s3805 + $0x58] sm:$0xf]
      %v4187 = vld [vmem:[%s3805 + $0x5c] sm:$0x1]
      %v4188 = vld [vmem:[%s3805 + $0x60] sm:$0xf]
      %v4189 = vld [vmem:[%s3805 + $0x64] sm:$0xf]
      %v4190 = vld [vmem:[%s3805 + $0x68] sm:$0x1]
      %v4191 = vld [vmem:[%s3805 + $0x6c] sm:$0xf]
      %v4192 = vld [vmem:[%s3805 + $0x70] sm:$0xf]
      %v4193 = vld [vmem:[%s3805 + $0x74] sm:$0x1]
      %v4194 = vld [vmem:[%s3805 + $0x78] sm:$0xf]
      %v4195 = vld [vmem:[%s3805 + $0x7c] sm:$0xf]
      %v4196 = vld [vmem:[%s3805 + $0x80] sm:$0x1]
      %v4197 = vld [vmem:[%s3805 + $0x84] sm:$0xf]
      %v4198 = vld [vmem:[%s3805 + $0x88] sm:$0xf]
      %v4199 = vld [vmem:[%s3805 + $0x8c] sm:$0x1]
      %v4200 = vld [vmem:[%s3805 + $0x90] sm:$0xf]
      %v4201 = vld [vmem:[%s3805 + $0x94] sm:$0xf]
      %v4202 = vld [vmem:[%s3805 + $0x98] sm:$0x1]
      %v4203 = vld [vmem:[%s3805 + $0x9c] sm:$0xf]
      %v4204 = vld [vmem:[%s3805 + $0xa0] sm:$0xf]
      %v4205 = vld [vmem:[%s3805 + $0xa4] sm:$0x1]
      %v4206 = vld [vmem:[%s3805 + $0xa8] sm:$0xf]
      %v4207 = vld [vmem:[%s3805 + $0xac] sm:$0xf]
      %v4208 = vld [vmem:[%s3805 + $0xb0] sm:$0x1]
      %v4209 = vld [vmem:[%s3805 + $0xb4] sm:$0xf]
      %v4210 = vld [vmem:[%s3805 + $0xb8] sm:$0xf]
      %v4211 = vld [vmem:[%s3805 + $0xbc] sm:$0x1]
      %v4213 = vshrl.u32 %v4164, 16
      %v4215 = vrot.slane %v4213, 4
      %v4216 = vshll.u32 %v4164, 16
      %v4218 = vrot.slane %v4216, 5
      %v4219 = vor.u32 %v4215, %v4218
      %v4220 = vrot.slane %v4219, 4
      %v4222 = vshll.u32 %v4165, 16
      %v4224 = vrot.slane %v4222, 5
      %v4225 = vsel %vm853, %v4220, %v4224
      %v4226 = vshrl.u32 %v4165, 16
      %v4228 = vrot.slane %v4226, 4
      %v4229 = vor.u32 %v4228, %v4224
      %v4230 = vrot.slane %v4229, 4
      %v4232 = vshll.u32 %v4166, 16
      %v4234 = vrot.slane %v4232, 5
      %v4235 = vsel %vm853, %v4230, %v4234
      %v4237 = vshrl.u32 %v4167, 16
      %v4239 = vrot.slane %v4237, 4
      %v4240 = vshll.u32 %v4167, 16
      %v4242 = vrot.slane %v4240, 5
      %v4243 = vor.u32 %v4239, %v4242
      %v4244 = vrot.slane %v4243, 4
      %v4246 = vshll.u32 %v4168, 16
      %v4248 = vrot.slane %v4246, 5
      %v4249 = vsel %vm853, %v4244, %v4248
      %v4250 = vshrl.u32 %v4168, 16
      %v4252 = vrot.slane %v4250, 4
      %v4253 = vor.u32 %v4252, %v4248
      %v4254 = vrot.slane %v4253, 4
      %v4256 = vshll.u32 %v4169, 16
      %v4258 = vrot.slane %v4256, 5
      %v4259 = vsel %vm853, %v4254, %v4258
      %v4261 = vshrl.u32 %v4170, 16
      %v4263 = vrot.slane %v4261, 4
      %v4264 = vshll.u32 %v4170, 16
      %v4266 = vrot.slane %v4264, 5
      %v4267 = vor.u32 %v4263, %v4266
      %v4268 = vrot.slane %v4267, 4
      %v4270 = vshll.u32 %v4171, 16
      %v4272 = vrot.slane %v4270, 5
      %v4273 = vsel %vm853, %v4268, %v4272
      %v4274 = vshrl.u32 %v4171, 16
      %v4276 = vrot.slane %v4274, 4
      %v4277 = vor.u32 %v4276, %v4272
      %v4278 = vrot.slane %v4277, 4
      %v4280 = vshll.u32 %v4172, 16
      %v4282 = vrot.slane %v4280, 5
      %v4283 = vsel %vm853, %v4278, %v4282
      %v4285 = vshrl.u32 %v4173, 16
      %v4287 = vrot.slane %v4285, 4
      %v4288 = vshll.u32 %v4173, 16
      %v4290 = vrot.slane %v4288, 5
      %v4291 = vor.u32 %v4287, %v4290
      %v4292 = vrot.slane %v4291, 4
      %v4294 = vshll.u32 %v4174, 16
      %v4296 = vrot.slane %v4294, 5
      %v4297 = vsel %vm853, %v4292, %v4296
      %v4298 = vshrl.u32 %v4174, 16
      %v4300 = vrot.slane %v4298, 4
      %v4301 = vor.u32 %v4300, %v4296
      %v4302 = vrot.slane %v4301, 4
      %v4304 = vshll.u32 %v4175, 16
      %v4306 = vrot.slane %v4304, 5
      %v4307 = vsel %vm853, %v4302, %v4306
      %v4309 = vshrl.u32 %v4176, 16
      %v4311 = vrot.slane %v4309, 4
      %v4312 = vshll.u32 %v4176, 16
      %v4314 = vrot.slane %v4312, 5
      %v4315 = vor.u32 %v4311, %v4314
      %v4316 = vrot.slane %v4315, 4
      %v4318 = vshll.u32 %v4177, 16
      %v4320 = vrot.slane %v4318, 5
      %v4321 = vsel %vm853, %v4316, %v4320
      %v4322 = vshrl.u32 %v4177, 16
      %v4324 = vrot.slane %v4322, 4
      %v4325 = vor.u32 %v4324, %v4320
      %v4326 = vrot.slane %v4325, 4
      %v4328 = vshll.u32 %v4178, 16
      %v4330 = vrot.slane %v4328, 5
      %v4331 = vsel %vm853, %v4326, %v4330
      %v4333 = vshrl.u32 %v4179, 16
      %v4335 = vrot.slane %v4333, 4
      %v4336 = vshll.u32 %v4179, 16
      %v4338 = vrot.slane %v4336, 5
      %v4339 = vor.u32 %v4335, %v4338
      %v4340 = vrot.slane %v4339, 4
      %v4342 = vshll.u32 %v4180, 16
      %v4344 = vrot.slane %v4342, 5
      %v4345 = vsel %vm853, %v4340, %v4344
      %v4346 = vshrl.u32 %v4180, 16
      %v4348 = vrot.slane %v4346, 4
      %v4349 = vor.u32 %v4348, %v4344
      %v4350 = vrot.slane %v4349, 4
      %v4352 = vshll.u32 %v4181, 16
      %v4354 = vrot.slane %v4352, 5
      %v4355 = vsel %vm853, %v4350, %v4354
      %v4357 = vshrl.u32 %v4182, 16
      %v4359 = vrot.slane %v4357, 4
      %v4360 = vshll.u32 %v4182, 16
      %v4362 = vrot.slane %v4360, 5
      %v4363 = vor.u32 %v4359, %v4362
      %v4364 = vrot.slane %v4363, 4
      %v4366 = vshll.u32 %v4183, 16
      %v4368 = vrot.slane %v4366, 5
      %v4369 = vsel %vm853, %v4364, %v4368
      %v4370 = vshrl.u32 %v4183, 16
      %v4372 = vrot.slane %v4370, 4
      %v4373 = vor.u32 %v4372, %v4368
      %v4374 = vrot.slane %v4373, 4
      %v4376 = vshll.u32 %v4184, 16
      %v4378 = vrot.slane %v4376, 5
      %v4379 = vsel %vm853, %v4374, %v4378
      %v4381 = vshrl.u32 %v4185, 16
      %v4383 = vrot.slane %v4381, 4
      %v4384 = vshll.u32 %v4185, 16
      %v4386 = vrot.slane %v4384, 5
      %v4387 = vor.u32 %v4383, %v4386
      %v4388 = vrot.slane %v4387, 4
      %v4390 = vshll.u32 %v4186, 16
      %v4392 = vrot.slane %v4390, 5
      %v4393 = vsel %vm853, %v4388, %v4392
      %v4394 = vshrl.u32 %v4186, 16
      %v4396 = vrot.slane %v4394, 4
      %v4397 = vor.u32 %v4396, %v4392
      %v4398 = vrot.slane %v4397, 4
      %v4400 = vshll.u32 %v4187, 16
      %v4402 = vrot.slane %v4400, 5
      %v4403 = vsel %vm853, %v4398, %v4402
      %v4405 = vshrl.u32 %v4188, 16
      %v4407 = vrot.slane %v4405, 4
      %v4408 = vshll.u32 %v4188, 16
      %v4410 = vrot.slane %v4408, 5
      %v4411 = vor.u32 %v4407, %v4410
      %v4412 = vrot.slane %v4411, 4
      %v4414 = vshll.u32 %v4189, 16
      %v4416 = vrot.slane %v4414, 5
      %v4417 = vsel %vm853, %v4412, %v4416
      %v4418 = vshrl.u32 %v4189, 16
      %v4420 = vrot.slane %v4418, 4
      %v4421 = vor.u32 %v4420, %v4416
      %v4422 = vrot.slane %v4421, 4
      %v4424 = vshll.u32 %v4190, 16
      %v4426 = vrot.slane %v4424, 5
      %v4427 = vsel %vm853, %v4422, %v4426
      %v4429 = vshrl.u32 %v4191, 16
      %v4431 = vrot.slane %v4429, 4
      %v4432 = vshll.u32 %v4191, 16
      %v4434 = vrot.slane %v4432, 5
      %v4435 = vor.u32 %v4431, %v4434
      %v4436 = vrot.slane %v4435, 4
      %v4438 = vshll.u32 %v4192, 16
      %v4440 = vrot.slane %v4438, 5
      %v4441 = vsel %vm853, %v4436, %v4440
      %v4442 = vshrl.u32 %v4192, 16
      %v4444 = vrot.slane %v4442, 4
      %v4445 = vor.u32 %v4444, %v4440
      %v4446 = vrot.slane %v4445, 4
      %v4448 = vshll.u32 %v4193, 16
      %v4450 = vrot.slane %v4448, 5
      %v4451 = vsel %vm853, %v4446, %v4450
      %v4453 = vshrl.u32 %v4194, 16
      %v4455 = vrot.slane %v4453, 4
      %v4456 = vshll.u32 %v4194, 16
      %v4458 = vrot.slane %v4456, 5
      %v4459 = vor.u32 %v4455, %v4458
      %v4460 = vrot.slane %v4459, 4
      %v4462 = vshll.u32 %v4195, 16
      %v4464 = vrot.slane %v4462, 5
      %v4465 = vsel %vm853, %v4460, %v4464
      %v4466 = vshrl.u32 %v4195, 16
      %v4468 = vrot.slane %v4466, 4
      %v4469 = vor.u32 %v4468, %v4464
      %v4470 = vrot.slane %v4469, 4
      %v4472 = vshll.u32 %v4196, 16
      %v4474 = vrot.slane %v4472, 5
      %v4475 = vsel %vm853, %v4470, %v4474
      %v4477 = vshrl.u32 %v4197, 16
      %v4479 = vrot.slane %v4477, 4
      %v4480 = vshll.u32 %v4197, 16
      %v4482 = vrot.slane %v4480, 5
      %v4483 = vor.u32 %v4479, %v4482
      %v4484 = vrot.slane %v4483, 4
      %v4486 = vshll.u32 %v4198, 16
      %v4488 = vrot.slane %v4486, 5
      %v4489 = vsel %vm853, %v4484, %v4488
      %v4490 = vshrl.u32 %v4198, 16
      %v4492 = vrot.slane %v4490, 4
      %v4493 = vor.u32 %v4492, %v4488
      %v4494 = vrot.slane %v4493, 4
      %v4496 = vshll.u32 %v4199, 16
      %v4498 = vrot.slane %v4496, 5
      %v4499 = vsel %vm853, %v4494, %v4498
      %v4501 = vshrl.u32 %v4200, 16
      %v4503 = vrot.slane %v4501, 4
      %v4504 = vshll.u32 %v4200, 16
      %v4506 = vrot.slane %v4504, 5
      %v4507 = vor.u32 %v4503, %v4506
      %v4508 = vrot.slane %v4507, 4
      %v4510 = vshll.u32 %v4201, 16
      %v4512 = vrot.slane %v4510, 5
      %v4513 = vsel %vm853, %v4508, %v4512
      %v4514 = vshrl.u32 %v4201, 16
      %v4516 = vrot.slane %v4514, 4
      %v4517 = vor.u32 %v4516, %v4512
      %v4518 = vrot.slane %v4517, 4
      %v4520 = vshll.u32 %v4202, 16
      %v4522 = vrot.slane %v4520, 5
      %v4523 = vsel %vm853, %v4518, %v4522
      %v4525 = vshrl.u32 %v4203, 16
      %v4527 = vrot.slane %v4525, 4
      %v4528 = vshll.u32 %v4203, 16
      %v4530 = vrot.slane %v4528, 5
      %v4531 = vor.u32 %v4527, %v4530
      %v4532 = vrot.slane %v4531, 4
      %v4534 = vshll.u32 %v4204, 16
      %v4536 = vrot.slane %v4534, 5
      %v4537 = vsel %vm853, %v4532, %v4536
      %v4538 = vshrl.u32 %v4204, 16
      %v4540 = vrot.slane %v4538, 4
      %v4541 = vor.u32 %v4540, %v4536
      %v4542 = vrot.slane %v4541, 4
      %v4544 = vshll.u32 %v4205, 16
      %v4546 = vrot.slane %v4544, 5
      %v4547 = vsel %vm853, %v4542, %v4546
      %v4549 = vshrl.u32 %v4206, 16
      %v4551 = vrot.slane %v4549, 4
      %v4552 = vshll.u32 %v4206, 16
      %v4554 = vrot.slane %v4552, 5
      %v4555 = vor.u32 %v4551, %v4554
      %v4556 = vrot.slane %v4555, 4
      %v4558 = vshll.u32 %v4207, 16
      %v4560 = vrot.slane %v4558, 5
      %v4561 = vsel %vm853, %v4556, %v4560
      %v4562 = vshrl.u32 %v4207, 16
      %v4564 = vrot.slane %v4562, 4
      %v4565 = vor.u32 %v4564, %v4560
      %v4566 = vrot.slane %v4565, 4
      %v4568 = vshll.u32 %v4208, 16
      %v4570 = vrot.slane %v4568, 5
      %v4571 = vsel %vm853, %v4566, %v4570
      %v4573 = vshrl.u32 %v4209, 16
      %v4575 = vrot.slane %v4573, 4
      %v4576 = vshll.u32 %v4209, 16
      %v4578 = vrot.slane %v4576, 5
      %v4579 = vor.u32 %v4575, %v4578
      %v4580 = vrot.slane %v4579, 4
      %v4582 = vshll.u32 %v4210, 16
      %v4584 = vrot.slane %v4582, 5
      %v4585 = vsel %vm853, %v4580, %v4584
      %v4586 = vshrl.u32 %v4210, 16
      %v4588 = vrot.slane %v4586, 4
      %v4589 = vor.u32 %v4588, %v4584
      %v4590 = vrot.slane %v4589, 4
      %v4592 = vshll.u32 %v4211, 16
      %v4594 = vrot.slane %v4592, 5
      %v4595 = vsel %vm853, %v4590, %v4594
      %s4596 = scalar_lea.vmem %s2, 14
      %v4597 = vld [vmem:[%s4596] sm:$0x3]
      %v4598 = vunpack.c.l.b16 %v4225
      %v4599 = vunpack.c.l.b16 %v4235
      %v4600 = vunpack.c.l.b16 %v4249
      %v4601 = vunpack.c.l.b16 %v4259
      %v4602 = vunpack.c.l.b16 %v4273
      %v4603 = vunpack.c.l.b16 %v4283
      %v4604 = vunpack.c.l.b16 %v4297
      %v4605 = vunpack.c.l.b16 %v4307
      %v4606 = vunpack.c.l.b16 %v4321
      %v4607 = vunpack.c.l.b16 %v4331
      %v4608 = vunpack.c.l.b16 %v4345
      %v4609 = vunpack.c.l.b16 %v4355
      %v4610 = vunpack.c.l.b16 %v4369
      %v4611 = vunpack.c.l.b16 %v4379
      %v4612 = vunpack.c.l.b16 %v4393
      %v4613 = vunpack.c.l.b16 %v4403
      %v4614 = vunpack.c.l.b16 %v4417
      %v4615 = vunpack.c.l.b16 %v4427
      %v4616 = vunpack.c.l.b16 %v4441
      %v4617 = vunpack.c.l.b16 %v4451
      %v4618 = vunpack.c.l.b16 %v4465
      %v4619 = vunpack.c.l.b16 %v4475
      %v4620 = vunpack.c.l.b16 %v4489
      %v4621 = vunpack.c.l.b16 %v4499
      %v4622 = vunpack.c.l.b16 %v4513
      %v4623 = vunpack.c.l.b16 %v4523
      %v4624 = vunpack.c.l.b16 %v4537
      %v4625 = vunpack.c.l.b16 %v4547
      %v4626 = vunpack.c.l.b16 %v4561
      %v4627 = vunpack.c.l.b16 %v4571
      %v4628 = vunpack.c.l.b16 %v4585
      %v4629 = vunpack.c.l.b16 %v4595
      %v4630 = vpack.c.b16 %v4599, %v4598
      %v4631 = vpack.c.b16 %v4601, %v4600
      %v4632 = vpack.c.b16 %v4603, %v4602
      %v4633 = vpack.c.b16 %v4605, %v4604
      %v4634 = vpack.c.b16 %v4607, %v4606
      %v4635 = vpack.c.b16 %v4609, %v4608
      %v4636 = vpack.c.b16 %v4611, %v4610
      %v4637 = vpack.c.b16 %v4613, %v4612
      %v4638 = vpack.c.b16 %v4615, %v4614
      %v4639 = vpack.c.b16 %v4617, %v4616
      %v4640 = vpack.c.b16 %v4619, %v4618
      %v4641 = vpack.c.b16 %v4621, %v4620
      %v4642 = vpack.c.b16 %v4623, %v4622
      %v4643 = vpack.c.b16 %v4625, %v4624
      %v4644 = vpack.c.b16 %v4627, %v4626
      %v4645 = vpack.c.b16 %v4629, %v4628
      %v4647 = vsel %vm1288, %v4630, 0
      %v4650 = vsel %vm1288, %v4631, 0
      %v4653 = vsel %vm1288, %v4632, 0
      %v4656 = vsel %vm1288, %v4633, 0
      %v4659 = vsel %vm1288, %v4634, 0
      %v4662 = vsel %vm1288, %v4635, 0
      %v4665 = vsel %vm1288, %v4636, 0
      %v4668 = vsel %vm1288, %v4637, 0
      %v4671 = vsel %vm1288, %v4638, 0
      %v4674 = vsel %vm1288, %v4639, 0
      %v4677 = vsel %vm1288, %v4640, 0
      %v4680 = vsel %vm1288, %v4641, 0
      %v4683 = vsel %vm1288, %v4642, 0
      %v4686 = vsel %vm1288, %v4643, 0
      %v4689 = vsel %vm1288, %v4644, 0
      %v4692 = vsel %vm1288, %v4645, 0
      %v4695 = vsel %vm1337, %v4597, 0
      %4697 = vmatprep.subr.bf16.mxu0 0
      %4698 = vmatpush1.bf16.msra.mxu0 0
      %4699 = vmatprep.subr.bf16.mxu0 0
      %4700 = vmatpush1.bf16.msra.mxu0 0
      %4701 = vmatprep.subr.bf16.mxu0 0
      %4702 = vmatpush1.bf16.msra.mxu0 0
      %4703 = vmatprep.subr.bf16.mxu0 0
      %4704 = vmatpush1.bf16.msra.mxu0 0
      %4705 = vmatprep.subr.bf16.mxu0 0
      %4706 = vmatpush1.bf16.msra.mxu0 0
      %4707 = vmatprep.subr.bf16.mxu0 0
      %4708 = vmatpush1.bf16.msra.mxu0 0
      %4709 = vmatprep.subr.bf16.mxu0 0
      %4710 = vmatpush1.bf16.msra.mxu0 0
      %4711 = vmatprep.subr.bf16.mxu0 0
      %4712 = vmatpush1.bf16.msra.mxu0 %v4695
      %4713 = vmatprep.subr.bf16.mxu0 0
      %4714 = vmatpush2.bf16.msra.mxu0 0
      %4715 = vmatprep.subr.bf16.mxu0 0
      %4716 = vmatpush2.bf16.msra.mxu0 0
      %4717 = vmatprep.subr.bf16.mxu0 0
      %4718 = vmatpush2.bf16.msra.mxu0 0
      %4719 = vmatprep.subr.bf16.mxu0 0
      %4720 = vmatpush2.bf16.msra.mxu0 0
      %4721 = vmatprep.subr.bf16.mxu0 0
      %4722 = vmatpush2.bf16.msra.mxu0 0
      %4723 = vmatprep.subr.bf16.mxu0 0
      %4724 = vmatpush2.bf16.msra.mxu0 0
      %4725 = vmatprep.subr.bf16.mxu0 0
      %4726 = vmatpush2.bf16.msra.mxu0 0
      %4727 = vmatprep.subr.bf16.mxu0 0
      %4728 = vmatpush2.bf16.msra.mxu0 0
      %4729 = vmatprep.mubr.bf16.mxu0 0
      %4730 = vmatmul.mubr.bf16.gmra.mxu0 %v4647
      %v4731 = vpop.f32.mrf.mxu0
      %v4732 = vadd.f32 0.0, %v4731
      %v4733 = vpop.f32.mrf.mxu0
      %v4734 = vpop.f32.mrf.mxu0
      %v4735 = vadd.f32 0.0, %v4734
      %v4736 = vpop.f32.mrf.mxu0
      %4737 = vmatprep.mubr.bf16.mxu0 0
      %4738 = vmatmul.mubr.bf16.gmra.mxu0 %v4650
      %v4739 = vpop.f32.mrf.mxu0
      %v4740 = vadd.f32 0.0, %v4739
      %v4741 = vpop.f32.mrf.mxu0
      %v4742 = vpop.f32.mrf.mxu0
      %v4743 = vadd.f32 0.0, %v4742
      %v4744 = vpop.f32.mrf.mxu0
      %4745 = vmatprep.mubr.bf16.mxu0 0
      %4746 = vmatmul.mubr.bf16.gmra.mxu0 %v4653
      %v4747 = vpop.f32.mrf.mxu0
      %v4748 = vadd.f32 0.0, %v4747
      %v4749 = vpop.f32.mrf.mxu0
      %v4750 = vpop.f32.mrf.mxu0
      %v4751 = vadd.f32 0.0, %v4750
      %v4752 = vpop.f32.mrf.mxu0
      %4753 = vmatprep.mubr.bf16.mxu0 0
      %4754 = vmatmul.mubr.bf16.gmra.mxu0 %v4656
      %v4755 = vpop.f32.mrf.mxu0
      %v4756 = vadd.f32 0.0, %v4755
      %v4757 = vpop.f32.mrf.mxu0
      %v4758 = vpop.f32.mrf.mxu0
      %v4759 = vadd.f32 0.0, %v4758
      %v4760 = vpop.f32.mrf.mxu0
      %4761 = vmatprep.mubr.bf16.mxu0 0
      %4762 = vmatmul.mubr.bf16.gmra.mxu0 %v4659
      %v4763 = vpop.f32.mrf.mxu0
      %v4764 = vadd.f32 0.0, %v4763
      %v4765 = vpop.f32.mrf.mxu0
      %v4766 = vpop.f32.mrf.mxu0
      %v4767 = vadd.f32 0.0, %v4766
      %v4768 = vpop.f32.mrf.mxu0
      %4769 = vmatprep.mubr.bf16.mxu0 0
      %4770 = vmatmul.mubr.bf16.gmra.mxu0 %v4662
      %v4771 = vpop.f32.mrf.mxu0
      %v4772 = vadd.f32 0.0, %v4771
      %v4773 = vpop.f32.mrf.mxu0
      %v4774 = vpop.f32.mrf.mxu0
      %v4775 = vadd.f32 0.0, %v4774
      %v4776 = vpop.f32.mrf.mxu0
      %4777 = vmatprep.mubr.bf16.mxu0 0
      %4778 = vmatmul.mubr.bf16.gmra.mxu0 %v4665
      %v4779 = vpop.f32.mrf.mxu0
      %v4780 = vadd.f32 0.0, %v4779
      %v4781 = vpop.f32.mrf.mxu0
      %v4782 = vpop.f32.mrf.mxu0
      %v4783 = vadd.f32 0.0, %v4782
      %v4784 = vpop.f32.mrf.mxu0
      %4785 = vmatprep.mubr.bf16.mxu0 0
      %4786 = vmatmul.mubr.bf16.gmra.mxu0 %v4668
      %v4787 = vpop.f32.mrf.mxu0
      %v4788 = vadd.f32 0.0, %v4787
      %v4789 = vpop.f32.mrf.mxu0
      %v4790 = vpop.f32.mrf.mxu0
      %v4791 = vadd.f32 0.0, %v4790
      %v4792 = vpop.f32.mrf.mxu0
      %4793 = vmatprep.mubr.bf16.mxu0 0
      %4794 = vmatmul.mubr.bf16.gmra.mxu0 %v4671
      %v4795 = vpop.f32.mrf.mxu0
      %v4796 = vadd.f32 0.0, %v4795
      %v4797 = vpop.f32.mrf.mxu0
      %v4798 = vpop.f32.mrf.mxu0
      %v4799 = vadd.f32 0.0, %v4798
      %v4800 = vpop.f32.mrf.mxu0
      %4801 = vmatprep.mubr.bf16.mxu0 0
      %4802 = vmatmul.mubr.bf16.gmra.mxu0 %v4674
      %v4803 = vpop.f32.mrf.mxu0
      %v4804 = vadd.f32 0.0, %v4803
      %v4805 = vpop.f32.mrf.mxu0
      %v4806 = vpop.f32.mrf.mxu0
      %v4807 = vadd.f32 0.0, %v4806
      %v4808 = vpop.f32.mrf.mxu0
      %4809 = vmatprep.mubr.bf16.mxu0 0
      %4810 = vmatmul.mubr.bf16.gmra.mxu0 %v4677
      %v4811 = vpop.f32.mrf.mxu0
      %v4812 = vadd.f32 0.0, %v4811
      %v4813 = vpop.f32.mrf.mxu0
      %v4814 = vpop.f32.mrf.mxu0
      %v4815 = vadd.f32 0.0, %v4814
      %v4816 = vpop.f32.mrf.mxu0
      %4817 = vmatprep.mubr.bf16.mxu0 0
      %4818 = vmatmul.mubr.bf16.gmra.mxu0 %v4680
      %v4819 = vpop.f32.mrf.mxu0
      %v4820 = vadd.f32 0.0, %v4819
      %v4821 = vpop.f32.mrf.mxu0
      %v4822 = vpop.f32.mrf.mxu0
      %v4823 = vadd.f32 0.0, %v4822
      %v4824 = vpop.f32.mrf.mxu0
      %4825 = vmatprep.mubr.bf16.mxu0 0
      %4826 = vmatmul.mubr.bf16.gmra.mxu0 %v4683
      %v4827 = vpop.f32.mrf.mxu0
      %v4828 = vadd.f32 0.0, %v4827
      %v4829 = vpop.f32.mrf.mxu0
      %v4830 = vpop.f32.mrf.mxu0
      %v4831 = vadd.f32 0.0, %v4830
      %v4832 = vpop.f32.mrf.mxu0
      %4833 = vmatprep.mubr.bf16.mxu0 0
      %4834 = vmatmul.mubr.bf16.gmra.mxu0 %v4686
      %v4835 = vpop.f32.mrf.mxu0
      %v4836 = vadd.f32 0.0, %v4835
      %v4837 = vpop.f32.mrf.mxu0
      %v4838 = vpop.f32.mrf.mxu0
      %v4839 = vadd.f32 0.0, %v4838
      %v4840 = vpop.f32.mrf.mxu0
      %4841 = vmatprep.mubr.bf16.mxu0 0
      %4842 = vmatmul.mubr.bf16.gmra.mxu0 %v4689
      %v4843 = vpop.f32.mrf.mxu0
      %v4844 = vadd.f32 0.0, %v4843
      %v4845 = vpop.f32.mrf.mxu0
      %v4846 = vpop.f32.mrf.mxu0
      %v4847 = vadd.f32 0.0, %v4846
      %v4848 = vpop.f32.mrf.mxu0
      %4849 = vmatprep.mubr.bf16.mxu0 0
      %4850 = vmatmul.mubr.bf16.gmra.mxu0 %v4692
      %v4851 = vpop.f32.mrf.mxu0
      %v4852 = vadd.f32 0.0, %v4851
      %v4853 = vpop.f32.mrf.mxu0
      %v4854 = vpop.f32.mrf.mxu0
      %v4855 = vadd.f32 0.0, %v4854
      %v4856 = vpop.f32.mrf.mxu0
      %4857 = vdwg.mxu0
      %v4858 = vadd.f32 %v4132, %v4732
      %v4859 = vadd.f32 %v4133, %v4735
      %v4860 = vadd.f32 %v4134, %v4740
      %v4861 = vadd.f32 %v4135, %v4743
      %v4862 = vadd.f32 %v4136, %v4748
      %v4863 = vadd.f32 %v4137, %v4751
      %v4864 = vadd.f32 %v4138, %v4756
      %v4865 = vadd.f32 %v4139, %v4759
      %v4866 = vadd.f32 %v4140, %v4764
      %v4867 = vadd.f32 %v4141, %v4767
      %v4868 = vadd.f32 %v4142, %v4772
      %v4869 = vadd.f32 %v4143, %v4775
      %v4870 = vadd.f32 %v4144, %v4780
      %v4871 = vadd.f32 %v4145, %v4783
      %v4872 = vadd.f32 %v4146, %v4788
      %v4873 = vadd.f32 %v4147, %v4791
      %v4874 = vadd.f32 %v4148, %v4796
      %v4875 = vadd.f32 %v4149, %v4799
      %v4876 = vadd.f32 %v4150, %v4804
      %v4877 = vadd.f32 %v4151, %v4807
      %v4878 = vadd.f32 %v4152, %v4812
      %v4879 = vadd.f32 %v4153, %v4815
      %v4880 = vadd.f32 %v4154, %v4820
      %v4881 = vadd.f32 %v4155, %v4823
      %v4882 = vadd.f32 %v4156, %v4828
      %v4883 = vadd.f32 %v4157, %v4831
      %v4884 = vadd.f32 %v4158, %v4836
      %v4885 = vadd.f32 %v4159, %v4839
      %v4886 = vadd.f32 %v4160, %v4844
      %v4887 = vadd.f32 %v4161, %v4847
      %v4888 = vadd.f32 %v4162, %v4852
      %v4889 = vadd.f32 %v4163, %v4855
      %v4890 = vld [vmem:[%s3805] sm:$0xe]
      %v4891 = vld [vmem:[%s3805 + $0xc] sm:$0xe]
      %v4892 = vld [vmem:[%s3805 + $0x18] sm:$0xe]
      %v4893 = vld [vmem:[%s3805 + $0x24] sm:$0xe]
      %v4894 = vld [vmem:[%s3805 + $0x30] sm:$0xe]
      %v4895 = vld [vmem:[%s3805 + $0x3c] sm:$0xe]
      %v4896 = vld [vmem:[%s3805 + $0x48] sm:$0xe]
      %v4897 = vld [vmem:[%s3805 + $0x54] sm:$0xe]
      %v4898 = vld [vmem:[%s3805 + $0x60] sm:$0xe]
      %v4899 = vld [vmem:[%s3805 + $0x6c] sm:$0xe]
      %v4900 = vld [vmem:[%s3805 + $0x78] sm:$0xe]
      %v4901 = vld [vmem:[%s3805 + $0x84] sm:$0xe]
      %v4902 = vld [vmem:[%s3805 + $0x90] sm:$0xe]
      %v4903 = vld [vmem:[%s3805 + $0x9c] sm:$0xe]
      %v4904 = vld [vmem:[%s3805 + $0xa8] sm:$0xe]
      %v4905 = vld [vmem:[%s3805 + $0xb4] sm:$0xe]
      %v4954 = vrot.slane %v4890, 5
      %v4955 = vrot.slane %v4954, 4
      %v4956 = vrot.slane %v4165, 5
      %v4957 = vsel %vm1844, %v4955, %v4956
      %v4958 = vrot.slane %v4956, 4
      %v4959 = vrot.slane %v4166, 5
      %v4960 = vsel %vm1844, %v4958, %v4959
      %v4961 = vrot.slane %v4891, 5
      %v4962 = vrot.slane %v4961, 4
      %v4963 = vrot.slane %v4168, 5
      %v4964 = vsel %vm1844, %v4962, %v4963
      %v4965 = vrot.slane %v4963, 4
      %v4966 = vrot.slane %v4169, 5
      %v4967 = vsel %vm1844, %v4965, %v4966
      %v4968 = vrot.slane %v4892, 5
      %v4969 = vrot.slane %v4968, 4
      %v4970 = vrot.slane %v4171, 5
      %v4971 = vsel %vm1844, %v4969, %v4970
      %v4972 = vrot.slane %v4970, 4
      %v4973 = vrot.slane %v4172, 5
      %v4974 = vsel %vm1844, %v4972, %v4973
      %v4975 = vrot.slane %v4893, 5
      %v4976 = vrot.slane %v4975, 4
      %v4977 = vrot.slane %v4174, 5
      %v4978 = vsel %vm1844, %v4976, %v4977
      %v4979 = vrot.slane %v4977, 4
      %v4980 = vrot.slane %v4175, 5
      %v4981 = vsel %vm1844, %v4979, %v4980
      %v4982 = vrot.slane %v4894, 5
      %v4983 = vrot.slane %v4982, 4
      %v4984 = vrot.slane %v4177, 5
      %v4985 = vsel %vm1844, %v4983, %v4984
      %v4986 = vrot.slane %v4984, 4
      %v4987 = vrot.slane %v4178, 5
      %v4988 = vsel %vm1844, %v4986, %v4987
      %v4989 = vrot.slane %v4895, 5
      %v4990 = vrot.slane %v4989, 4
      %v4991 = vrot.slane %v4180, 5
      %v4992 = vsel %vm1844, %v4990, %v4991
      %v4993 = vrot.slane %v4991, 4
      %v4994 = vrot.slane %v4181, 5
      %v4995 = vsel %vm1844, %v4993, %v4994
      %v4996 = vrot.slane %v4896, 5
      %v4997 = vrot.slane %v4996, 4
      %v4998 = vrot.slane %v4183, 5
      %v4999 = vsel %vm1844, %v4997, %v4998
      %v5000 = vrot.slane %v4998, 4
      %v5001 = vrot.slane %v4184, 5
      %v5002 = vsel %vm1844, %v5000, %v5001
      %v5003 = vrot.slane %v4897, 5
      %v5004 = vrot.slane %v5003, 4
      %v5005 = vrot.slane %v4186, 5
      %v5006 = vsel %vm1844, %v5004, %v5005
      %v5007 = vrot.slane %v5005, 4
      %v5008 = vrot.slane %v4187, 5
      %v5009 = vsel %vm1844, %v5007, %v5008
      %v5010 = vrot.slane %v4898, 5
      %v5011 = vrot.slane %v5010, 4
      %v5012 = vrot.slane %v4189, 5
      %v5013 = vsel %vm1844, %v5011, %v5012
      %v5014 = vrot.slane %v5012, 4
      %v5015 = vrot.slane %v4190, 5
      %v5016 = vsel %vm1844, %v5014, %v5015
      %v5017 = vrot.slane %v4899, 5
      %v5018 = vrot.slane %v5017, 4
      %v5019 = vrot.slane %v4192, 5
      %v5020 = vsel %vm1844, %v5018, %v5019
      %v5021 = vrot.slane %v5019, 4
      %v5022 = vrot.slane %v4193, 5
      %v5023 = vsel %vm1844, %v5021, %v5022
      %v5024 = vrot.slane %v4900, 5
      %v5025 = vrot.slane %v5024, 4
      %v5026 = vrot.slane %v4195, 5
      %v5027 = vsel %vm1844, %v5025, %v5026
      %v5028 = vrot.slane %v5026, 4
      %v5029 = vrot.slane %v4196, 5
      %v5030 = vsel %vm1844, %v5028, %v5029
      %v5031 = vrot.slane %v4901, 5
      %v5032 = vrot.slane %v5031, 4
      %v5033 = vrot.slane %v4198, 5
      %v5034 = vsel %vm1844, %v5032, %v5033
      %v5035 = vrot.slane %v5033, 4
      %v5036 = vrot.slane %v4199, 5
      %v5037 = vsel %vm1844, %v5035, %v5036
      %v5038 = vrot.slane %v4902, 5
      %v5039 = vrot.slane %v5038, 4
      %v5040 = vrot.slane %v4201, 5
      %v5041 = vsel %vm1844, %v5039, %v5040
      %v5042 = vrot.slane %v5040, 4
      %v5043 = vrot.slane %v4202, 5
      %v5044 = vsel %vm1844, %v5042, %v5043
      %v5045 = vrot.slane %v4903, 5
      %v5046 = vrot.slane %v5045, 4
      %v5047 = vrot.slane %v4204, 5
      %v5048 = vsel %vm1844, %v5046, %v5047
      %v5049 = vrot.slane %v5047, 4
      %v5050 = vrot.slane %v4205, 5
      %v5051 = vsel %vm1844, %v5049, %v5050
      %v5052 = vrot.slane %v4904, 5
      %v5053 = vrot.slane %v5052, 4
      %v5054 = vrot.slane %v4207, 5
      %v5055 = vsel %vm1844, %v5053, %v5054
      %v5056 = vrot.slane %v5054, 4
      %v5057 = vrot.slane %v4208, 5
      %v5058 = vsel %vm1844, %v5056, %v5057
      %v5059 = vrot.slane %v4905, 5
      %v5060 = vrot.slane %v5059, 4
      %v5061 = vrot.slane %v4210, 5
      %v5062 = vsel %vm1844, %v5060, %v5061
      %v5063 = vrot.slane %v5061, 4
      %v5064 = vrot.slane %v4211, 5
      %v5065 = vsel %vm1844, %v5063, %v5064
      %s5066 = scalar_lea.vmem %s2, 16
      %v5067 = vld [vmem:[%s5066] sm:$0x3]
      %v5068 = vunpack.c.l.b16 %v4957
      %v5069 = vunpack.c.l.b16 %v4960
      %v5070 = vunpack.c.l.b16 %v4964
      %v5071 = vunpack.c.l.b16 %v4967
      %v5072 = vunpack.c.l.b16 %v4971
      %v5073 = vunpack.c.l.b16 %v4974
      %v5074 = vunpack.c.l.b16 %v4978
      %v5075 = vunpack.c.l.b16 %v4981
      %v5076 = vunpack.c.l.b16 %v4985
      %v5077 = vunpack.c.l.b16 %v4988
      %v5078 = vunpack.c.l.b16 %v4992
      %v5079 = vunpack.c.l.b16 %v4995
      %v5080 = vunpack.c.l.b16 %v4999
      %v5081 = vunpack.c.l.b16 %v5002
      %v5082 = vunpack.c.l.b16 %v5006
      %v5083 = vunpack.c.l.b16 %v5009
      %v5084 = vunpack.c.l.b16 %v5013
      %v5085 = vunpack.c.l.b16 %v5016
      %v5086 = vunpack.c.l.b16 %v5020
      %v5087 = vunpack.c.l.b16 %v5023
      %v5088 = vunpack.c.l.b16 %v5027
      %v5089 = vunpack.c.l.b16 %v5030
      %v5090 = vunpack.c.l.b16 %v5034
      %v5091 = vunpack.c.l.b16 %v5037
      %v5092 = vunpack.c.l.b16 %v5041
      %v5093 = vunpack.c.l.b16 %v5044
      %v5094 = vunpack.c.l.b16 %v5048
      %v5095 = vunpack.c.l.b16 %v5051
      %v5096 = vunpack.c.l.b16 %v5055
      %v5097 = vunpack.c.l.b16 %v5058
      %v5098 = vunpack.c.l.b16 %v5062
      %v5099 = vunpack.c.l.b16 %v5065
      %v5100 = vpack.c.b16 %v5069, %v5068
      %v5101 = vpack.c.b16 %v5071, %v5070
      %v5102 = vpack.c.b16 %v5073, %v5072
      %v5103 = vpack.c.b16 %v5075, %v5074
      %v5104 = vpack.c.b16 %v5077, %v5076
      %v5105 = vpack.c.b16 %v5079, %v5078
      %v5106 = vpack.c.b16 %v5081, %v5080
      %v5107 = vpack.c.b16 %v5083, %v5082
      %v5108 = vpack.c.b16 %v5085, %v5084
      %v5109 = vpack.c.b16 %v5087, %v5086
      %v5110 = vpack.c.b16 %v5089, %v5088
      %v5111 = vpack.c.b16 %v5091, %v5090
      %v5112 = vpack.c.b16 %v5093, %v5092
      %v5113 = vpack.c.b16 %v5095, %v5094
      %v5114 = vpack.c.b16 %v5097, %v5096
      %v5115 = vpack.c.b16 %v5099, %v5098
      %v5117 = vsel %vm1288, %v5100, 0
      %v5120 = vsel %vm1288, %v5101, 0
      %v5123 = vsel %vm1288, %v5102, 0
      %v5126 = vsel %vm1288, %v5103, 0
      %v5129 = vsel %vm1288, %v5104, 0
      %v5132 = vsel %vm1288, %v5105, 0
      %v5135 = vsel %vm1288, %v5106, 0
      %v5138 = vsel %vm1288, %v5107, 0
      %v5141 = vsel %vm1288, %v5108, 0
      %v5144 = vsel %vm1288, %v5109, 0
      %v5147 = vsel %vm1288, %v5110, 0
      %v5150 = vsel %vm1288, %v5111, 0
      %v5153 = vsel %vm1288, %v5112, 0
      %v5156 = vsel %vm1288, %v5113, 0
      %v5159 = vsel %vm1288, %v5114, 0
      %v5162 = vsel %vm1288, %v5115, 0
      %v5165 = vsel %vm1337, %v5067, 0
      %5167 = vmatprep.subr.bf16.mxu0 0
      %5168 = vmatpush1.bf16.msra.mxu0 0
      %5169 = vmatprep.subr.bf16.mxu0 0
      %5170 = vmatpush1.bf16.msra.mxu0 0
      %5171 = vmatprep.subr.bf16.mxu0 0
      %5172 = vmatpush1.bf16.msra.mxu0 0
      %5173 = vmatprep.subr.bf16.mxu0 0
      %5174 = vmatpush1.bf16.msra.mxu0 0
      %5175 = vmatprep.subr.bf16.mxu0 0
      %5176 = vmatpush1.bf16.msra.mxu0 0
      %5177 = vmatprep.subr.bf16.mxu0 0
      %5178 = vmatpush1.bf16.msra.mxu0 0
      %5179 = vmatprep.subr.bf16.mxu0 0
      %5180 = vmatpush1.bf16.msra.mxu0 0
      %5181 = vmatprep.subr.bf16.mxu0 0
      %5182 = vmatpush1.bf16.msra.mxu0 %v5165
      %5183 = vmatprep.subr.bf16.mxu0 0
      %5184 = vmatpush2.bf16.msra.mxu0 0
      %5185 = vmatprep.subr.bf16.mxu0 0
      %5186 = vmatpush2.bf16.msra.mxu0 0
      %5187 = vmatprep.subr.bf16.mxu0 0
      %5188 = vmatpush2.bf16.msra.mxu0 0
      %5189 = vmatprep.subr.bf16.mxu0 0
      %5190 = vmatpush2.bf16.msra.mxu0 0
      %5191 = vmatprep.subr.bf16.mxu0 0
      %5192 = vmatpush2.bf16.msra.mxu0 0
      %5193 = vmatprep.subr.bf16.mxu0 0
      %5194 = vmatpush2.bf16.msra.mxu0 0
      %5195 = vmatprep.subr.bf16.mxu0 0
      %5196 = vmatpush2.bf16.msra.mxu0 0
      %5197 = vmatprep.subr.bf16.mxu0 0
      %5198 = vmatpush2.bf16.msra.mxu0 0
      %5199 = vmatprep.mubr.bf16.mxu0 0
      %5200 = vmatmul.mubr.bf16.gmra.mxu0 %v5117
      %v5201 = vpop.f32.mrf.mxu0
      %v5202 = vadd.f32 0.0, %v5201
      %v5203 = vpop.f32.mrf.mxu0
      %v5204 = vpop.f32.mrf.mxu0
      %v5205 = vadd.f32 0.0, %v5204
      %v5206 = vpop.f32.mrf.mxu0
      %5207 = vmatprep.mubr.bf16.mxu0 0
      %5208 = vmatmul.mubr.bf16.gmra.mxu0 %v5120
      %v5209 = vpop.f32.mrf.mxu0
      %v5210 = vadd.f32 0.0, %v5209
      %v5211 = vpop.f32.mrf.mxu0
      %v5212 = vpop.f32.mrf.mxu0
      %v5213 = vadd.f32 0.0, %v5212
      %v5214 = vpop.f32.mrf.mxu0
      %5215 = vmatprep.mubr.bf16.mxu0 0
      %5216 = vmatmul.mubr.bf16.gmra.mxu0 %v5123
      %v5217 = vpop.f32.mrf.mxu0
      %v5218 = vadd.f32 0.0, %v5217
      %v5219 = vpop.f32.mrf.mxu0
      %v5220 = vpop.f32.mrf.mxu0
      %v5221 = vadd.f32 0.0, %v5220
      %v5222 = vpop.f32.mrf.mxu0
      %5223 = vmatprep.mubr.bf16.mxu0 0
      %5224 = vmatmul.mubr.bf16.gmra.mxu0 %v5126
      %v5225 = vpop.f32.mrf.mxu0
      %v5226 = vadd.f32 0.0, %v5225
      %v5227 = vpop.f32.mrf.mxu0
      %v5228 = vpop.f32.mrf.mxu0
      %v5229 = vadd.f32 0.0, %v5228
      %v5230 = vpop.f32.mrf.mxu0
      %5231 = vmatprep.mubr.bf16.mxu0 0
      %5232 = vmatmul.mubr.bf16.gmra.mxu0 %v5129
      %v5233 = vpop.f32.mrf.mxu0
      %v5234 = vadd.f32 0.0, %v5233
      %v5235 = vpop.f32.mrf.mxu0
      %v5236 = vpop.f32.mrf.mxu0
      %v5237 = vadd.f32 0.0, %v5236
      %v5238 = vpop.f32.mrf.mxu0
      %5239 = vmatprep.mubr.bf16.mxu0 0
      %5240 = vmatmul.mubr.bf16.gmra.mxu0 %v5132
      %v5241 = vpop.f32.mrf.mxu0
      %v5242 = vadd.f32 0.0, %v5241
      %v5243 = vpop.f32.mrf.mxu0
      %v5244 = vpop.f32.mrf.mxu0
      %v5245 = vadd.f32 0.0, %v5244
      %v5246 = vpop.f32.mrf.mxu0
      %5247 = vmatprep.mubr.bf16.mxu0 0
      %5248 = vmatmul.mubr.bf16.gmra.mxu0 %v5135
      %v5249 = vpop.f32.mrf.mxu0
      %v5250 = vadd.f32 0.0, %v5249
      %v5251 = vpop.f32.mrf.mxu0
      %v5252 = vpop.f32.mrf.mxu0
      %v5253 = vadd.f32 0.0, %v5252
      %v5254 = vpop.f32.mrf.mxu0
      %5255 = vmatprep.mubr.bf16.mxu0 0
      %5256 = vmatmul.mubr.bf16.gmra.mxu0 %v5138
      %v5257 = vpop.f32.mrf.mxu0
      %v5258 = vadd.f32 0.0, %v5257
      %v5259 = vpop.f32.mrf.mxu0
      %v5260 = vpop.f32.mrf.mxu0
      %v5261 = vadd.f32 0.0, %v5260
      %v5262 = vpop.f32.mrf.mxu0
      %5263 = vmatprep.mubr.bf16.mxu0 0
      %5264 = vmatmul.mubr.bf16.gmra.mxu0 %v5141
      %v5265 = vpop.f32.mrf.mxu0
      %v5266 = vadd.f32 0.0, %v5265
      %v5267 = vpop.f32.mrf.mxu0
      %v5268 = vpop.f32.mrf.mxu0
      %v5269 = vadd.f32 0.0, %v5268
      %v5270 = vpop.f32.mrf.mxu0
      %5271 = vmatprep.mubr.bf16.mxu0 0
      %5272 = vmatmul.mubr.bf16.gmra.mxu0 %v5144
      %v5273 = vpop.f32.mrf.mxu0
      %v5274 = vadd.f32 0.0, %v5273
      %v5275 = vpop.f32.mrf.mxu0
      %v5276 = vpop.f32.mrf.mxu0
      %v5277 = vadd.f32 0.0, %v5276
      %v5278 = vpop.f32.mrf.mxu0
      %5279 = vmatprep.mubr.bf16.mxu0 0
      %5280 = vmatmul.mubr.bf16.gmra.mxu0 %v5147
      %v5281 = vpop.f32.mrf.mxu0
      %v5282 = vadd.f32 0.0, %v5281
      %v5283 = vpop.f32.mrf.mxu0
      %v5284 = vpop.f32.mrf.mxu0
      %v5285 = vadd.f32 0.0, %v5284
      %v5286 = vpop.f32.mrf.mxu0
      %5287 = vmatprep.mubr.bf16.mxu0 0
      %5288 = vmatmul.mubr.bf16.gmra.mxu0 %v5150
      %v5289 = vpop.f32.mrf.mxu0
      %v5290 = vadd.f32 0.0, %v5289
      %v5291 = vpop.f32.mrf.mxu0
      %v5292 = vpop.f32.mrf.mxu0
      %v5293 = vadd.f32 0.0, %v5292
      %v5294 = vpop.f32.mrf.mxu0
      %5295 = vmatprep.mubr.bf16.mxu0 0
      %5296 = vmatmul.mubr.bf16.gmra.mxu0 %v5153
      %v5297 = vpop.f32.mrf.mxu0
      %v5298 = vadd.f32 0.0, %v5297
      %v5299 = vpop.f32.mrf.mxu0
      %v5300 = vpop.f32.mrf.mxu0
      %v5301 = vadd.f32 0.0, %v5300
      %v5302 = vpop.f32.mrf.mxu0
      %5303 = vmatprep.mubr.bf16.mxu0 0
      %5304 = vmatmul.mubr.bf16.gmra.mxu0 %v5156
      %v5305 = vpop.f32.mrf.mxu0
      %v5306 = vadd.f32 0.0, %v5305
      %v5307 = vpop.f32.mrf.mxu0
      %v5308 = vpop.f32.mrf.mxu0
      %v5309 = vadd.f32 0.0, %v5308
      %v5310 = vpop.f32.mrf.mxu0
      %5311 = vmatprep.mubr.bf16.mxu0 0
      %5312 = vmatmul.mubr.bf16.gmra.mxu0 %v5159
      %v5313 = vpop.f32.mrf.mxu0
      %v5314 = vadd.f32 0.0, %v5313
      %v5315 = vpop.f32.mrf.mxu0
      %v5316 = vpop.f32.mrf.mxu0
      %v5317 = vadd.f32 0.0, %v5316
      %v5318 = vpop.f32.mrf.mxu0
      %5319 = vmatprep.mubr.bf16.mxu0 0
      %5320 = vmatmul.mubr.bf16.gmra.mxu0 %v5162
      %v5321 = vpop.f32.mrf.mxu0
      %v5322 = vadd.f32 0.0, %v5321
      %v5323 = vpop.f32.mrf.mxu0
      %v5324 = vpop.f32.mrf.mxu0
      %v5325 = vadd.f32 0.0, %v5324
      %v5326 = vpop.f32.mrf.mxu0
      %5327 = vdwg.mxu0
      %v5328 = vadd.f32 %v4858, %v5202
      %v5329 = vadd.f32 %v4859, %v5205
      %v5330 = vadd.f32 %v4860, %v5210
      %v5331 = vadd.f32 %v4861, %v5213
      %v5332 = vadd.f32 %v4862, %v5218
      %v5333 = vadd.f32 %v4863, %v5221
      %v5334 = vadd.f32 %v4864, %v5226
      %v5335 = vadd.f32 %v4865, %v5229
      %v5336 = vadd.f32 %v4866, %v5234
      %v5337 = vadd.f32 %v4867, %v5237
      %v5338 = vadd.f32 %v4868, %v5242
      %v5339 = vadd.f32 %v4869, %v5245
      %v5340 = vadd.f32 %v4870, %v5250
      %v5341 = vadd.f32 %v4871, %v5253
      %v5342 = vadd.f32 %v4872, %v5258
      %v5343 = vadd.f32 %v4873, %v5261
      %v5344 = vadd.f32 %v4874, %v5266
      %v5345 = vadd.f32 %v4875, %v5269
      %v5346 = vadd.f32 %v4876, %v5274
      %v5347 = vadd.f32 %v4877, %v5277
      %v5348 = vadd.f32 %v4878, %v5282
      %v5349 = vadd.f32 %v4879, %v5285
      %v5350 = vadd.f32 %v4880, %v5290
      %v5351 = vadd.f32 %v4881, %v5293
      %v5352 = vadd.f32 %v4882, %v5298
      %v5353 = vadd.f32 %v4883, %v5301
      %v5354 = vadd.f32 %v4884, %v5306
      %v5355 = vadd.f32 %v4885, %v5309
      %v5356 = vadd.f32 %v4886, %v5314
      %v5357 = vadd.f32 %v4887, %v5317
      %v5358 = vadd.f32 %v4888, %v5322
      %v5359 = vadd.f32 %v4889, %v5325
      %v5360 = vld [vmem:[%s4] sm:$0x1]
      %v5362 = vlaneseq
      %v5363 = vshrl.u32 %v5362, 7
      %v5364 = vsub.s32 0, %v5363
      %v5365 = vrot.slane %v5360, %v5364
      %v5367 = vmul.f32 %v5328, %v5365
      %v5368 = vmul.f32 %v5329, %v5365
      %v5369 = vmul.f32 %v5330, %v5365
      %v5370 = vmul.f32 %v5331, %v5365
      %v5371 = vmul.f32 %v5332, %v5365
      %v5372 = vmul.f32 %v5333, %v5365
      %v5373 = vmul.f32 %v5334, %v5365
      %v5374 = vmul.f32 %v5335, %v5365
      %v5375 = vmul.f32 %v5336, %v5365
      %v5376 = vmul.f32 %v5337, %v5365
      %v5377 = vmul.f32 %v5338, %v5365
      %v5378 = vmul.f32 %v5339, %v5365
      %v5379 = vmul.f32 %v5340, %v5365
      %v5380 = vmul.f32 %v5341, %v5365
      %v5381 = vmul.f32 %v5342, %v5365
      %v5382 = vmul.f32 %v5343, %v5365
      %v5383 = vmul.f32 %v5344, %v5365
      %v5384 = vmul.f32 %v5345, %v5365
      %v5385 = vmul.f32 %v5346, %v5365
      %v5386 = vmul.f32 %v5347, %v5365
      %v5387 = vmul.f32 %v5348, %v5365
      %v5388 = vmul.f32 %v5349, %v5365
      %v5389 = vmul.f32 %v5350, %v5365
      %v5390 = vmul.f32 %v5351, %v5365
      %v5391 = vmul.f32 %v5352, %v5365
      %v5392 = vmul.f32 %v5353, %v5365
      %v5393 = vmul.f32 %v5354, %v5365
      %v5394 = vmul.f32 %v5355, %v5365
      %v5395 = vmul.f32 %v5356, %v5365
      %v5396 = vmul.f32 %v5357, %v5365
      %v5397 = vmul.f32 %v5358, %v5365
      %v5398 = vmul.f32 %v5359, %v5365
      %v5399 = vld [vmem:[%s5] sm:$0x1]
      %v5401 = vlaneseq
      %v5402 = vshrl.u32 %v5401, 7
      %v5403 = vsub.s32 0, %v5402
      %v5404 = vrot.slane %v5399, %v5403
      %v5406 = vadd.f32 %v5367, %v5404
      %v5407 = vadd.f32 %v5368, %v5404
      %v5408 = vadd.f32 %v5369, %v5404
      %v5409 = vadd.f32 %v5370, %v5404
      %v5410 = vadd.f32 %v5371, %v5404
      %v5411 = vadd.f32 %v5372, %v5404
      %v5412 = vadd.f32 %v5373, %v5404
      %v5413 = vadd.f32 %v5374, %v5404
      %v5414 = vadd.f32 %v5375, %v5404
      %v5415 = vadd.f32 %v5376, %v5404
      %v5416 = vadd.f32 %v5377, %v5404
      %v5417 = vadd.f32 %v5378, %v5404
      %v5418 = vadd.f32 %v5379, %v5404
      %v5419 = vadd.f32 %v5380, %v5404
      %v5420 = vadd.f32 %v5381, %v5404
      %v5421 = vadd.f32 %v5382, %v5404
      %v5422 = vadd.f32 %v5383, %v5404
      %v5423 = vadd.f32 %v5384, %v5404
      %v5424 = vadd.f32 %v5385, %v5404
      %v5425 = vadd.f32 %v5386, %v5404
      %v5426 = vadd.f32 %v5387, %v5404
      %v5427 = vadd.f32 %v5388, %v5404
      %v5428 = vadd.f32 %v5389, %v5404
      %v5429 = vadd.f32 %v5390, %v5404
      %v5430 = vadd.f32 %v5391, %v5404
      %v5431 = vadd.f32 %v5392, %v5404
      %v5432 = vadd.f32 %v5393, %v5404
      %v5433 = vadd.f32 %v5394, %v5404
      %v5434 = vadd.f32 %v5395, %v5404
      %v5435 = vadd.f32 %v5396, %v5404
      %v5436 = vadd.f32 %v5397, %v5404
      %v5437 = vadd.f32 %v5398, %v5404
      %v5438 = vmax.f32 %v5406, 0.0
      %v5439 = vmax.f32 %v5407, 0.0
      %v5440 = vmax.f32 %v5408, 0.0
      %v5441 = vmax.f32 %v5409, 0.0
      %v5442 = vmax.f32 %v5410, 0.0
      %v5443 = vmax.f32 %v5411, 0.0
      %v5444 = vmax.f32 %v5412, 0.0
      %v5445 = vmax.f32 %v5413, 0.0
      %v5446 = vmax.f32 %v5414, 0.0
      %v5447 = vmax.f32 %v5415, 0.0
      %v5448 = vmax.f32 %v5416, 0.0
      %v5449 = vmax.f32 %v5417, 0.0
      %v5450 = vmax.f32 %v5418, 0.0
      %v5451 = vmax.f32 %v5419, 0.0
      %v5452 = vmax.f32 %v5420, 0.0
      %v5453 = vmax.f32 %v5421, 0.0
      %v5454 = vmax.f32 %v5422, 0.0
      %v5455 = vmax.f32 %v5423, 0.0
      %v5456 = vmax.f32 %v5424, 0.0
      %v5457 = vmax.f32 %v5425, 0.0
      %v5458 = vmax.f32 %v5426, 0.0
      %v5459 = vmax.f32 %v5427, 0.0
      %v5460 = vmax.f32 %v5428, 0.0
      %v5461 = vmax.f32 %v5429, 0.0
      %v5462 = vmax.f32 %v5430, 0.0
      %v5463 = vmax.f32 %v5431, 0.0
      %v5464 = vmax.f32 %v5432, 0.0
      %v5465 = vmax.f32 %v5433, 0.0
      %v5466 = vmax.f32 %v5434, 0.0
      %v5467 = vmax.f32 %v5435, 0.0
      %v5468 = vmax.f32 %v5436, 0.0
      %v5469 = vmax.f32 %v5437, 0.0
      %v5470 = vpack.c.bf16 %v5439, %v5438
      %v5471 = vpack.c.bf16 %v5441, %v5440
      %v5472 = vpack.c.bf16 %v5443, %v5442
      %v5473 = vpack.c.bf16 %v5445, %v5444
      %v5474 = vpack.c.bf16 %v5447, %v5446
      %v5475 = vpack.c.bf16 %v5449, %v5448
      %v5476 = vpack.c.bf16 %v5451, %v5450
      %v5477 = vpack.c.bf16 %v5453, %v5452
      %v5478 = vpack.c.bf16 %v5455, %v5454
      %v5479 = vpack.c.bf16 %v5457, %v5456
      %v5480 = vpack.c.bf16 %v5459, %v5458
      %v5481 = vpack.c.bf16 %v5461, %v5460
      %v5482 = vpack.c.bf16 %v5463, %v5462
      %v5483 = vpack.c.bf16 %v5465, %v5464
      %v5484 = vpack.c.bf16 %v5467, %v5466
      %v5485 = vpack.c.bf16 %v5469, %v5468
      %v5486 = vld [vmem:[%s3] sm:$0x3]
      %v5487 = vld [vmem:[%s266] sm:$0xf]
      %v5488 = vld [vmem:[%s266 + $0x4] sm:$0xf]
      %v5489 = vld [vmem:[%s266 + $0x8] sm:$0xf]
      %v5490 = vld [vmem:[%s266 + $0xc] sm:$0xf]
      %v5491 = vld [vmem:[%s266 + $0x10] sm:$0xf]
      %v5492 = vld [vmem:[%s266 + $0x14] sm:$0xf]
      %v5493 = vld [vmem:[%s266 + $0x18] sm:$0xf]
      %v5494 = vld [vmem:[%s266 + $0x1c] sm:$0xf]
      %v5495 = vld [vmem:[%s266 + $0x20] sm:$0xf]
      %v5496 = vld [vmem:[%s266 + $0x24] sm:$0xf]
      %v5497 = vld [vmem:[%s266 + $0x28] sm:$0xf]
      %v5498 = vld [vmem:[%s266 + $0x2c] sm:$0xf]
      %v5499 = vld [vmem:[%s266 + $0x30] sm:$0xf]
      %v5500 = vld [vmem:[%s266 + $0x34] sm:$0xf]
      %v5501 = vld [vmem:[%s266 + $0x38] sm:$0xf]
      %v5502 = vld [vmem:[%s266 + $0x3c] sm:$0xf]
      %v5503 = vld [vmem:[%s266 + $0x40] sm:$0xf]
      %v5504 = vld [vmem:[%s266 + $0x44] sm:$0xf]
      %v5505 = vld [vmem:[%s266 + $0x48] sm:$0xf]
      %v5506 = vld [vmem:[%s266 + $0x4c] sm:$0xf]
      %v5507 = vld [vmem:[%s266 + $0x50] sm:$0xf]
      %v5508 = vld [vmem:[%s266 + $0x54] sm:$0xf]
      %v5509 = vld [vmem:[%s266 + $0x58] sm:$0xf]
      %v5510 = vld [vmem:[%s266 + $0x5c] sm:$0xf]
      %v5511 = vld [vmem:[%s266 + $0x60] sm:$0xf]
      %v5512 = vld [vmem:[%s266 + $0x64] sm:$0xf]
      %v5513 = vld [vmem:[%s266 + $0x68] sm:$0xf]
      %v5514 = vld [vmem:[%s266 + $0x6c] sm:$0xf]
      %v5515 = vld [vmem:[%s266 + $0x70] sm:$0xf]
      %v5516 = vld [vmem:[%s266 + $0x74] sm:$0xf]
      %v5517 = vld [vmem:[%s266 + $0x78] sm:$0xf]
      %v5518 = vld [vmem:[%s266 + $0x7c] sm:$0xf]
      %v5519 = vunpack.c.l.bf16 %v5487
      %v5520 = vunpack.c.l.bf16 %v5488
      %v5521 = vunpack.c.l.bf16 %v5489
      %v5522 = vunpack.c.l.bf16 %v5490
      %v5523 = vunpack.c.l.bf16 %v5491
      %v5524 = vunpack.c.l.bf16 %v5492
      %v5525 = vunpack.c.l.bf16 %v5493
      %v5526 = vunpack.c.l.bf16 %v5494
      %v5527 = vunpack.c.l.bf16 %v5495
      %v5528 = vunpack.c.l.bf16 %v5496
      %v5529 = vunpack.c.l.bf16 %v5497
      %v5530 = vunpack.c.l.bf16 %v5498
      %v5531 = vunpack.c.l.bf16 %v5499
      %v5532 = vunpack.c.l.bf16 %v5500
      %v5533 = vunpack.c.l.bf16 %v5501
      %v5534 = vunpack.c.l.bf16 %v5502
      %v5535 = vunpack.c.l.bf16 %v5503
      %v5536 = vunpack.c.l.bf16 %v5504
      %v5537 = vunpack.c.l.bf16 %v5505
      %v5538 = vunpack.c.l.bf16 %v5506
      %v5539 = vunpack.c.l.bf16 %v5507
      %v5540 = vunpack.c.l.bf16 %v5508
      %v5541 = vunpack.c.l.bf16 %v5509
      %v5542 = vunpack.c.l.bf16 %v5510
      %v5543 = vunpack.c.l.bf16 %v5511
      %v5544 = vunpack.c.l.bf16 %v5512
      %v5545 = vunpack.c.l.bf16 %v5513
      %v5546 = vunpack.c.l.bf16 %v5514
      %v5547 = vunpack.c.l.bf16 %v5515
      %v5548 = vunpack.c.l.bf16 %v5516
      %v5549 = vunpack.c.l.bf16 %v5517
      %v5550 = vunpack.c.l.bf16 %v5518
      %v5552 = vsel %vm1288, %v5470, 0
      %v5555 = vsel %vm1288, %v5471, 0
      %v5558 = vsel %vm1288, %v5472, 0
      %v5561 = vsel %vm1288, %v5473, 0
      %v5564 = vsel %vm1288, %v5474, 0
      %v5567 = vsel %vm1288, %v5475, 0
      %v5570 = vsel %vm1288, %v5476, 0
      %v5573 = vsel %vm1288, %v5477, 0
      %v5576 = vsel %vm1288, %v5478, 0
      %v5579 = vsel %vm1288, %v5479, 0
      %v5582 = vsel %vm1288, %v5480, 0
      %v5585 = vsel %vm1288, %v5481, 0
      %v5588 = vsel %vm1288, %v5482, 0
      %v5591 = vsel %vm1288, %v5483, 0
      %v5594 = vsel %vm1288, %v5484, 0
      %v5597 = vsel %vm1288, %v5485, 0
      %v5600 = vsel %vm1337, %v5486, 0
      %5602 = vmatprep.subr.bf16.mxu0 0
      %5603 = vmatpush1.bf16.msra.mxu0 0
      %5604 = vmatprep.subr.bf16.mxu0 0
      %5605 = vmatpush1.bf16.msra.mxu0 0
      %5606 = vmatprep.subr.bf16.mxu0 0
      %5607 = vmatpush1.bf16.msra.mxu0 0
      %5608 = vmatprep.subr.bf16.mxu0 0
      %5609 = vmatpush1.bf16.msra.mxu0 0
      %5610 = vmatprep.subr.bf16.mxu0 0
      %5611 = vmatpush1.bf16.msra.mxu0 0
      %5612 = vmatprep.subr.bf16.mxu0 0
      %5613 = vmatpush1.bf16.msra.mxu0 0
      %5614 = vmatprep.subr.bf16.mxu0 0
      %5615 = vmatpush1.bf16.msra.mxu0 0
      %5616 = vmatprep.subr.bf16.mxu0 0
      %5617 = vmatpush1.bf16.msra.mxu0 %v5600
      %5618 = vmatprep.subr.bf16.mxu0 0
      %5619 = vmatpush2.bf16.msra.mxu0 0
      %5620 = vmatprep.subr.bf16.mxu0 0
      %5621 = vmatpush2.bf16.msra.mxu0 0
      %5622 = vmatprep.subr.bf16.mxu0 0
      %5623 = vmatpush2.bf16.msra.mxu0 0
      %5624 = vmatprep.subr.bf16.mxu0 0
      %5625 = vmatpush2.bf16.msra.mxu0 0
      %5626 = vmatprep.subr.bf16.mxu0 0
      %5627 = vmatpush2.bf16.msra.mxu0 0
      %5628 = vmatprep.subr.bf16.mxu0 0
      %5629 = vmatpush2.bf16.msra.mxu0 0
      %5630 = vmatprep.subr.bf16.mxu0 0
      %5631 = vmatpush2.bf16.msra.mxu0 0
      %5632 = vmatprep.subr.bf16.mxu0 0
      %5633 = vmatpush2.bf16.msra.mxu0 0
      %5634 = vmatprep.mubr.bf16.mxu0 0
      %5635 = vmatmul.mubr.bf16.gmra.mxu0 %v5552
      %v5636 = vpop.f32.mrf.mxu0
      %v5637 = vadd.f32 %v5519, %v5636
      %v5638 = vpop.f32.mrf.mxu0
      %v5639 = vpop.f32.mrf.mxu0
      %v5640 = vadd.f32 %v5520, %v5639
      %v5641 = vpop.f32.mrf.mxu0
      %5642 = vmatprep.mubr.bf16.mxu0 0
      %5643 = vmatmul.mubr.bf16.gmra.mxu0 %v5555
      %v5644 = vpop.f32.mrf.mxu0
      %v5645 = vadd.f32 %v5521, %v5644
      %v5646 = vpop.f32.mrf.mxu0
      %v5647 = vpop.f32.mrf.mxu0
      %v5648 = vadd.f32 %v5522, %v5647
      %v5649 = vpop.f32.mrf.mxu0
      %5650 = vmatprep.mubr.bf16.mxu0 0
      %5651 = vmatmul.mubr.bf16.gmra.mxu0 %v5558
      %v5652 = vpop.f32.mrf.mxu0
      %v5653 = vadd.f32 %v5523, %v5652
      %v5654 = vpop.f32.mrf.mxu0
      %v5655 = vpop.f32.mrf.mxu0
      %v5656 = vadd.f32 %v5524, %v5655
      %v5657 = vpop.f32.mrf.mxu0
      %5658 = vmatprep.mubr.bf16.mxu0 0
      %5659 = vmatmul.mubr.bf16.gmra.mxu0 %v5561
      %v5660 = vpop.f32.mrf.mxu0
      %v5661 = vadd.f32 %v5525, %v5660
      %v5662 = vpop.f32.mrf.mxu0
      %v5663 = vpop.f32.mrf.mxu0
      %v5664 = vadd.f32 %v5526, %v5663
      %v5665 = vpop.f32.mrf.mxu0
      %5666 = vmatprep.mubr.bf16.mxu0 0
      %5667 = vmatmul.mubr.bf16.gmra.mxu0 %v5564
      %v5668 = vpop.f32.mrf.mxu0
      %v5669 = vadd.f32 %v5527, %v5668
      %v5670 = vpop.f32.mrf.mxu0
      %v5671 = vpop.f32.mrf.mxu0
      %v5672 = vadd.f32 %v5528, %v5671
      %v5673 = vpop.f32.mrf.mxu0
      %5674 = vmatprep.mubr.bf16.mxu0 0
      %5675 = vmatmul.mubr.bf16.gmra.mxu0 %v5567
      %v5676 = vpop.f32.mrf.mxu0
      %v5677 = vadd.f32 %v5529, %v5676
      %v5678 = vpop.f32.mrf.mxu0
      %v5679 = vpop.f32.mrf.mxu0
      %v5680 = vadd.f32 %v5530, %v5679
      %v5681 = vpop.f32.mrf.mxu0
      %5682 = vmatprep.mubr.bf16.mxu0 0
      %5683 = vmatmul.mubr.bf16.gmra.mxu0 %v5570
      %v5684 = vpop.f32.mrf.mxu0
      %v5685 = vadd.f32 %v5531, %v5684
      %v5686 = vpop.f32.mrf.mxu0
      %v5687 = vpop.f32.mrf.mxu0
      %v5688 = vadd.f32 %v5532, %v5687
      %v5689 = vpop.f32.mrf.mxu0
      %5690 = vmatprep.mubr.bf16.mxu0 0
      %5691 = vmatmul.mubr.bf16.gmra.mxu0 %v5573
      %v5692 = vpop.f32.mrf.mxu0
      %v5693 = vadd.f32 %v5533, %v5692
      %v5694 = vpop.f32.mrf.mxu0
      %v5695 = vpop.f32.mrf.mxu0
      %v5696 = vadd.f32 %v5534, %v5695
      %v5697 = vpop.f32.mrf.mxu0
      %5698 = vmatprep.mubr.bf16.mxu0 0
      %5699 = vmatmul.mubr.bf16.gmra.mxu0 %v5576
      %v5700 = vpop.f32.mrf.mxu0
      %v5701 = vadd.f32 %v5535, %v5700
      %v5702 = vpop.f32.mrf.mxu0
      %v5703 = vpop.f32.mrf.mxu0
      %v5704 = vadd.f32 %v5536, %v5703
      %v5705 = vpop.f32.mrf.mxu0
      %5706 = vmatprep.mubr.bf16.mxu0 0
      %5707 = vmatmul.mubr.bf16.gmra.mxu0 %v5579
      %v5708 = vpop.f32.mrf.mxu0
      %v5709 = vadd.f32 %v5537, %v5708
      %v5710 = vpop.f32.mrf.mxu0
      %v5711 = vpop.f32.mrf.mxu0
      %v5712 = vadd.f32 %v5538, %v5711
      %v5713 = vpop.f32.mrf.mxu0
      %5714 = vmatprep.mubr.bf16.mxu0 0
      %5715 = vmatmul.mubr.bf16.gmra.mxu0 %v5582
      %v5716 = vpop.f32.mrf.mxu0
      %v5717 = vadd.f32 %v5539, %v5716
      %v5718 = vpop.f32.mrf.mxu0
      %v5719 = vpop.f32.mrf.mxu0
      %v5720 = vadd.f32 %v5540, %v5719
      %v5721 = vpop.f32.mrf.mxu0
      %5722 = vmatprep.mubr.bf16.mxu0 0
      %5723 = vmatmul.mubr.bf16.gmra.mxu0 %v5585
      %v5724 = vpop.f32.mrf.mxu0
      %v5725 = vadd.f32 %v5541, %v5724
      %v5726 = vpop.f32.mrf.mxu0
      %v5727 = vpop.f32.mrf.mxu0
      %v5728 = vadd.f32 %v5542, %v5727
      %v5729 = vpop.f32.mrf.mxu0
      %5730 = vmatprep.mubr.bf16.mxu0 0
      %5731 = vmatmul.mubr.bf16.gmra.mxu0 %v5588
      %v5732 = vpop.f32.mrf.mxu0
      %v5733 = vadd.f32 %v5543, %v5732
      %v5734 = vpop.f32.mrf.mxu0
      %v5735 = vpop.f32.mrf.mxu0
      %v5736 = vadd.f32 %v5544, %v5735
      %v5737 = vpop.f32.mrf.mxu0
      %5738 = vmatprep.mubr.bf16.mxu0 0
      %5739 = vmatmul.mubr.bf16.gmra.mxu0 %v5591
      %v5740 = vpop.f32.mrf.mxu0
      %v5741 = vadd.f32 %v5545, %v5740
      %v5742 = vpop.f32.mrf.mxu0
      %v5743 = vpop.f32.mrf.mxu0
      %v5744 = vadd.f32 %v5546, %v5743
      %v5745 = vpop.f32.mrf.mxu0
      %5746 = vmatprep.mubr.bf16.mxu0 0
      %5747 = vmatmul.mubr.bf16.gmra.mxu0 %v5594
      %v5748 = vpop.f32.mrf.mxu0
      %v5749 = vadd.f32 %v5547, %v5748
      %v5750 = vpop.f32.mrf.mxu0
      %v5751 = vpop.f32.mrf.mxu0
      %v5752 = vadd.f32 %v5548, %v5751
      %v5753 = vpop.f32.mrf.mxu0
      %5754 = vmatprep.mubr.bf16.mxu0 0
      %5755 = vmatmul.mubr.bf16.gmra.mxu0 %v5597
      %v5756 = vpop.f32.mrf.mxu0
      %v5757 = vadd.f32 %v5549, %v5756
      %v5758 = vpop.f32.mrf.mxu0
      %v5759 = vpop.f32.mrf.mxu0
      %v5760 = vadd.f32 %v5550, %v5759
      %v5761 = vpop.f32.mrf.mxu0
      %5762 = vdwg.mxu0
      %v5763 = vpack.c.bf16 %v5640, %v5637
      %v5764 = vpack.c.bf16 %v5648, %v5645
      %v5765 = vpack.c.bf16 %v5656, %v5653
      %v5766 = vpack.c.bf16 %v5664, %v5661
      %v5767 = vpack.c.bf16 %v5672, %v5669
      %v5768 = vpack.c.bf16 %v5680, %v5677
      %v5769 = vpack.c.bf16 %v5688, %v5685
      %v5770 = vpack.c.bf16 %v5696, %v5693
      %v5771 = vpack.c.bf16 %v5704, %v5701
      %v5772 = vpack.c.bf16 %v5712, %v5709
      %v5773 = vpack.c.bf16 %v5720, %v5717
      %v5774 = vpack.c.bf16 %v5728, %v5725
      %v5775 = vpack.c.bf16 %v5736, %v5733
      %v5776 = vpack.c.bf16 %v5744, %v5741
      %v5777 = vpack.c.bf16 %v5752, %v5749
      %v5778 = vpack.c.bf16 %v5760, %v5757
      %v5795 = vunpack.c.l.b16 %v5763
      %v5796 = vunpack.c.h.b16 %v5763
      %v5797 = vunpack.c.l.b16 %v5764
      %v5798 = vunpack.c.h.b16 %v5764
      %v5799 = vunpack.c.l.b16 %v5765
      %v5800 = vunpack.c.h.b16 %v5765
      %v5801 = vunpack.c.l.b16 %v5766
      %v5802 = vunpack.c.h.b16 %v5766
      %v5803 = vunpack.c.l.b16 %v5767
      %v5804 = vunpack.c.h.b16 %v5767
      %v5805 = vunpack.c.l.b16 %v5768
      %v5806 = vunpack.c.h.b16 %v5768
      %v5807 = vunpack.c.l.b16 %v5769
      %v5808 = vunpack.c.h.b16 %v5769
      %v5809 = vunpack.c.l.b16 %v5770
      %v5810 = vunpack.c.h.b16 %v5770
      %v5811 = vunpack.c.l.b16 %v5771
      %v5812 = vunpack.c.h.b16 %v5771
      %v5813 = vunpack.c.l.b16 %v5772
      %v5814 = vunpack.c.h.b16 %v5772
      %v5815 = vunpack.c.l.b16 %v5773
      %v5816 = vunpack.c.h.b16 %v5773
      %v5817 = vunpack.c.l.b16 %v5774
      %v5818 = vunpack.c.h.b16 %v5774
      %v5819 = vunpack.c.l.b16 %v5775
      %v5820 = vunpack.c.h.b16 %v5775
      %v5821 = vunpack.c.l.b16 %v5776
      %v5822 = vunpack.c.h.b16 %v5776
      %v5823 = vunpack.c.l.b16 %v5777
      %v5824 = vunpack.c.h.b16 %v5777
      %v5825 = vunpack.c.l.b16 %v5778
      %v5826 = vunpack.c.h.b16 %v5778
      %v5827 = vpack.c.b16 %v5795, %v5795
      %v5828 = vpack.c.b16 %v5796, %v5796
      %v5829 = vpack.c.b16 %v5797, %v5797
      %v5830 = vpack.c.b16 %v5798, %v5798
      %v5831 = vpack.c.b16 %v5799, %v5799
      %v5832 = vpack.c.b16 %v5800, %v5800
      %v5833 = vpack.c.b16 %v5801, %v5801
      %v5834 = vpack.c.b16 %v5802, %v5802
      %v5835 = vpack.c.b16 %v5803, %v5803
      %v5836 = vpack.c.b16 %v5804, %v5804
      %v5837 = vpack.c.b16 %v5805, %v5805
      %v5838 = vpack.c.b16 %v5806, %v5806
      %v5839 = vpack.c.b16 %v5807, %v5807
      %v5840 = vpack.c.b16 %v5808, %v5808
      %v5841 = vpack.c.b16 %v5809, %v5809
      %v5842 = vpack.c.b16 %v5810, %v5810
      %v5843 = vpack.c.b16 %v5811, %v5811
      %v5844 = vpack.c.b16 %v5812, %v5812
      %v5845 = vpack.c.b16 %v5813, %v5813
      %v5846 = vpack.c.b16 %v5814, %v5814
      %v5847 = vpack.c.b16 %v5815, %v5815
      %v5848 = vpack.c.b16 %v5816, %v5816
      %v5849 = vpack.c.b16 %v5817, %v5817
      %v5850 = vpack.c.b16 %v5818, %v5818
      %v5851 = vpack.c.b16 %v5819, %v5819
      %v5852 = vpack.c.b16 %v5820, %v5820
      %v5853 = vpack.c.b16 %v5821, %v5821
      %v5854 = vpack.c.b16 %v5822, %v5822
      %v5855 = vpack.c.b16 %v5823, %v5823
      %v5856 = vpack.c.b16 %v5824, %v5824
      %v5857 = vpack.c.b16 %v5825, %v5825
      %v5858 = vpack.c.b16 %v5826, %v5826
      %vm5891 = vcmask 125952
      %5892 = vst.msk [vmem:[%s271] sm:$0xf] %vm5891, %v5827
      %5893 = vst.msk [vmem:[%s271 + $0x4] sm:$0xf] %vm5891, %v5828
      %5894 = vst.msk [vmem:[%s271 + $0x8] sm:$0xf] %vm5891, %v5829
      %5895 = vst.msk [vmem:[%s271 + $0xc] sm:$0xf] %vm5891, %v5830
      %5896 = vst.msk [vmem:[%s271 + $0x10] sm:$0xf] %vm5891, %v5831
      %5897 = vst.msk [vmem:[%s271 + $0x14] sm:$0xf] %vm5891, %v5832
      %5898 = vst.msk [vmem:[%s271 + $0x18] sm:$0xf] %vm5891, %v5833
      %5899 = vst.msk [vmem:[%s271 + $0x1c] sm:$0xf] %vm5891, %v5834
      %5900 = vst.msk [vmem:[%s271 + $0x20] sm:$0xf] %vm5891, %v5835
      %5901 = vst.msk [vmem:[%s271 + $0x24] sm:$0xf] %vm5891, %v5836
      %5902 = vst.msk [vmem:[%s271 + $0x28] sm:$0xf] %vm5891, %v5837
      %5903 = vst.msk [vmem:[%s271 + $0x2c] sm:$0xf] %vm5891, %v5838
      %5904 = vst.msk [vmem:[%s271 + $0x30] sm:$0xf] %vm5891, %v5839
      %5905 = vst.msk [vmem:[%s271 + $0x34] sm:$0xf] %vm5891, %v5840
      %5906 = vst.msk [vmem:[%s271 + $0x38] sm:$0xf] %vm5891, %v5841
      %5907 = vst.msk [vmem:[%s271 + $0x3c] sm:$0xf] %vm5891, %v5842
      %5908 = vst.msk [vmem:[%s271 + $0x40] sm:$0xf] %vm5891, %v5843
      %5909 = vst.msk [vmem:[%s271 + $0x44] sm:$0xf] %vm5891, %v5844
      %5910 = vst.msk [vmem:[%s271 + $0x48] sm:$0xf] %vm5891, %v5845
      %5911 = vst.msk [vmem:[%s271 + $0x4c] sm:$0xf] %vm5891, %v5846
      %5912 = vst.msk [vmem:[%s271 + $0x50] sm:$0xf] %vm5891, %v5847
      %5913 = vst.msk [vmem:[%s271 + $0x54] sm:$0xf] %vm5891, %v5848
      %5914 = vst.msk [vmem:[%s271 + $0x58] sm:$0xf] %vm5891, %v5849
      %5915 = vst.msk [vmem:[%s271 + $0x5c] sm:$0xf] %vm5891, %v5850
      %5916 = vst.msk [vmem:[%s271 + $0x60] sm:$0xf] %vm5891, %v5851
      %5917 = vst.msk [vmem:[%s271 + $0x64] sm:$0xf] %vm5891, %v5852
      %5918 = vst.msk [vmem:[%s271 + $0x68] sm:$0xf] %vm5891, %v5853
      %5919 = vst.msk [vmem:[%s271 + $0x6c] sm:$0xf] %vm5891, %v5854
      %5920 = vst.msk [vmem:[%s271 + $0x70] sm:$0xf] %vm5891, %v5855
      %5921 = vst.msk [vmem:[%s271 + $0x74] sm:$0xf] %vm5891, %v5856
      %5922 = vst.msk [vmem:[%s271 + $0x78] sm:$0xf] %vm5891, %v5857
      %5923 = vst.msk [vmem:[%s271 + $0x7c] sm:$0xf] %vm5891, %v5858
      %p5924 = scmp.lt.s32.totalorder %s17, 1
      %s5925 = scalar_select %p5924, %s17, 1
      %s5926 = smul.addr %s5925, 32
      %s5927 = smul.addr %s5926, 4
      %s5928 = scalar_lea.vmem %s6, %s5927
      // Predicated region
      $region45: #{preact_bottleneck_pallas.3} parent=43 // pred_check
        %p5929 = pneg %p171
      $region46: #{preact_bottleneck_pallas.3} parent=43 // pred_check_branch
        %5931 = sbr.rel (%p5929) target = $region48
      $region47: #{preact_bottleneck_pallas.3} parent=43 // pred_region
        _
      $region48: #{preact_bottleneck_pallas.3} parent=43 // pred_fallthru
        _
    $region44: #{preact_bottleneck_pallas.3} parent=5 // pred_fallthru
      _
    %p5932 = scmp.le.s32.totalorder 2, %s12
    // Predicated region
    $region49: #{preact_bottleneck_pallas.3} parent=5 // pred_check
      %p5933 = pneg %p5932
    $region50: #{preact_bottleneck_pallas.3} parent=5 // pred_check_branch
      %5935 = sbr.rel (%p5933) target = $region52
    $region51: #{preact_bottleneck_pallas.3} parent=5 // pred_region
      %s5936 = ssub.s32 %s12, 2
      // Predicated region
      $region53: #{preact_bottleneck_pallas.3} parent=51 // pred_check
        %p5937 = pneg %p177
      $region54: #{preact_bottleneck_pallas.3} parent=51 // pred_check_branch
        %5939 = sbr.rel (%p5937) target = $region56
      $region55: #{preact_bottleneck_pallas.3} parent=51 // pred_region
        %p5940 = scmp.lt.s32.totalorder %s18, 1
        %s5941 = scalar_select %p5940, %s18, 1
        %s5942 = smul.addr %s5941, 32
        %s5943 = smul.addr %s5942, 4
        %s5944 = scalar_lea.vmem %s6, %s5943
      $region56: #{preact_bottleneck_pallas.3} parent=51 // pred_fallthru
        _
    $region52: #{preact_bottleneck_pallas.3} parent=5 // pred_fallthru
      _
  $region6: #{preact_bottleneck_pallas.3} parent=0 // loop_footer
    %s16 = sadd.s32 1, %s12
  $region7: #{preact_bottleneck_pallas.3} parent=0 // loop_footer_branch
    %11 = sbr.rel target = $region3
  $region8: #{preact_bottleneck_pallas.3} parent=0 // loop_exit
    _

</llo_original>
